<compile_context>
chip_gen: v7x
topology: tpu7x:2x2x1
jax: 0.10.0
libtpu: 0.0.40
codegen_flags: <defaults>
</compile_context>

<pallas_src>
import functools

import numpy as np
import jax
import jax.numpy as jnp
from jax import lax
from jax.experimental import pallas as pl
from jax.experimental.pallas import tpu as pltpu


# uint32 spatial-hash primes from the CUDA kernel, reinterpreted as int32
# (int32 wrapping multiply == low 32 bits of uint32 multiply; XOR/AND are bit-identical).
_PRIMES_I32 = np.array(
    [1, 2654435761, 805459861, 3674653429, 2097192037, 1434869437, 2165219737],
    dtype=np.uint32,
).view(np.int32).tolist()

_BS = 128        # table "page" size (lane width of one slab column)
_BS_LOG2 = 7


def _round_up(a, b):
    return ((a + b - 1) // b) * b


def _hash_encode_kernel(meta_i_ref, res_f_ref, x_ref, emb_ref, o_ref, *,
                        D, C, q_pad, size, inv_2size):
    """One (level, batch-tile) grid step.

    meta_i_ref: (L, 2+D) int32 SMEM  [hashmap_size, dense_flag, stride_0..stride_{D-1}]
    res_f_ref:  (L,)     f32  SMEM   per-level grid resolution
    x_ref:      (D, TB)  f32  VMEM   raw inputs in [-size, size], batch lane-dense
    emb_ref:    (1, C*_BS, q_pad)    this level's table slab (fetched once per level:
                                     level is the OUTER grid axis, block index (l,0,0))
    o_ref:      (1, C, TB)           this level's features for this batch tile
    """
    l = pl.program_id(0)
    TB = x_ref.shape[1]

    # per-level scalars (scalar-prefetch SMEM)
    hs = meta_i_ref[l, 0]
    dense = meta_i_ref[l, 1]                     # 1 -> dense grid, 0 -> spatial hash
    hsm1 = hs - 1
    res_f = res_f_ref[l]
    strides = [meta_i_ref[l, 2 + d] for d in range(D)]   # (res+1)**d if dense else 0

    # normalize to [0, 1] and scale to this level's grid
    x = (x_ref[...] + size) * inv_2size          # (D, TB)
    pos = x * res_f
    pos_f = jnp.floor(pos)
    frac = pos - pos_f
    one_m_frac = 1.0 - frac
    pos_i = pos_f.astype(jnp.int32)

    slab = emb_ref[0]                            # (C*_BS, q_pad), VMEM resident
    # hoisted iotas, kept rank-2 but skinny (broadcast happens inside the compares)
    q_iota = lax.broadcasted_iota(jnp.int32, (q_pad, 1), 0)
    j_iota = lax.broadcasted_iota(jnp.int32, (_BS, 1), 0)

    acc = [jnp.zeros((1, TB), jnp.float32) for _ in range(C)]

    for corner in range(1 << D):                 # 2**D interpolation corners
        w = None
        idx_dense = jnp.zeros((1, TB), jnp.int32)
        hsh = jnp.zeros((1, TB), jnp.int32)
        for d in range(D):
            bit = (corner >> d) & 1
            cd = pos_i[d:d + 1, :] + bit                         # (1, TB)
            wd = frac[d:d + 1, :] if bit else one_m_frac[d:d + 1, :]
            w = wd if w is None else w * wd
            idx_dense = idx_dense + cd * strides[d]              # 0 contribution if hashed
            hsh = jnp.bitwise_xor(hsh, cd * _PRIMES_I32[d])
        idx_hash = jnp.bitwise_and(hsh, hsm1)                    # hs is a power of two here
        # scalar-flag arithmetic select (avoids i1 splat), then clamp: only zero-weight
        # corners (x exactly at +size) can exceed hs for dense grids, so clamping matches
        # the CUDA `index % hashmap_size` semantics (contribution is exactly 0 either way).
        idx = dense * idx_dense + (1 - dense) * idx_hash
        idx = jnp.clip(idx, 0, hsm1)

        hi = lax.shift_right_logical(idx, _BS_LOG2)              # page id,     (1, TB)
        lo = jnp.bitwise_and(idx, _BS - 1)                       # in-page pos, (1, TB)

        # stage 1: pull each point's 128-entry page out of the slab on the MXU
        m1 = jnp.where(q_iota == hi, 1.0, 0.0).astype(slab.dtype)        # (q_pad, TB)
        r = jnp.dot(slab, m1, preferred_element_type=jnp.float32)        # (C*_BS, TB)
        # stage 2: in-page select, weight folded into the one-hot (VPU + sublane reduce)
        m2 = jnp.where(j_iota == lo, w, 0.0)                             # (_BS, TB) f32
        for c in range(C):
            acc[c] = acc[c] + jnp.sum(r[c * _BS:(c + 1) * _BS, :] * m2,
                                      axis=0, keepdims=True)

    # single full-block, lane-dense store for this (level, tile)
    o_ref[0] = jnp.concatenate(acc, axis=0).astype(o_ref.dtype)


class HashEncoderPallas:
    """JAX/Pallas port of HashEncoder (forward pass)."""

    def __init__(self, input_dim=3, num_levels=16, level_dim=2,
                 base_resolution=16, log2_hashmap_size=19, key=None,
                 batch_tile=512, table_dtype=jnp.bfloat16):
        self.input_dim = input_dim
        self.num_levels = num_levels
        self.level_dim = level_dim
        self.base_resolution = base_resolution
        self.log2_hashmap_size = log2_hashmap_size
        self.output_dim = num_levels * level_dim
        self.max_params = 2 ** log2_hashmap_size
        self.batch_tile = batch_tile
        self.table_dtype = table_dtype

        offsets = []
        offset = 0
        self.level_meta = []                 # (offset, hashmap_size, resolution, dense)
        for i in range(num_levels):
            resolution = base_resolution * 2 ** i
            params_in_level = min(self.max_params, (resolution + 1) ** input_dim)
            offsets.append(offset)
            dense = (resolution + 1) ** input_dim <= params_in_level
            self.level_meta.append((offset, params_in_level, resolution, dense))
            offset += params_in_level
        offsets.append(offset)
        self.offsets = np.array(offsets, dtype=np.int32)
        self.n_params = offset * level_dim

        max_hs = max(hs for (_, hs, _, _) in self.level_meta)
        self.q_pad = max(1, _round_up(max_hs, _BS) // _BS)       # pages per level slab

        # deterministic init: uniform(-1e-4, 1e-4), same as reset_parameters()
        std = 1e-4
        key = jax.random.PRNGKey(0) if key is None else key
        self.embeddings = jax.random.uniform(
            key, (offset, level_dim), dtype=jnp.float32, minval=-std, maxval=std)

        # Pack the table as (L, C*_BS, q_pad): slab[l, c*_BS + j, q] = emb[off_l + q*_BS + j, c].
        # Stored in bf16 by default (values ~1e-4; halves footprint -> v7x-friendly).
        # Forward-only port, so repacking once at construction is fine; with trainable
        # embeddings this repack (pure reshape/transpose/cast) is part of the fwd graph.
        hs_pad = self.q_pad * _BS
        slabs = []
        for (off, hs, _, _) in self.level_meta:
            sl = self.embeddings[off:off + hs]                              # (hs, C)
            sl = jnp.pad(sl, ((0, hs_pad - hs), (0, 0)))                    # (hs_pad, C)
            sl = sl.reshape(self.q_pad, _BS, level_dim)                     # (q, j, c)
            sl = jnp.transpose(sl, (2, 1, 0)).reshape(level_dim * _BS, self.q_pad)
            slabs.append(sl)
        self.emb_packed = jnp.stack(slabs, axis=0).astype(table_dtype)      # (L, C*_BS, q_pad)

        # per-level scalar metadata (SMEM via scalar prefetch)
        mi = np.zeros((num_levels, 2 + input_dim), np.int32)
        mf = np.zeros((num_levels,), np.float32)
        for li, (off, hs, res, dense) in enumerate(self.level_meta):
            mi[li, 0] = hs
            mi[li, 1] = 1 if dense else 0
            for d in range(input_dim):
                mi[li, 2 + d] = (res + 1) ** d if dense else 0
            mf[li] = float(res)
        self.meta_i = jnp.asarray(mi)
        self.meta_f = jnp.asarray(mf)

    def __call__(self, inputs, size=1.01):
        # NOTE: the torch module's eager min/max range check is omitted on purpose —
        # it forces a device->host sync per call; out-of-range inputs hit the clamp path.
        prefix = inputs.shape[:-1]
        x = inputs.reshape(-1, self.input_dim).astype(jnp.float32)
        B = x.shape[0]
        TB = self.batch_tile
        Bp = _round_up(max(B, 1), TB)
        if Bp != B:
            x = jnp.pad(x, ((0, Bp - B), (0, 0)))
        x_t = x.T                                        # (D, Bp), batch axis lane-dense
        L, C, D = self.num_levels, self.level_dim, self.input_dim

        kernel = functools.partial(
            _hash_encode_kernel,
            D=D, C=C, q_pad=self.q_pad,
            size=float(size), inv_2size=float(1.0 / (2.0 * size)))

        out3 = pl.pallas_call(
            kernel,
            out_shape=jax.ShapeDtypeStruct((L, C, Bp), jnp.float32),
            grid_spec=pltpu.PrefetchScalarGridSpec(
                num_scalar_prefetch=2,                   # meta_i, meta_f -> SMEM
                grid=(L, Bp // TB),                      # level OUTER, batch INNER
                in_specs=[
                    pl.BlockSpec((D, TB), lambda l, i, mi, mf: (0, i)),          # coords tile
                    pl.BlockSpec((1, C * _BS, self.q_pad),
                                 lambda l, i, mi, mf: (l, 0, 0)),                # level slab
                ],
                out_specs=pl.BlockSpec((1, C, TB), lambda l, i, mi, mf: (l, 0, i)),
            ),
            compiler_params=pltpu.CompilerParams(
                # shard the LEVEL axis across TensorCores (v7x): each core fetches only
                # its own levels' slabs once; batch tiles run sequentially per core.
                dimension_semantics=("parallel", "arbitrary"),
                vmem_limit_bytes=48 * 1024 * 1024),
        )(self.meta_i, self.meta_f, x_t, self.emb_packed)

        # (L, C, B) -> (B, L*C), matching torch's outputs.permute(1, 0, 2).reshape(B, L*C)
        out = jnp.transpose(out3[:, :, :B], (2, 0, 1)).reshape(B, L * C)
        return out.reshape(*prefix, L * C)


def hash_encode_ref(inputs, embeddings, level_meta, D, size=1.01):
    """Pure-JAX reference with identical semantics (for validation)."""
    prefix = inputs.shape[:-1]
    x = (inputs.reshape(-1, D).astype(jnp.float32) + size) * (1.0 / (2.0 * size))
    B = x.shape[0]
    C = embeddings.shape[1]
    outs = []
    for (off, hs, res, dense) in level_meta:
        pos = x * float(res)
        pos_f = jnp.floor(pos)
        frac = pos - pos_f
        pos_i = pos_f.astype(jnp.int32)
        acc = jnp.zeros((B, C), jnp.float32)
        for corner in range(1 << D):
            w = jnp.ones((B,), jnp.float32)
            if dense:
                idx = jnp.zeros((B,), jnp.int32)
                stride = 1
                for d in range(D):
                    bit = (corner >> d) & 1
                    cd = pos_i[:, d] + bit
                    fd = frac[:, d]
                    w = w * (fd if bit else (1.0 - fd))
                    idx = idx + cd * stride
                    stride *= (res + 1)
                idx = jnp.clip(idx, 0, hs - 1)   # only zero-weight corners can exceed hs
            else:
                h = jnp.zeros((B,), jnp.int32)
                for d in range(D):
                    bit = (corner >> d) & 1
                    cd = pos_i[:, d] + bit
                    fd = frac[:, d]
                    w = w * (fd if bit else (1.0 - fd))
                    h = jnp.bitwise_xor(h, cd * _PRIMES_I32[d])
                idx = jnp.bitwise_and(h, hs - 1)
            acc = acc + w[:, None] * embeddings[off + idx]
        outs.append(acc)
    out = jnp.concatenate(outs, axis=-1)
    return out.reshape(*prefix, out.shape[-1])


if __name__ == "__main__":
    key = jax.random.PRNGKey(0)
    k_in, k_emb = jax.random.split(key)

    # small config: 4 levels, feature dim 2, base res 4, 2**10 hashmap
    # (levels 0-1 are dense grids, levels 2-3 use the spatial hash)
    enc = HashEncoderPallas(input_dim=3, num_levels=4, level_dim=2,
                            base_resolution=4, log2_hashmap_size=10, key=k_emb)

    # inputs: prefix shape (2, 8), coord dim 3, values in [-1, 1] (within [-1.01, 1.01])
    inputs = jax.random.uniform(k_in, (2, 8, 3), dtype=jnp.float32,
                                minval=-1.0, maxval=1.0)

    out = enc(inputs)
    out = jax.block_until_ready(out)
    assert out.shape == (2, 8, enc.output_dim), out.shape

    # reference uses the same bf16-quantized table the kernel reads, so this checks the
    # indexing / hashing / interpolation logic exactly (accumulation is f32 in both).
    emb_q = enc.embeddings.astype(enc.table_dtype).astype(jnp.float32)
    ref = hash_encode_ref(inputs, emb_q, enc.level_meta, enc.input_dim)
    np.testing.assert_allclose(np.asarray(out), np.asarray(ref), rtol=5e-3, atol=1e-6)

    print("KERNEL_OK")
</pallas_src>

<mosaic_0001>
module attributes {stable_mosaic.version = 11 : i64} {
  func.func @_hash_encode_kernel(%arg0: i32, %arg1: i32, %arg2: memref<4x5xi32, #tpu.memory_space<smem>>, %arg3: memref<4xf32, #tpu.memory_space<smem>>, %arg4: memref<3x512xf32, #tpu.memory_space<vmem>>, %arg5: memref<1x256x8xbf16, #tpu.memory_space<vmem>>, %arg6: memref<1x2x512xf32, #tpu.memory_space<vmem>>) attributes {dimension_semantics = [#tpu.dimension_semantics<parallel>, #tpu.dimension_semantics<arbitrary>], iteration_bounds = array<i64: 4, 1>, scalar_prefetch = 2 : i64, scratch_operands = 0 : i64, tpu.core_type = #tpu.core_type<tc>, window_params = [{transform_indices = @transform_0, window_bounds = array<i64: 3, 512>}, {transform_indices = @transform_1, window_bounds = array<i64: 1, 256, 8>}, {transform_indices = @transform_2, window_bounds = array<i64: 1, 2, 512>}]} {
    %0 = arith.index_cast %arg0 : i32 to index
    %c0 = arith.constant 0 : index
    %1 = memref.load %arg2[%0, %c0] : memref<4x5xi32, #tpu.memory_space<smem>>
    %2 = arith.index_cast %arg0 : i32 to index
    %c1 = arith.constant 1 : index
    %3 = memref.load %arg2[%2, %c1] : memref<4x5xi32, #tpu.memory_space<smem>>
    %c1_i32 = arith.constant 1 : i32
    %4 = arith.subi %1, %c1_i32 : i32
    %5 = arith.index_cast %arg0 : i32 to index
    %6 = memref.load %arg3[%5] : memref<4xf32, #tpu.memory_space<smem>>
    %7 = arith.index_cast %arg0 : i32 to index
    %c2 = arith.constant 2 : index
    %8 = memref.load %arg2[%7, %c2] : memref<4x5xi32, #tpu.memory_space<smem>>
    %9 = arith.index_cast %arg0 : i32 to index
    %c3 = arith.constant 3 : index
    %10 = memref.load %arg2[%9, %c3] : memref<4x5xi32, #tpu.memory_space<smem>>
    %11 = arith.index_cast %arg0 : i32 to index
    %c4 = arith.constant 4 : index
    %12 = memref.load %arg2[%11, %c4] : memref<4x5xi32, #tpu.memory_space<smem>>
    %c0_0 = arith.constant 0 : index
    %c0_1 = arith.constant 0 : index
    %13 = vector.load %arg4[%c0_0, %c0_1] : memref<3x512xf32, #tpu.memory_space<vmem>>, vector<3x512xf32>
    %cst = arith.constant 1.010000e+00 : f32
    %14 = vector.broadcast %cst : f32 to vector<3x512xf32>
    %15 = arith.addf %13, %14 : vector<3x512xf32>
    %cst_2 = arith.constant 0.495049506 : f32
    %16 = vector.broadcast %cst_2 : f32 to vector<3x512xf32>
    %17 = arith.mulf %15, %16 : vector<3x512xf32>
    %18 = vector.broadcast %6 : f32 to vector<3x512xf32>
    %19 = arith.mulf %17, %18 : vector<3x512xf32>
    %20 = math.floor %19 : vector<3x512xf32>
    %21 = arith.subf %19, %20 : vector<3x512xf32>
    %cst_3 = arith.constant 1.000000e+00 : f32
    %22 = vector.broadcast %cst_3 : f32 to vector<3x512xf32>
    %23 = arith.subf %22, %21 : vector<3x512xf32>
    %24 = arith.fptosi %20 : vector<3x512xf32> to vector<3x512xi32>
    %c0_4 = arith.constant 0 : index
    %c0_5 = arith.constant 0 : index
    %c0_6 = arith.constant 0 : index
    %25 = vector.load %arg5[%c0_4, %c0_5, %c0_6] : memref<1x256x8xbf16, #tpu.memory_space<vmem>>, vector<1x256x8xbf16>
    %26 = vector.shape_cast %25 : vector<1x256x8xbf16> to vector<256x8xbf16>
    %27 = tpu.iota {dimensions = array<i32: 0>} : vector<8x1xi32>
    %28 = tpu.iota {dimensions = array<i32: 0>} : vector<128x1xi32>
    %cst_7 = arith.constant 0.000000e+00 : f32
    %29 = vector.broadcast %cst_7 : f32 to vector<1x512xf32>
    %cst_8 = arith.constant 0.000000e+00 : f32
    %30 = vector.broadcast %cst_8 : f32 to vector<1x512xf32>
    %c0_i32 = arith.constant 0 : i32
    %31 = vector.broadcast %c0_i32 : i32 to vector<1x512xi32>
    %c0_i32_9 = arith.constant 0 : i32
    %32 = vector.broadcast %c0_i32_9 : i32 to vector<1x512xi32>
    %33 = vector.extract_strided_slice %24 {offsets = [0, 0], sizes = [1, 512], strides = [1, 1]} : vector<3x512xi32> to vector<1x512xi32>
    %c0_i32_10 = arith.constant 0 : i32
    %34 = vector.broadcast %c0_i32_10 : i32 to vector<1x512xi32>
    %35 = arith.addi %33, %34 : vector<1x512xi32>
    %36 = vector.extract_strided_slice %23 {offsets = [0, 0], sizes = [1, 512], strides = [1, 1]} : vector<3x512xf32> to vector<1x512xf32>
    %37 = vector.broadcast %8 : i32 to vector<1x512xi32>
    %38 = arith.muli %35, %37 : vector<1x512xi32>
    %39 = arith.addi %31, %38 : vector<1x512xi32>
    %c1_i32_11 = arith.constant 1 : i32
    %40 = vector.broadcast %c1_i32_11 : i32 to vector<1x512xi32>
    %41 = arith.muli %35, %40 : vector<1x512xi32>
    %42 = arith.xori %32, %41 : vector<1x512xi32>
    %43 = vector.extract_strided_slice %24 {offsets = [1, 0], sizes = [1, 512], strides = [1, 1]} : vector<3x512xi32> to vector<1x512xi32>
    %c0_i32_12 = arith.constant 0 : i32
    %44 = vector.broadcast %c0_i32_12 : i32 to vector<1x512xi32>
    %45 = arith.addi %43, %44 : vector<1x512xi32>
    %46 = vector.extract_strided_slice %23 {offsets = [1, 0], sizes = [1, 512], strides = [1, 1]} : vector<3x512xf32> to vector<1x512xf32>
    %47 = arith.mulf %36, %46 : vector<1x512xf32>
    %48 = vector.broadcast %10 : i32 to vector<1x512xi32>
    %49 = arith.muli %45, %48 : vector<1x512xi32>
    %50 = arith.addi %39, %49 : vector<1x512xi32>
    %c-1640531535_i32 = arith.constant -1640531535 : i32
    %51 = vector.broadcast %c-1640531535_i32 : i32 to vector<1x512xi32>
    %52 = arith.muli %45, %51 : vector<1x512xi32>
    %53 = arith.xori %42, %52 : vector<1x512xi32>
    %54 = vector.extract_strided_slice %24 {offsets = [2, 0], sizes = [1, 512], strides = [1, 1]} : vector<3x512xi32> to vector<1x512xi32>
    %c0_i32_13 = arith.constant 0 : i32
    %55 = vector.broadcast %c0_i32_13 : i32 to vector<1x512xi32>
    %56 = arith.addi %54, %55 : vector<1x512xi32>
    %57 = vector.extract_strided_slice %23 {offsets = [2, 0], sizes = [1, 512], strides = [1, 1]} : vector<3x512xf32> to vector<1x512xf32>
    %58 = arith.mulf %47, %57 : vector<1x512xf32>
    %59 = vector.broadcast %12 : i32 to vector<1x512xi32>
    %60 = arith.muli %56, %59 : vector<1x512xi32>
    %61 = arith.addi %50, %60 : vector<1x512xi32>
    %c805459861_i32 = arith.constant 805459861 : i32
    %62 = vector.broadcast %c805459861_i32 : i32 to vector<1x512xi32>
    %63 = arith.muli %56, %62 : vector<1x512xi32>
    %64 = arith.xori %53, %63 : vector<1x512xi32>
    %65 = vector.broadcast %4 : i32 to vector<1x512xi32>
    %66 = arith.andi %64, %65 : vector<1x512xi32>
    %67 = vector.broadcast %3 : i32 to vector<1x512xi32>
    %68 = arith.muli %67, %61 : vector<1x512xi32>
    %c1_i32_14 = arith.constant 1 : i32
    %69 = arith.subi %c1_i32_14, %3 : i32
    %70 = vector.broadcast %69 : i32 to vector<1x512xi32>
    %71 = arith.muli %70, %66 : vector<1x512xi32>
    %72 = arith.addi %68, %71 : vector<1x512xi32>
    %c0_i32_15 = arith.constant 0 : i32
    %73 = vector.broadcast %c0_i32_15 : i32 to vector<1x512xi32>
    %74 = arith.maxsi %73, %72 : vector<1x512xi32>
    %75 = vector.broadcast %4 : i32 to vector<1x512xi32>
    %76 = arith.minsi %75, %74 : vector<1x512xi32>
    %c7_i32 = arith.constant 7 : i32
    %77 = vector.broadcast %c7_i32 : i32 to vector<1x512xi32>
    %78 = arith.shrui %76, %77 : vector<1x512xi32>
    %c127_i32 = arith.constant 127 : i32
    %79 = vector.broadcast %c127_i32 : i32 to vector<1x512xi32>
    %80 = arith.andi %76, %79 : vector<1x512xi32>
    %81 = vector.broadcast %27 : vector<8x1xi32> to vector<8x512xi32>
    %82 = vector.broadcast %78 : vector<1x512xi32> to vector<8x512xi32>
    %83 = arith.cmpi eq, %81, %82 : vector<8x512xi32>
    %cst_16 = arith.constant 1.000000e+00 : f32
    %cst_17 = arith.constant 0.000000e+00 : f32
    %84 = vector.broadcast %cst_16 : f32 to vector<8x512xf32>
    %85 = vector.broadcast %cst_17 : f32 to vector<8x512xf32>
    %86 = arith.select %83, %84, %85 : vector<8x512xi1>, vector<8x512xf32>
    %87 = arith.truncf %86 : vector<8x512xf32> to vector<8x512xbf16>
    %cst_18 = arith.constant dense<0.000000e+00> : vector<256x512xf32>
    %88 = tpu.matmul %26, %87, %cst_18 {dimension_numbers = #tpu.dot_dimension_numbers<[1], [0], [0], [1], [0, 0, 1, 1], [], []>} : vector<256x8xbf16>, vector<8x512xbf16>, vector<256x512xf32> -> vector<256x512xf32>
    %89 = vector.broadcast %28 : vector<128x1xi32> to vector<128x512xi32>
    %90 = vector.broadcast %80 : vector<1x512xi32> to vector<128x512xi32>
    %91 = arith.cmpi eq, %89, %90 : vector<128x512xi32>
    %cst_19 = arith.constant 0.000000e+00 : f32
    %92 = vector.shape_cast %58 : vector<1x512xf32> to vector<1x512xf32>
    %93 = vector.broadcast %92 : vector<1x512xf32> to vector<128x512xf32>
    %94 = vector.broadcast %cst_19 : f32 to vector<128x512xf32>
    %95 = arith.select %91, %93, %94 : vector<128x512xi1>, vector<128x512xf32>
    %96 = vector.extract_strided_slice %88 {offsets = [0, 0], sizes = [128, 512], strides = [1, 1]} : vector<256x512xf32> to vector<128x512xf32>
    %97 = arith.mulf %96, %95 : vector<128x512xf32>
    %cst_20 = arith.constant dense<0.000000e+00> : vector<512xf32>
    %98 = vector.multi_reduction <add>, %97, %cst_20 [0] : vector<128x512xf32> to vector<512xf32>
    %99 = vector.shape_cast %98 : vector<512xf32> to vector<1x512xf32>
    %100 = arith.addf %29, %99 : vector<1x512xf32>
    %101 = vector.extract_strided_slice %88 {offsets = [128, 0], sizes = [128, 512], strides = [1, 1]} : vector<256x512xf32> to vector<128x512xf32>
    %102 = arith.mulf %101, %95 : vector<128x512xf32>
    %cst_21 = arith.constant dense<0.000000e+00> : vector<512xf32>
    %103 = vector.multi_reduction <add>, %102, %cst_21 [0] : vector<128x512xf32> to vector<512xf32>
    %104 = vector.shape_cast %103 : vector<512xf32> to vector<1x512xf32>
    %105 = arith.addf %30, %104 : vector<1x512xf32>
    %c0_i32_22 = arith.constant 0 : i32
    %106 = vector.broadcast %c0_i32_22 : i32 to vector<1x512xi32>
    %c0_i32_23 = arith.constant 0 : i32
    %107 = vector.broadcast %c0_i32_23 : i32 to vector<1x512xi32>
    %108 = vector.extract_strided_slice %24 {offsets = [0, 0], sizes = [1, 512], strides = [1, 1]} : vector<3x512xi32> to vector<1x512xi32>
    %c1_i32_24 = arith.constant 1 : i32
    %109 = vector.broadcast %c1_i32_24 : i32 to vector<1x512xi32>
    %110 = arith.addi %108, %109 : vector<1x512xi32>
    %111 = vector.extract_strided_slice %21 {offsets = [0, 0], sizes = [1, 512], strides = [1, 1]} : vector<3x512xf32> to vector<1x512xf32>
    %112 = vector.broadcast %8 : i32 to vector<1x512xi32>
    %113 = arith.muli %110, %112 : vector<1x512xi32>
    %114 = arith.addi %106, %113 : vector<1x512xi32>
    %c1_i32_25 = arith.constant 1 : i32
    %115 = vector.broadcast %c1_i32_25 : i32 to vector<1x512xi32>
    %116 = arith.muli %110, %115 : vector<1x512xi32>
    %117 = arith.xori %107, %116 : vector<1x512xi32>
    %118 = vector.extract_strided_slice %24 {offsets = [1, 0], sizes = [1, 512], strides = [1, 1]} : vector<3x512xi32> to vector<1x512xi32>
    %c0_i32_26 = arith.constant 0 : i32
    %119 = vector.broadcast %c0_i32_26 : i32 to vector<1x512xi32>
    %120 = arith.addi %118, %119 : vector<1x512xi32>
    %121 = vector.extract_strided_slice %23 {offsets = [1, 0], sizes = [1, 512], strides = [1, 1]} : vector<3x512xf32> to vector<1x512xf32>
    %122 = arith.mulf %111, %121 : vector<1x512xf32>
    %123 = vector.broadcast %10 : i32 to vector<1x512xi32>
    %124 = arith.muli %120, %123 : vector<1x512xi32>
    %125 = arith.addi %114, %124 : vector<1x512xi32>
    %c-1640531535_i32_27 = arith.constant -1640531535 : i32
    %126 = vector.broadcast %c-1640531535_i32_27 : i32 to vector<1x512xi32>
    %127 = arith.muli %120, %126 : vector<1x512xi32>
    %128 = arith.xori %117, %127 : vector<1x512xi32>
    %129 = vector.extract_strided_slice %24 {offsets = [2, 0], sizes = [1, 512], strides = [1, 1]} : vector<3x512xi32> to vector<1x512xi32>
    %c0_i32_28 = arith.constant 0 : i32
    %130 = vector.broadcast %c0_i32_28 : i32 to vector<1x512xi32>
    %131 = arith.addi %129, %130 : vector<1x512xi32>
    %132 = vector.extract_strided_slice %23 {offsets = [2, 0], sizes = [1, 512], strides = [1, 1]} : vector<3x512xf32> to vector<1x512xf32>
    %133 = arith.mulf %122, %132 : vector<1x512xf32>
    %134 = vector.broadcast %12 : i32 to vector<1x512xi32>
    %135 = arith.muli %131, %134 : vector<1x512xi32>
    %136 = arith.addi %125, %135 : vector<1x512xi32>
    %c805459861_i32_29 = arith.constant 805459861 : i32
    %137 = vector.broadcast %c805459861_i32_29 : i32 to vector<1x512xi32>
    %138 = arith.muli %131, %137 : vector<1x512xi32>
    %139 = arith.xori %128, %138 : vector<1x512xi32>
    %140 = vector.broadcast %4 : i32 to vector<1x512xi32>
    %141 = arith.andi %139, %140 : vector<1x512xi32>
    %142 = vector.broadcast %3 : i32 to vector<1x512xi32>
    %143 = arith.muli %142, %136 : vector<1x512xi32>
    %c1_i32_30 = arith.constant 1 : i32
    %144 = arith.subi %c1_i32_30, %3 : i32
    %145 = vector.broadcast %144 : i32 to vector<1x512xi32>
    %146 = arith.muli %145, %141 : vector<1x512xi32>
    %147 = arith.addi %143, %146 : vector<1x512xi32>
    %c0_i32_31 = arith.constant 0 : i32
    %148 = vector.broadcast %c0_i32_31 : i32 to vector<1x512xi32>
    %149 = arith.maxsi %148, %147 : vector<1x512xi32>
    %150 = vector.broadcast %4 : i32 to vector<1x512xi32>
    %151 = arith.minsi %150, %149 : vector<1x512xi32>
    %c7_i32_32 = arith.constant 7 : i32
    %152 = vector.broadcast %c7_i32_32 : i32 to vector<1x512xi32>
    %153 = arith.shrui %151, %152 : vector<1x512xi32>
    %c127_i32_33 = arith.constant 127 : i32
    %154 = vector.broadcast %c127_i32_33 : i32 to vector<1x512xi32>
    %155 = arith.andi %151, %154 : vector<1x512xi32>
    %156 = vector.broadcast %27 : vector<8x1xi32> to vector<8x512xi32>
    %157 = vector.broadcast %153 : vector<1x512xi32> to vector<8x512xi32>
    %158 = arith.cmpi eq, %156, %157 : vector<8x512xi32>
    %cst_34 = arith.constant 1.000000e+00 : f32
    %cst_35 = arith.constant 0.000000e+00 : f32
    %159 = vector.broadcast %cst_34 : f32 to vector<8x512xf32>
    %160 = vector.broadcast %cst_35 : f32 to vector<8x512xf32>
    %161 = arith.select %158, %159, %160 : vector<8x512xi1>, vector<8x512xf32>
    %162 = arith.truncf %161 : vector<8x512xf32> to vector<8x512xbf16>
    %cst_36 = arith.constant dense<0.000000e+00> : vector<256x512xf32>
    %163 = tpu.matmul %26, %162, %cst_36 {dimension_numbers = #tpu.dot_dimension_numbers<[1], [0], [0], [1], [0, 0, 1, 1], [], []>} : vector<256x8xbf16>, vector<8x512xbf16>, vector<256x512xf32> -> vector<256x512xf32>
    %164 = vector.broadcast %28 : vector<128x1xi32> to vector<128x512xi32>
    %165 = vector.broadcast %155 : vector<1x512xi32> to vector<128x512xi32>
    %166 = arith.cmpi eq, %164, %165 : vector<128x512xi32>
    %cst_37 = arith.constant 0.000000e+00 : f32
    %167 = vector.shape_cast %133 : vector<1x512xf32> to vector<1x512xf32>
    %168 = vector.broadcast %167 : vector<1x512xf32> to vector<128x512xf32>
    %169 = vector.broadcast %cst_37 : f32 to vector<128x512xf32>
    %170 = arith.select %166, %168, %169 : vector<128x512xi1>, vector<128x512xf32>
    %171 = vector.extract_strided_slice %163 {offsets = [0, 0], sizes = [128, 512], strides = [1, 1]} : vector<256x512xf32> to vector<128x512xf32>
    %172 = arith.mulf %171, %170 : vector<128x512xf32>
    %cst_38 = arith.constant dense<0.000000e+00> : vector<512xf32>
    %173 = vector.multi_reduction <add>, %172, %cst_38 [0] : vector<128x512xf32> to vector<512xf32>
    %174 = vector.shape_cast %173 : vector<512xf32> to vector<1x512xf32>
    %175 = arith.addf %100, %174 : vector<1x512xf32>
    %176 = vector.extract_strided_slice %163 {offsets = [128, 0], sizes = [128, 512], strides = [1, 1]} : vector<256x512xf32> to vector<128x512xf32>
    %177 = arith.mulf %176, %170 : vector<128x512xf32>
    %cst_39 = arith.constant dense<0.000000e+00> : vector<512xf32>
    %178 = vector.multi_reduction <add>, %177, %cst_39 [0] : vector<128x512xf32> to vector<512xf32>
    %179 = vector.shape_cast %178 : vector<512xf32> to vector<1x512xf32>
    %180 = arith.addf %105, %179 : vector<1x512xf32>
    %c0_i32_40 = arith.constant 0 : i32
    %181 = vector.broadcast %c0_i32_40 : i32 to vector<1x512xi32>
    %c0_i32_41 = arith.constant 0 : i32
    %182 = vector.broadcast %c0_i32_41 : i32 to vector<1x512xi32>
    %183 = vector.extract_strided_slice %24 {offsets = [0, 0], sizes = [1, 512], strides = [1, 1]} : vector<3x512xi32> to vector<1x512xi32>
    %c0_i32_42 = arith.constant 0 : i32
    %184 = vector.broadcast %c0_i32_42 : i32 to vector<1x512xi32>
    %185 = arith.addi %183, %184 : vector<1x512xi32>
    %186 = vector.extract_strided_slice %23 {offsets = [0, 0], sizes = [1, 512], strides = [1, 1]} : vector<3x512xf32> to vector<1x512xf32>
    %187 = vector.broadcast %8 : i32 to vector<1x512xi32>
    %188 = arith.muli %185, %187 : vector<1x512xi32>
    %189 = arith.addi %181, %188 : vector<1x512xi32>
    %c1_i32_43 = arith.constant 1 : i32
    %190 = vector.broadcast %c1_i32_43 : i32 to vector<1x512xi32>
    %191 = arith.muli %185, %190 : vector<1x512xi32>
    %192 = arith.xori %182, %191 : vector<1x512xi32>
    %193 = vector.extract_strided_slice %24 {offsets = [1, 0], sizes = [1, 512], strides = [1, 1]} : vector<3x512xi32> to vector<1x512xi32>
    %c1_i32_44 = arith.constant 1 : i32
    %194 = vector.broadcast %c1_i32_44 : i32 to vector<1x512xi32>
    %195 = arith.addi %193, %194 : vector<1x512xi32>
    %196 = vector.extract_strided_slice %21 {offsets = [1, 0], sizes = [1, 512], strides = [1, 1]} : vector<3x512xf32> to vector<1x512xf32>
    %197 = arith.mulf %186, %196 : vector<1x512xf32>
    %198 = vector.broadcast %10 : i32 to vector<1x512xi32>
    %199 = arith.muli %195, %198 : vector<1x512xi32>
    %200 = arith.addi %189, %199 : vector<1x512xi32>
    %c-1640531535_i32_45 = arith.constant -1640531535 : i32
    %201 = vector.broadcast %c-1640531535_i32_45 : i32 to vector<1x512xi32>
    %202 = arith.muli %195, %201 : vector<1x512xi32>
    %203 = arith.xori %192, %202 : vector<1x512xi32>
    %204 = vector.extract_strided_slice %24 {offsets = [2, 0], sizes = [1, 512], strides = [1, 1]} : vector<3x512xi32> to vector<1x512xi32>
    %c0_i32_46 = arith.constant 0 : i32
    %205 = vector.broadcast %c0_i32_46 : i32 to vector<1x512xi32>
    %206 = arith.addi %204, %205 : vector<1x512xi32>
    %207 = vector.extract_strided_slice %23 {offsets = [2, 0], sizes = [1, 512], strides = [1, 1]} : vector<3x512xf32> to vector<1x512xf32>
    %208 = arith.mulf %197, %207 : vector<1x512xf32>
    %209 = vector.broadcast %12 : i32 to vector<1x512xi32>
    %210 = arith.muli %206, %209 : vector<1x512xi32>
    %211 = arith.addi %200, %210 : vector<1x512xi32>
    %c805459861_i32_47 = arith.constant 805459861 : i32
    %212 = vector.broadcast %c805459861_i32_47 : i32 to vector<1x512xi32>
    %213 = arith.muli %206, %212 : vector<1x512xi32>
    %214 = arith.xori %203, %213 : vector<1x512xi32>
    %215 = vector.broadcast %4 : i32 to vector<1x512xi32>
    %216 = arith.andi %214, %215 : vector<1x512xi32>
    %217 = vector.broadcast %3 : i32 to vector<1x512xi32>
    %218 = arith.muli %217, %211 : vector<1x512xi32>
    %c1_i32_48 = arith.constant 1 : i32
    %219 = arith.subi %c1_i32_48, %3 : i32
    %220 = vector.broadcast %219 : i32 to vector<1x512xi32>
    %221 = arith.muli %220, %216 : vector<1x512xi32>
    %222 = arith.addi %218, %221 : vector<1x512xi32>
    %c0_i32_49 = arith.constant 0 : i32
    %223 = vector.broadcast %c0_i32_49 : i32 to vector<1x512xi32>
    %224 = arith.maxsi %223, %222 : vector<1x512xi32>
    %225 = vector.broadcast %4 : i32 to vector<1x512xi32>
    %226 = arith.minsi %225, %224 : vector<1x512xi32>
    %c7_i32_50 = arith.constant 7 : i32
    %227 = vector.broadcast %c7_i32_50 : i32 to vector<1x512xi32>
    %228 = arith.shrui %226, %227 : vector<1x512xi32>
    %c127_i32_51 = arith.constant 127 : i32
    %229 = vector.broadcast %c127_i32_51 : i32 to vector<1x512xi32>
    %230 = arith.andi %226, %229 : vector<1x512xi32>
    %231 = vector.broadcast %27 : vector<8x1xi32> to vector<8x512xi32>
    %232 = vector.broadcast %228 : vector<1x512xi32> to vector<8x512xi32>
    %233 = arith.cmpi eq, %231, %232 : vector<8x512xi32>
    %cst_52 = arith.constant 1.000000e+00 : f32
    %cst_53 = arith.constant 0.000000e+00 : f32
    %234 = vector.broadcast %cst_52 : f32 to vector<8x512xf32>
    %235 = vector.broadcast %cst_53 : f32 to vector<8x512xf32>
    %236 = arith.select %233, %234, %235 : vector<8x512xi1>, vector<8x512xf32>
    %237 = arith.truncf %236 : vector<8x512xf32> to vector<8x512xbf16>
    %cst_54 = arith.constant dense<0.000000e+00> : vector<256x512xf32>
    %238 = tpu.matmul %26, %237, %cst_54 {dimension_numbers = #tpu.dot_dimension_numbers<[1], [0], [0], [1], [0, 0, 1, 1], [], []>} : vector<256x8xbf16>, vector<8x512xbf16>, vector<256x512xf32> -> vector<256x512xf32>
    %239 = vector.broadcast %28 : vector<128x1xi32> to vector<128x512xi32>
    %240 = vector.broadcast %230 : vector<1x512xi32> to vector<128x512xi32>
    %241 = arith.cmpi eq, %239, %240 : vector<128x512xi32>
    %cst_55 = arith.constant 0.000000e+00 : f32
    %242 = vector.shape_cast %208 : vector<1x512xf32> to vector<1x512xf32>
    %243 = vector.broadcast %242 : vector<1x512xf32> to vector<128x512xf32>
    %244 = vector.broadcast %cst_55 : f32 to vector<128x512xf32>
    %245 = arith.select %241, %243, %244 : vector<128x512xi1>, vector<128x512xf32>
    %246 = vector.extract_strided_slice %238 {offsets = [0, 0], sizes = [128, 512], strides = [1, 1]} : vector<256x512xf32> to vector<128x512xf32>
    %247 = arith.mulf %246, %245 : vector<128x512xf32>
    %cst_56 = arith.constant dense<0.000000e+00> : vector<512xf32>
    %248 = vector.multi_reduction <add>, %247, %cst_56 [0] : vector<128x512xf32> to vector<512xf32>
    %249 = vector.shape_cast %248 : vector<512xf32> to vector<1x512xf32>
    %250 = arith.addf %175, %249 : vector<1x512xf32>
    %251 = vector.extract_strided_slice %238 {offsets = [128, 0], sizes = [128, 512], strides = [1, 1]} : vector<256x512xf32> to vector<128x512xf32>
    %252 = arith.mulf %251, %245 : vector<128x512xf32>
    %cst_57 = arith.constant dense<0.000000e+00> : vector<512xf32>
    %253 = vector.multi_reduction <add>, %252, %cst_57 [0] : vector<128x512xf32> to vector<512xf32>
    %254 = vector.shape_cast %253 : vector<512xf32> to vector<1x512xf32>
    %255 = arith.addf %180, %254 : vector<1x512xf32>
    %c0_i32_58 = arith.constant 0 : i32
    %256 = vector.broadcast %c0_i32_58 : i32 to vector<1x512xi32>
    %c0_i32_59 = arith.constant 0 : i32
    %257 = vector.broadcast %c0_i32_59 : i32 to vector<1x512xi32>
    %258 = vector.extract_strided_slice %24 {offsets = [0, 0], sizes = [1, 512], strides = [1, 1]} : vector<3x512xi32> to vector<1x512xi32>
    %c1_i32_60 = arith.constant 1 : i32
    %259 = vector.broadcast %c1_i32_60 : i32 to vector<1x512xi32>
    %260 = arith.addi %258, %259 : vector<1x512xi32>
    %261 = vector.extract_strided_slice %21 {offsets = [0, 0], sizes = [1, 512], strides = [1, 1]} : vector<3x512xf32> to vector<1x512xf32>
    %262 = vector.broadcast %8 : i32 to vector<1x512xi32>
    %263 = arith.muli %260, %262 : vector<1x512xi32>
    %264 = arith.addi %256, %263 : vector<1x512xi32>
    %c1_i32_61 = arith.constant 1 : i32
    %265 = vector.broadcast %c1_i32_61 : i32 to vector<1x512xi32>
    %266 = arith.muli %260, %265 : vector<1x512xi32>
    %267 = arith.xori %257, %266 : vector<1x512xi32>
    %268 = vector.extract_strided_slice %24 {offsets = [1, 0], sizes = [1, 512], strides = [1, 1]} : vector<3x512xi32> to vector<1x512xi32>
    %c1_i32_62 = arith.constant 1 : i32
    %269 = vector.broadcast %c1_i32_62 : i32 to vector<1x512xi32>
    %270 = arith.addi %268, %269 : vector<1x512xi32>
    %271 = vector.extract_strided_slice %21 {offsets = [1, 0], sizes = [1, 512], strides = [1, 1]} : vector<3x512xf32> to vector<1x512xf32>
    %272 = arith.mulf %261, %271 : vector<1x512xf32>
    %273 = vector.broadcast %10 : i32 to vector<1x512xi32>
    %274 = arith.muli %270, %273 : vector<1x512xi32>
    %275 = arith.addi %264, %274 : vector<1x512xi32>
    %c-1640531535_i32_63 = arith.constant -1640531535 : i32
    %276 = vector.broadcast %c-1640531535_i32_63 : i32 to vector<1x512xi32>
    %277 = arith.muli %270, %276 : vector<1x512xi32>
    %278 = arith.xori %267, %277 : vector<1x512xi32>
    %279 = vector.extract_strided_slice %24 {offsets = [2, 0], sizes = [1, 512], strides = [1, 1]} : vector<3x512xi32> to vector<1x512xi32>
    %c0_i32_64 = arith.constant 0 : i32
    %280 = vector.broadcast %c0_i32_64 : i32 to vector<1x512xi32>
    %281 = arith.addi %279, %280 : vector<1x512xi32>
    %282 = vector.extract_strided_slice %23 {offsets = [2, 0], sizes = [1, 512], strides = [1, 1]} : vector<3x512xf32> to vector<1x512xf32>
    %283 = arith.mulf %272, %282 : vector<1x512xf32>
    %284 = vector.broadcast %12 : i32 to vector<1x512xi32>
    %285 = arith.muli %281, %284 : vector<1x512xi32>
    %286 = arith.addi %275, %285 : vector<1x512xi32>
    %c805459861_i32_65 = arith.constant 805459861 : i32
    %287 = vector.broadcast %c805459861_i32_65 : i32 to vector<1x512xi32>
    %288 = arith.muli %281, %287 : vector<1x512xi32>
    %289 = arith.xori %278, %288 : vector<1x512xi32>
    %290 = vector.broadcast %4 : i32 to vector<1x512xi32>
    %291 = arith.andi %289, %290 : vector<1x512xi32>
    %292 = vector.broadcast %3 : i32 to vector<1x512xi32>
    %293 = arith.muli %292, %286 : vector<1x512xi32>
    %c1_i32_66 = arith.constant 1 : i32
    %294 = arith.subi %c1_i32_66, %3 : i32
    %295 = vector.broadcast %294 : i32 to vector<1x512xi32>
    %296 = arith.muli %295, %291 : vector<1x512xi32>
    %297 = arith.addi %293, %296 : vector<1x512xi32>
    %c0_i32_67 = arith.constant 0 : i32
    %298 = vector.broadcast %c0_i32_67 : i32 to vector<1x512xi32>
    %299 = arith.maxsi %298, %297 : vector<1x512xi32>
    %300 = vector.broadcast %4 : i32 to vector<1x512xi32>
    %301 = arith.minsi %300, %299 : vector<1x512xi32>
    %c7_i32_68 = arith.constant 7 : i32
    %302 = vector.broadcast %c7_i32_68 : i32 to vector<1x512xi32>
    %303 = arith.shrui %301, %302 : vector<1x512xi32>
    %c127_i32_69 = arith.constant 127 : i32
    %304 = vector.broadcast %c127_i32_69 : i32 to vector<1x512xi32>
    %305 = arith.andi %301, %304 : vector<1x512xi32>
    %306 = vector.broadcast %27 : vector<8x1xi32> to vector<8x512xi32>
    %307 = vector.broadcast %303 : vector<1x512xi32> to vector<8x512xi32>
    %308 = arith.cmpi eq, %306, %307 : vector<8x512xi32>
    %cst_70 = arith.constant 1.000000e+00 : f32
    %cst_71 = arith.constant 0.000000e+00 : f32
    %309 = vector.broadcast %cst_70 : f32 to vector<8x512xf32>
    %310 = vector.broadcast %cst_71 : f32 to vector<8x512xf32>
    %311 = arith.select %308, %309, %310 : vector<8x512xi1>, vector<8x512xf32>
    %312 = arith.truncf %311 : vector<8x512xf32> to vector<8x512xbf16>
    %cst_72 = arith.constant dense<0.000000e+00> : vector<256x512xf32>
    %313 = tpu.matmul %26, %312, %cst_72 {dimension_numbers = #tpu.dot_dimension_numbers<[1], [0], [0], [1], [0, 0, 1, 1], [], []>} : vector<256x8xbf16>, vector<8x512xbf16>, vector<256x512xf32> -> vector<256x512xf32>
    %314 = vector.broadcast %28 : vector<128x1xi32> to vector<128x512xi32>
    %315 = vector.broadcast %305 : vector<1x512xi32> to vector<128x512xi32>
    %316 = arith.cmpi eq, %314, %315 : vector<128x512xi32>
    %cst_73 = arith.constant 0.000000e+00 : f32
    %317 = vector.shape_cast %283 : vector<1x512xf32> to vector<1x512xf32>
    %318 = vector.broadcast %317 : vector<1x512xf32> to vector<128x512xf32>
    %319 = vector.broadcast %cst_73 : f32 to vector<128x512xf32>
    %320 = arith.select %316, %318, %319 : vector<128x512xi1>, vector<128x512xf32>
    %321 = vector.extract_strided_slice %313 {offsets = [0, 0], sizes = [128, 512], strides = [1, 1]} : vector<256x512xf32> to vector<128x512xf32>
    %322 = arith.mulf %321, %320 : vector<128x512xf32>
    %cst_74 = arith.constant dense<0.000000e+00> : vector<512xf32>
    %323 = vector.multi_reduction <add>, %322, %cst_74 [0] : vector<128x512xf32> to vector<512xf32>
    %324 = vector.shape_cast %323 : vector<512xf32> to vector<1x512xf32>
    %325 = arith.addf %250, %324 : vector<1x512xf32>
    %326 = vector.extract_strided_slice %313 {offsets = [128, 0], sizes = [128, 512], strides = [1, 1]} : vector<256x512xf32> to vector<128x512xf32>
    %327 = arith.mulf %326, %320 : vector<128x512xf32>
    %cst_75 = arith.constant dense<0.000000e+00> : vector<512xf32>
    %328 = vector.multi_reduction <add>, %327, %cst_75 [0] : vector<128x512xf32> to vector<512xf32>
    %329 = vector.shape_cast %328 : vector<512xf32> to vector<1x512xf32>
    %330 = arith.addf %255, %329 : vector<1x512xf32>
    %c0_i32_76 = arith.constant 0 : i32
    %331 = vector.broadcast %c0_i32_76 : i32 to vector<1x512xi32>
    %c0_i32_77 = arith.constant 0 : i32
    %332 = vector.broadcast %c0_i32_77 : i32 to vector<1x512xi32>
    %333 = vector.extract_strided_slice %24 {offsets = [0, 0], sizes = [1, 512], strides = [1, 1]} : vector<3x512xi32> to vector<1x512xi32>
    %c0_i32_78 = arith.constant 0 : i32
    %334 = vector.broadcast %c0_i32_78 : i32 to vector<1x512xi32>
    %335 = arith.addi %333, %334 : vector<1x512xi32>
    %336 = vector.extract_strided_slice %23 {offsets = [0, 0], sizes = [1, 512], strides = [1, 1]} : vector<3x512xf32> to vector<1x512xf32>
    %337 = vector.broadcast %8 : i32 to vector<1x512xi32>
    %338 = arith.muli %335, %337 : vector<1x512xi32>
    %339 = arith.addi %331, %338 : vector<1x512xi32>
    %c1_i32_79 = arith.constant 1 : i32
    %340 = vector.broadcast %c1_i32_79 : i32 to vector<1x512xi32>
    %341 = arith.muli %335, %340 : vector<1x512xi32>
    %342 = arith.xori %332, %341 : vector<1x512xi32>
    %343 = vector.extract_strided_slice %24 {offsets = [1, 0], sizes = [1, 512], strides = [1, 1]} : vector<3x512xi32> to vector<1x512xi32>
    %c0_i32_80 = arith.constant 0 : i32
    %344 = vector.broadcast %c0_i32_80 : i32 to vector<1x512xi32>
    %345 = arith.addi %343, %344 : vector<1x512xi32>
    %346 = vector.extract_strided_slice %23 {offsets = [1, 0], sizes = [1, 512], strides = [1, 1]} : vector<3x512xf32> to vector<1x512xf32>
    %347 = arith.mulf %336, %346 : vector<1x512xf32>
    %348 = vector.broadcast %10 : i32 to vector<1x512xi32>
    %349 = arith.muli %345, %348 : vector<1x512xi32>
    %350 = arith.addi %339, %349 : vector<1x512xi32>
    %c-1640531535_i32_81 = arith.constant -1640531535 : i32
    %351 = vector.broadcast %c-1640531535_i32_81 : i32 to vector<1x512xi32>
    %352 = arith.muli %345, %351 : vector<1x512xi32>
    %353 = arith.xori %342, %352 : vector<1x512xi32>
    %354 = vector.extract_strided_slice %24 {offsets = [2, 0], sizes = [1, 512], strides = [1, 1]} : vector<3x512xi32> to vector<1x512xi32>
    %c1_i32_82 = arith.constant 1 : i32
    %355 = vector.broadcast %c1_i32_82 : i32 to vector<1x512xi32>
    %356 = arith.addi %354, %355 : vector<1x512xi32>
    %357 = vector.extract_strided_slice %21 {offsets = [2, 0], sizes = [1, 512], strides = [1, 1]} : vector<3x512xf32> to vector<1x512xf32>
    %358 = arith.mulf %347, %357 : vector<1x512xf32>
    %359 = vector.broadcast %12 : i32 to vector<1x512xi32>
    %360 = arith.muli %356, %359 : vector<1x512xi32>
    %361 = arith.addi %350, %360 : vector<1x512xi32>
    %c805459861_i32_83 = arith.constant 805459861 : i32
    %362 = vector.broadcast %c805459861_i32_83 : i32 to vector<1x512xi32>
    %363 = arith.muli %356, %362 : vector<1x512xi32>
    %364 = arith.xori %353, %363 : vector<1x512xi32>
    %365 = vector.broadcast %4 : i32 to vector<1x512xi32>
    %366 = arith.andi %364, %365 : vector<1x512xi32>
    %367 = vector.broadcast %3 : i32 to vector<1x512xi32>
    %368 = arith.muli %367, %361 : vector<1x512xi32>
    %c1_i32_84 = arith.constant 1 : i32
    %369 = arith.subi %c1_i32_84, %3 : i32
    %370 = vector.broadcast %369 : i32 to vector<1x512xi32>
    %371 = arith.muli %370, %366 : vector<1x512xi32>
    %372 = arith.addi %368, %371 : vector<1x512xi32>
    %c0_i32_85 = arith.constant 0 : i32
    %373 = vector.broadcast %c0_i32_85 : i32 to vector<1x512xi32>
    %374 = arith.maxsi %373, %372 : vector<1x512xi32>
    %375 = vector.broadcast %4 : i32 to vector<1x512xi32>
    %376 = arith.minsi %375, %374 : vector<1x512xi32>
    %c7_i32_86 = arith.constant 7 : i32
    %377 = vector.broadcast %c7_i32_86 : i32 to vector<1x512xi32>
    %378 = arith.shrui %376, %377 : vector<1x512xi32>
    %c127_i32_87 = arith.constant 127 : i32
    %379 = vector.broadcast %c127_i32_87 : i32 to vector<1x512xi32>
    %380 = arith.andi %376, %379 : vector<1x512xi32>
    %381 = vector.broadcast %27 : vector<8x1xi32> to vector<8x512xi32>
    %382 = vector.broadcast %378 : vector<1x512xi32> to vector<8x512xi32>
    %383 = arith.cmpi eq, %381, %382 : vector<8x512xi32>
    %cst_88 = arith.constant 1.000000e+00 : f32
    %cst_89 = arith.constant 0.000000e+00 : f32
    %384 = vector.broadcast %cst_88 : f32 to vector<8x512xf32>
    %385 = vector.broadcast %cst_89 : f32 to vector<8x512xf32>
    %386 = arith.select %383, %384, %385 : vector<8x512xi1>, vector<8x512xf32>
    %387 = arith.truncf %386 : vector<8x512xf32> to vector<8x512xbf16>
    %cst_90 = arith.constant dense<0.000000e+00> : vector<256x512xf32>
    %388 = tpu.matmul %26, %387, %cst_90 {dimension_numbers = #tpu.dot_dimension_numbers<[1], [0], [0], [1], [0, 0, 1, 1], [], []>} : vector<256x8xbf16>, vector<8x512xbf16>, vector<256x512xf32> -> vector<256x512xf32>
    %389 = vector.broadcast %28 : vector<128x1xi32> to vector<128x512xi32>
    %390 = vector.broadcast %380 : vector<1x512xi32> to vector<128x512xi32>
    %391 = arith.cmpi eq, %389, %390 : vector<128x512xi32>
    %cst_91 = arith.constant 0.000000e+00 : f32
    %392 = vector.shape_cast %358 : vector<1x512xf32> to vector<1x512xf32>
    %393 = vector.broadcast %392 : vector<1x512xf32> to vector<128x512xf32>
    %394 = vector.broadcast %cst_91 : f32 to vector<128x512xf32>
    %395 = arith.select %391, %393, %394 : vector<128x512xi1>, vector<128x512xf32>
    %396 = vector.extract_strided_slice %388 {offsets = [0, 0], sizes = [128, 512], strides = [1, 1]} : vector<256x512xf32> to vector<128x512xf32>
    %397 = arith.mulf %396, %395 : vector<128x512xf32>
    %cst_92 = arith.constant dense<0.000000e+00> : vector<512xf32>
    %398 = vector.multi_reduction <add>, %397, %cst_92 [0] : vector<128x512xf32> to vector<512xf32>
    %399 = vector.shape_cast %398 : vector<512xf32> to vector<1x512xf32>
    %400 = arith.addf %325, %399 : vector<1x512xf32>
    %401 = vector.extract_strided_slice %388 {offsets = [128, 0], sizes = [128, 512], strides = [1, 1]} : vector<256x512xf32> to vector<128x512xf32>
    %402 = arith.mulf %401, %395 : vector<128x512xf32>
    %cst_93 = arith.constant dense<0.000000e+00> : vector<512xf32>
    %403 = vector.multi_reduction <add>, %402, %cst_93 [0] : vector<128x512xf32> to vector<512xf32>
    %404 = vector.shape_cast %403 : vector<512xf32> to vector<1x512xf32>
    %405 = arith.addf %330, %404 : vector<1x512xf32>
    %c0_i32_94 = arith.constant 0 : i32
    %406 = vector.broadcast %c0_i32_94 : i32 to vector<1x512xi32>
    %c0_i32_95 = arith.constant 0 : i32
    %407 = vector.broadcast %c0_i32_95 : i32 to vector<1x512xi32>
    %408 = vector.extract_strided_slice %24 {offsets = [0, 0], sizes = [1, 512], strides = [1, 1]} : vector<3x512xi32> to vector<1x512xi32>
    %c1_i32_96 = arith.constant 1 : i32
    %409 = vector.broadcast %c1_i32_96 : i32 to vector<1x512xi32>
    %410 = arith.addi %408, %409 : vector<1x512xi32>
    %411 = vector.extract_strided_slice %21 {offsets = [0, 0], sizes = [1, 512], strides = [1, 1]} : vector<3x512xf32> to vector<1x512xf32>
    %412 = vector.broadcast %8 : i32 to vector<1x512xi32>
    %413 = arith.muli %410, %412 : vector<1x512xi32>
    %414 = arith.addi %406, %413 : vector<1x512xi32>
    %c1_i32_97 = arith.constant 1 : i32
    %415 = vector.broadcast %c1_i32_97 : i32 to vector<1x512xi32>
    %416 = arith.muli %410, %415 : vector<1x512xi32>
    %417 = arith.xori %407, %416 : vector<1x512xi32>
    %418 = vector.extract_strided_slice %24 {offsets = [1, 0], sizes = [1, 512], strides = [1, 1]} : vector<3x512xi32> to vector<1x512xi32>
    %c0_i32_98 = arith.constant 0 : i32
    %419 = vector.broadcast %c0_i32_98 : i32 to vector<1x512xi32>
    %420 = arith.addi %418, %419 : vector<1x512xi32>
    %421 = vector.extract_strided_slice %23 {offsets = [1, 0], sizes = [1, 512], strides = [1, 1]} : vector<3x512xf32> to vector<1x512xf32>
    %422 = arith.mulf %411, %421 : vector<1x512xf32>
    %423 = vector.broadcast %10 : i32 to vector<1x512xi32>
    %424 = arith.muli %420, %423 : vector<1x512xi32>
    %425 = arith.addi %414, %424 : vector<1x512xi32>
    %c-1640531535_i32_99 = arith.constant -1640531535 : i32
    %426 = vector.broadcast %c-1640531535_i32_99 : i32 to vector<1x512xi32>
    %427 = arith.muli %420, %426 : vector<1x512xi32>
    %428 = arith.xori %417, %427 : vector<1x512xi32>
    %429 = vector.extract_strided_slice %24 {offsets = [2, 0], sizes = [1, 512], strides = [1, 1]} : vector<3x512xi32> to vector<1x512xi32>
    %c1_i32_100 = arith.constant 1 : i32
    %430 = vector.broadcast %c1_i32_100 : i32 to vector<1x512xi32>
    %431 = arith.addi %429, %430 : vector<1x512xi32>
    %432 = vector.extract_strided_slice %21 {offsets = [2, 0], sizes = [1, 512], strides = [1, 1]} : vector<3x512xf32> to vector<1x512xf32>
    %433 = arith.mulf %422, %432 : vector<1x512xf32>
    %434 = vector.broadcast %12 : i32 to vector<1x512xi32>
    %435 = arith.muli %431, %434 : vector<1x512xi32>
    %436 = arith.addi %425, %435 : vector<1x512xi32>
    %c805459861_i32_101 = arith.constant 805459861 : i32
    %437 = vector.broadcast %c805459861_i32_101 : i32 to vector<1x512xi32>
    %438 = arith.muli %431, %437 : vector<1x512xi32>
    %439 = arith.xori %428, %438 : vector<1x512xi32>
    %440 = vector.broadcast %4 : i32 to vector<1x512xi32>
    %441 = arith.andi %439, %440 : vector<1x512xi32>
    %442 = vector.broadcast %3 : i32 to vector<1x512xi32>
    %443 = arith.muli %442, %436 : vector<1x512xi32>
    %c1_i32_102 = arith.constant 1 : i32
    %444 = arith.subi %c1_i32_102, %3 : i32
    %445 = vector.broadcast %444 : i32 to vector<1x512xi32>
    %446 = arith.muli %445, %441 : vector<1x512xi32>
    %447 = arith.addi %443, %446 : vector<1x512xi32>
    %c0_i32_103 = arith.constant 0 : i32
    %448 = vector.broadcast %c0_i32_103 : i32 to vector<1x512xi32>
    %449 = arith.maxsi %448, %447 : vector<1x512xi32>
    %450 = vector.broadcast %4 : i32 to vector<1x512xi32>
    %451 = arith.minsi %450, %449 : vector<1x512xi32>
    %c7_i32_104 = arith.constant 7 : i32
    %452 = vector.broadcast %c7_i32_104 : i32 to vector<1x512xi32>
    %453 = arith.shrui %451, %452 : vector<1x512xi32>
    %c127_i32_105 = arith.constant 127 : i32
    %454 = vector.broadcast %c127_i32_105 : i32 to vector<1x512xi32>
    %455 = arith.andi %451, %454 : vector<1x512xi32>
    %456 = vector.broadcast %27 : vector<8x1xi32> to vector<8x512xi32>
    %457 = vector.broadcast %453 : vector<1x512xi32> to vector<8x512xi32>
    %458 = arith.cmpi eq, %456, %457 : vector<8x512xi32>
    %cst_106 = arith.constant 1.000000e+00 : f32
    %cst_107 = arith.constant 0.000000e+00 : f32
    %459 = vector.broadcast %cst_106 : f32 to vector<8x512xf32>
    %460 = vector.broadcast %cst_107 : f32 to vector<8x512xf32>
    %461 = arith.select %458, %459, %460 : vector<8x512xi1>, vector<8x512xf32>
    %462 = arith.truncf %461 : vector<8x512xf32> to vector<8x512xbf16>
    %cst_108 = arith.constant dense<0.000000e+00> : vector<256x512xf32>
    %463 = tpu.matmul %26, %462, %cst_108 {dimension_numbers = #tpu.dot_dimension_numbers<[1], [0], [0], [1], [0, 0, 1, 1], [], []>} : vector<256x8xbf16>, vector<8x512xbf16>, vector<256x512xf32> -> vector<256x512xf32>
    %464 = vector.broadcast %28 : vector<128x1xi32> to vector<128x512xi32>
    %465 = vector.broadcast %455 : vector<1x512xi32> to vector<128x512xi32>
    %466 = arith.cmpi eq, %464, %465 : vector<128x512xi32>
    %cst_109 = arith.constant 0.000000e+00 : f32
    %467 = vector.shape_cast %433 : vector<1x512xf32> to vector<1x512xf32>
    %468 = vector.broadcast %467 : vector<1x512xf32> to vector<128x512xf32>
    %469 = vector.broadcast %cst_109 : f32 to vector<128x512xf32>
    %470 = arith.select %466, %468, %469 : vector<128x512xi1>, vector<128x512xf32>
    %471 = vector.extract_strided_slice %463 {offsets = [0, 0], sizes = [128, 512], strides = [1, 1]} : vector<256x512xf32> to vector<128x512xf32>
    %472 = arith.mulf %471, %470 : vector<128x512xf32>
    %cst_110 = arith.constant dense<0.000000e+00> : vector<512xf32>
    %473 = vector.multi_reduction <add>, %472, %cst_110 [0] : vector<128x512xf32> to vector<512xf32>
    %474 = vector.shape_cast %473 : vector<512xf32> to vector<1x512xf32>
    %475 = arith.addf %400, %474 : vector<1x512xf32>
    %476 = vector.extract_strided_slice %463 {offsets = [128, 0], sizes = [128, 512], strides = [1, 1]} : vector<256x512xf32> to vector<128x512xf32>
    %477 = arith.mulf %476, %470 : vector<128x512xf32>
    %cst_111 = arith.constant dense<0.000000e+00> : vector<512xf32>
    %478 = vector.multi_reduction <add>, %477, %cst_111 [0] : vector<128x512xf32> to vector<512xf32>
    %479 = vector.shape_cast %478 : vector<512xf32> to vector<1x512xf32>
    %480 = arith.addf %405, %479 : vector<1x512xf32>
    %c0_i32_112 = arith.constant 0 : i32
    %481 = vector.broadcast %c0_i32_112 : i32 to vector<1x512xi32>
    %c0_i32_113 = arith.constant 0 : i32
    %482 = vector.broadcast %c0_i32_113 : i32 to vector<1x512xi32>
    %483 = vector.extract_strided_slice %24 {offsets = [0, 0], sizes = [1, 512], strides = [1, 1]} : vector<3x512xi32> to vector<1x512xi32>
    %c0_i32_114 = arith.constant 0 : i32
    %484 = vector.broadcast %c0_i32_114 : i32 to vector<1x512xi32>
    %485 = arith.addi %483, %484 : vector<1x512xi32>
    %486 = vector.extract_strided_slice %23 {offsets = [0, 0], sizes = [1, 512], strides = [1, 1]} : vector<3x512xf32> to vector<1x512xf32>
    %487 = vector.broadcast %8 : i32 to vector<1x512xi32>
    %488 = arith.muli %485, %487 : vector<1x512xi32>
    %489 = arith.addi %481, %488 : vector<1x512xi32>
    %c1_i32_115 = arith.constant 1 : i32
    %490 = vector.broadcast %c1_i32_115 : i32 to vector<1x512xi32>
    %491 = arith.muli %485, %490 : vector<1x512xi32>
    %492 = arith.xori %482, %491 : vector<1x512xi32>
    %493 = vector.extract_strided_slice %24 {offsets = [1, 0], sizes = [1, 512], strides = [1, 1]} : vector<3x512xi32> to vector<1x512xi32>
    %c1_i32_116 = arith.constant 1 : i32
    %494 = vector.broadcast %c1_i32_116 : i32 to vector<1x512xi32>
    %495 = arith.addi %493, %494 : vector<1x512xi32>
    %496 = vector.extract_strided_slice %21 {offsets = [1, 0], sizes = [1, 512], strides = [1, 1]} : vector<3x512xf32> to vector<1x512xf32>
    %497 = arith.mulf %486, %496 : vector<1x512xf32>
    %498 = vector.broadcast %10 : i32 to vector<1x512xi32>
    %499 = arith.muli %495, %498 : vector<1x512xi32>
    %500 = arith.addi %489, %499 : vector<1x512xi32>
    %c-1640531535_i32_117 = arith.constant -1640531535 : i32
    %501 = vector.broadcast %c-1640531535_i32_117 : i32 to vector<1x512xi32>
    %502 = arith.muli %495, %501 : vector<1x512xi32>
    %503 = arith.xori %492, %502 : vector<1x512xi32>
    %504 = vector.extract_strided_slice %24 {offsets = [2, 0], sizes = [1, 512], strides = [1, 1]} : vector<3x512xi32> to vector<1x512xi32>
    %c1_i32_118 = arith.constant 1 : i32
    %505 = vector.broadcast %c1_i32_118 : i32 to vector<1x512xi32>
    %506 = arith.addi %504, %505 : vector<1x512xi32>
    %507 = vector.extract_strided_slice %21 {offsets = [2, 0], sizes = [1, 512], strides = [1, 1]} : vector<3x512xf32> to vector<1x512xf32>
    %508 = arith.mulf %497, %507 : vector<1x512xf32>
    %509 = vector.broadcast %12 : i32 to vector<1x512xi32>
    %510 = arith.muli %506, %509 : vector<1x512xi32>
    %511 = arith.addi %500, %510 : vector<1x512xi32>
    %c805459861_i32_119 = arith.constant 805459861 : i32
    %512 = vector.broadcast %c805459861_i32_119 : i32 to vector<1x512xi32>
    %513 = arith.muli %506, %512 : vector<1x512xi32>
    %514 = arith.xori %503, %513 : vector<1x512xi32>
    %515 = vector.broadcast %4 : i32 to vector<1x512xi32>
    %516 = arith.andi %514, %515 : vector<1x512xi32>
    %517 = vector.broadcast %3 : i32 to vector<1x512xi32>
    %518 = arith.muli %517, %511 : vector<1x512xi32>
    %c1_i32_120 = arith.constant 1 : i32
    %519 = arith.subi %c1_i32_120, %3 : i32
    %520 = vector.broadcast %519 : i32 to vector<1x512xi32>
    %521 = arith.muli %520, %516 : vector<1x512xi32>
    %522 = arith.addi %518, %521 : vector<1x512xi32>
    %c0_i32_121 = arith.constant 0 : i32
    %523 = vector.broadcast %c0_i32_121 : i32 to vector<1x512xi32>
    %524 = arith.maxsi %523, %522 : vector<1x512xi32>
    %525 = vector.broadcast %4 : i32 to vector<1x512xi32>
    %526 = arith.minsi %525, %524 : vector<1x512xi32>
    %c7_i32_122 = arith.constant 7 : i32
    %527 = vector.broadcast %c7_i32_122 : i32 to vector<1x512xi32>
    %528 = arith.shrui %526, %527 : vector<1x512xi32>
    %c127_i32_123 = arith.constant 127 : i32
    %529 = vector.broadcast %c127_i32_123 : i32 to vector<1x512xi32>
    %530 = arith.andi %526, %529 : vector<1x512xi32>
    %531 = vector.broadcast %27 : vector<8x1xi32> to vector<8x512xi32>
    %532 = vector.broadcast %528 : vector<1x512xi32> to vector<8x512xi32>
    %533 = arith.cmpi eq, %531, %532 : vector<8x512xi32>
    %cst_124 = arith.constant 1.000000e+00 : f32
    %cst_125 = arith.constant 0.000000e+00 : f32
    %534 = vector.broadcast %cst_124 : f32 to vector<8x512xf32>
    %535 = vector.broadcast %cst_125 : f32 to vector<8x512xf32>
    %536 = arith.select %533, %534, %535 : vector<8x512xi1>, vector<8x512xf32>
    %537 = arith.truncf %536 : vector<8x512xf32> to vector<8x512xbf16>
    %cst_126 = arith.constant dense<0.000000e+00> : vector<256x512xf32>
    %538 = tpu.matmul %26, %537, %cst_126 {dimension_numbers = #tpu.dot_dimension_numbers<[1], [0], [0], [1], [0, 0, 1, 1], [], []>} : vector<256x8xbf16>, vector<8x512xbf16>, vector<256x512xf32> -> vector<256x512xf32>
    %539 = vector.broadcast %28 : vector<128x1xi32> to vector<128x512xi32>
    %540 = vector.broadcast %530 : vector<1x512xi32> to vector<128x512xi32>
    %541 = arith.cmpi eq, %539, %540 : vector<128x512xi32>
    %cst_127 = arith.constant 0.000000e+00 : f32
    %542 = vector.shape_cast %508 : vector<1x512xf32> to vector<1x512xf32>
    %543 = vector.broadcast %542 : vector<1x512xf32> to vector<128x512xf32>
    %544 = vector.broadcast %cst_127 : f32 to vector<128x512xf32>
    %545 = arith.select %541, %543, %544 : vector<128x512xi1>, vector<128x512xf32>
    %546 = vector.extract_strided_slice %538 {offsets = [0, 0], sizes = [128, 512], strides = [1, 1]} : vector<256x512xf32> to vector<128x512xf32>
    %547 = arith.mulf %546, %545 : vector<128x512xf32>
    %cst_128 = arith.constant dense<0.000000e+00> : vector<512xf32>
    %548 = vector.multi_reduction <add>, %547, %cst_128 [0] : vector<128x512xf32> to vector<512xf32>
    %549 = vector.shape_cast %548 : vector<512xf32> to vector<1x512xf32>
    %550 = arith.addf %475, %549 : vector<1x512xf32>
    %551 = vector.extract_strided_slice %538 {offsets = [128, 0], sizes = [128, 512], strides = [1, 1]} : vector<256x512xf32> to vector<128x512xf32>
    %552 = arith.mulf %551, %545 : vector<128x512xf32>
    %cst_129 = arith.constant dense<0.000000e+00> : vector<512xf32>
    %553 = vector.multi_reduction <add>, %552, %cst_129 [0] : vector<128x512xf32> to vector<512xf32>
    %554 = vector.shape_cast %553 : vector<512xf32> to vector<1x512xf32>
    %555 = arith.addf %480, %554 : vector<1x512xf32>
    %c0_i32_130 = arith.constant 0 : i32
    %556 = vector.broadcast %c0_i32_130 : i32 to vector<1x512xi32>
    %c0_i32_131 = arith.constant 0 : i32
    %557 = vector.broadcast %c0_i32_131 : i32 to vector<1x512xi32>
    %558 = vector.extract_strided_slice %24 {offsets = [0, 0], sizes = [1, 512], strides = [1, 1]} : vector<3x512xi32> to vector<1x512xi32>
    %c1_i32_132 = arith.constant 1 : i32
    %559 = vector.broadcast %c1_i32_132 : i32 to vector<1x512xi32>
    %560 = arith.addi %558, %559 : vector<1x512xi32>
    %561 = vector.extract_strided_slice %21 {offsets = [0, 0], sizes = [1, 512], strides = [1, 1]} : vector<3x512xf32> to vector<1x512xf32>
    %562 = vector.broadcast %8 : i32 to vector<1x512xi32>
    %563 = arith.muli %560, %562 : vector<1x512xi32>
    %564 = arith.addi %556, %563 : vector<1x512xi32>
    %c1_i32_133 = arith.constant 1 : i32
    %565 = vector.broadcast %c1_i32_133 : i32 to vector<1x512xi32>
    %566 = arith.muli %560, %565 : vector<1x512xi32>
    %567 = arith.xori %557, %566 : vector<1x512xi32>
    %568 = vector.extract_strided_slice %24 {offsets = [1, 0], sizes = [1, 512], strides = [1, 1]} : vector<3x512xi32> to vector<1x512xi32>
    %c1_i32_134 = arith.constant 1 : i32
    %569 = vector.broadcast %c1_i32_134 : i32 to vector<1x512xi32>
    %570 = arith.addi %568, %569 : vector<1x512xi32>
    %571 = vector.extract_strided_slice %21 {offsets = [1, 0], sizes = [1, 512], strides = [1, 1]} : vector<3x512xf32> to vector<1x512xf32>
    %572 = arith.mulf %561, %571 : vector<1x512xf32>
    %573 = vector.broadcast %10 : i32 to vector<1x512xi32>
    %574 = arith.muli %570, %573 : vector<1x512xi32>
    %575 = arith.addi %564, %574 : vector<1x512xi32>
    %c-1640531535_i32_135 = arith.constant -1640531535 : i32
    %576 = vector.broadcast %c-1640531535_i32_135 : i32 to vector<1x512xi32>
    %577 = arith.muli %570, %576 : vector<1x512xi32>
    %578 = arith.xori %567, %577 : vector<1x512xi32>
    %579 = vector.extract_strided_slice %24 {offsets = [2, 0], sizes = [1, 512], strides = [1, 1]} : vector<3x512xi32> to vector<1x512xi32>
    %c1_i32_136 = arith.constant 1 : i32
    %580 = vector.broadcast %c1_i32_136 : i32 to vector<1x512xi32>
    %581 = arith.addi %579, %580 : vector<1x512xi32>
    %582 = vector.extract_strided_slice %21 {offsets = [2, 0], sizes = [1, 512], strides = [1, 1]} : vector<3x512xf32> to vector<1x512xf32>
    %583 = arith.mulf %572, %582 : vector<1x512xf32>
    %584 = vector.broadcast %12 : i32 to vector<1x512xi32>
    %585 = arith.muli %581, %584 : vector<1x512xi32>
    %586 = arith.addi %575, %585 : vector<1x512xi32>
    %c805459861_i32_137 = arith.constant 805459861 : i32
    %587 = vector.broadcast %c805459861_i32_137 : i32 to vector<1x512xi32>
    %588 = arith.muli %581, %587 : vector<1x512xi32>
    %589 = arith.xori %578, %588 : vector<1x512xi32>
    %590 = vector.broadcast %4 : i32 to vector<1x512xi32>
    %591 = arith.andi %589, %590 : vector<1x512xi32>
    %592 = vector.broadcast %3 : i32 to vector<1x512xi32>
    %593 = arith.muli %592, %586 : vector<1x512xi32>
    %c1_i32_138 = arith.constant 1 : i32
    %594 = arith.subi %c1_i32_138, %3 : i32
    %595 = vector.broadcast %594 : i32 to vector<1x512xi32>
    %596 = arith.muli %595, %591 : vector<1x512xi32>
    %597 = arith.addi %593, %596 : vector<1x512xi32>
    %c0_i32_139 = arith.constant 0 : i32
    %598 = vector.broadcast %c0_i32_139 : i32 to vector<1x512xi32>
    %599 = arith.maxsi %598, %597 : vector<1x512xi32>
    %600 = vector.broadcast %4 : i32 to vector<1x512xi32>
    %601 = arith.minsi %600, %599 : vector<1x512xi32>
    %c7_i32_140 = arith.constant 7 : i32
    %602 = vector.broadcast %c7_i32_140 : i32 to vector<1x512xi32>
    %603 = arith.shrui %601, %602 : vector<1x512xi32>
    %c127_i32_141 = arith.constant 127 : i32
    %604 = vector.broadcast %c127_i32_141 : i32 to vector<1x512xi32>
    %605 = arith.andi %601, %604 : vector<1x512xi32>
    %606 = vector.broadcast %27 : vector<8x1xi32> to vector<8x512xi32>
    %607 = vector.broadcast %603 : vector<1x512xi32> to vector<8x512xi32>
    %608 = arith.cmpi eq, %606, %607 : vector<8x512xi32>
    %cst_142 = arith.constant 1.000000e+00 : f32
    %cst_143 = arith.constant 0.000000e+00 : f32
    %609 = vector.broadcast %cst_142 : f32 to vector<8x512xf32>
    %610 = vector.broadcast %cst_143 : f32 to vector<8x512xf32>
    %611 = arith.select %608, %609, %610 : vector<8x512xi1>, vector<8x512xf32>
    %612 = arith.truncf %611 : vector<8x512xf32> to vector<8x512xbf16>
    %cst_144 = arith.constant dense<0.000000e+00> : vector<256x512xf32>
    %613 = tpu.matmul %26, %612, %cst_144 {dimension_numbers = #tpu.dot_dimension_numbers<[1], [0], [0], [1], [0, 0, 1, 1], [], []>} : vector<256x8xbf16>, vector<8x512xbf16>, vector<256x512xf32> -> vector<256x512xf32>
    %614 = vector.broadcast %28 : vector<128x1xi32> to vector<128x512xi32>
    %615 = vector.broadcast %605 : vector<1x512xi32> to vector<128x512xi32>
    %616 = arith.cmpi eq, %614, %615 : vector<128x512xi32>
    %cst_145 = arith.constant 0.000000e+00 : f32
    %617 = vector.shape_cast %583 : vector<1x512xf32> to vector<1x512xf32>
    %618 = vector.broadcast %617 : vector<1x512xf32> to vector<128x512xf32>
    %619 = vector.broadcast %cst_145 : f32 to vector<128x512xf32>
    %620 = arith.select %616, %618, %619 : vector<128x512xi1>, vector<128x512xf32>
    %621 = vector.extract_strided_slice %613 {offsets = [0, 0], sizes = [128, 512], strides = [1, 1]} : vector<256x512xf32> to vector<128x512xf32>
    %622 = arith.mulf %621, %620 : vector<128x512xf32>
    %cst_146 = arith.constant dense<0.000000e+00> : vector<512xf32>
    %623 = vector.multi_reduction <add>, %622, %cst_146 [0] : vector<128x512xf32> to vector<512xf32>
    %624 = vector.shape_cast %623 : vector<512xf32> to vector<1x512xf32>
    %625 = arith.addf %550, %624 : vector<1x512xf32>
    %626 = vector.extract_strided_slice %613 {offsets = [128, 0], sizes = [128, 512], strides = [1, 1]} : vector<256x512xf32> to vector<128x512xf32>
    %627 = arith.mulf %626, %620 : vector<128x512xf32>
    %cst_147 = arith.constant dense<0.000000e+00> : vector<512xf32>
    %628 = vector.multi_reduction <add>, %627, %cst_147 [0] : vector<128x512xf32> to vector<512xf32>
    %629 = vector.shape_cast %628 : vector<512xf32> to vector<1x512xf32>
    %630 = arith.addf %555, %629 : vector<1x512xf32>
    %631 = tpu.concatenate %625, %630 in 0 : vector<1x512xf32>, vector<1x512xf32> -> vector<2x512xf32>
    %c0_148 = arith.constant 0 : index
    %c0_149 = arith.constant 0 : index
    %c0_150 = arith.constant 0 : index
    %632 = vector.load %arg6[%c0_148, %c0_149, %c0_150] : memref<1x2x512xf32, #tpu.memory_space<vmem>>, vector<1x2x512xf32>
    %633 = vector.shape_cast %632 : vector<1x2x512xf32> to vector<2x512xf32>
    %634 = vector.shape_cast %631 : vector<2x512xf32> to vector<1x2x512xf32>
    tpu.vector_store %arg6[%c0_148, %c0_149, %c0_150], %634 {strides = array<i32>} : memref<1x2x512xf32, #tpu.memory_space<vmem>>, vector<1x2x512xf32>,
    return
  }
  func.func @transform_0(%arg0: i32, %arg1: i32, %arg2: memref<4x5xi32, #tpu.memory_space<smem>>, %arg3: memref<4xf32, #tpu.memory_space<smem>>) -> (i32, i32) {
    %c0_i32 = arith.constant 0 : i32
    %c0_i32_0 = arith.constant 0 : i32
    return %c0_i32, %arg1 : i32, i32
  }
  func.func @transform_1(%arg0: i32, %arg1: i32, %arg2: memref<4x5xi32, #tpu.memory_space<smem>>, %arg3: memref<4xf32, #tpu.memory_space<smem>>) -> (i32, i32, i32) {
    %c0_i32 = arith.constant 0 : i32
    %c0_i32_0 = arith.constant 0 : i32
    %c0_i32_1 = arith.constant 0 : i32
    return %arg0, %c0_i32, %c0_i32_0 : i32, i32, i32
  }
  func.func @transform_2(%arg0: i32, %arg1: i32, %arg2: memref<4x5xi32, #tpu.memory_space<smem>>, %arg3: memref<4xf32, #tpu.memory_space<smem>>) -> (i32, i32, i32) {
    %c0_i32 = arith.constant 0 : i32
    %c0_i32_0 = arith.constant 0 : i32
    return %arg0, %c0_i32, %arg1 : i32, i32, i32
  }
}

</mosaic_0001>

<llo_original>
// kernel: tpu_custom_call.1
$region0: #{tpu_custom_call.1}
  #allocation0 [shape = 'u32[]', space=smem, size = 0x4, offset = 0x4, fixed_abs, tag = 'smem constant byte address 0x4 - core index']
  #allocation1 [shape = 'u32[144,128]{1,0:T(1,128)}', space=vmem, size = 0x12000, scoped, tag = 'internal scratch']
  #allocation2 [shape = 's32[1]{0}', space=sflag, size = 0x4, scoped, tag = 'scoped memory for tpu_custom_call.1']
  #allocation3 [shape = 'u8[2048]{0}', space=smem, size = 0x800, scoped, tag = 'prefetched SMEM operand 0']
  #allocation4 [shape = 'u8[512]{0}', space=smem, size = 0x200, scoped, tag = 'prefetched SMEM operand 1']
  %s0 = inlined_call_operand.vmem [shape: s32[4,5], index: 0, kind: input, shape index: {}]
  %s1 = inlined_call_operand.vmem [shape: f32[4], index: 1, kind: input, shape index: {}]
  %s2 = inlined_call_operand.vmem [shape: f32[3,512], index: 2, kind: input, shape index: {}]
  %s3 = inlined_call_operand.vmem [shape: bf16[4,256,8], index: 3, kind: input, shape index: {}]
  %s4 = inlined_call_operand.hbm [shape: f32[4,2,512], index: 4, kind: output, shape index: {}]
  %s5 = sld [smem:[#allocation0]]
  $region41: #{tpu_custom_call.1} parent=0
    _
  %s7 = ssub.s32 1, %s5
  %s8 = scalar_select 0, %s7, %s5
  %s9 = sshll.u32 %s0, 4
  %s10 = int_to_ptr.vmem [resolvable:$true] %s9
  %12 = dma.vmem_to_smem %s10, 64, [#allocation3], [#allocation2]
  %s13 = sshll.u32 %s1, 4
  %s14 = int_to_ptr.vmem [resolvable:$true] %s13
  %16 = dma.vmem_to_smem %s14, 16, [#allocation4], [#allocation2]
  %17 = dma.done [#allocation2], 80
  %18 = sfence
  $region1: #{tpu_custom_call.1} parent=0
    #allocation5 [shape = 'u8[8192]{0}', space=vmem, size = 0x2000, scoped, tag = 'output window, operand 0']
    #allocation6 [shape = 's32[2]{0}', space=sflag, size = 0x8, scoped, tag = 'scoped memory for tpu_custom_call.1']
    %19 = vsyncpa [#allocation6], 0
    %s20 = scalar_lea.sflag [#allocation6], 1
    %21 = vsyncpa %s20, 0
    loop: start=0, step=1, limit=6
    $region2: #{tpu_custom_call.1} parent=1 // loop_pre_header
      _
    $region3: #{tpu_custom_call.1} parent=1 // loop_header
      %s23 = sphi 0, %s27
      %p24 = scmp.ge.s32.totalorder %s23, 6
      %s30 = sphi 0, %s42
      %s31 = sphi 0, %s38
      %s32 = sphi 0, %s30
      %s33 = sphi 0, %s31
      %s34 = sphi 0, %s32
      %s35 = sphi 0, %s33
      %s45 = sphi 0, %s47
      %s48 = sphi 0, %s45
      %s49 = sphi 0, %s48
      %s65 = sphi 0, %s49
      %s71 = sphi 0, %s73
      %s74 = sphi 0, %s71
      %s75 = sphi 0, %s74
      %s91 = sphi 0, %s75
      %s99 = sphi 0, %s101
      %s102 = sphi 0, %s99
      %s103 = sphi 0, %s102
      %s119 = sphi 0, %s103
    $region4: #{tpu_custom_call.1} parent=1 // loop_header_branch
      %26 = sbr.rel (%p24) target = $region8
    $region5: #{tpu_custom_call.1} parent=1 // loop_body
      %s28 = ssub.s32 %s23, 1
      %s29 = ssub.s32 %s23, 2
      %s36 = sadd.s32 1, %s31
      %p37 = scmp.ge.s32.totalorder %s36, 1
      %s38 = scalar_select %p37, 0, %s36
      %s39 = sadd.s32 1, %s30
      %s40 = scalar_select %p37, %s39, %s30
      %p41 = scmp.ge.s32.totalorder %s40, 4
      %s42 = scalar_select %p41, 0, %s40
      %s43 = ssub.s32 %s31, %s38
      %p44 = scmp.eq.s32.totalorder %s43, 0
      %s46 = sadd.s32 %s45, 1
      %s47 = scalar_select %p44, %s45, %s46
      %p50 = pneg %p44
      %p51 = scmp.eq.s32.totalorder %s23, 3
      %p52 = por %p50, %p51
      %p53 = scmp.ne.s32.totalorder %s45, %s48
      %p54 = scmp.eq.s32.totalorder %s23, 0
      %p55 = por %p53, %p54
      %p56 = scmp.ne.s32.totalorder %s45, %s48
      %p57 = scmp.eq.s32.totalorder %s28, 3
      %p58 = por %p56, %p57
      %p59 = scmp.ne.s32.totalorder %s48, %s49
      %p60 = scmp.eq.s32.totalorder %s28, 0
      %p61 = por %p59, %p60
      %p62 = scmp.ne.s32.totalorder %s48, %s49
      %p63 = scmp.eq.s32.totalorder %s29, 3
      %p64 = por %p62, %p63
      %p66 = scmp.ne.s32.totalorder %s49, %s65
      %p67 = scmp.eq.s32.totalorder %s29, 0
      %p68 = por %p66, %p67
      %s69 = ssub.s32 %s30, %s42
      %p70 = scmp.eq.s32.totalorder %s69, 0
      %s72 = sadd.s32 %s71, 1
      %s73 = scalar_select %p70, %s71, %s72
      %p76 = pneg %p70
      %p77 = scmp.eq.s32.totalorder %s23, 3
      %p78 = por %p76, %p77
      %p79 = scmp.ne.s32.totalorder %s71, %s74
      %p80 = scmp.eq.s32.totalorder %s23, 0
      %p81 = por %p79, %p80
      %p82 = scmp.ne.s32.totalorder %s71, %s74
      %p83 = scmp.eq.s32.totalorder %s28, 3
      %p84 = por %p82, %p83
      %p85 = scmp.ne.s32.totalorder %s74, %s75
      %p86 = scmp.eq.s32.totalorder %s28, 0
      %p87 = por %p85, %p86
      %p88 = scmp.ne.s32.totalorder %s74, %s75
      %p89 = scmp.eq.s32.totalorder %s29, 3
      %p90 = por %p88, %p89
      %p92 = scmp.ne.s32.totalorder %s75, %s91
      %p93 = scmp.eq.s32.totalorder %s29, 0
      %p94 = por %p92, %p93
      %s95 = ssub.s32 %s30, %s42
      %s96 = ssub.s32 %s31, %s38
      %s97 = sor.u32 %s95, %s96
      %p98 = scmp.eq.s32.totalorder %s97, 0
      %s100 = sadd.s32 %s99, 1
      %s101 = scalar_select %p98, %s99, %s100
      %p104 = pneg %p98
      %p105 = scmp.eq.s32.totalorder %s23, 3
      %p106 = por %p104, %p105
      %p107 = scmp.ne.s32.totalorder %s99, %s102
      %p108 = scmp.eq.s32.totalorder %s23, 0
      %p109 = por %p107, %p108
      %p110 = scmp.ne.s32.totalorder %s99, %s102
      %p111 = scmp.eq.s32.totalorder %s28, 3
      %p112 = por %p110, %p111
      %p113 = scmp.ne.s32.totalorder %s102, %s103
      %p114 = scmp.eq.s32.totalorder %s28, 0
      %p115 = por %p113, %p114
      %p116 = scmp.ne.s32.totalorder %s102, %s103
      %p117 = scmp.eq.s32.totalorder %s29, 3
      %p118 = por %p116, %p117
      %p120 = scmp.ne.s32.totalorder %s103, %s119
      %p121 = scmp.eq.s32.totalorder %s29, 0
      %p122 = por %p120, %p121
      %p123 = scmp.le.s32.totalorder 1, %s23
      %p124 = scmp.lt.s32.totalorder %s23, 5
      %p125 = pnand %p123, %p124
      %p126 = pneg %p125
      // Predicated region
      $region9: #{tpu_custom_call.1} parent=5 // pred_check
        _
      $region10: #{tpu_custom_call.1} parent=5 // pred_check_branch
        %128 = sbr.rel (%p125) target = $region12
      $region11: #{tpu_custom_call.1} parent=5 // pred_region
        %s129 = ssub.s32 %s23, 1
        // Predicated region
        $region13: #{tpu_custom_call.1} parent=11 // pred_check
          %p130 = pneg %p61
        $region14: #{tpu_custom_call.1} parent=11 // pred_check_branch
          %132 = sbr.rel (%p130) target = $region16
        $region15: #{tpu_custom_call.1} parent=11 // pred_region
          %s133 = smul.u32 4, %s33
          %p134 = scmp.lt.s32.totalorder %s133, 3
          %s135 = scalar_select %p134, %s133, 3
          %s136 = smul.addr %s135, 4
          %s137 = scalar_lea.vmem %s2, %s136
          %s138 = smul.u32 4, %s33
        $region16: #{tpu_custom_call.1} parent=11 // pred_fallthru
          _
      $region12: #{tpu_custom_call.1} parent=5 // pred_fallthru
        _
      %p139 = scmp.lt.s32.totalorder %s23, 4
      // Predicated region
      $region17: #{tpu_custom_call.1} parent=5 // pred_check
        %p140 = pneg %p139
      $region18: #{tpu_custom_call.1} parent=5 // pred_check_branch
        %142 = sbr.rel (%p140) target = $region20
      $region19: #{tpu_custom_call.1} parent=5 // pred_region
        // Predicated region
        $region21: #{tpu_custom_call.1} parent=19 // pred_check
          %p143 = pneg %p81
        $region22: #{tpu_custom_call.1} parent=19 // pred_check_branch
          %145 = sbr.rel (%p143) target = $region24
        $region23: #{tpu_custom_call.1} parent=19 // pred_region
          %p146 = scmp.lt.s32.totalorder %s30, 3
          %s147 = scalar_select %p146, %s30, 3
          %s148 = smul.addr %s147, 32
          %s149 = smul.addr %s148, 4
          %s150 = scalar_lea.vmem %s3, %s149
        $region24: #{tpu_custom_call.1} parent=19 // pred_fallthru
          _
      $region20: #{tpu_custom_call.1} parent=5 // pred_fallthru
        _
      %p151 = scmp.le.s32.totalorder 1, %s23
      %p152 = scmp.lt.s32.totalorder %s23, 5
      %p153 = pnand %p151, %p152
      %p154 = pneg %p153
      // Predicated region
      $region25: #{tpu_custom_call.1} parent=5 // pred_check
        _
      $region26: #{tpu_custom_call.1} parent=5 // pred_check_branch
        %156 = sbr.rel (%p153) target = $region28
      $region27: #{tpu_custom_call.1} parent=5 // pred_region
        %s157 = ssub.s32 %s23, 1
        %s158 = smul.u32 4, %s33
        %p159 = scmp.lt.s32.totalorder %s158, 3
        %s160 = scalar_select %p159, %s158, 3
        %s161 = smul.addr %s160, 4
        %s162 = scalar_lea.vmem %s2, %s161
        %p163 = pneg %p61
        %p164 = pneg %p58
        %p165 = scmp.lt.s32.totalorder %s32, 3
        %s166 = scalar_select %p165, %s32, 3
        %s167 = smul.addr %s166, 32
        %s168 = smul.addr %s167, 4
        %s169 = scalar_lea.vmem %s3, %s168
        %p170 = pneg %p87
        %p171 = pneg %p84
        %p172 = pneg %p115
        %p173 = pneg %p112
        %s174 = sand.u32 %s102, 1
        %s175 = scalar_lea.sflag [#allocation6], %s174
        %s176 = sand.u32 %s102, 1
        %s177 = smul.addr %s176, 8
        %s178 = scalar_lea.vmem [#allocation5], %s177
        %s179 = smul.u32 4, %s33
        %p180 = scmp.lt.s32.totalorder %s179, 3
        %s181 = scalar_select %p180, %s179, 3
        %s182 = smul.addr %s181, 4
        %s183 = scalar_lea.vmem %s2, %s182
        %s184 = smul.u32 4, %s33
        %p185 = scmp.lt.s32.totalorder %s32, 3
        %s186 = scalar_select %p185, %s32, 3
        %s187 = smul.addr %s186, 32
        %s188 = smul.addr %s187, 4
        %s189 = scalar_lea.vmem %s3, %s188
        %s190 = smul.u32 4, %s33
        %s192 = smul.u32 %s32, 128
        %s193 = sld [smem:[#allocation3 + %s192]]
        %s194 = sadd.s32 %s192, 1
        %s195 = sld [smem:[#allocation3 + %s194]]
        %s196 = ssub.s32 %s193, 1
        %s197 = sld [smem:[#allocation4 + %s32]]
        %s198 = sadd.s32 %s192, 2
        %s199 = sld [smem:[#allocation3 + %s198]]
        %s200 = sadd.s32 %s192, 3
        %s201 = sld [smem:[#allocation3 + %s200]]
        %s202 = sadd.s32 %s192, 4
        %s203 = sld [smem:[#allocation3 + %s202]]
        %v204 = vld [vmem:[%s183] sm:$0x77]
        %v205 = vld [vmem:[%s183 + $0x8] sm:$0x77]
        %v206 = vadd.f32 %v204, 1.01
        %v207 = vadd.f32 %v205, 1.01
        %v208 = vmul.f32 %v206, 0.4950495
        %v209 = vmul.f32 %v207, 0.4950495
        %v210 = vstv %s197
        %v211 = vmul.f32 %v208, %v210
        %v212 = vmul.f32 %v209, %v210
        %v213 = vfloor.f32 %v211
        %v214 = vfloor.f32 %v212
        %v215 = vsub.f32 %v211, %v213
        %v216 = vsub.f32 %v212, %v214
        %v217 = vsub.f32 1.0, %v215
        %v218 = vsub.f32 1.0, %v216
        %v219 = vcvt.f32.s32.to.zero.pseudo %v213
        %v220 = vcvt.f32.s32.to.zero.pseudo %v214
        %v221 = vld [vmem:[%s189] sm:$0xf]
        %v222 = vld [vmem:[%s189 + $0x4] sm:$0xf]
        %v223 = vld [vmem:[%s189 + $0x8] sm:$0xf]
        %v224 = vld [vmem:[%s189 + $0xc] sm:$0xf]
        %v225 = vld [vmem:[%s189 + $0x10] sm:$0xf]
        %v226 = vld [vmem:[%s189 + $0x14] sm:$0xf]
        %v227 = vld [vmem:[%s189 + $0x18] sm:$0xf]
        %v228 = vld [vmem:[%s189 + $0x1c] sm:$0xf]
        %v229 = vld [vmem:[%s189 + $0x20] sm:$0xf]
        %v230 = vld [vmem:[%s189 + $0x24] sm:$0xf]
        %v231 = vld [vmem:[%s189 + $0x28] sm:$0xf]
        %v232 = vld [vmem:[%s189 + $0x2c] sm:$0xf]
        %v233 = vld [vmem:[%s189 + $0x30] sm:$0xf]
        %v234 = vld [vmem:[%s189 + $0x34] sm:$0xf]
        %v235 = vld [vmem:[%s189 + $0x38] sm:$0xf]
        %v236 = vld [vmem:[%s189 + $0x3c] sm:$0xf]
        %v237 = vld [vmem:[%s189 + $0x40] sm:$0xf]
        %v238 = vld [vmem:[%s189 + $0x44] sm:$0xf]
        %v239 = vld [vmem:[%s189 + $0x48] sm:$0xf]
        %v240 = vld [vmem:[%s189 + $0x4c] sm:$0xf]
        %v241 = vld [vmem:[%s189 + $0x50] sm:$0xf]
        %v242 = vld [vmem:[%s189 + $0x54] sm:$0xf]
        %v243 = vld [vmem:[%s189 + $0x58] sm:$0xf]
        %v244 = vld [vmem:[%s189 + $0x5c] sm:$0xf]
        %v245 = vld [vmem:[%s189 + $0x60] sm:$0xf]
        %v246 = vld [vmem:[%s189 + $0x64] sm:$0xf]
        %v247 = vld [vmem:[%s189 + $0x68] sm:$0xf]
        %v248 = vld [vmem:[%s189 + $0x6c] sm:$0xf]
        %v249 = vld [vmem:[%s189 + $0x70] sm:$0xf]
        %v250 = vld [vmem:[%s189 + $0x74] sm:$0xf]
        %v251 = vld [vmem:[%s189 + $0x78] sm:$0xf]
        %v252 = vld [vmem:[%s189 + $0x7c] sm:$0xf]
        %v253 = vlaneseq
        %v254 = vshrl.u32 %v253, 7
        %v255 = vadd.s32 %v254, 8
        %v256 = vadd.s32 %v254, 16
        %v257 = vadd.s32 %v254, 24
        %v258 = vadd.s32 %v254, 32
        %v259 = vadd.s32 %v254, 40
        %v260 = vadd.s32 %v254, 48
        %v261 = vadd.s32 %v254, 56
        %v262 = vadd.s32 %v254, 64
        %v263 = vadd.s32 %v254, 72
        %v264 = vadd.s32 %v254, 80
        %v265 = vadd.s32 %v254, 88
        %v266 = vadd.s32 %v254, 96
        %v267 = vadd.s32 %v254, 104
        %v268 = vadd.s32 %v254, 112
        %v269 = vadd.s32 %v254, 120
        %v270 = vstv %s199
        %v271 = vmul.u32 %v219, %v270
        %v272 = vmul.u32 %v220, %v270
        %v275 = vrot.slane %v217, 5
        %v276 = vrot.slane %v275, 4
        %v277 = vrot.slane %v218, 5
        %v278 = vrot.slane %v277, 4
        %v281 = vmul.f32 %v217, %v276
        %v282 = vmul.f32 %v218, %v278
        %v283 = vstv %s201
        %v284 = vmul.u32 %v219, %v283
        %v285 = vmul.u32 %v220, %v283
        %v286 = vrot.slane %v284, 5
        %v287 = vrot.slane %v286, 4
        %v288 = vrot.slane %v285, 5
        %v289 = vrot.slane %v288, 4
        %v290 = vadd.s32 %v271, %v287
        %v291 = vadd.s32 %v272, %v289
        %v292 = vmul.u32 %v219, 2654435761
        %v293 = vmul.u32 %v220, 2654435761
        %v294 = vrot.slane %v292, 5
        %v295 = vrot.slane %v294, 4
        %v296 = vrot.slane %v293, 5
        %v297 = vrot.slane %v296, 4
        %v298 = vxor.u32 %v219, %v295
        %v299 = vxor.u32 %v220, %v297
        %v300 = vrot.slane %v217, 6
        %v301 = vrot.slane %v300, 4
        %v302 = vrot.slane %v218, 6
        %v303 = vrot.slane %v302, 4
        %v306 = vmul.f32 %v281, %v301
        %v307 = vmul.f32 %v282, %v303
        %v308 = vstv %s203
        %v309 = vmul.u32 %v219, %v308
        %v310 = vmul.u32 %v220, %v308
        %v311 = vrot.slane %v309, 6
        %v312 = vrot.slane %v311, 4
        %v313 = vrot.slane %v310, 6
        %v314 = vrot.slane %v313, 4
        %v315 = vadd.s32 %v290, %v312
        %v316 = vadd.s32 %v291, %v314
        %v317 = vmul.u32 %v219, 805459861
        %v318 = vmul.u32 %v220, 805459861
        %v319 = vrot.slane %v317, 6
        %v320 = vrot.slane %v319, 4
        %v321 = vrot.slane %v318, 6
        %v322 = vrot.slane %v321, 4
        %v323 = vxor.u32 %v298, %v320
        %v324 = vxor.u32 %v299, %v322
        %v325 = vstv %s196
        %v326 = vand.u32 %v323, %v325
        %v327 = vand.u32 %v324, %v325
        %v328 = vstv %s195
        %v329 = vmul.u32 %v328, %v315
        %v330 = vmul.u32 %v328, %v316
        %s331 = ssub.s32 1, %s195
        %v332 = vstv %s331
        %v333 = vmul.u32 %v332, %v326
        %v334 = vmul.u32 %v332, %v327
        %v335 = vadd.s32 %v329, %v333
        %v336 = vadd.s32 %v330, %v334
        %vm337 = vcmp.gt.s32.totalorder %v335, 0
        %v338 = vsel %vm337, %v335, 0
        %vm339 = vcmp.gt.s32.totalorder %v336, 0
        %v340 = vsel %vm339, %v336, 0
        %vm341 = vcmp.lt.s32.totalorder %v325, %v338
        %v342 = vsel %vm341, %v325, %v338
        %vm343 = vcmp.lt.s32.totalorder %v325, %v340
        %v344 = vsel %vm343, %v325, %v340
        %v345 = vshrl.u32 %v342, 7
        %v346 = vshrl.u32 %v344, 7
        %v347 = vand.u32 %v342, 127
        %v348 = vand.u32 %v344, 127
        %v349 = vlaneseq
        %v350 = vshrl.u32 %v349, 7
        %v351 = vsub.s32 0, %v350
        %v352 = vrot.slane %v345, %v351
        %v353 = vlaneseq
        %v354 = vshrl.u32 %v353, 7
        %v355 = vsub.s32 4, %v354
        %v356 = vrot.slane %v345, %v355
        %v357 = vlaneseq
        %v358 = vshrl.u32 %v357, 7
        %v359 = vsub.s32 0, %v358
        %v360 = vrot.slane %v346, %v359
        %v361 = vlaneseq
        %v362 = vshrl.u32 %v361, 7
        %v363 = vsub.s32 4, %v362
        %v364 = vrot.slane %v346, %v363
        %v365 = vlaneseq
        %v366 = vshrl.u32 %v365, 7
        %v367 = vsub.s32 0, %v366
        %v368 = vrot.slane %v352, %v367
        %v369 = vlaneseq
        %v370 = vshrl.u32 %v369, 7
        %v371 = vsub.s32 0, %v370
        %v372 = vrot.slane %v356, %v371
        %v373 = vlaneseq
        %v374 = vshrl.u32 %v373, 7
        %v375 = vsub.s32 0, %v374
        %v376 = vrot.slane %v360, %v375
        %v377 = vlaneseq
        %v378 = vshrl.u32 %v377, 7
        %v379 = vsub.s32 0, %v378
        %v380 = vrot.slane %v364, %v379
        %vm381 = vcmp.eq.s32.totalorder %v254, %v368
        %vm382 = vcmp.eq.s32.totalorder %v254, %v372
        %vm383 = vcmp.eq.s32.totalorder %v254, %v376
        %vm384 = vcmp.eq.s32.totalorder %v254, %v380
        %v385 = vsel %vm381, 1.0, 0.0
        %v386 = vsel %vm382, 1.0, 0.0
        %v387 = vsel %vm383, 1.0, 0.0
        %v388 = vsel %vm384, 1.0, 0.0
        %v389 = vpack.c.bf16 %v385, %v385
        %v390 = vpack.c.bf16 %v386, %v386
        %v391 = vpack.c.bf16 %v387, %v387
        %v392 = vpack.c.bf16 %v388, %v388
        %v425 = vunpack.c.l.b16 %v221
        %v426 = vunpack.c.l.b16 %v222
        %v427 = vunpack.c.l.b16 %v223
        %v428 = vunpack.c.l.b16 %v224
        %v429 = vunpack.c.l.b16 %v225
        %v430 = vunpack.c.l.b16 %v226
        %v431 = vunpack.c.l.b16 %v227
        %v432 = vunpack.c.l.b16 %v228
        %v433 = vunpack.c.l.b16 %v229
        %v434 = vunpack.c.l.b16 %v230
        %v435 = vunpack.c.l.b16 %v231
        %v436 = vunpack.c.l.b16 %v232
        %v437 = vunpack.c.l.b16 %v233
        %v438 = vunpack.c.l.b16 %v234
        %v439 = vunpack.c.l.b16 %v235
        %v440 = vunpack.c.l.b16 %v236
        %v441 = vunpack.c.l.b16 %v237
        %v442 = vunpack.c.l.b16 %v238
        %v443 = vunpack.c.l.b16 %v239
        %v444 = vunpack.c.l.b16 %v240
        %v445 = vunpack.c.l.b16 %v241
        %v446 = vunpack.c.l.b16 %v242
        %v447 = vunpack.c.l.b16 %v243
        %v448 = vunpack.c.l.b16 %v244
        %v449 = vunpack.c.l.b16 %v245
        %v450 = vunpack.c.l.b16 %v246
        %v451 = vunpack.c.l.b16 %v247
        %v452 = vunpack.c.l.b16 %v248
        %v453 = vunpack.c.l.b16 %v249
        %v454 = vunpack.c.l.b16 %v250
        %v455 = vunpack.c.l.b16 %v251
        %v456 = vunpack.c.l.b16 %v252
        %v457 = vpack.c.b16 %v426, %v425
        %v458 = vpack.c.b16 %v428, %v427
        %v459 = vpack.c.b16 %v430, %v429
        %v460 = vpack.c.b16 %v432, %v431
        %v461 = vpack.c.b16 %v434, %v433
        %v462 = vpack.c.b16 %v436, %v435
        %v463 = vpack.c.b16 %v438, %v437
        %v464 = vpack.c.b16 %v440, %v439
        %v465 = vpack.c.b16 %v442, %v441
        %v466 = vpack.c.b16 %v444, %v443
        %v467 = vpack.c.b16 %v446, %v445
        %v468 = vpack.c.b16 %v448, %v447
        %v469 = vpack.c.b16 %v450, %v449
        %v470 = vpack.c.b16 %v452, %v451
        %v471 = vpack.c.b16 %v454, %v453
        %v472 = vpack.c.b16 %v456, %v455
        %vm473 = vcmask 64512
        %v475 = vsel %vm473, %v457, 0
        %v478 = vsel %vm473, %v458, 0
        %v481 = vsel %vm473, %v459, 0
        %v484 = vsel %vm473, %v460, 0
        %v487 = vsel %vm473, %v461, 0
        %v490 = vsel %vm473, %v462, 0
        %v493 = vsel %vm473, %v463, 0
        %v496 = vsel %vm473, %v464, 0
        %v499 = vsel %vm473, %v465, 0
        %v502 = vsel %vm473, %v466, 0
        %v505 = vsel %vm473, %v467, 0
        %v508 = vsel %vm473, %v468, 0
        %v511 = vsel %vm473, %v469, 0
        %v514 = vsel %vm473, %v470, 0
        %v517 = vsel %vm473, %v471, 0
        %v520 = vsel %vm473, %v472, 0
        %vm522 = vcmask 1043456
        %v524 = vsel %vm522, %v389, 0
        %v527 = vsel %vm522, %v390, 0
        %v530 = vsel %vm522, %v391, 0
        %v533 = vsel %vm522, %v392, 0
        %535 = vmatprep.subr.bf16.mxu0 %v527
        %536 = vmatpush1.bf16.msra.mxu0 %v524
        %537 = vmatprep.subr.bf16.mxu0 0
        %538 = vmatpush1.bf16.msra.mxu0 0
        %539 = vmatprep.subr.bf16.mxu0 0
        %540 = vmatpush1.bf16.msra.mxu0 0
        %541 = vmatprep.subr.bf16.mxu0 0
        %542 = vmatpush1.bf16.msra.mxu0 0
        %543 = vmatprep.subr.bf16.mxu0 0
        %544 = vmatpush1.bf16.msra.mxu0 0
        %545 = vmatprep.subr.bf16.mxu0 0
        %546 = vmatpush1.bf16.msra.mxu0 0
        %547 = vmatprep.subr.bf16.mxu0 0
        %548 = vmatpush1.bf16.msra.mxu0 0
        %549 = vmatprep.subr.bf16.mxu0 0
        %550 = vmatpush1.bf16.msra.mxu0 0
        %551 = vmatprep.subr.bf16.mxu0 0
        %552 = vmatpush1.bf16.msra.mxu0 0
        %553 = vmatprep.subr.bf16.mxu0 0
        %554 = vmatpush1.bf16.msra.mxu0 0
        %555 = vmatprep.subr.bf16.mxu0 0
        %556 = vmatpush1.bf16.msra.mxu0 0
        %557 = vmatprep.subr.bf16.mxu0 0
        %558 = vmatpush1.bf16.msra.mxu0 0
        %559 = vmatprep.subr.bf16.mxu0 0
        %560 = vmatpush1.bf16.msra.mxu0 0
        %561 = vmatprep.subr.bf16.mxu0 0
        %562 = vmatpush1.bf16.msra.mxu0 0
        %563 = vmatprep.subr.bf16.mxu0 0
        %564 = vmatpush1.bf16.msra.mxu0 0
        %565 = vmatprep.subr.bf16.mxu0 0
        %566 = vmatpush1.bf16.msra.mxu0 0
        %567 = vmatprep.mubr.bf16.mxu0 0
        %568 = vmatmul.mubr.bf16.gmra.mrb[0].mxu0 %v475
        %v569 = vpop.f32.mrb[0].mxu0
        %v570 = vadd.f32 0.0, %v569
        %v571 = vpop.f32.mrb[0].mxu0
        %v572 = vadd.f32 0.0, %v571
        %v573 = vpop.f32.mrb[0].mxu0
        %v574 = vadd.f32 0.0, %v573
        %v575 = vpop.f32.mrb[0].mxu0
        %v576 = vadd.f32 0.0, %v575
        %577 = vmatprep.mubr.bf16.mxu0 0
        %578 = vmatmul.mubr.bf16.gmra.mrb[0].mxu0 %v478
        %v579 = vpop.f32.mrb[0].mxu0
        %v580 = vadd.f32 0.0, %v579
        %v581 = vpop.f32.mrb[0].mxu0
        %v582 = vadd.f32 0.0, %v581
        %v583 = vpop.f32.mrb[0].mxu0
        %v584 = vadd.f32 0.0, %v583
        %v585 = vpop.f32.mrb[0].mxu0
        %v586 = vadd.f32 0.0, %v585
        %587 = vmatprep.mubr.bf16.mxu0 0
        %588 = vmatmul.mubr.bf16.gmra.mrb[0].mxu0 %v481
        %v589 = vpop.f32.mrb[0].mxu0
        %v590 = vadd.f32 0.0, %v589
        %v591 = vpop.f32.mrb[0].mxu0
        %v592 = vadd.f32 0.0, %v591
        %v593 = vpop.f32.mrb[0].mxu0
        %v594 = vadd.f32 0.0, %v593
        %v595 = vpop.f32.mrb[0].mxu0
        %v596 = vadd.f32 0.0, %v595
        %597 = vmatprep.mubr.bf16.mxu0 0
        %598 = vmatmul.mubr.bf16.gmra.mrb[0].mxu0 %v484
        %v599 = vpop.f32.mrb[0].mxu0
        %v600 = vadd.f32 0.0, %v599
        %v601 = vpop.f32.mrb[0].mxu0
        %v602 = vadd.f32 0.0, %v601
        %v603 = vpop.f32.mrb[0].mxu0
        %v604 = vadd.f32 0.0, %v603
        %v605 = vpop.f32.mrb[0].mxu0
        %v606 = vadd.f32 0.0, %v605
        %607 = vmatprep.mubr.bf16.mxu0 0
        %608 = vmatmul.mubr.bf16.gmra.mrb[0].mxu0 %v487
        %v609 = vpop.f32.mrb[0].mxu0
        %v610 = vadd.f32 0.0, %v609
        %v611 = vpop.f32.mrb[0].mxu0
        %v612 = vadd.f32 0.0, %v611
        %v613 = vpop.f32.mrb[0].mxu0
        %v614 = vadd.f32 0.0, %v613
        %v615 = vpop.f32.mrb[0].mxu0
        %v616 = vadd.f32 0.0, %v615
        %617 = vmatprep.mubr.bf16.mxu0 0
        %618 = vmatmul.mubr.bf16.gmra.mrb[0].mxu0 %v490
        %v619 = vpop.f32.mrb[0].mxu0
        %v620 = vadd.f32 0.0, %v619
        %v621 = vpop.f32.mrb[0].mxu0
        %v622 = vadd.f32 0.0, %v621
        %v623 = vpop.f32.mrb[0].mxu0
        %v624 = vadd.f32 0.0, %v623
        %v625 = vpop.f32.mrb[0].mxu0
        %v626 = vadd.f32 0.0, %v625
        %627 = vmatprep.mubr.bf16.mxu0 0
        %628 = vmatmul.mubr.bf16.gmra.mrb[0].mxu0 %v493
        %v629 = vpop.f32.mrb[0].mxu0
        %v630 = vadd.f32 0.0, %v629
        %v631 = vpop.f32.mrb[0].mxu0
        %v632 = vadd.f32 0.0, %v631
        %v633 = vpop.f32.mrb[0].mxu0
        %v634 = vadd.f32 0.0, %v633
        %v635 = vpop.f32.mrb[0].mxu0
        %v636 = vadd.f32 0.0, %v635
        %637 = vmatprep.mubr.bf16.mxu0 0
        %638 = vmatmul.mubr.bf16.gmra.mrb[0].mxu0 %v496
        %v639 = vpop.f32.mrb[0].mxu0
        %v640 = vadd.f32 0.0, %v639
        %v641 = vpop.f32.mrb[0].mxu0
        %v642 = vadd.f32 0.0, %v641
        %v643 = vpop.f32.mrb[0].mxu0
        %v644 = vadd.f32 0.0, %v643
        %v645 = vpop.f32.mrb[0].mxu0
        %v646 = vadd.f32 0.0, %v645
        %647 = vmatprep.mubr.bf16.mxu0 0
        %648 = vmatmul.mubr.bf16.gmra.mrb[0].mxu0 %v499
        %v649 = vpop.f32.mrb[0].mxu0
        %v650 = vadd.f32 0.0, %v649
        %v651 = vpop.f32.mrb[0].mxu0
        %v652 = vadd.f32 0.0, %v651
        %v653 = vpop.f32.mrb[0].mxu0
        %v654 = vadd.f32 0.0, %v653
        %v655 = vpop.f32.mrb[0].mxu0
        %v656 = vadd.f32 0.0, %v655
        %657 = vmatprep.mubr.bf16.mxu0 0
        %658 = vmatmul.mubr.bf16.gmra.mrb[0].mxu0 %v502
        %v659 = vpop.f32.mrb[0].mxu0
        %v660 = vadd.f32 0.0, %v659
        %v661 = vpop.f32.mrb[0].mxu0
        %v662 = vadd.f32 0.0, %v661
        %v663 = vpop.f32.mrb[0].mxu0
        %v664 = vadd.f32 0.0, %v663
        %v665 = vpop.f32.mrb[0].mxu0
        %v666 = vadd.f32 0.0, %v665
        %667 = vmatprep.mubr.bf16.mxu0 0
        %668 = vmatmul.mubr.bf16.gmra.mrb[0].mxu0 %v505
        %v669 = vpop.f32.mrb[0].mxu0
        %v670 = vadd.f32 0.0, %v669
        %v671 = vpop.f32.mrb[0].mxu0
        %v672 = vadd.f32 0.0, %v671
        %v673 = vpop.f32.mrb[0].mxu0
        %v674 = vadd.f32 0.0, %v673
        %v675 = vpop.f32.mrb[0].mxu0
        %v676 = vadd.f32 0.0, %v675
        %677 = vmatprep.mubr.bf16.mxu0 0
        %678 = vmatmul.mubr.bf16.gmra.mrb[0].mxu0 %v508
        %v679 = vpop.f32.mrb[0].mxu0
        %v680 = vadd.f32 0.0, %v679
        %v681 = vpop.f32.mrb[0].mxu0
        %v682 = vadd.f32 0.0, %v681
        %v683 = vpop.f32.mrb[0].mxu0
        %v684 = vadd.f32 0.0, %v683
        %v685 = vpop.f32.mrb[0].mxu0
        %v686 = vadd.f32 0.0, %v685
        %687 = vmatprep.mubr.bf16.mxu0 0
        %688 = vmatmul.mubr.bf16.gmra.mrb[0].mxu0 %v511
        %v689 = vpop.f32.mrb[0].mxu0
        %v690 = vadd.f32 0.0, %v689
        %v691 = vpop.f32.mrb[0].mxu0
        %v692 = vadd.f32 0.0, %v691
        %v693 = vpop.f32.mrb[0].mxu0
        %v694 = vadd.f32 0.0, %v693
        %v695 = vpop.f32.mrb[0].mxu0
        %v696 = vadd.f32 0.0, %v695
        %697 = vmatprep.mubr.bf16.mxu0 0
        %698 = vmatmul.mubr.bf16.gmra.mrb[0].mxu0 %v514
        %v699 = vpop.f32.mrb[0].mxu0
        %v700 = vadd.f32 0.0, %v699
        %v701 = vpop.f32.mrb[0].mxu0
        %v702 = vadd.f32 0.0, %v701
        %v703 = vpop.f32.mrb[0].mxu0
        %v704 = vadd.f32 0.0, %v703
        %v705 = vpop.f32.mrb[0].mxu0
        %v706 = vadd.f32 0.0, %v705
        %707 = vmatprep.mubr.bf16.mxu0 0
        %708 = vmatmul.mubr.bf16.gmra.mrb[0].mxu0 %v517
        %v709 = vpop.f32.mrb[0].mxu0
        %v710 = vadd.f32 0.0, %v709
        %v711 = vpop.f32.mrb[0].mxu0
        %v712 = vadd.f32 0.0, %v711
        %v713 = vpop.f32.mrb[0].mxu0
        %v714 = vadd.f32 0.0, %v713
        %v715 = vpop.f32.mrb[0].mxu0
        %v716 = vadd.f32 0.0, %v715
        %717 = vmatprep.mubr.bf16.mxu0 0
        %718 = vmatmul.mubr.bf16.gmra.mrb[0].mxu0 %v520
        %v719 = vpop.f32.mrb[0].mxu0
        %v720 = vadd.f32 0.0, %v719
        %v721 = vpop.f32.mrb[0].mxu0
        %v722 = vadd.f32 0.0, %v721
        %v723 = vpop.f32.mrb[0].mxu0
        %v724 = vadd.f32 0.0, %v723
        %v725 = vpop.f32.mrb[0].mxu0
        %v726 = vadd.f32 0.0, %v725
        %727 = vdwg.mxu0
        %728 = vmatprep.subr.bf16.mxu0 %v533
        %729 = vmatpush1.bf16.msra.mxu0 %v530
        %730 = vmatprep.subr.bf16.mxu0 0
        %731 = vmatpush1.bf16.msra.mxu0 0
        %732 = vmatprep.subr.bf16.mxu0 0
        %733 = vmatpush1.bf16.msra.mxu0 0
        %734 = vmatprep.subr.bf16.mxu0 0
        %735 = vmatpush1.bf16.msra.mxu0 0
        %736 = vmatprep.subr.bf16.mxu0 0
        %737 = vmatpush1.bf16.msra.mxu0 0
        %738 = vmatprep.subr.bf16.mxu0 0
        %739 = vmatpush1.bf16.msra.mxu0 0
        %740 = vmatprep.subr.bf16.mxu0 0
        %741 = vmatpush1.bf16.msra.mxu0 0
        %742 = vmatprep.subr.bf16.mxu0 0
        %743 = vmatpush1.bf16.msra.mxu0 0
        %744 = vmatprep.subr.bf16.mxu0 0
        %745 = vmatpush1.bf16.msra.mxu0 0
        %746 = vmatprep.subr.bf16.mxu0 0
        %747 = vmatpush1.bf16.msra.mxu0 0
        %748 = vmatprep.subr.bf16.mxu0 0
        %749 = vmatpush1.bf16.msra.mxu0 0
        %750 = vmatprep.subr.bf16.mxu0 0
        %751 = vmatpush1.bf16.msra.mxu0 0
        %752 = vmatprep.subr.bf16.mxu0 0
        %753 = vmatpush1.bf16.msra.mxu0 0
        %754 = vmatprep.subr.bf16.mxu0 0
        %755 = vmatpush1.bf16.msra.mxu0 0
        %756 = vmatprep.subr.bf16.mxu0 0
        %757 = vmatpush1.bf16.msra.mxu0 0
        %758 = vmatprep.subr.bf16.mxu0 0
        %759 = vmatpush1.bf16.msra.mxu0 0
        %760 = vmatprep.mubr.bf16.mxu0 0
        %761 = vmatmul.mubr.bf16.gmra.mrb[0].mxu0 %v475
        %v762 = vpop.f32.mrb[0].mxu0
        %v763 = vadd.f32 0.0, %v762
        %v764 = vpop.f32.mrb[0].mxu0
        %v765 = vadd.f32 0.0, %v764
        %v766 = vpop.f32.mrb[0].mxu0
        %v767 = vadd.f32 0.0, %v766
        %v768 = vpop.f32.mrb[0].mxu0
        %v769 = vadd.f32 0.0, %v768
        %770 = vmatprep.mubr.bf16.mxu0 0
        %771 = vmatmul.mubr.bf16.gmra.mrb[0].mxu0 %v478
        %v772 = vpop.f32.mrb[0].mxu0
        %v773 = vadd.f32 0.0, %v772
        %v774 = vpop.f32.mrb[0].mxu0
        %v775 = vadd.f32 0.0, %v774
        %v776 = vpop.f32.mrb[0].mxu0
        %v777 = vadd.f32 0.0, %v776
        %v778 = vpop.f32.mrb[0].mxu0
        %v779 = vadd.f32 0.0, %v778
        %780 = vmatprep.mubr.bf16.mxu0 0
        %781 = vmatmul.mubr.bf16.gmra.mrb[0].mxu0 %v481
        %v782 = vpop.f32.mrb[0].mxu0
        %v783 = vadd.f32 0.0, %v782
        %v784 = vpop.f32.mrb[0].mxu0
        %v785 = vadd.f32 0.0, %v784
        %v786 = vpop.f32.mrb[0].mxu0
        %v787 = vadd.f32 0.0, %v786
        %v788 = vpop.f32.mrb[0].mxu0
        %v789 = vadd.f32 0.0, %v788
        %790 = vmatprep.mubr.bf16.mxu0 0
        %791 = vmatmul.mubr.bf16.gmra.mrb[0].mxu0 %v484
        %v792 = vpop.f32.mrb[0].mxu0
        %v793 = vadd.f32 0.0, %v792
        %v794 = vpop.f32.mrb[0].mxu0
        %v795 = vadd.f32 0.0, %v794
        %v796 = vpop.f32.mrb[0].mxu0
        %v797 = vadd.f32 0.0, %v796
        %v798 = vpop.f32.mrb[0].mxu0
        %v799 = vadd.f32 0.0, %v798
        %800 = vmatprep.mubr.bf16.mxu0 0
        %801 = vmatmul.mubr.bf16.gmra.mrb[0].mxu0 %v487
        %v802 = vpop.f32.mrb[0].mxu0
        %v803 = vadd.f32 0.0, %v802
        %v804 = vpop.f32.mrb[0].mxu0
        %v805 = vadd.f32 0.0, %v804
        %v806 = vpop.f32.mrb[0].mxu0
        %v807 = vadd.f32 0.0, %v806
        %v808 = vpop.f32.mrb[0].mxu0
        %v809 = vadd.f32 0.0, %v808
        %810 = vmatprep.mubr.bf16.mxu0 0
        %811 = vmatmul.mubr.bf16.gmra.mrb[0].mxu0 %v490
        %v812 = vpop.f32.mrb[0].mxu0
        %v813 = vadd.f32 0.0, %v812
        %v814 = vpop.f32.mrb[0].mxu0
        %v815 = vadd.f32 0.0, %v814
        %v816 = vpop.f32.mrb[0].mxu0
        %v817 = vadd.f32 0.0, %v816
        %v818 = vpop.f32.mrb[0].mxu0
        %v819 = vadd.f32 0.0, %v818
        %820 = vmatprep.mubr.bf16.mxu0 0
        %821 = vmatmul.mubr.bf16.gmra.mrb[0].mxu0 %v493
        %v822 = vpop.f32.mrb[0].mxu0
        %v823 = vadd.f32 0.0, %v822
        %v824 = vpop.f32.mrb[0].mxu0
        %v825 = vadd.f32 0.0, %v824
        %v826 = vpop.f32.mrb[0].mxu0
        %v827 = vadd.f32 0.0, %v826
        %v828 = vpop.f32.mrb[0].mxu0
        %v829 = vadd.f32 0.0, %v828
        %830 = vmatprep.mubr.bf16.mxu0 0
        %831 = vmatmul.mubr.bf16.gmra.mrb[0].mxu0 %v496
        %v832 = vpop.f32.mrb[0].mxu0
        %v833 = vadd.f32 0.0, %v832
        %v834 = vpop.f32.mrb[0].mxu0
        %v835 = vadd.f32 0.0, %v834
        %v836 = vpop.f32.mrb[0].mxu0
        %v837 = vadd.f32 0.0, %v836
        %v838 = vpop.f32.mrb[0].mxu0
        %v839 = vadd.f32 0.0, %v838
        %840 = vmatprep.mubr.bf16.mxu0 0
        %841 = vmatmul.mubr.bf16.gmra.mrb[0].mxu0 %v499
        %v842 = vpop.f32.mrb[0].mxu0
        %v843 = vadd.f32 0.0, %v842
        %v844 = vpop.f32.mrb[0].mxu0
        %v845 = vadd.f32 0.0, %v844
        %v846 = vpop.f32.mrb[0].mxu0
        %v847 = vadd.f32 0.0, %v846
        %v848 = vpop.f32.mrb[0].mxu0
        %v849 = vadd.f32 0.0, %v848
        %850 = vmatprep.mubr.bf16.mxu0 0
        %851 = vmatmul.mubr.bf16.gmra.mrb[0].mxu0 %v502
        %v852 = vpop.f32.mrb[0].mxu0
        %v853 = vadd.f32 0.0, %v852
        %v854 = vpop.f32.mrb[0].mxu0
        %v855 = vadd.f32 0.0, %v854
        %v856 = vpop.f32.mrb[0].mxu0
        %v857 = vadd.f32 0.0, %v856
        %v858 = vpop.f32.mrb[0].mxu0
        %v859 = vadd.f32 0.0, %v858
        %860 = vmatprep.mubr.bf16.mxu0 0
        %861 = vmatmul.mubr.bf16.gmra.mrb[0].mxu0 %v505
        %v862 = vpop.f32.mrb[0].mxu0
        %v863 = vadd.f32 0.0, %v862
        %v864 = vpop.f32.mrb[0].mxu0
        %v865 = vadd.f32 0.0, %v864
        %v866 = vpop.f32.mrb[0].mxu0
        %v867 = vadd.f32 0.0, %v866
        %v868 = vpop.f32.mrb[0].mxu0
        %v869 = vadd.f32 0.0, %v868
        %870 = vmatprep.mubr.bf16.mxu0 0
        %871 = vmatmul.mubr.bf16.gmra.mrb[0].mxu0 %v508
        %v872 = vpop.f32.mrb[0].mxu0
        %v873 = vadd.f32 0.0, %v872
        %v874 = vpop.f32.mrb[0].mxu0
        %v875 = vadd.f32 0.0, %v874
        %v876 = vpop.f32.mrb[0].mxu0
        %v877 = vadd.f32 0.0, %v876
        %v878 = vpop.f32.mrb[0].mxu0
        %v879 = vadd.f32 0.0, %v878
        %880 = vmatprep.mubr.bf16.mxu0 0
        %881 = vmatmul.mubr.bf16.gmra.mrb[0].mxu0 %v511
        %v882 = vpop.f32.mrb[0].mxu0
        %v883 = vadd.f32 0.0, %v882
        %v884 = vpop.f32.mrb[0].mxu0
        %v885 = vadd.f32 0.0, %v884
        %v886 = vpop.f32.mrb[0].mxu0
        %v887 = vadd.f32 0.0, %v886
        %v888 = vpop.f32.mrb[0].mxu0
        %v889 = vadd.f32 0.0, %v888
        %890 = vmatprep.mubr.bf16.mxu0 0
        %891 = vmatmul.mubr.bf16.gmra.mrb[0].mxu0 %v514
        %v892 = vpop.f32.mrb[0].mxu0
        %v893 = vadd.f32 0.0, %v892
        %v894 = vpop.f32.mrb[0].mxu0
        %v895 = vadd.f32 0.0, %v894
        %v896 = vpop.f32.mrb[0].mxu0
        %v897 = vadd.f32 0.0, %v896
        %v898 = vpop.f32.mrb[0].mxu0
        %v899 = vadd.f32 0.0, %v898
        %900 = vmatprep.mubr.bf16.mxu0 0
        %901 = vmatmul.mubr.bf16.gmra.mrb[0].mxu0 %v517
        %v902 = vpop.f32.mrb[0].mxu0
        %v903 = vadd.f32 0.0, %v902
        %v904 = vpop.f32.mrb[0].mxu0
        %v905 = vadd.f32 0.0, %v904
        %v906 = vpop.f32.mrb[0].mxu0
        %v907 = vadd.f32 0.0, %v906
        %v908 = vpop.f32.mrb[0].mxu0
        %v909 = vadd.f32 0.0, %v908
        %910 = vmatprep.mubr.bf16.mxu0 0
        %911 = vmatmul.mubr.bf16.gmra.mrb[0].mxu0 %v520
        %v912 = vpop.f32.mrb[0].mxu0
        %v913 = vadd.f32 0.0, %v912
        %v914 = vpop.f32.mrb[0].mxu0
        %v915 = vadd.f32 0.0, %v914
        %v916 = vpop.f32.mrb[0].mxu0
        %v917 = vadd.f32 0.0, %v916
        %v918 = vpop.f32.mrb[0].mxu0
        %v919 = vadd.f32 0.0, %v918
        %920 = vdwg.mxu0
        %v921 = vlaneseq
        %v922 = vshrl.u32 %v921, 7
        %v923 = vsub.s32 0, %v922
        %v924 = vrot.slane %v347, %v923
        %v925 = vlaneseq
        %v926 = vshrl.u32 %v925, 7
        %v927 = vsub.s32 4, %v926
        %v928 = vrot.slane %v347, %v927
        %v929 = vlaneseq
        %v930 = vshrl.u32 %v929, 7
        %v931 = vsub.s32 0, %v930
        %v932 = vrot.slane %v348, %v931
        %v933 = vlaneseq
        %v934 = vshrl.u32 %v933, 7
        %v935 = vsub.s32 4, %v934
        %v936 = vrot.slane %v348, %v935
        %v937 = vlaneseq
        %v938 = vshrl.u32 %v937, 7
        %v939 = vsub.s32 0, %v938
        %v940 = vrot.slane %v924, %v939
        %v941 = vlaneseq
        %v942 = vshrl.u32 %v941, 7
        %v943 = vsub.s32 0, %v942
        %v944 = vrot.slane %v928, %v943
        %v945 = vlaneseq
        %v946 = vshrl.u32 %v945, 7
        %v947 = vsub.s32 0, %v946
        %v948 = vrot.slane %v932, %v947
        %v949 = vlaneseq
        %v950 = vshrl.u32 %v949, 7
        %v951 = vsub.s32 0, %v950
        %v952 = vrot.slane %v936, %v951
        %vm953 = vcmp.eq.s32.totalorder %v254, %v940
        %vm954 = vcmp.eq.s32.totalorder %v254, %v944
        %vm955 = vcmp.eq.s32.totalorder %v254, %v948
        %vm956 = vcmp.eq.s32.totalorder %v254, %v952
        %vm957 = vcmp.eq.s32.totalorder %v255, %v940
        %vm958 = vcmp.eq.s32.totalorder %v255, %v944
        %vm959 = vcmp.eq.s32.totalorder %v255, %v948
        %vm960 = vcmp.eq.s32.totalorder %v255, %v952
        %vm961 = vcmp.eq.s32.totalorder %v256, %v940
        %vm962 = vcmp.eq.s32.totalorder %v256, %v944
        %vm963 = vcmp.eq.s32.totalorder %v256, %v948
        %vm964 = vcmp.eq.s32.totalorder %v256, %v952
        %vm965 = vcmp.eq.s32.totalorder %v257, %v940
        %vm966 = vcmp.eq.s32.totalorder %v257, %v944
        %vm967 = vcmp.eq.s32.totalorder %v257, %v948
        %vm968 = vcmp.eq.s32.totalorder %v257, %v952
        %vm969 = vcmp.eq.s32.totalorder %v258, %v940
        %vm970 = vcmp.eq.s32.totalorder %v258, %v944
        %vm971 = vcmp.eq.s32.totalorder %v258, %v948
        %vm972 = vcmp.eq.s32.totalorder %v258, %v952
        %vm973 = vcmp.eq.s32.totalorder %v259, %v940
        %vm974 = vcmp.eq.s32.totalorder %v259, %v944
        %vm975 = vcmp.eq.s32.totalorder %v259, %v948
        %vm976 = vcmp.eq.s32.totalorder %v259, %v952
        %vm977 = vcmp.eq.s32.totalorder %v260, %v940
        %vm978 = vcmp.eq.s32.totalorder %v260, %v944
        %vm979 = vcmp.eq.s32.totalorder %v260, %v948
        %vm980 = vcmp.eq.s32.totalorder %v260, %v952
        %vm981 = vcmp.eq.s32.totalorder %v261, %v940
        %vm982 = vcmp.eq.s32.totalorder %v261, %v944
        %vm983 = vcmp.eq.s32.totalorder %v261, %v948
        %vm984 = vcmp.eq.s32.totalorder %v261, %v952
        %vm985 = vcmp.eq.s32.totalorder %v262, %v940
        %vm986 = vcmp.eq.s32.totalorder %v262, %v944
        %vm987 = vcmp.eq.s32.totalorder %v262, %v948
        %vm988 = vcmp.eq.s32.totalorder %v262, %v952
        %vm989 = vcmp.eq.s32.totalorder %v263, %v940
        %vm990 = vcmp.eq.s32.totalorder %v263, %v944
        %vm991 = vcmp.eq.s32.totalorder %v263, %v948
        %vm992 = vcmp.eq.s32.totalorder %v263, %v952
        %vm993 = vcmp.eq.s32.totalorder %v264, %v940
        %vm994 = vcmp.eq.s32.totalorder %v264, %v944
        %vm995 = vcmp.eq.s32.totalorder %v264, %v948
        %vm996 = vcmp.eq.s32.totalorder %v264, %v952
        %vm997 = vcmp.eq.s32.totalorder %v265, %v940
        %vm998 = vcmp.eq.s32.totalorder %v265, %v944
        %vm999 = vcmp.eq.s32.totalorder %v265, %v948
        %vm1000 = vcmp.eq.s32.totalorder %v265, %v952
        %vm1001 = vcmp.eq.s32.totalorder %v266, %v940
        %vm1002 = vcmp.eq.s32.totalorder %v266, %v944
        %vm1003 = vcmp.eq.s32.totalorder %v266, %v948
        %vm1004 = vcmp.eq.s32.totalorder %v266, %v952
        %vm1005 = vcmp.eq.s32.totalorder %v267, %v940
        %vm1006 = vcmp.eq.s32.totalorder %v267, %v944
        %vm1007 = vcmp.eq.s32.totalorder %v267, %v948
        %vm1008 = vcmp.eq.s32.totalorder %v267, %v952
        %vm1009 = vcmp.eq.s32.totalorder %v268, %v940
        %vm1010 = vcmp.eq.s32.totalorder %v268, %v944
        %vm1011 = vcmp.eq.s32.totalorder %v268, %v948
        %vm1012 = vcmp.eq.s32.totalorder %v268, %v952
        %vm1013 = vcmp.eq.s32.totalorder %v269, %v940
        %vm1014 = vcmp.eq.s32.totalorder %v269, %v944
        %vm1015 = vcmp.eq.s32.totalorder %v269, %v948
        %vm1016 = vcmp.eq.s32.totalorder %v269, %v952
        %v1019 = vlaneseq
        %v1020 = vshrl.u32 %v1019, 7
        %v1021 = vsub.s32 0, %v1020
        %v1022 = vrot.slane %v306, %v1021
        %v1023 = vlaneseq
        %v1024 = vshrl.u32 %v1023, 7
        %v1025 = vsub.s32 4, %v1024
        %v1026 = vrot.slane %v306, %v1025
        %v1027 = vlaneseq
        %v1028 = vshrl.u32 %v1027, 7
        %v1029 = vsub.s32 0, %v1028
        %v1030 = vrot.slane %v307, %v1029
        %v1031 = vlaneseq
        %v1032 = vshrl.u32 %v1031, 7
        %v1033 = vsub.s32 4, %v1032
        %v1034 = vrot.slane %v307, %v1033
        %v1039 = vlaneseq
        %v1040 = vshrl.u32 %v1039, 7
        %v1041 = vsub.s32 0, %v1040
        %v1042 = vrot.slane %v1022, %v1041
        %v1043 = vlaneseq
        %v1044 = vshrl.u32 %v1043, 7
        %v1045 = vsub.s32 0, %v1044
        %v1046 = vrot.slane %v1026, %v1045
        %v1047 = vlaneseq
        %v1048 = vshrl.u32 %v1047, 7
        %v1049 = vsub.s32 0, %v1048
        %v1050 = vrot.slane %v1030, %v1049
        %v1051 = vlaneseq
        %v1052 = vshrl.u32 %v1051, 7
        %v1053 = vsub.s32 0, %v1052
        %v1054 = vrot.slane %v1034, %v1053
        %v1055 = vsel %vm953, %v1042, 0.0
        %v1056 = vsel %vm954, %v1046, 0.0
        %v1057 = vsel %vm955, %v1050, 0.0
        %v1058 = vsel %vm956, %v1054, 0.0
        %v1059 = vsel %vm957, %v1042, 0.0
        %v1060 = vsel %vm958, %v1046, 0.0
        %v1061 = vsel %vm959, %v1050, 0.0
        %v1062 = vsel %vm960, %v1054, 0.0
        %v1063 = vsel %vm961, %v1042, 0.0
        %v1064 = vsel %vm962, %v1046, 0.0
        %v1065 = vsel %vm963, %v1050, 0.0
        %v1066 = vsel %vm964, %v1054, 0.0
        %v1067 = vsel %vm965, %v1042, 0.0
        %v1068 = vsel %vm966, %v1046, 0.0
        %v1069 = vsel %vm967, %v1050, 0.0
        %v1070 = vsel %vm968, %v1054, 0.0
        %v1071 = vsel %vm969, %v1042, 0.0
        %v1072 = vsel %vm970, %v1046, 0.0
        %v1073 = vsel %vm971, %v1050, 0.0
        %v1074 = vsel %vm972, %v1054, 0.0
        %v1075 = vsel %vm973, %v1042, 0.0
        %v1076 = vsel %vm974, %v1046, 0.0
        %v1077 = vsel %vm975, %v1050, 0.0
        %v1078 = vsel %vm976, %v1054, 0.0
        %v1079 = vsel %vm977, %v1042, 0.0
        %v1080 = vsel %vm978, %v1046, 0.0
        %v1081 = vsel %vm979, %v1050, 0.0
        %v1082 = vsel %vm980, %v1054, 0.0
        %v1083 = vsel %vm981, %v1042, 0.0
        %v1084 = vsel %vm982, %v1046, 0.0
        %v1085 = vsel %vm983, %v1050, 0.0
        %v1086 = vsel %vm984, %v1054, 0.0
        %v1087 = vsel %vm985, %v1042, 0.0
        %v1088 = vsel %vm986, %v1046, 0.0
        %v1089 = vsel %vm987, %v1050, 0.0
        %v1090 = vsel %vm988, %v1054, 0.0
        %v1091 = vsel %vm989, %v1042, 0.0
        %v1092 = vsel %vm990, %v1046, 0.0
        %v1093 = vsel %vm991, %v1050, 0.0
        %v1094 = vsel %vm992, %v1054, 0.0
        %v1095 = vsel %vm993, %v1042, 0.0
        %v1096 = vsel %vm994, %v1046, 0.0
        %v1097 = vsel %vm995, %v1050, 0.0
        %v1098 = vsel %vm996, %v1054, 0.0
        %v1099 = vsel %vm997, %v1042, 0.0
        %v1100 = vsel %vm998, %v1046, 0.0
        %v1101 = vsel %vm999, %v1050, 0.0
        %v1102 = vsel %vm1000, %v1054, 0.0
        %v1103 = vsel %vm1001, %v1042, 0.0
        %v1104 = vsel %vm1002, %v1046, 0.0
        %v1105 = vsel %vm1003, %v1050, 0.0
        %v1106 = vsel %vm1004, %v1054, 0.0
        %v1107 = vsel %vm1005, %v1042, 0.0
        %v1108 = vsel %vm1006, %v1046, 0.0
        %v1109 = vsel %vm1007, %v1050, 0.0
        %v1110 = vsel %vm1008, %v1054, 0.0
        %v1111 = vsel %vm1009, %v1042, 0.0
        %v1112 = vsel %vm1010, %v1046, 0.0
        %v1113 = vsel %vm1011, %v1050, 0.0
        %v1114 = vsel %vm1012, %v1054, 0.0
        %v1115 = vsel %vm1013, %v1042, 0.0
        %v1116 = vsel %vm1014, %v1046, 0.0
        %v1117 = vsel %vm1015, %v1050, 0.0
        %v1118 = vsel %vm1016, %v1054, 0.0
        %v1119 = vmul.f32 %v570, %v1055
        %v1120 = vmul.f32 %v572, %v1056
        %v1121 = vmul.f32 %v763, %v1057
        %v1122 = vmul.f32 %v765, %v1058
        %v1123 = vmul.f32 %v574, %v1059
        %v1124 = vmul.f32 %v576, %v1060
        %v1125 = vmul.f32 %v767, %v1061
        %v1126 = vmul.f32 %v769, %v1062
        %v1127 = vmul.f32 %v580, %v1063
        %v1128 = vmul.f32 %v582, %v1064
        %v1129 = vmul.f32 %v773, %v1065
        %v1130 = vmul.f32 %v775, %v1066
        %v1131 = vmul.f32 %v584, %v1067
        %v1132 = vmul.f32 %v586, %v1068
        %v1133 = vmul.f32 %v777, %v1069
        %v1134 = vmul.f32 %v779, %v1070
        %v1135 = vmul.f32 %v590, %v1071
        %v1136 = vmul.f32 %v592, %v1072
        %v1137 = vmul.f32 %v783, %v1073
        %v1138 = vmul.f32 %v785, %v1074
        %v1139 = vmul.f32 %v594, %v1075
        %v1140 = vmul.f32 %v596, %v1076
        %v1141 = vmul.f32 %v787, %v1077
        %v1142 = vmul.f32 %v789, %v1078
        %v1143 = vmul.f32 %v600, %v1079
        %v1144 = vmul.f32 %v602, %v1080
        %v1145 = vmul.f32 %v793, %v1081
        %v1146 = vmul.f32 %v795, %v1082
        %v1147 = vmul.f32 %v604, %v1083
        %v1148 = vmul.f32 %v606, %v1084
        %v1149 = vmul.f32 %v797, %v1085
        %v1150 = vmul.f32 %v799, %v1086
        %v1151 = vmul.f32 %v610, %v1087
        %v1152 = vmul.f32 %v612, %v1088
        %v1153 = vmul.f32 %v803, %v1089
        %v1154 = vmul.f32 %v805, %v1090
        %v1155 = vmul.f32 %v614, %v1091
        %v1156 = vmul.f32 %v616, %v1092
        %v1157 = vmul.f32 %v807, %v1093
        %v1158 = vmul.f32 %v809, %v1094
        %v1159 = vmul.f32 %v620, %v1095
        %v1160 = vmul.f32 %v622, %v1096
        %v1161 = vmul.f32 %v813, %v1097
        %v1162 = vmul.f32 %v815, %v1098
        %v1163 = vmul.f32 %v624, %v1099
        %v1164 = vmul.f32 %v626, %v1100
        %v1165 = vmul.f32 %v817, %v1101
        %v1166 = vmul.f32 %v819, %v1102
        %v1167 = vmul.f32 %v630, %v1103
        %v1168 = vmul.f32 %v632, %v1104
        %v1169 = vmul.f32 %v823, %v1105
        %v1170 = vmul.f32 %v825, %v1106
        %v1171 = vmul.f32 %v634, %v1107
        %v1172 = vmul.f32 %v636, %v1108
        %v1173 = vmul.f32 %v827, %v1109
        %v1174 = vmul.f32 %v829, %v1110
        %v1175 = vmul.f32 %v640, %v1111
        %v1176 = vmul.f32 %v642, %v1112
        %v1177 = vmul.f32 %v833, %v1113
        %v1178 = vmul.f32 %v835, %v1114
        %v1179 = vmul.f32 %v644, %v1115
        %v1180 = vmul.f32 %v646, %v1116
        %v1181 = vmul.f32 %v837, %v1117
        %v1182 = vmul.f32 %v839, %v1118
        %v1183 = vadd.f32 %v1119, %v1123
        %v1184 = vadd.f32 %v1183, %v1127
        %v1185 = vadd.f32 %v1184, %v1131
        %v1186 = vadd.f32 %v1185, %v1135
        %v1187 = vadd.f32 %v1186, %v1139
        %v1188 = vadd.f32 %v1187, %v1143
        %v1189 = vadd.f32 %v1188, %v1147
        %v1190 = vadd.f32 %v1189, %v1151
        %v1191 = vadd.f32 %v1190, %v1155
        %v1192 = vadd.f32 %v1191, %v1159
        %v1193 = vadd.f32 %v1192, %v1163
        %v1194 = vadd.f32 %v1193, %v1167
        %v1195 = vadd.f32 %v1194, %v1171
        %v1196 = vadd.f32 %v1195, %v1175
        %v1197 = vadd.f32 %v1196, %v1179
        %v1198 = vrot.slane %v1197, 4
        %v1199 = vadd.f32 %v1197, %v1198
        %v1200 = vrot.slane %v1199, 2
        %v1201 = vadd.f32 %v1199, %v1200
        %v1202 = vrot.slane %v1201, 1
        %v1203 = vadd.f32 %v1201, %v1202
        %v1204 = vadd.f32 %v1120, %v1124
        %v1205 = vadd.f32 %v1204, %v1128
        %v1206 = vadd.f32 %v1205, %v1132
        %v1207 = vadd.f32 %v1206, %v1136
        %v1208 = vadd.f32 %v1207, %v1140
        %v1209 = vadd.f32 %v1208, %v1144
        %v1210 = vadd.f32 %v1209, %v1148
        %v1211 = vadd.f32 %v1210, %v1152
        %v1212 = vadd.f32 %v1211, %v1156
        %v1213 = vadd.f32 %v1212, %v1160
        %v1214 = vadd.f32 %v1213, %v1164
        %v1215 = vadd.f32 %v1214, %v1168
        %v1216 = vadd.f32 %v1215, %v1172
        %v1217 = vadd.f32 %v1216, %v1176
        %v1218 = vadd.f32 %v1217, %v1180
        %v1219 = vrot.slane %v1218, 4
        %v1220 = vadd.f32 %v1218, %v1219
        %v1221 = vrot.slane %v1220, 2
        %v1222 = vadd.f32 %v1220, %v1221
        %v1223 = vrot.slane %v1222, 1
        %v1224 = vadd.f32 %v1222, %v1223
        %v1225 = vadd.f32 %v1121, %v1125
        %v1226 = vadd.f32 %v1225, %v1129
        %v1227 = vadd.f32 %v1226, %v1133
        %v1228 = vadd.f32 %v1227, %v1137
        %v1229 = vadd.f32 %v1228, %v1141
        %v1230 = vadd.f32 %v1229, %v1145
        %v1231 = vadd.f32 %v1230, %v1149
        %v1232 = vadd.f32 %v1231, %v1153
        %v1233 = vadd.f32 %v1232, %v1157
        %v1234 = vadd.f32 %v1233, %v1161
        %v1235 = vadd.f32 %v1234, %v1165
        %v1236 = vadd.f32 %v1235, %v1169
        %v1237 = vadd.f32 %v1236, %v1173
        %v1238 = vadd.f32 %v1237, %v1177
        %v1239 = vadd.f32 %v1238, %v1181
        %v1240 = vrot.slane %v1239, 4
        %v1241 = vadd.f32 %v1239, %v1240
        %v1242 = vrot.slane %v1241, 2
        %v1243 = vadd.f32 %v1241, %v1242
        %v1244 = vrot.slane %v1243, 1
        %v1245 = vadd.f32 %v1243, %v1244
        %v1246 = vadd.f32 %v1122, %v1126
        %v1247 = vadd.f32 %v1246, %v1130
        %v1248 = vadd.f32 %v1247, %v1134
        %v1249 = vadd.f32 %v1248, %v1138
        %v1250 = vadd.f32 %v1249, %v1142
        %v1251 = vadd.f32 %v1250, %v1146
        %v1252 = vadd.f32 %v1251, %v1150
        %v1253 = vadd.f32 %v1252, %v1154
        %v1254 = vadd.f32 %v1253, %v1158
        %v1255 = vadd.f32 %v1254, %v1162
        %v1256 = vadd.f32 %v1255, %v1166
        %v1257 = vadd.f32 %v1256, %v1170
        %v1258 = vadd.f32 %v1257, %v1174
        %v1259 = vadd.f32 %v1258, %v1178
        %v1260 = vadd.f32 %v1259, %v1182
        %v1261 = vrot.slane %v1260, 4
        %v1262 = vadd.f32 %v1260, %v1261
        %v1263 = vrot.slane %v1262, 2
        %v1264 = vadd.f32 %v1262, %v1263
        %v1265 = vrot.slane %v1264, 1
        %v1266 = vadd.f32 %v1264, %v1265
        %v1267 = vadd.f32 %v1203, 0.0
        %v1268 = vadd.f32 %v1224, 0.0
        %v1269 = vadd.f32 %v1245, 0.0
        %v1270 = vadd.f32 %v1266, 0.0
        %v1271 = vmul.f32 %v650, %v1055
        %v1272 = vmul.f32 %v652, %v1056
        %v1273 = vmul.f32 %v843, %v1057
        %v1274 = vmul.f32 %v845, %v1058
        %v1275 = vmul.f32 %v654, %v1059
        %v1276 = vmul.f32 %v656, %v1060
        %v1277 = vmul.f32 %v847, %v1061
        %v1278 = vmul.f32 %v849, %v1062
        %v1279 = vmul.f32 %v660, %v1063
        %v1280 = vmul.f32 %v662, %v1064
        %v1281 = vmul.f32 %v853, %v1065
        %v1282 = vmul.f32 %v855, %v1066
        %v1283 = vmul.f32 %v664, %v1067
        %v1284 = vmul.f32 %v666, %v1068
        %v1285 = vmul.f32 %v857, %v1069
        %v1286 = vmul.f32 %v859, %v1070
        %v1287 = vmul.f32 %v670, %v1071
        %v1288 = vmul.f32 %v672, %v1072
        %v1289 = vmul.f32 %v863, %v1073
        %v1290 = vmul.f32 %v865, %v1074
        %v1291 = vmul.f32 %v674, %v1075
        %v1292 = vmul.f32 %v676, %v1076
        %v1293 = vmul.f32 %v867, %v1077
        %v1294 = vmul.f32 %v869, %v1078
        %v1295 = vmul.f32 %v680, %v1079
        %v1296 = vmul.f32 %v682, %v1080
        %v1297 = vmul.f32 %v873, %v1081
        %v1298 = vmul.f32 %v875, %v1082
        %v1299 = vmul.f32 %v684, %v1083
        %v1300 = vmul.f32 %v686, %v1084
        %v1301 = vmul.f32 %v877, %v1085
        %v1302 = vmul.f32 %v879, %v1086
        %v1303 = vmul.f32 %v690, %v1087
        %v1304 = vmul.f32 %v692, %v1088
        %v1305 = vmul.f32 %v883, %v1089
        %v1306 = vmul.f32 %v885, %v1090
        %v1307 = vmul.f32 %v694, %v1091
        %v1308 = vmul.f32 %v696, %v1092
        %v1309 = vmul.f32 %v887, %v1093
        %v1310 = vmul.f32 %v889, %v1094
        %v1311 = vmul.f32 %v700, %v1095
        %v1312 = vmul.f32 %v702, %v1096
        %v1313 = vmul.f32 %v893, %v1097
        %v1314 = vmul.f32 %v895, %v1098
        %v1315 = vmul.f32 %v704, %v1099
        %v1316 = vmul.f32 %v706, %v1100
        %v1317 = vmul.f32 %v897, %v1101
        %v1318 = vmul.f32 %v899, %v1102
        %v1319 = vmul.f32 %v710, %v1103
        %v1320 = vmul.f32 %v712, %v1104
        %v1321 = vmul.f32 %v903, %v1105
        %v1322 = vmul.f32 %v905, %v1106
        %v1323 = vmul.f32 %v714, %v1107
        %v1324 = vmul.f32 %v716, %v1108
        %v1325 = vmul.f32 %v907, %v1109
        %v1326 = vmul.f32 %v909, %v1110
        %v1327 = vmul.f32 %v720, %v1111
        %v1328 = vmul.f32 %v722, %v1112
        %v1329 = vmul.f32 %v913, %v1113
        %v1330 = vmul.f32 %v915, %v1114
        %v1331 = vmul.f32 %v724, %v1115
        %v1332 = vmul.f32 %v726, %v1116
        %v1333 = vmul.f32 %v917, %v1117
        %v1334 = vmul.f32 %v919, %v1118
        %v1335 = vadd.f32 %v1271, %v1275
        %v1336 = vadd.f32 %v1335, %v1279
        %v1337 = vadd.f32 %v1336, %v1283
        %v1338 = vadd.f32 %v1337, %v1287
        %v1339 = vadd.f32 %v1338, %v1291
        %v1340 = vadd.f32 %v1339, %v1295
        %v1341 = vadd.f32 %v1340, %v1299
        %v1342 = vadd.f32 %v1341, %v1303
        %v1343 = vadd.f32 %v1342, %v1307
        %v1344 = vadd.f32 %v1343, %v1311
        %v1345 = vadd.f32 %v1344, %v1315
        %v1346 = vadd.f32 %v1345, %v1319
        %v1347 = vadd.f32 %v1346, %v1323
        %v1348 = vadd.f32 %v1347, %v1327
        %v1349 = vadd.f32 %v1348, %v1331
        %v1350 = vrot.slane %v1349, 4
        %v1351 = vadd.f32 %v1349, %v1350
        %v1352 = vrot.slane %v1351, 2
        %v1353 = vadd.f32 %v1351, %v1352
        %v1354 = vrot.slane %v1353, 1
        %v1355 = vadd.f32 %v1353, %v1354
        %v1356 = vadd.f32 %v1272, %v1276
        %v1357 = vadd.f32 %v1356, %v1280
        %v1358 = vadd.f32 %v1357, %v1284
        %v1359 = vadd.f32 %v1358, %v1288
        %v1360 = vadd.f32 %v1359, %v1292
        %v1361 = vadd.f32 %v1360, %v1296
        %v1362 = vadd.f32 %v1361, %v1300
        %v1363 = vadd.f32 %v1362, %v1304
        %v1364 = vadd.f32 %v1363, %v1308
        %v1365 = vadd.f32 %v1364, %v1312
        %v1366 = vadd.f32 %v1365, %v1316
        %v1367 = vadd.f32 %v1366, %v1320
        %v1368 = vadd.f32 %v1367, %v1324
        %v1369 = vadd.f32 %v1368, %v1328
        %v1370 = vadd.f32 %v1369, %v1332
        %v1371 = vrot.slane %v1370, 4
        %v1372 = vadd.f32 %v1370, %v1371
        %v1373 = vrot.slane %v1372, 2
        %v1374 = vadd.f32 %v1372, %v1373
        %v1375 = vrot.slane %v1374, 1
        %v1376 = vadd.f32 %v1374, %v1375
        %v1377 = vadd.f32 %v1273, %v1277
        %v1378 = vadd.f32 %v1377, %v1281
        %v1379 = vadd.f32 %v1378, %v1285
        %v1380 = vadd.f32 %v1379, %v1289
        %v1381 = vadd.f32 %v1380, %v1293
        %v1382 = vadd.f32 %v1381, %v1297
        %v1383 = vadd.f32 %v1382, %v1301
        %v1384 = vadd.f32 %v1383, %v1305
        %v1385 = vadd.f32 %v1384, %v1309
        %v1386 = vadd.f32 %v1385, %v1313
        %v1387 = vadd.f32 %v1386, %v1317
        %v1388 = vadd.f32 %v1387, %v1321
        %v1389 = vadd.f32 %v1388, %v1325
        %v1390 = vadd.f32 %v1389, %v1329
        %v1391 = vadd.f32 %v1390, %v1333
        %v1392 = vrot.slane %v1391, 4
        %v1393 = vadd.f32 %v1391, %v1392
        %v1394 = vrot.slane %v1393, 2
        %v1395 = vadd.f32 %v1393, %v1394
        %v1396 = vrot.slane %v1395, 1
        %v1397 = vadd.f32 %v1395, %v1396
        %v1398 = vadd.f32 %v1274, %v1278
        %v1399 = vadd.f32 %v1398, %v1282
        %v1400 = vadd.f32 %v1399, %v1286
        %v1401 = vadd.f32 %v1400, %v1290
        %v1402 = vadd.f32 %v1401, %v1294
        %v1403 = vadd.f32 %v1402, %v1298
        %v1404 = vadd.f32 %v1403, %v1302
        %v1405 = vadd.f32 %v1404, %v1306
        %v1406 = vadd.f32 %v1405, %v1310
        %v1407 = vadd.f32 %v1406, %v1314
        %v1408 = vadd.f32 %v1407, %v1318
        %v1409 = vadd.f32 %v1408, %v1322
        %v1410 = vadd.f32 %v1409, %v1326
        %v1411 = vadd.f32 %v1410, %v1330
        %v1412 = vadd.f32 %v1411, %v1334
        %v1413 = vrot.slane %v1412, 4
        %v1414 = vadd.f32 %v1412, %v1413
        %v1415 = vrot.slane %v1414, 2
        %v1416 = vadd.f32 %v1414, %v1415
        %v1417 = vrot.slane %v1416, 1
        %v1418 = vadd.f32 %v1416, %v1417
        %v1419 = vadd.f32 %v1355, 0.0
        %v1420 = vadd.f32 %v1376, 0.0
        %v1421 = vadd.f32 %v1397, 0.0
        %v1422 = vadd.f32 %v1418, 0.0
        %v1423 = vadd.s32 %v219, 1
        %v1424 = vadd.s32 %v220, 1
        %v1425 = vmul.u32 %v1423, %v270
        %v1426 = vmul.u32 %v1424, %v270
        %v1427 = vmul.f32 %v215, %v276
        %v1428 = vmul.f32 %v216, %v278
        %v1429 = vadd.s32 %v1425, %v287
        %v1430 = vadd.s32 %v1426, %v289
        %v1431 = vxor.u32 %v1423, %v295
        %v1432 = vxor.u32 %v1424, %v297
        %v1433 = vmul.f32 %v1427, %v301
        %v1434 = vmul.f32 %v1428, %v303
        %v1435 = vadd.s32 %v1429, %v312
        %v1436 = vadd.s32 %v1430, %v314
        %v1437 = vxor.u32 %v1431, %v320
        %v1438 = vxor.u32 %v1432, %v322
        %v1439 = vand.u32 %v1437, %v325
        %v1440 = vand.u32 %v1438, %v325
        %v1441 = vmul.u32 %v328, %v1435
        %v1442 = vmul.u32 %v328, %v1436
        %v1443 = vmul.u32 %v332, %v1439
        %v1444 = vmul.u32 %v332, %v1440
        %v1445 = vadd.s32 %v1441, %v1443
        %v1446 = vadd.s32 %v1442, %v1444
        %vm1447 = vcmp.gt.s32.totalorder %v1445, 0
        %v1448 = vsel %vm1447, %v1445, 0
        %vm1449 = vcmp.gt.s32.totalorder %v1446, 0
        %v1450 = vsel %vm1449, %v1446, 0
        %vm1451 = vcmp.lt.s32.totalorder %v325, %v1448
        %v1452 = vsel %vm1451, %v325, %v1448
        %vm1453 = vcmp.lt.s32.totalorder %v325, %v1450
        %v1454 = vsel %vm1453, %v325, %v1450
        %v1455 = vshrl.u32 %v1452, 7
        %v1456 = vshrl.u32 %v1454, 7
        %v1457 = vand.u32 %v1452, 127
        %v1458 = vand.u32 %v1454, 127
        %v1459 = vlaneseq
        %v1460 = vshrl.u32 %v1459, 7
        %v1461 = vsub.s32 0, %v1460
        %v1462 = vrot.slane %v1455, %v1461
        %v1463 = vlaneseq
        %v1464 = vshrl.u32 %v1463, 7
        %v1465 = vsub.s32 4, %v1464
        %v1466 = vrot.slane %v1455, %v1465
        %v1467 = vlaneseq
        %v1468 = vshrl.u32 %v1467, 7
        %v1469 = vsub.s32 0, %v1468
        %v1470 = vrot.slane %v1456, %v1469
        %v1471 = vlaneseq
        %v1472 = vshrl.u32 %v1471, 7
        %v1473 = vsub.s32 4, %v1472
        %v1474 = vrot.slane %v1456, %v1473
        %v1475 = vlaneseq
        %v1476 = vshrl.u32 %v1475, 7
        %v1477 = vsub.s32 0, %v1476
        %v1478 = vrot.slane %v1462, %v1477
        %v1479 = vlaneseq
        %v1480 = vshrl.u32 %v1479, 7
        %v1481 = vsub.s32 0, %v1480
        %v1482 = vrot.slane %v1466, %v1481
        %v1483 = vlaneseq
        %v1484 = vshrl.u32 %v1483, 7
        %v1485 = vsub.s32 0, %v1484
        %v1486 = vrot.slane %v1470, %v1485
        %v1487 = vlaneseq
        %v1488 = vshrl.u32 %v1487, 7
        %v1489 = vsub.s32 0, %v1488
        %v1490 = vrot.slane %v1474, %v1489
        %vm1491 = vcmp.eq.s32.totalorder %v254, %v1478
        %vm1492 = vcmp.eq.s32.totalorder %v254, %v1482
        %vm1493 = vcmp.eq.s32.totalorder %v254, %v1486
        %vm1494 = vcmp.eq.s32.totalorder %v254, %v1490
        %v1495 = vsel %vm1491, 1.0, 0.0
        %v1496 = vsel %vm1492, 1.0, 0.0
        %v1497 = vsel %vm1493, 1.0, 0.0
        %v1498 = vsel %vm1494, 1.0, 0.0
        %v1499 = vpack.c.bf16 %v1495, %v1495
        %v1500 = vpack.c.bf16 %v1496, %v1496
        %v1501 = vpack.c.bf16 %v1497, %v1497
        %v1502 = vpack.c.bf16 %v1498, %v1498
        %v1504 = vsel %vm522, %v1499, 0
        %v1507 = vsel %vm522, %v1500, 0
        %v1510 = vsel %vm522, %v1501, 0
        %v1513 = vsel %vm522, %v1502, 0
        %1515 = vmatprep.subr.bf16.mxu0 %v1507
        %1516 = vmatpush1.bf16.msra.mxu0 %v1504
        %1517 = vmatprep.subr.bf16.mxu0 0
        %1518 = vmatpush1.bf16.msra.mxu0 0
        %1519 = vmatprep.subr.bf16.mxu0 0
        %1520 = vmatpush1.bf16.msra.mxu0 0
        %1521 = vmatprep.subr.bf16.mxu0 0
        %1522 = vmatpush1.bf16.msra.mxu0 0
        %1523 = vmatprep.subr.bf16.mxu0 0
        %1524 = vmatpush1.bf16.msra.mxu0 0
        %1525 = vmatprep.subr.bf16.mxu0 0
        %1526 = vmatpush1.bf16.msra.mxu0 0
        %1527 = vmatprep.subr.bf16.mxu0 0
        %1528 = vmatpush1.bf16.msra.mxu0 0
        %1529 = vmatprep.subr.bf16.mxu0 0
        %1530 = vmatpush1.bf16.msra.mxu0 0
        %1531 = vmatprep.subr.bf16.mxu0 0
        %1532 = vmatpush1.bf16.msra.mxu0 0
        %1533 = vmatprep.subr.bf16.mxu0 0
        %1534 = vmatpush1.bf16.msra.mxu0 0
        %1535 = vmatprep.subr.bf16.mxu0 0
        %1536 = vmatpush1.bf16.msra.mxu0 0
        %1537 = vmatprep.subr.bf16.mxu0 0
        %1538 = vmatpush1.bf16.msra.mxu0 0
        %1539 = vmatprep.subr.bf16.mxu0 0
        %1540 = vmatpush1.bf16.msra.mxu0 0
        %1541 = vmatprep.subr.bf16.mxu0 0
        %1542 = vmatpush1.bf16.msra.mxu0 0
        %1543 = vmatprep.subr.bf16.mxu0 0
        %1544 = vmatpush1.bf16.msra.mxu0 0
        %1545 = vmatprep.subr.bf16.mxu0 0
        %1546 = vmatpush1.bf16.msra.mxu0 0
        %1547 = vmatprep.mubr.bf16.mxu0 0
        %1548 = vmatmul.mubr.bf16.gmra.mrb[0].mxu0 %v475
        %v1549 = vpop.f32.mrb[0].mxu0
        %v1550 = vadd.f32 0.0, %v1549
        %v1551 = vpop.f32.mrb[0].mxu0
        %v1552 = vadd.f32 0.0, %v1551
        %v1553 = vpop.f32.mrb[0].mxu0
        %v1554 = vadd.f32 0.0, %v1553
        %v1555 = vpop.f32.mrb[0].mxu0
        %v1556 = vadd.f32 0.0, %v1555
        %1557 = vmatprep.mubr.bf16.mxu0 0
        %1558 = vmatmul.mubr.bf16.gmra.mrb[0].mxu0 %v478
        %v1559 = vpop.f32.mrb[0].mxu0
        %v1560 = vadd.f32 0.0, %v1559
        %v1561 = vpop.f32.mrb[0].mxu0
        %v1562 = vadd.f32 0.0, %v1561
        %v1563 = vpop.f32.mrb[0].mxu0
        %v1564 = vadd.f32 0.0, %v1563
        %v1565 = vpop.f32.mrb[0].mxu0
        %v1566 = vadd.f32 0.0, %v1565
        %1567 = vmatprep.mubr.bf16.mxu0 0
        %1568 = vmatmul.mubr.bf16.gmra.mrb[0].mxu0 %v481
        %v1569 = vpop.f32.mrb[0].mxu0
        %v1570 = vadd.f32 0.0, %v1569
        %v1571 = vpop.f32.mrb[0].mxu0
        %v1572 = vadd.f32 0.0, %v1571
        %v1573 = vpop.f32.mrb[0].mxu0
        %v1574 = vadd.f32 0.0, %v1573
        %v1575 = vpop.f32.mrb[0].mxu0
        %v1576 = vadd.f32 0.0, %v1575
        %1577 = vmatprep.mubr.bf16.mxu0 0
        %1578 = vmatmul.mubr.bf16.gmra.mrb[0].mxu0 %v484
        %v1579 = vpop.f32.mrb[0].mxu0
        %v1580 = vadd.f32 0.0, %v1579
        %v1581 = vpop.f32.mrb[0].mxu0
        %v1582 = vadd.f32 0.0, %v1581
        %v1583 = vpop.f32.mrb[0].mxu0
        %v1584 = vadd.f32 0.0, %v1583
        %v1585 = vpop.f32.mrb[0].mxu0
        %v1586 = vadd.f32 0.0, %v1585
        %1587 = vmatprep.mubr.bf16.mxu0 0
        %1588 = vmatmul.mubr.bf16.gmra.mrb[0].mxu0 %v487
        %v1589 = vpop.f32.mrb[0].mxu0
        %v1590 = vadd.f32 0.0, %v1589
        %v1591 = vpop.f32.mrb[0].mxu0
        %v1592 = vadd.f32 0.0, %v1591
        %v1593 = vpop.f32.mrb[0].mxu0
        %v1594 = vadd.f32 0.0, %v1593
        %v1595 = vpop.f32.mrb[0].mxu0
        %v1596 = vadd.f32 0.0, %v1595
        %1597 = vmatprep.mubr.bf16.mxu0 0
        %1598 = vmatmul.mubr.bf16.gmra.mrb[0].mxu0 %v490
        %v1599 = vpop.f32.mrb[0].mxu0
        %v1600 = vadd.f32 0.0, %v1599
        %v1601 = vpop.f32.mrb[0].mxu0
        %v1602 = vadd.f32 0.0, %v1601
        %v1603 = vpop.f32.mrb[0].mxu0
        %v1604 = vadd.f32 0.0, %v1603
        %v1605 = vpop.f32.mrb[0].mxu0
        %v1606 = vadd.f32 0.0, %v1605
        %1607 = vmatprep.mubr.bf16.mxu0 0
        %1608 = vmatmul.mubr.bf16.gmra.mrb[0].mxu0 %v493
        %v1609 = vpop.f32.mrb[0].mxu0
        %v1610 = vadd.f32 0.0, %v1609
        %v1611 = vpop.f32.mrb[0].mxu0
        %v1612 = vadd.f32 0.0, %v1611
        %v1613 = vpop.f32.mrb[0].mxu0
        %v1614 = vadd.f32 0.0, %v1613
        %v1615 = vpop.f32.mrb[0].mxu0
        %v1616 = vadd.f32 0.0, %v1615
        %1617 = vmatprep.mubr.bf16.mxu0 0
        %1618 = vmatmul.mubr.bf16.gmra.mrb[0].mxu0 %v496
        %v1619 = vpop.f32.mrb[0].mxu0
        %v1620 = vadd.f32 0.0, %v1619
        %v1621 = vpop.f32.mrb[0].mxu0
        %v1622 = vadd.f32 0.0, %v1621
        %v1623 = vpop.f32.mrb[0].mxu0
        %v1624 = vadd.f32 0.0, %v1623
        %v1625 = vpop.f32.mrb[0].mxu0
        %v1626 = vadd.f32 0.0, %v1625
        %1627 = vmatprep.mubr.bf16.mxu0 0
        %1628 = vmatmul.mubr.bf16.gmra.mrb[0].mxu0 %v499
        %v1629 = vpop.f32.mrb[0].mxu0
        %v1630 = vadd.f32 0.0, %v1629
        %v1631 = vpop.f32.mrb[0].mxu0
        %v1632 = vadd.f32 0.0, %v1631
        %v1633 = vpop.f32.mrb[0].mxu0
        %v1634 = vadd.f32 0.0, %v1633
        %v1635 = vpop.f32.mrb[0].mxu0
        %v1636 = vadd.f32 0.0, %v1635
        %1637 = vmatprep.mubr.bf16.mxu0 0
        %1638 = vmatmul.mubr.bf16.gmra.mrb[0].mxu0 %v502
        %v1639 = vpop.f32.mrb[0].mxu0
        %v1640 = vadd.f32 0.0, %v1639
        %v1641 = vpop.f32.mrb[0].mxu0
        %v1642 = vadd.f32 0.0, %v1641
        %v1643 = vpop.f32.mrb[0].mxu0
        %v1644 = vadd.f32 0.0, %v1643
        %v1645 = vpop.f32.mrb[0].mxu0
        %v1646 = vadd.f32 0.0, %v1645
        %1647 = vmatprep.mubr.bf16.mxu0 0
        %1648 = vmatmul.mubr.bf16.gmra.mrb[0].mxu0 %v505
        %v1649 = vpop.f32.mrb[0].mxu0
        %v1650 = vadd.f32 0.0, %v1649
        %v1651 = vpop.f32.mrb[0].mxu0
        %v1652 = vadd.f32 0.0, %v1651
        %v1653 = vpop.f32.mrb[0].mxu0
        %v1654 = vadd.f32 0.0, %v1653
        %v1655 = vpop.f32.mrb[0].mxu0
        %v1656 = vadd.f32 0.0, %v1655
        %1657 = vmatprep.mubr.bf16.mxu0 0
        %1658 = vmatmul.mubr.bf16.gmra.mrb[0].mxu0 %v508
        %v1659 = vpop.f32.mrb[0].mxu0
        %v1660 = vadd.f32 0.0, %v1659
        %v1661 = vpop.f32.mrb[0].mxu0
        %v1662 = vadd.f32 0.0, %v1661
        %v1663 = vpop.f32.mrb[0].mxu0
        %v1664 = vadd.f32 0.0, %v1663
        %v1665 = vpop.f32.mrb[0].mxu0
        %v1666 = vadd.f32 0.0, %v1665
        %1667 = vmatprep.mubr.bf16.mxu0 0
        %1668 = vmatmul.mubr.bf16.gmra.mrb[0].mxu0 %v511
        %v1669 = vpop.f32.mrb[0].mxu0
        %v1670 = vadd.f32 0.0, %v1669
        %v1671 = vpop.f32.mrb[0].mxu0
        %v1672 = vadd.f32 0.0, %v1671
        %v1673 = vpop.f32.mrb[0].mxu0
        %v1674 = vadd.f32 0.0, %v1673
        %v1675 = vpop.f32.mrb[0].mxu0
        %v1676 = vadd.f32 0.0, %v1675
        %1677 = vmatprep.mubr.bf16.mxu0 0
        %1678 = vmatmul.mubr.bf16.gmra.mrb[0].mxu0 %v514
        %v1679 = vpop.f32.mrb[0].mxu0
        %v1680 = vadd.f32 0.0, %v1679
        %v1681 = vpop.f32.mrb[0].mxu0
        %v1682 = vadd.f32 0.0, %v1681
        %v1683 = vpop.f32.mrb[0].mxu0
        %v1684 = vadd.f32 0.0, %v1683
        %v1685 = vpop.f32.mrb[0].mxu0
        %v1686 = vadd.f32 0.0, %v1685
        %1687 = vmatprep.mubr.bf16.mxu0 0
        %1688 = vmatmul.mubr.bf16.gmra.mrb[0].mxu0 %v517
        %v1689 = vpop.f32.mrb[0].mxu0
        %v1690 = vadd.f32 0.0, %v1689
        %v1691 = vpop.f32.mrb[0].mxu0
        %v1692 = vadd.f32 0.0, %v1691
        %v1693 = vpop.f32.mrb[0].mxu0
        %v1694 = vadd.f32 0.0, %v1693
        %v1695 = vpop.f32.mrb[0].mxu0
        %v1696 = vadd.f32 0.0, %v1695
        %1697 = vmatprep.mubr.bf16.mxu0 0
        %1698 = vmatmul.mubr.bf16.gmra.mrb[0].mxu0 %v520
        %v1699 = vpop.f32.mrb[0].mxu0
        %v1700 = vadd.f32 0.0, %v1699
        %v1701 = vpop.f32.mrb[0].mxu0
        %v1702 = vadd.f32 0.0, %v1701
        %v1703 = vpop.f32.mrb[0].mxu0
        %v1704 = vadd.f32 0.0, %v1703
        %v1705 = vpop.f32.mrb[0].mxu0
        %v1706 = vadd.f32 0.0, %v1705
        %1707 = vdwg.mxu0
        %1708 = vmatprep.subr.bf16.mxu0 %v1513
        %1709 = vmatpush1.bf16.msra.mxu0 %v1510
        %1710 = vmatprep.subr.bf16.mxu0 0
        %1711 = vmatpush1.bf16.msra.mxu0 0
        %1712 = vmatprep.subr.bf16.mxu0 0
        %1713 = vmatpush1.bf16.msra.mxu0 0
        %1714 = vmatprep.subr.bf16.mxu0 0
        %1715 = vmatpush1.bf16.msra.mxu0 0
        %1716 = vmatprep.subr.bf16.mxu0 0
        %1717 = vmatpush1.bf16.msra.mxu0 0
        %1718 = vmatprep.subr.bf16.mxu0 0
        %1719 = vmatpush1.bf16.msra.mxu0 0
        %1720 = vmatprep.subr.bf16.mxu0 0
        %1721 = vmatpush1.bf16.msra.mxu0 0
        %1722 = vmatprep.subr.bf16.mxu0 0
        %1723 = vmatpush1.bf16.msra.mxu0 0
        %1724 = vmatprep.subr.bf16.mxu0 0
        %1725 = vmatpush1.bf16.msra.mxu0 0
        %1726 = vmatprep.subr.bf16.mxu0 0
        %1727 = vmatpush1.bf16.msra.mxu0 0
        %1728 = vmatprep.subr.bf16.mxu0 0
        %1729 = vmatpush1.bf16.msra.mxu0 0
        %1730 = vmatprep.subr.bf16.mxu0 0
        %1731 = vmatpush1.bf16.msra.mxu0 0
        %1732 = vmatprep.subr.bf16.mxu0 0
        %1733 = vmatpush1.bf16.msra.mxu0 0
        %1734 = vmatprep.subr.bf16.mxu0 0
        %1735 = vmatpush1.bf16.msra.mxu0 0
        %1736 = vmatprep.subr.bf16.mxu0 0
        %1737 = vmatpush1.bf16.msra.mxu0 0
        %1738 = vmatprep.subr.bf16.mxu0 0
        %1739 = vmatpush1.bf16.msra.mxu0 0
        %1740 = vmatprep.mubr.bf16.mxu0 0
        %1741 = vmatmul.mubr.bf16.gmra.mrb[0].mxu0 %v475
        %v1742 = vpop.f32.mrb[0].mxu0
        %v1743 = vadd.f32 0.0, %v1742
        %v1744 = vpop.f32.mrb[0].mxu0
        %v1745 = vadd.f32 0.0, %v1744
        %v1746 = vpop.f32.mrb[0].mxu0
        %v1747 = vadd.f32 0.0, %v1746
        %v1748 = vpop.f32.mrb[0].mxu0
        %v1749 = vadd.f32 0.0, %v1748
        %1750 = vmatprep.mubr.bf16.mxu0 0
        %1751 = vmatmul.mubr.bf16.gmra.mrb[0].mxu0 %v478
        %v1752 = vpop.f32.mrb[0].mxu0
        %v1753 = vadd.f32 0.0, %v1752
        %v1754 = vpop.f32.mrb[0].mxu0
        %v1755 = vadd.f32 0.0, %v1754
        %v1756 = vpop.f32.mrb[0].mxu0
        %v1757 = vadd.f32 0.0, %v1756
        %v1758 = vpop.f32.mrb[0].mxu0
        %v1759 = vadd.f32 0.0, %v1758
        %1760 = vmatprep.mubr.bf16.mxu0 0
        %1761 = vmatmul.mubr.bf16.gmra.mrb[0].mxu0 %v481
        %v1762 = vpop.f32.mrb[0].mxu0
        %v1763 = vadd.f32 0.0, %v1762
        %v1764 = vpop.f32.mrb[0].mxu0
        %v1765 = vadd.f32 0.0, %v1764
        %v1766 = vpop.f32.mrb[0].mxu0
        %v1767 = vadd.f32 0.0, %v1766
        %v1768 = vpop.f32.mrb[0].mxu0
        %v1769 = vadd.f32 0.0, %v1768
        %1770 = vmatprep.mubr.bf16.mxu0 0
        %1771 = vmatmul.mubr.bf16.gmra.mrb[0].mxu0 %v484
        %v1772 = vpop.f32.mrb[0].mxu0
        %v1773 = vadd.f32 0.0, %v1772
        %v1774 = vpop.f32.mrb[0].mxu0
        %v1775 = vadd.f32 0.0, %v1774
        %v1776 = vpop.f32.mrb[0].mxu0
        %v1777 = vadd.f32 0.0, %v1776
        %v1778 = vpop.f32.mrb[0].mxu0
        %v1779 = vadd.f32 0.0, %v1778
        %1780 = vmatprep.mubr.bf16.mxu0 0
        %1781 = vmatmul.mubr.bf16.gmra.mrb[0].mxu0 %v487
        %v1782 = vpop.f32.mrb[0].mxu0
        %v1783 = vadd.f32 0.0, %v1782
        %v1784 = vpop.f32.mrb[0].mxu0
        %v1785 = vadd.f32 0.0, %v1784
        %v1786 = vpop.f32.mrb[0].mxu0
        %v1787 = vadd.f32 0.0, %v1786
        %v1788 = vpop.f32.mrb[0].mxu0
        %v1789 = vadd.f32 0.0, %v1788
        %1790 = vmatprep.mubr.bf16.mxu0 0
        %1791 = vmatmul.mubr.bf16.gmra.mrb[0].mxu0 %v490
        %v1792 = vpop.f32.mrb[0].mxu0
        %v1793 = vadd.f32 0.0, %v1792
        %v1794 = vpop.f32.mrb[0].mxu0
        %v1795 = vadd.f32 0.0, %v1794
        %v1796 = vpop.f32.mrb[0].mxu0
        %v1797 = vadd.f32 0.0, %v1796
        %v1798 = vpop.f32.mrb[0].mxu0
        %v1799 = vadd.f32 0.0, %v1798
        %1800 = vmatprep.mubr.bf16.mxu0 0
        %1801 = vmatmul.mubr.bf16.gmra.mrb[0].mxu0 %v493
        %v1802 = vpop.f32.mrb[0].mxu0
        %v1803 = vadd.f32 0.0, %v1802
        %v1804 = vpop.f32.mrb[0].mxu0
        %v1805 = vadd.f32 0.0, %v1804
        %v1806 = vpop.f32.mrb[0].mxu0
        %v1807 = vadd.f32 0.0, %v1806
        %v1808 = vpop.f32.mrb[0].mxu0
        %v1809 = vadd.f32 0.0, %v1808
        %1810 = vmatprep.mubr.bf16.mxu0 0
        %1811 = vmatmul.mubr.bf16.gmra.mrb[0].mxu0 %v496
        %v1812 = vpop.f32.mrb[0].mxu0
        %v1813 = vadd.f32 0.0, %v1812
        %v1814 = vpop.f32.mrb[0].mxu0
        %v1815 = vadd.f32 0.0, %v1814
        %v1816 = vpop.f32.mrb[0].mxu0
        %v1817 = vadd.f32 0.0, %v1816
        %v1818 = vpop.f32.mrb[0].mxu0
        %v1819 = vadd.f32 0.0, %v1818
        %1820 = vmatprep.mubr.bf16.mxu0 0
        %1821 = vmatmul.mubr.bf16.gmra.mrb[0].mxu0 %v499
        %v1822 = vpop.f32.mrb[0].mxu0
        %v1823 = vadd.f32 0.0, %v1822
        %v1824 = vpop.f32.mrb[0].mxu0
        %v1825 = vadd.f32 0.0, %v1824
        %v1826 = vpop.f32.mrb[0].mxu0
        %v1827 = vadd.f32 0.0, %v1826
        %v1828 = vpop.f32.mrb[0].mxu0
        %v1829 = vadd.f32 0.0, %v1828
        %1830 = vmatprep.mubr.bf16.mxu0 0
        %1831 = vmatmul.mubr.bf16.gmra.mrb[0].mxu0 %v502
        %v1832 = vpop.f32.mrb[0].mxu0
        %v1833 = vadd.f32 0.0, %v1832
        %v1834 = vpop.f32.mrb[0].mxu0
        %v1835 = vadd.f32 0.0, %v1834
        %v1836 = vpop.f32.mrb[0].mxu0
        %v1837 = vadd.f32 0.0, %v1836
        %v1838 = vpop.f32.mrb[0].mxu0
        %v1839 = vadd.f32 0.0, %v1838
        %1840 = vmatprep.mubr.bf16.mxu0 0
        %1841 = vmatmul.mubr.bf16.gmra.mrb[0].mxu0 %v505
        %v1842 = vpop.f32.mrb[0].mxu0
        %v1843 = vadd.f32 0.0, %v1842
        %v1844 = vpop.f32.mrb[0].mxu0
        %v1845 = vadd.f32 0.0, %v1844
        %v1846 = vpop.f32.mrb[0].mxu0
        %v1847 = vadd.f32 0.0, %v1846
        %v1848 = vpop.f32.mrb[0].mxu0
        %v1849 = vadd.f32 0.0, %v1848
        %1850 = vmatprep.mubr.bf16.mxu0 0
        %1851 = vmatmul.mubr.bf16.gmra.mrb[0].mxu0 %v508
        %v1852 = vpop.f32.mrb[0].mxu0
        %v1853 = vadd.f32 0.0, %v1852
        %v1854 = vpop.f32.mrb[0].mxu0
        %v1855 = vadd.f32 0.0, %v1854
        %v1856 = vpop.f32.mrb[0].mxu0
        %v1857 = vadd.f32 0.0, %v1856
        %v1858 = vpop.f32.mrb[0].mxu0
        %v1859 = vadd.f32 0.0, %v1858
        %1860 = vmatprep.mubr.bf16.mxu0 0
        %1861 = vmatmul.mubr.bf16.gmra.mrb[0].mxu0 %v511
        %v1862 = vpop.f32.mrb[0].mxu0
        %v1863 = vadd.f32 0.0, %v1862
        %v1864 = vpop.f32.mrb[0].mxu0
        %v1865 = vadd.f32 0.0, %v1864
        %v1866 = vpop.f32.mrb[0].mxu0
        %v1867 = vadd.f32 0.0, %v1866
        %v1868 = vpop.f32.mrb[0].mxu0
        %v1869 = vadd.f32 0.0, %v1868
        %1870 = vmatprep.mubr.bf16.mxu0 0
        %1871 = vmatmul.mubr.bf16.gmra.mrb[0].mxu0 %v514
        %v1872 = vpop.f32.mrb[0].mxu0
        %v1873 = vadd.f32 0.0, %v1872
        %v1874 = vpop.f32.mrb[0].mxu0
        %v1875 = vadd.f32 0.0, %v1874
        %v1876 = vpop.f32.mrb[0].mxu0
        %v1877 = vadd.f32 0.0, %v1876
        %v1878 = vpop.f32.mrb[0].mxu0
        %v1879 = vadd.f32 0.0, %v1878
        %1880 = vmatprep.mubr.bf16.mxu0 0
        %1881 = vmatmul.mubr.bf16.gmra.mrb[0].mxu0 %v517
        %v1882 = vpop.f32.mrb[0].mxu0
        %v1883 = vadd.f32 0.0, %v1882
        %v1884 = vpop.f32.mrb[0].mxu0
        %v1885 = vadd.f32 0.0, %v1884
        %v1886 = vpop.f32.mrb[0].mxu0
        %v1887 = vadd.f32 0.0, %v1886
        %v1888 = vpop.f32.mrb[0].mxu0
        %v1889 = vadd.f32 0.0, %v1888
        %1890 = vmatprep.mubr.bf16.mxu0 0
        %1891 = vmatmul.mubr.bf16.gmra.mrb[0].mxu0 %v520
        %v1892 = vpop.f32.mrb[0].mxu0
        %v1893 = vadd.f32 0.0, %v1892
        %v1894 = vpop.f32.mrb[0].mxu0
        %v1895 = vadd.f32 0.0, %v1894
        %v1896 = vpop.f32.mrb[0].mxu0
        %v1897 = vadd.f32 0.0, %v1896
        %v1898 = vpop.f32.mrb[0].mxu0
        %v1899 = vadd.f32 0.0, %v1898
        %1900 = vdwg.mxu0
        %v1901 = vlaneseq
        %v1902 = vshrl.u32 %v1901, 7
        %v1903 = vsub.s32 0, %v1902
        %v1904 = vrot.slane %v1457, %v1903
        %v1905 = vlaneseq
        %v1906 = vshrl.u32 %v1905, 7
        %v1907 = vsub.s32 4, %v1906
        %v1908 = vrot.slane %v1457, %v1907
        %v1909 = vlaneseq
        %v1910 = vshrl.u32 %v1909, 7
        %v1911 = vsub.s32 0, %v1910
        %v1912 = vrot.slane %v1458, %v1911
        %v1913 = vlaneseq
        %v1914 = vshrl.u32 %v1913, 7
        %v1915 = vsub.s32 4, %v1914
        %v1916 = vrot.slane %v1458, %v1915
        %v1917 = vlaneseq
        %v1918 = vshrl.u32 %v1917, 7
        %v1919 = vsub.s32 0, %v1918
        %v1920 = vrot.slane %v1904, %v1919
        %v1921 = vlaneseq
        %v1922 = vshrl.u32 %v1921, 7
        %v1923 = vsub.s32 0, %v1922
        %v1924 = vrot.slane %v1908, %v1923
        %v1925 = vlaneseq
        %v1926 = vshrl.u32 %v1925, 7
        %v1927 = vsub.s32 0, %v1926
        %v1928 = vrot.slane %v1912, %v1927
        %v1929 = vlaneseq
        %v1930 = vshrl.u32 %v1929, 7
        %v1931 = vsub.s32 0, %v1930
        %v1932 = vrot.slane %v1916, %v1931
        %vm1933 = vcmp.eq.s32.totalorder %v254, %v1920
        %vm1934 = vcmp.eq.s32.totalorder %v254, %v1924
        %vm1935 = vcmp.eq.s32.totalorder %v254, %v1928
        %vm1936 = vcmp.eq.s32.totalorder %v254, %v1932
        %vm1937 = vcmp.eq.s32.totalorder %v255, %v1920
        %vm1938 = vcmp.eq.s32.totalorder %v255, %v1924
        %vm1939 = vcmp.eq.s32.totalorder %v255, %v1928
        %vm1940 = vcmp.eq.s32.totalorder %v255, %v1932
        %vm1941 = vcmp.eq.s32.totalorder %v256, %v1920
        %vm1942 = vcmp.eq.s32.totalorder %v256, %v1924
        %vm1943 = vcmp.eq.s32.totalorder %v256, %v1928
        %vm1944 = vcmp.eq.s32.totalorder %v256, %v1932
        %vm1945 = vcmp.eq.s32.totalorder %v257, %v1920
        %vm1946 = vcmp.eq.s32.totalorder %v257, %v1924
        %vm1947 = vcmp.eq.s32.totalorder %v257, %v1928
        %vm1948 = vcmp.eq.s32.totalorder %v257, %v1932
        %vm1949 = vcmp.eq.s32.totalorder %v258, %v1920
        %vm1950 = vcmp.eq.s32.totalorder %v258, %v1924
        %vm1951 = vcmp.eq.s32.totalorder %v258, %v1928
        %vm1952 = vcmp.eq.s32.totalorder %v258, %v1932
        %vm1953 = vcmp.eq.s32.totalorder %v259, %v1920
        %vm1954 = vcmp.eq.s32.totalorder %v259, %v1924
        %vm1955 = vcmp.eq.s32.totalorder %v259, %v1928
        %vm1956 = vcmp.eq.s32.totalorder %v259, %v1932
        %vm1957 = vcmp.eq.s32.totalorder %v260, %v1920
        %vm1958 = vcmp.eq.s32.totalorder %v260, %v1924
        %vm1959 = vcmp.eq.s32.totalorder %v260, %v1928
        %vm1960 = vcmp.eq.s32.totalorder %v260, %v1932
        %vm1961 = vcmp.eq.s32.totalorder %v261, %v1920
        %vm1962 = vcmp.eq.s32.totalorder %v261, %v1924
        %vm1963 = vcmp.eq.s32.totalorder %v261, %v1928
        %vm1964 = vcmp.eq.s32.totalorder %v261, %v1932
        %vm1965 = vcmp.eq.s32.totalorder %v262, %v1920
        %vm1966 = vcmp.eq.s32.totalorder %v262, %v1924
        %vm1967 = vcmp.eq.s32.totalorder %v262, %v1928
        %vm1968 = vcmp.eq.s32.totalorder %v262, %v1932
        %vm1969 = vcmp.eq.s32.totalorder %v263, %v1920
        %vm1970 = vcmp.eq.s32.totalorder %v263, %v1924
        %vm1971 = vcmp.eq.s32.totalorder %v263, %v1928
        %vm1972 = vcmp.eq.s32.totalorder %v263, %v1932
        %vm1973 = vcmp.eq.s32.totalorder %v264, %v1920
        %vm1974 = vcmp.eq.s32.totalorder %v264, %v1924
        %vm1975 = vcmp.eq.s32.totalorder %v264, %v1928
        %vm1976 = vcmp.eq.s32.totalorder %v264, %v1932
        %vm1977 = vcmp.eq.s32.totalorder %v265, %v1920
        %vm1978 = vcmp.eq.s32.totalorder %v265, %v1924
        %vm1979 = vcmp.eq.s32.totalorder %v265, %v1928
        %vm1980 = vcmp.eq.s32.totalorder %v265, %v1932
        %vm1981 = vcmp.eq.s32.totalorder %v266, %v1920
        %vm1982 = vcmp.eq.s32.totalorder %v266, %v1924
        %vm1983 = vcmp.eq.s32.totalorder %v266, %v1928
        %vm1984 = vcmp.eq.s32.totalorder %v266, %v1932
        %vm1985 = vcmp.eq.s32.totalorder %v267, %v1920
        %vm1986 = vcmp.eq.s32.totalorder %v267, %v1924
        %vm1987 = vcmp.eq.s32.totalorder %v267, %v1928
        %vm1988 = vcmp.eq.s32.totalorder %v267, %v1932
        %vm1989 = vcmp.eq.s32.totalorder %v268, %v1920
        %vm1990 = vcmp.eq.s32.totalorder %v268, %v1924
        %vm1991 = vcmp.eq.s32.totalorder %v268, %v1928
        %vm1992 = vcmp.eq.s32.totalorder %v268, %v1932
        %vm1993 = vcmp.eq.s32.totalorder %v269, %v1920
        %vm1994 = vcmp.eq.s32.totalorder %v269, %v1924
        %vm1995 = vcmp.eq.s32.totalorder %v269, %v1928
        %vm1996 = vcmp.eq.s32.totalorder %v269, %v1932
        %v1999 = vlaneseq
        %v2000 = vshrl.u32 %v1999, 7
        %v2001 = vsub.s32 0, %v2000
        %v2002 = vrot.slane %v1433, %v2001
        %v2003 = vlaneseq
        %v2004 = vshrl.u32 %v2003, 7
        %v2005 = vsub.s32 4, %v2004
        %v2006 = vrot.slane %v1433, %v2005
        %v2007 = vlaneseq
        %v2008 = vshrl.u32 %v2007, 7
        %v2009 = vsub.s32 0, %v2008
        %v2010 = vrot.slane %v1434, %v2009
        %v2011 = vlaneseq
        %v2012 = vshrl.u32 %v2011, 7
        %v2013 = vsub.s32 4, %v2012
        %v2014 = vrot.slane %v1434, %v2013
        %v2019 = vlaneseq
        %v2020 = vshrl.u32 %v2019, 7
        %v2021 = vsub.s32 0, %v2020
        %v2022 = vrot.slane %v2002, %v2021
        %v2023 = vlaneseq
        %v2024 = vshrl.u32 %v2023, 7
        %v2025 = vsub.s32 0, %v2024
        %v2026 = vrot.slane %v2006, %v2025
        %v2027 = vlaneseq
        %v2028 = vshrl.u32 %v2027, 7
        %v2029 = vsub.s32 0, %v2028
        %v2030 = vrot.slane %v2010, %v2029
        %v2031 = vlaneseq
        %v2032 = vshrl.u32 %v2031, 7
        %v2033 = vsub.s32 0, %v2032
        %v2034 = vrot.slane %v2014, %v2033
        %v2035 = vsel %vm1933, %v2022, 0.0
        %v2036 = vsel %vm1934, %v2026, 0.0
        %v2037 = vsel %vm1935, %v2030, 0.0
        %v2038 = vsel %vm1936, %v2034, 0.0
        %v2039 = vsel %vm1937, %v2022, 0.0
        %v2040 = vsel %vm1938, %v2026, 0.0
        %v2041 = vsel %vm1939, %v2030, 0.0
        %v2042 = vsel %vm1940, %v2034, 0.0
        %v2043 = vsel %vm1941, %v2022, 0.0
        %v2044 = vsel %vm1942, %v2026, 0.0
        %v2045 = vsel %vm1943, %v2030, 0.0
        %v2046 = vsel %vm1944, %v2034, 0.0
        %v2047 = vsel %vm1945, %v2022, 0.0
        %v2048 = vsel %vm1946, %v2026, 0.0
        %v2049 = vsel %vm1947, %v2030, 0.0
        %v2050 = vsel %vm1948, %v2034, 0.0
        %v2051 = vsel %vm1949, %v2022, 0.0
        %v2052 = vsel %vm1950, %v2026, 0.0
        %v2053 = vsel %vm1951, %v2030, 0.0
        %v2054 = vsel %vm1952, %v2034, 0.0
        %v2055 = vsel %vm1953, %v2022, 0.0
        %v2056 = vsel %vm1954, %v2026, 0.0
        %v2057 = vsel %vm1955, %v2030, 0.0
        %v2058 = vsel %vm1956, %v2034, 0.0
        %v2059 = vsel %vm1957, %v2022, 0.0
        %v2060 = vsel %vm1958, %v2026, 0.0
        %v2061 = vsel %vm1959, %v2030, 0.0
        %v2062 = vsel %vm1960, %v2034, 0.0
        %v2063 = vsel %vm1961, %v2022, 0.0
        %v2064 = vsel %vm1962, %v2026, 0.0
        %v2065 = vsel %vm1963, %v2030, 0.0
        %v2066 = vsel %vm1964, %v2034, 0.0
        %v2067 = vsel %vm1965, %v2022, 0.0
        %v2068 = vsel %vm1966, %v2026, 0.0
        %v2069 = vsel %vm1967, %v2030, 0.0
        %v2070 = vsel %vm1968, %v2034, 0.0
        %v2071 = vsel %vm1969, %v2022, 0.0
        %v2072 = vsel %vm1970, %v2026, 0.0
        %v2073 = vsel %vm1971, %v2030, 0.0
        %v2074 = vsel %vm1972, %v2034, 0.0
        %v2075 = vsel %vm1973, %v2022, 0.0
        %v2076 = vsel %vm1974, %v2026, 0.0
        %v2077 = vsel %vm1975, %v2030, 0.0
        %v2078 = vsel %vm1976, %v2034, 0.0
        %v2079 = vsel %vm1977, %v2022, 0.0
        %v2080 = vsel %vm1978, %v2026, 0.0
        %v2081 = vsel %vm1979, %v2030, 0.0
        %v2082 = vsel %vm1980, %v2034, 0.0
        %v2083 = vsel %vm1981, %v2022, 0.0
        %v2084 = vsel %vm1982, %v2026, 0.0
        %v2085 = vsel %vm1983, %v2030, 0.0
        %v2086 = vsel %vm1984, %v2034, 0.0
        %v2087 = vsel %vm1985, %v2022, 0.0
        %v2088 = vsel %vm1986, %v2026, 0.0
        %v2089 = vsel %vm1987, %v2030, 0.0
        %v2090 = vsel %vm1988, %v2034, 0.0
        %v2091 = vsel %vm1989, %v2022, 0.0
        %v2092 = vsel %vm1990, %v2026, 0.0
        %v2093 = vsel %vm1991, %v2030, 0.0
        %v2094 = vsel %vm1992, %v2034, 0.0
        %v2095 = vsel %vm1993, %v2022, 0.0
        %v2096 = vsel %vm1994, %v2026, 0.0
        %v2097 = vsel %vm1995, %v2030, 0.0
        %v2098 = vsel %vm1996, %v2034, 0.0
        %v2099 = vmul.f32 %v1550, %v2035
        %v2100 = vmul.f32 %v1552, %v2036
        %v2101 = vmul.f32 %v1743, %v2037
        %v2102 = vmul.f32 %v1745, %v2038
        %v2103 = vmul.f32 %v1554, %v2039
        %v2104 = vmul.f32 %v1556, %v2040
        %v2105 = vmul.f32 %v1747, %v2041
        %v2106 = vmul.f32 %v1749, %v2042
        %v2107 = vmul.f32 %v1560, %v2043
        %v2108 = vmul.f32 %v1562, %v2044
        %v2109 = vmul.f32 %v1753, %v2045
        %v2110 = vmul.f32 %v1755, %v2046
        %v2111 = vmul.f32 %v1564, %v2047
        %v2112 = vmul.f32 %v1566, %v2048
        %v2113 = vmul.f32 %v1757, %v2049
        %v2114 = vmul.f32 %v1759, %v2050
        %v2115 = vmul.f32 %v1570, %v2051
        %v2116 = vmul.f32 %v1572, %v2052
        %v2117 = vmul.f32 %v1763, %v2053
        %v2118 = vmul.f32 %v1765, %v2054
        %v2119 = vmul.f32 %v1574, %v2055
        %v2120 = vmul.f32 %v1576, %v2056
        %v2121 = vmul.f32 %v1767, %v2057
        %v2122 = vmul.f32 %v1769, %v2058
        %v2123 = vmul.f32 %v1580, %v2059
        %v2124 = vmul.f32 %v1582, %v2060
        %v2125 = vmul.f32 %v1773, %v2061
        %v2126 = vmul.f32 %v1775, %v2062
        %v2127 = vmul.f32 %v1584, %v2063
        %v2128 = vmul.f32 %v1586, %v2064
        %v2129 = vmul.f32 %v1777, %v2065
        %v2130 = vmul.f32 %v1779, %v2066
        %v2131 = vmul.f32 %v1590, %v2067
        %v2132 = vmul.f32 %v1592, %v2068
        %v2133 = vmul.f32 %v1783, %v2069
        %v2134 = vmul.f32 %v1785, %v2070
        %v2135 = vmul.f32 %v1594, %v2071
        %v2136 = vmul.f32 %v1596, %v2072
        %v2137 = vmul.f32 %v1787, %v2073
        %v2138 = vmul.f32 %v1789, %v2074
        %v2139 = vmul.f32 %v1600, %v2075
        %v2140 = vmul.f32 %v1602, %v2076
        %v2141 = vmul.f32 %v1793, %v2077
        %v2142 = vmul.f32 %v1795, %v2078
        %v2143 = vmul.f32 %v1604, %v2079
        %v2144 = vmul.f32 %v1606, %v2080
        %v2145 = vmul.f32 %v1797, %v2081
        %v2146 = vmul.f32 %v1799, %v2082
        %v2147 = vmul.f32 %v1610, %v2083
        %v2148 = vmul.f32 %v1612, %v2084
        %v2149 = vmul.f32 %v1803, %v2085
        %v2150 = vmul.f32 %v1805, %v2086
        %v2151 = vmul.f32 %v1614, %v2087
        %v2152 = vmul.f32 %v1616, %v2088
        %v2153 = vmul.f32 %v1807, %v2089
        %v2154 = vmul.f32 %v1809, %v2090
        %v2155 = vmul.f32 %v1620, %v2091
        %v2156 = vmul.f32 %v1622, %v2092
        %v2157 = vmul.f32 %v1813, %v2093
        %v2158 = vmul.f32 %v1815, %v2094
        %v2159 = vmul.f32 %v1624, %v2095
        %v2160 = vmul.f32 %v1626, %v2096
        %v2161 = vmul.f32 %v1817, %v2097
        %v2162 = vmul.f32 %v1819, %v2098
        %v2163 = vadd.f32 %v2099, %v2103
        %v2164 = vadd.f32 %v2163, %v2107
        %v2165 = vadd.f32 %v2164, %v2111
        %v2166 = vadd.f32 %v2165, %v2115
        %v2167 = vadd.f32 %v2166, %v2119
        %v2168 = vadd.f32 %v2167, %v2123
        %v2169 = vadd.f32 %v2168, %v2127
        %v2170 = vadd.f32 %v2169, %v2131
        %v2171 = vadd.f32 %v2170, %v2135
        %v2172 = vadd.f32 %v2171, %v2139
        %v2173 = vadd.f32 %v2172, %v2143
        %v2174 = vadd.f32 %v2173, %v2147
        %v2175 = vadd.f32 %v2174, %v2151
        %v2176 = vadd.f32 %v2175, %v2155
        %v2177 = vadd.f32 %v2176, %v2159
        %v2178 = vrot.slane %v2177, 4
        %v2179 = vadd.f32 %v2177, %v2178
        %v2180 = vrot.slane %v2179, 2
        %v2181 = vadd.f32 %v2179, %v2180
        %v2182 = vrot.slane %v2181, 1
        %v2183 = vadd.f32 %v2181, %v2182
        %v2184 = vadd.f32 %v2100, %v2104
        %v2185 = vadd.f32 %v2184, %v2108
        %v2186 = vadd.f32 %v2185, %v2112
        %v2187 = vadd.f32 %v2186, %v2116
        %v2188 = vadd.f32 %v2187, %v2120
        %v2189 = vadd.f32 %v2188, %v2124
        %v2190 = vadd.f32 %v2189, %v2128
        %v2191 = vadd.f32 %v2190, %v2132
        %v2192 = vadd.f32 %v2191, %v2136
        %v2193 = vadd.f32 %v2192, %v2140
        %v2194 = vadd.f32 %v2193, %v2144
        %v2195 = vadd.f32 %v2194, %v2148
        %v2196 = vadd.f32 %v2195, %v2152
        %v2197 = vadd.f32 %v2196, %v2156
        %v2198 = vadd.f32 %v2197, %v2160
        %v2199 = vrot.slane %v2198, 4
        %v2200 = vadd.f32 %v2198, %v2199
        %v2201 = vrot.slane %v2200, 2
        %v2202 = vadd.f32 %v2200, %v2201
        %v2203 = vrot.slane %v2202, 1
        %v2204 = vadd.f32 %v2202, %v2203
        %v2205 = vadd.f32 %v2101, %v2105
        %v2206 = vadd.f32 %v2205, %v2109
        %v2207 = vadd.f32 %v2206, %v2113
        %v2208 = vadd.f32 %v2207, %v2117
        %v2209 = vadd.f32 %v2208, %v2121
        %v2210 = vadd.f32 %v2209, %v2125
        %v2211 = vadd.f32 %v2210, %v2129
        %v2212 = vadd.f32 %v2211, %v2133
        %v2213 = vadd.f32 %v2212, %v2137
        %v2214 = vadd.f32 %v2213, %v2141
        %v2215 = vadd.f32 %v2214, %v2145
        %v2216 = vadd.f32 %v2215, %v2149
        %v2217 = vadd.f32 %v2216, %v2153
        %v2218 = vadd.f32 %v2217, %v2157
        %v2219 = vadd.f32 %v2218, %v2161
        %v2220 = vrot.slane %v2219, 4
        %v2221 = vadd.f32 %v2219, %v2220
        %v2222 = vrot.slane %v2221, 2
        %v2223 = vadd.f32 %v2221, %v2222
        %v2224 = vrot.slane %v2223, 1
        %v2225 = vadd.f32 %v2223, %v2224
        %v2226 = vadd.f32 %v2102, %v2106
        %v2227 = vadd.f32 %v2226, %v2110
        %v2228 = vadd.f32 %v2227, %v2114
        %v2229 = vadd.f32 %v2228, %v2118
        %v2230 = vadd.f32 %v2229, %v2122
        %v2231 = vadd.f32 %v2230, %v2126
        %v2232 = vadd.f32 %v2231, %v2130
        %v2233 = vadd.f32 %v2232, %v2134
        %v2234 = vadd.f32 %v2233, %v2138
        %v2235 = vadd.f32 %v2234, %v2142
        %v2236 = vadd.f32 %v2235, %v2146
        %v2237 = vadd.f32 %v2236, %v2150
        %v2238 = vadd.f32 %v2237, %v2154
        %v2239 = vadd.f32 %v2238, %v2158
        %v2240 = vadd.f32 %v2239, %v2162
        %v2241 = vrot.slane %v2240, 4
        %v2242 = vadd.f32 %v2240, %v2241
        %v2243 = vrot.slane %v2242, 2
        %v2244 = vadd.f32 %v2242, %v2243
        %v2245 = vrot.slane %v2244, 1
        %v2246 = vadd.f32 %v2244, %v2245
        %v2247 = vadd.f32 %v1267, %v2183
        %v2248 = vadd.f32 %v1268, %v2204
        %v2249 = vadd.f32 %v1269, %v2225
        %v2250 = vadd.f32 %v1270, %v2246
        %v2251 = vmul.f32 %v1630, %v2035
        %v2252 = vmul.f32 %v1632, %v2036
        %v2253 = vmul.f32 %v1823, %v2037
        %v2254 = vmul.f32 %v1825, %v2038
        %v2255 = vmul.f32 %v1634, %v2039
        %v2256 = vmul.f32 %v1636, %v2040
        %v2257 = vmul.f32 %v1827, %v2041
        %v2258 = vmul.f32 %v1829, %v2042
        %v2259 = vmul.f32 %v1640, %v2043
        %v2260 = vmul.f32 %v1642, %v2044
        %v2261 = vmul.f32 %v1833, %v2045
        %v2262 = vmul.f32 %v1835, %v2046
        %v2263 = vmul.f32 %v1644, %v2047
        %v2264 = vmul.f32 %v1646, %v2048
        %v2265 = vmul.f32 %v1837, %v2049
        %v2266 = vmul.f32 %v1839, %v2050
        %v2267 = vmul.f32 %v1650, %v2051
        %v2268 = vmul.f32 %v1652, %v2052
        %v2269 = vmul.f32 %v1843, %v2053
        %v2270 = vmul.f32 %v1845, %v2054
        %v2271 = vmul.f32 %v1654, %v2055
        %v2272 = vmul.f32 %v1656, %v2056
        %v2273 = vmul.f32 %v1847, %v2057
        %v2274 = vmul.f32 %v1849, %v2058
        %v2275 = vmul.f32 %v1660, %v2059
        %v2276 = vmul.f32 %v1662, %v2060
        %v2277 = vmul.f32 %v1853, %v2061
        %v2278 = vmul.f32 %v1855, %v2062
        %v2279 = vmul.f32 %v1664, %v2063
        %v2280 = vmul.f32 %v1666, %v2064
        %v2281 = vmul.f32 %v1857, %v2065
        %v2282 = vmul.f32 %v1859, %v2066
        %v2283 = vmul.f32 %v1670, %v2067
        %v2284 = vmul.f32 %v1672, %v2068
        %v2285 = vmul.f32 %v1863, %v2069
        %v2286 = vmul.f32 %v1865, %v2070
        %v2287 = vmul.f32 %v1674, %v2071
        %v2288 = vmul.f32 %v1676, %v2072
        %v2289 = vmul.f32 %v1867, %v2073
        %v2290 = vmul.f32 %v1869, %v2074
        %v2291 = vmul.f32 %v1680, %v2075
        %v2292 = vmul.f32 %v1682, %v2076
        %v2293 = vmul.f32 %v1873, %v2077
        %v2294 = vmul.f32 %v1875, %v2078
        %v2295 = vmul.f32 %v1684, %v2079
        %v2296 = vmul.f32 %v1686, %v2080
        %v2297 = vmul.f32 %v1877, %v2081
        %v2298 = vmul.f32 %v1879, %v2082
        %v2299 = vmul.f32 %v1690, %v2083
        %v2300 = vmul.f32 %v1692, %v2084
        %v2301 = vmul.f32 %v1883, %v2085
        %v2302 = vmul.f32 %v1885, %v2086
        %v2303 = vmul.f32 %v1694, %v2087
        %v2304 = vmul.f32 %v1696, %v2088
        %v2305 = vmul.f32 %v1887, %v2089
        %v2306 = vmul.f32 %v1889, %v2090
        %v2307 = vmul.f32 %v1700, %v2091
        %v2308 = vmul.f32 %v1702, %v2092
        %v2309 = vmul.f32 %v1893, %v2093
        %v2310 = vmul.f32 %v1895, %v2094
        %v2311 = vmul.f32 %v1704, %v2095
        %v2312 = vmul.f32 %v1706, %v2096
        %v2313 = vmul.f32 %v1897, %v2097
        %v2314 = vmul.f32 %v1899, %v2098
        %v2315 = vadd.f32 %v2251, %v2255
        %v2316 = vadd.f32 %v2315, %v2259
        %v2317 = vadd.f32 %v2316, %v2263
        %v2318 = vadd.f32 %v2317, %v2267
        %v2319 = vadd.f32 %v2318, %v2271
        %v2320 = vadd.f32 %v2319, %v2275
        %v2321 = vadd.f32 %v2320, %v2279
        %v2322 = vadd.f32 %v2321, %v2283
        %v2323 = vadd.f32 %v2322, %v2287
        %v2324 = vadd.f32 %v2323, %v2291
        %v2325 = vadd.f32 %v2324, %v2295
        %v2326 = vadd.f32 %v2325, %v2299
        %v2327 = vadd.f32 %v2326, %v2303
        %v2328 = vadd.f32 %v2327, %v2307
        %v2329 = vadd.f32 %v2328, %v2311
        %v2330 = vrot.slane %v2329, 4
        %v2331 = vadd.f32 %v2329, %v2330
        %v2332 = vrot.slane %v2331, 2
        %v2333 = vadd.f32 %v2331, %v2332
        %v2334 = vrot.slane %v2333, 1
        %v2335 = vadd.f32 %v2333, %v2334
        %v2336 = vadd.f32 %v2252, %v2256
        %v2337 = vadd.f32 %v2336, %v2260
        %v2338 = vadd.f32 %v2337, %v2264
        %v2339 = vadd.f32 %v2338, %v2268
        %v2340 = vadd.f32 %v2339, %v2272
        %v2341 = vadd.f32 %v2340, %v2276
        %v2342 = vadd.f32 %v2341, %v2280
        %v2343 = vadd.f32 %v2342, %v2284
        %v2344 = vadd.f32 %v2343, %v2288
        %v2345 = vadd.f32 %v2344, %v2292
        %v2346 = vadd.f32 %v2345, %v2296
        %v2347 = vadd.f32 %v2346, %v2300
        %v2348 = vadd.f32 %v2347, %v2304
        %v2349 = vadd.f32 %v2348, %v2308
        %v2350 = vadd.f32 %v2349, %v2312
        %v2351 = vrot.slane %v2350, 4
        %v2352 = vadd.f32 %v2350, %v2351
        %v2353 = vrot.slane %v2352, 2
        %v2354 = vadd.f32 %v2352, %v2353
        %v2355 = vrot.slane %v2354, 1
        %v2356 = vadd.f32 %v2354, %v2355
        %v2357 = vadd.f32 %v2253, %v2257
        %v2358 = vadd.f32 %v2357, %v2261
        %v2359 = vadd.f32 %v2358, %v2265
        %v2360 = vadd.f32 %v2359, %v2269
        %v2361 = vadd.f32 %v2360, %v2273
        %v2362 = vadd.f32 %v2361, %v2277
        %v2363 = vadd.f32 %v2362, %v2281
        %v2364 = vadd.f32 %v2363, %v2285
        %v2365 = vadd.f32 %v2364, %v2289
        %v2366 = vadd.f32 %v2365, %v2293
        %v2367 = vadd.f32 %v2366, %v2297
        %v2368 = vadd.f32 %v2367, %v2301
        %v2369 = vadd.f32 %v2368, %v2305
        %v2370 = vadd.f32 %v2369, %v2309
        %v2371 = vadd.f32 %v2370, %v2313
        %v2372 = vrot.slane %v2371, 4
        %v2373 = vadd.f32 %v2371, %v2372
        %v2374 = vrot.slane %v2373, 2
        %v2375 = vadd.f32 %v2373, %v2374
        %v2376 = vrot.slane %v2375, 1
        %v2377 = vadd.f32 %v2375, %v2376
        %v2378 = vadd.f32 %v2254, %v2258
        %v2379 = vadd.f32 %v2378, %v2262
        %v2380 = vadd.f32 %v2379, %v2266
        %v2381 = vadd.f32 %v2380, %v2270
        %v2382 = vadd.f32 %v2381, %v2274
        %v2383 = vadd.f32 %v2382, %v2278
        %v2384 = vadd.f32 %v2383, %v2282
        %v2385 = vadd.f32 %v2384, %v2286
        %v2386 = vadd.f32 %v2385, %v2290
        %v2387 = vadd.f32 %v2386, %v2294
        %v2388 = vadd.f32 %v2387, %v2298
        %v2389 = vadd.f32 %v2388, %v2302
        %v2390 = vadd.f32 %v2389, %v2306
        %v2391 = vadd.f32 %v2390, %v2310
        %v2392 = vadd.f32 %v2391, %v2314
        %v2393 = vrot.slane %v2392, 4
        %v2394 = vadd.f32 %v2392, %v2393
        %v2395 = vrot.slane %v2394, 2
        %v2396 = vadd.f32 %v2394, %v2395
        %v2397 = vrot.slane %v2396, 1
        %v2398 = vadd.f32 %v2396, %v2397
        %v2399 = vadd.f32 %v1419, %v2335
        %v2400 = vadd.f32 %v1420, %v2356
        %v2401 = vadd.f32 %v1421, %v2377
        %v2402 = vadd.f32 %v1422, %v2398
        %v2405 = vrot.slane %v215, 5
        %v2406 = vrot.slane %v2405, 4
        %v2407 = vrot.slane %v216, 5
        %v2408 = vrot.slane %v2407, 4
        %v2411 = vmul.f32 %v217, %v2406
        %v2412 = vmul.f32 %v218, %v2408
        %v2413 = vmul.u32 %v1423, %v283
        %v2414 = vmul.u32 %v1424, %v283
        %v2415 = vrot.slane %v2413, 5
        %v2416 = vrot.slane %v2415, 4
        %v2417 = vrot.slane %v2414, 5
        %v2418 = vrot.slane %v2417, 4
        %v2419 = vadd.s32 %v271, %v2416
        %v2420 = vadd.s32 %v272, %v2418
        %v2421 = vmul.u32 %v1423, 2654435761
        %v2422 = vmul.u32 %v1424, 2654435761
        %v2423 = vrot.slane %v2421, 5
        %v2424 = vrot.slane %v2423, 4
        %v2425 = vrot.slane %v2422, 5
        %v2426 = vrot.slane %v2425, 4
        %v2427 = vxor.u32 %v219, %v2424
        %v2428 = vxor.u32 %v220, %v2426
        %v2429 = vmul.f32 %v2411, %v301
        %v2430 = vmul.f32 %v2412, %v303
        %v2431 = vadd.s32 %v2419, %v312
        %v2432 = vadd.s32 %v2420, %v314
        %v2433 = vxor.u32 %v2427, %v320
        %v2434 = vxor.u32 %v2428, %v322
        %v2435 = vand.u32 %v2433, %v325
        %v2436 = vand.u32 %v2434, %v325
        %v2437 = vmul.u32 %v328, %v2431
        %v2438 = vmul.u32 %v328, %v2432
        %v2439 = vmul.u32 %v332, %v2435
        %v2440 = vmul.u32 %v332, %v2436
        %v2441 = vadd.s32 %v2437, %v2439
        %v2442 = vadd.s32 %v2438, %v2440
        %vm2443 = vcmp.gt.s32.totalorder %v2441, 0
        %v2444 = vsel %vm2443, %v2441, 0
        %vm2445 = vcmp.gt.s32.totalorder %v2442, 0
        %v2446 = vsel %vm2445, %v2442, 0
        %vm2447 = vcmp.lt.s32.totalorder %v325, %v2444
        %v2448 = vsel %vm2447, %v325, %v2444
        %vm2449 = vcmp.lt.s32.totalorder %v325, %v2446
        %v2450 = vsel %vm2449, %v325, %v2446
        %v2451 = vshrl.u32 %v2448, 7
        %v2452 = vshrl.u32 %v2450, 7
        %v2453 = vand.u32 %v2448, 127
        %v2454 = vand.u32 %v2450, 127
        %v2455 = vlaneseq
        %v2456 = vshrl.u32 %v2455, 7
        %v2457 = vsub.s32 0, %v2456
        %v2458 = vrot.slane %v2451, %v2457
        %v2459 = vlaneseq
        %v2460 = vshrl.u32 %v2459, 7
        %v2461 = vsub.s32 4, %v2460
        %v2462 = vrot.slane %v2451, %v2461
        %v2463 = vlaneseq
        %v2464 = vshrl.u32 %v2463, 7
        %v2465 = vsub.s32 0, %v2464
        %v2466 = vrot.slane %v2452, %v2465
        %v2467 = vlaneseq
        %v2468 = vshrl.u32 %v2467, 7
        %v2469 = vsub.s32 4, %v2468
        %v2470 = vrot.slane %v2452, %v2469
        %v2471 = vlaneseq
        %v2472 = vshrl.u32 %v2471, 7
        %v2473 = vsub.s32 0, %v2472
        %v2474 = vrot.slane %v2458, %v2473
        %v2475 = vlaneseq
        %v2476 = vshrl.u32 %v2475, 7
        %v2477 = vsub.s32 0, %v2476
        %v2478 = vrot.slane %v2462, %v2477
        %v2479 = vlaneseq
        %v2480 = vshrl.u32 %v2479, 7
        %v2481 = vsub.s32 0, %v2480
        %v2482 = vrot.slane %v2466, %v2481
        %v2483 = vlaneseq
        %v2484 = vshrl.u32 %v2483, 7
        %v2485 = vsub.s32 0, %v2484
        %v2486 = vrot.slane %v2470, %v2485
        %vm2487 = vcmp.eq.s32.totalorder %v254, %v2474
        %vm2488 = vcmp.eq.s32.totalorder %v254, %v2478
        %vm2489 = vcmp.eq.s32.totalorder %v254, %v2482
        %vm2490 = vcmp.eq.s32.totalorder %v254, %v2486
        %v2491 = vsel %vm2487, 1.0, 0.0
        %v2492 = vsel %vm2488, 1.0, 0.0
        %v2493 = vsel %vm2489, 1.0, 0.0
        %v2494 = vsel %vm2490, 1.0, 0.0
        %v2495 = vpack.c.bf16 %v2491, %v2491
        %v2496 = vpack.c.bf16 %v2492, %v2492
        %v2497 = vpack.c.bf16 %v2493, %v2493
        %v2498 = vpack.c.bf16 %v2494, %v2494
        %v2500 = vsel %vm522, %v2495, 0
        %v2503 = vsel %vm522, %v2496, 0
        %v2506 = vsel %vm522, %v2497, 0
        %v2509 = vsel %vm522, %v2498, 0
        %2511 = vmatprep.subr.bf16.mxu0 %v2503
        %2512 = vmatpush1.bf16.msra.mxu0 %v2500
        %2513 = vmatprep.subr.bf16.mxu0 0
        %2514 = vmatpush1.bf16.msra.mxu0 0
        %2515 = vmatprep.subr.bf16.mxu0 0
        %2516 = vmatpush1.bf16.msra.mxu0 0
        %2517 = vmatprep.subr.bf16.mxu0 0
        %2518 = vmatpush1.bf16.msra.mxu0 0
        %2519 = vmatprep.subr.bf16.mxu0 0
        %2520 = vmatpush1.bf16.msra.mxu0 0
        %2521 = vmatprep.subr.bf16.mxu0 0
        %2522 = vmatpush1.bf16.msra.mxu0 0
        %2523 = vmatprep.subr.bf16.mxu0 0
        %2524 = vmatpush1.bf16.msra.mxu0 0
        %2525 = vmatprep.subr.bf16.mxu0 0
        %2526 = vmatpush1.bf16.msra.mxu0 0
        %2527 = vmatprep.subr.bf16.mxu0 0
        %2528 = vmatpush1.bf16.msra.mxu0 0
        %2529 = vmatprep.subr.bf16.mxu0 0
        %2530 = vmatpush1.bf16.msra.mxu0 0
        %2531 = vmatprep.subr.bf16.mxu0 0
        %2532 = vmatpush1.bf16.msra.mxu0 0
        %2533 = vmatprep.subr.bf16.mxu0 0
        %2534 = vmatpush1.bf16.msra.mxu0 0
        %2535 = vmatprep.subr.bf16.mxu0 0
        %2536 = vmatpush1.bf16.msra.mxu0 0
        %2537 = vmatprep.subr.bf16.mxu0 0
        %2538 = vmatpush1.bf16.msra.mxu0 0
        %2539 = vmatprep.subr.bf16.mxu0 0
        %2540 = vmatpush1.bf16.msra.mxu0 0
        %2541 = vmatprep.subr.bf16.mxu0 0
        %2542 = vmatpush1.bf16.msra.mxu0 0
        %2543 = vmatprep.mubr.bf16.mxu0 0
        %2544 = vmatmul.mubr.bf16.gmra.mrb[0].mxu0 %v475
        %v2545 = vpop.f32.mrb[0].mxu0
        %v2546 = vadd.f32 0.0, %v2545
        %v2547 = vpop.f32.mrb[0].mxu0
        %v2548 = vadd.f32 0.0, %v2547
        %v2549 = vpop.f32.mrb[0].mxu0
        %v2550 = vadd.f32 0.0, %v2549
        %v2551 = vpop.f32.mrb[0].mxu0
        %v2552 = vadd.f32 0.0, %v2551
        %2553 = vmatprep.mubr.bf16.mxu0 0
        %2554 = vmatmul.mubr.bf16.gmra.mrb[0].mxu0 %v478
        %v2555 = vpop.f32.mrb[0].mxu0
        %v2556 = vadd.f32 0.0, %v2555
        %v2557 = vpop.f32.mrb[0].mxu0
        %v2558 = vadd.f32 0.0, %v2557
        %v2559 = vpop.f32.mrb[0].mxu0
        %v2560 = vadd.f32 0.0, %v2559
        %v2561 = vpop.f32.mrb[0].mxu0
        %v2562 = vadd.f32 0.0, %v2561
        %2563 = vmatprep.mubr.bf16.mxu0 0
        %2564 = vmatmul.mubr.bf16.gmra.mrb[0].mxu0 %v481
        %v2565 = vpop.f32.mrb[0].mxu0
        %v2566 = vadd.f32 0.0, %v2565
        %v2567 = vpop.f32.mrb[0].mxu0
        %v2568 = vadd.f32 0.0, %v2567
        %v2569 = vpop.f32.mrb[0].mxu0
        %v2570 = vadd.f32 0.0, %v2569
        %v2571 = vpop.f32.mrb[0].mxu0
        %v2572 = vadd.f32 0.0, %v2571
        %2573 = vmatprep.mubr.bf16.mxu0 0
        %2574 = vmatmul.mubr.bf16.gmra.mrb[0].mxu0 %v484
        %v2575 = vpop.f32.mrb[0].mxu0
        %v2576 = vadd.f32 0.0, %v2575
        %v2577 = vpop.f32.mrb[0].mxu0
        %v2578 = vadd.f32 0.0, %v2577
        %v2579 = vpop.f32.mrb[0].mxu0
        %v2580 = vadd.f32 0.0, %v2579
        %v2581 = vpop.f32.mrb[0].mxu0
        %v2582 = vadd.f32 0.0, %v2581
        %2583 = vmatprep.mubr.bf16.mxu0 0
        %2584 = vmatmul.mubr.bf16.gmra.mrb[0].mxu0 %v487
        %v2585 = vpop.f32.mrb[0].mxu0
        %v2586 = vadd.f32 0.0, %v2585
        %v2587 = vpop.f32.mrb[0].mxu0
        %v2588 = vadd.f32 0.0, %v2587
        %v2589 = vpop.f32.mrb[0].mxu0
        %v2590 = vadd.f32 0.0, %v2589
        %v2591 = vpop.f32.mrb[0].mxu0
        %v2592 = vadd.f32 0.0, %v2591
        %2593 = vmatprep.mubr.bf16.mxu0 0
        %2594 = vmatmul.mubr.bf16.gmra.mrb[0].mxu0 %v490
        %v2595 = vpop.f32.mrb[0].mxu0
        %v2596 = vadd.f32 0.0, %v2595
        %v2597 = vpop.f32.mrb[0].mxu0
        %v2598 = vadd.f32 0.0, %v2597
        %v2599 = vpop.f32.mrb[0].mxu0
        %v2600 = vadd.f32 0.0, %v2599
        %v2601 = vpop.f32.mrb[0].mxu0
        %v2602 = vadd.f32 0.0, %v2601
        %2603 = vmatprep.mubr.bf16.mxu0 0
        %2604 = vmatmul.mubr.bf16.gmra.mrb[0].mxu0 %v493
        %v2605 = vpop.f32.mrb[0].mxu0
        %v2606 = vadd.f32 0.0, %v2605
        %v2607 = vpop.f32.mrb[0].mxu0
        %v2608 = vadd.f32 0.0, %v2607
        %v2609 = vpop.f32.mrb[0].mxu0
        %v2610 = vadd.f32 0.0, %v2609
        %v2611 = vpop.f32.mrb[0].mxu0
        %v2612 = vadd.f32 0.0, %v2611
        %2613 = vmatprep.mubr.bf16.mxu0 0
        %2614 = vmatmul.mubr.bf16.gmra.mrb[0].mxu0 %v496
        %v2615 = vpop.f32.mrb[0].mxu0
        %v2616 = vadd.f32 0.0, %v2615
        %v2617 = vpop.f32.mrb[0].mxu0
        %v2618 = vadd.f32 0.0, %v2617
        %v2619 = vpop.f32.mrb[0].mxu0
        %v2620 = vadd.f32 0.0, %v2619
        %v2621 = vpop.f32.mrb[0].mxu0
        %v2622 = vadd.f32 0.0, %v2621
        %2623 = vmatprep.mubr.bf16.mxu0 0
        %2624 = vmatmul.mubr.bf16.gmra.mrb[0].mxu0 %v499
        %v2625 = vpop.f32.mrb[0].mxu0
        %v2626 = vadd.f32 0.0, %v2625
        %v2627 = vpop.f32.mrb[0].mxu0
        %v2628 = vadd.f32 0.0, %v2627
        %v2629 = vpop.f32.mrb[0].mxu0
        %v2630 = vadd.f32 0.0, %v2629
        %v2631 = vpop.f32.mrb[0].mxu0
        %v2632 = vadd.f32 0.0, %v2631
        %2633 = vmatprep.mubr.bf16.mxu0 0
        %2634 = vmatmul.mubr.bf16.gmra.mrb[0].mxu0 %v502
        %v2635 = vpop.f32.mrb[0].mxu0
        %v2636 = vadd.f32 0.0, %v2635
        %v2637 = vpop.f32.mrb[0].mxu0
        %v2638 = vadd.f32 0.0, %v2637
        %v2639 = vpop.f32.mrb[0].mxu0
        %v2640 = vadd.f32 0.0, %v2639
        %v2641 = vpop.f32.mrb[0].mxu0
        %v2642 = vadd.f32 0.0, %v2641
        %2643 = vmatprep.mubr.bf16.mxu0 0
        %2644 = vmatmul.mubr.bf16.gmra.mrb[0].mxu0 %v505
        %v2645 = vpop.f32.mrb[0].mxu0
        %v2646 = vadd.f32 0.0, %v2645
        %v2647 = vpop.f32.mrb[0].mxu0
        %v2648 = vadd.f32 0.0, %v2647
        %v2649 = vpop.f32.mrb[0].mxu0
        %v2650 = vadd.f32 0.0, %v2649
        %v2651 = vpop.f32.mrb[0].mxu0
        %v2652 = vadd.f32 0.0, %v2651
        %2653 = vmatprep.mubr.bf16.mxu0 0
        %2654 = vmatmul.mubr.bf16.gmra.mrb[0].mxu0 %v508
        %v2655 = vpop.f32.mrb[0].mxu0
        %v2656 = vadd.f32 0.0, %v2655
        %v2657 = vpop.f32.mrb[0].mxu0
        %v2658 = vadd.f32 0.0, %v2657
        %v2659 = vpop.f32.mrb[0].mxu0
        %v2660 = vadd.f32 0.0, %v2659
        %v2661 = vpop.f32.mrb[0].mxu0
        %v2662 = vadd.f32 0.0, %v2661
        %2663 = vmatprep.mubr.bf16.mxu0 0
        %2664 = vmatmul.mubr.bf16.gmra.mrb[0].mxu0 %v511
        %v2665 = vpop.f32.mrb[0].mxu0
        %v2666 = vadd.f32 0.0, %v2665
        %v2667 = vpop.f32.mrb[0].mxu0
        %v2668 = vadd.f32 0.0, %v2667
        %v2669 = vpop.f32.mrb[0].mxu0
        %v2670 = vadd.f32 0.0, %v2669
        %v2671 = vpop.f32.mrb[0].mxu0
        %v2672 = vadd.f32 0.0, %v2671
        %2673 = vmatprep.mubr.bf16.mxu0 0
        %2674 = vmatmul.mubr.bf16.gmra.mrb[0].mxu0 %v514
        %v2675 = vpop.f32.mrb[0].mxu0
        %v2676 = vadd.f32 0.0, %v2675
        %v2677 = vpop.f32.mrb[0].mxu0
        %v2678 = vadd.f32 0.0, %v2677
        %v2679 = vpop.f32.mrb[0].mxu0
        %v2680 = vadd.f32 0.0, %v2679
        %v2681 = vpop.f32.mrb[0].mxu0
        %v2682 = vadd.f32 0.0, %v2681
        %2683 = vmatprep.mubr.bf16.mxu0 0
        %2684 = vmatmul.mubr.bf16.gmra.mrb[0].mxu0 %v517
        %v2685 = vpop.f32.mrb[0].mxu0
        %v2686 = vadd.f32 0.0, %v2685
        %v2687 = vpop.f32.mrb[0].mxu0
        %v2688 = vadd.f32 0.0, %v2687
        %v2689 = vpop.f32.mrb[0].mxu0
        %v2690 = vadd.f32 0.0, %v2689
        %v2691 = vpop.f32.mrb[0].mxu0
        %v2692 = vadd.f32 0.0, %v2691
        %2693 = vmatprep.mubr.bf16.mxu0 0
        %2694 = vmatmul.mubr.bf16.gmra.mrb[0].mxu0 %v520
        %v2695 = vpop.f32.mrb[0].mxu0
        %v2696 = vadd.f32 0.0, %v2695
        %v2697 = vpop.f32.mrb[0].mxu0
        %v2698 = vadd.f32 0.0, %v2697
        %v2699 = vpop.f32.mrb[0].mxu0
        %v2700 = vadd.f32 0.0, %v2699
        %v2701 = vpop.f32.mrb[0].mxu0
        %v2702 = vadd.f32 0.0, %v2701
        %2703 = vdwg.mxu0
        %2704 = vmatprep.subr.bf16.mxu0 %v2509
        %2705 = vmatpush1.bf16.msra.mxu0 %v2506
        %2706 = vmatprep.subr.bf16.mxu0 0
        %2707 = vmatpush1.bf16.msra.mxu0 0
        %2708 = vmatprep.subr.bf16.mxu0 0
        %2709 = vmatpush1.bf16.msra.mxu0 0
        %2710 = vmatprep.subr.bf16.mxu0 0
        %2711 = vmatpush1.bf16.msra.mxu0 0
        %2712 = vmatprep.subr.bf16.mxu0 0
        %2713 = vmatpush1.bf16.msra.mxu0 0
        %2714 = vmatprep.subr.bf16.mxu0 0
        %2715 = vmatpush1.bf16.msra.mxu0 0
        %2716 = vmatprep.subr.bf16.mxu0 0
        %2717 = vmatpush1.bf16.msra.mxu0 0
        %2718 = vmatprep.subr.bf16.mxu0 0
        %2719 = vmatpush1.bf16.msra.mxu0 0
        %2720 = vmatprep.subr.bf16.mxu0 0
        %2721 = vmatpush1.bf16.msra.mxu0 0
        %2722 = vmatprep.subr.bf16.mxu0 0
        %2723 = vmatpush1.bf16.msra.mxu0 0
        %2724 = vmatprep.subr.bf16.mxu0 0
        %2725 = vmatpush1.bf16.msra.mxu0 0
        %2726 = vmatprep.subr.bf16.mxu0 0
        %2727 = vmatpush1.bf16.msra.mxu0 0
        %2728 = vmatprep.subr.bf16.mxu0 0
        %2729 = vmatpush1.bf16.msra.mxu0 0
        %2730 = vmatprep.subr.bf16.mxu0 0
        %2731 = vmatpush1.bf16.msra.mxu0 0
        %2732 = vmatprep.subr.bf16.mxu0 0
        %2733 = vmatpush1.bf16.msra.mxu0 0
        %2734 = vmatprep.subr.bf16.mxu0 0
        %2735 = vmatpush1.bf16.msra.mxu0 0
        %2736 = vmatprep.mubr.bf16.mxu0 0
        %2737 = vmatmul.mubr.bf16.gmra.mrb[0].mxu0 %v475
        %v2738 = vpop.f32.mrb[0].mxu0
        %v2739 = vadd.f32 0.0, %v2738
        %v2740 = vpop.f32.mrb[0].mxu0
        %v2741 = vadd.f32 0.0, %v2740
        %v2742 = vpop.f32.mrb[0].mxu0
        %v2743 = vadd.f32 0.0, %v2742
        %v2744 = vpop.f32.mrb[0].mxu0
        %v2745 = vadd.f32 0.0, %v2744
        %2746 = vmatprep.mubr.bf16.mxu0 0
        %2747 = vmatmul.mubr.bf16.gmra.mrb[0].mxu0 %v478
        %v2748 = vpop.f32.mrb[0].mxu0
        %v2749 = vadd.f32 0.0, %v2748
        %v2750 = vpop.f32.mrb[0].mxu0
        %v2751 = vadd.f32 0.0, %v2750
        %v2752 = vpop.f32.mrb[0].mxu0
        %v2753 = vadd.f32 0.0, %v2752
        %v2754 = vpop.f32.mrb[0].mxu0
        %v2755 = vadd.f32 0.0, %v2754
        %2756 = vmatprep.mubr.bf16.mxu0 0
        %2757 = vmatmul.mubr.bf16.gmra.mrb[0].mxu0 %v481
        %v2758 = vpop.f32.mrb[0].mxu0
        %v2759 = vadd.f32 0.0, %v2758
        %v2760 = vpop.f32.mrb[0].mxu0
        %v2761 = vadd.f32 0.0, %v2760
        %v2762 = vpop.f32.mrb[0].mxu0
        %v2763 = vadd.f32 0.0, %v2762
        %v2764 = vpop.f32.mrb[0].mxu0
        %v2765 = vadd.f32 0.0, %v2764
        %2766 = vmatprep.mubr.bf16.mxu0 0
        %2767 = vmatmul.mubr.bf16.gmra.mrb[0].mxu0 %v484
        %v2768 = vpop.f32.mrb[0].mxu0
        %v2769 = vadd.f32 0.0, %v2768
        %v2770 = vpop.f32.mrb[0].mxu0
        %v2771 = vadd.f32 0.0, %v2770
        %v2772 = vpop.f32.mrb[0].mxu0
        %v2773 = vadd.f32 0.0, %v2772
        %v2774 = vpop.f32.mrb[0].mxu0
        %v2775 = vadd.f32 0.0, %v2774
        %2776 = vmatprep.mubr.bf16.mxu0 0
        %2777 = vmatmul.mubr.bf16.gmra.mrb[0].mxu0 %v487
        %v2778 = vpop.f32.mrb[0].mxu0
        %v2779 = vadd.f32 0.0, %v2778
        %v2780 = vpop.f32.mrb[0].mxu0
        %v2781 = vadd.f32 0.0, %v2780
        %v2782 = vpop.f32.mrb[0].mxu0
        %v2783 = vadd.f32 0.0, %v2782
        %v2784 = vpop.f32.mrb[0].mxu0
        %v2785 = vadd.f32 0.0, %v2784
        %2786 = vmatprep.mubr.bf16.mxu0 0
        %2787 = vmatmul.mubr.bf16.gmra.mrb[0].mxu0 %v490
        %v2788 = vpop.f32.mrb[0].mxu0
        %v2789 = vadd.f32 0.0, %v2788
        %v2790 = vpop.f32.mrb[0].mxu0
        %v2791 = vadd.f32 0.0, %v2790
        %v2792 = vpop.f32.mrb[0].mxu0
        %v2793 = vadd.f32 0.0, %v2792
        %v2794 = vpop.f32.mrb[0].mxu0
        %v2795 = vadd.f32 0.0, %v2794
        %2796 = vmatprep.mubr.bf16.mxu0 0
        %2797 = vmatmul.mubr.bf16.gmra.mrb[0].mxu0 %v493
        %v2798 = vpop.f32.mrb[0].mxu0
        %v2799 = vadd.f32 0.0, %v2798
        %v2800 = vpop.f32.mrb[0].mxu0
        %v2801 = vadd.f32 0.0, %v2800
        %v2802 = vpop.f32.mrb[0].mxu0
        %v2803 = vadd.f32 0.0, %v2802
        %v2804 = vpop.f32.mrb[0].mxu0
        %v2805 = vadd.f32 0.0, %v2804
        %2806 = vmatprep.mubr.bf16.mxu0 0
        %2807 = vmatmul.mubr.bf16.gmra.mrb[0].mxu0 %v496
        %v2808 = vpop.f32.mrb[0].mxu0
        %v2809 = vadd.f32 0.0, %v2808
        %v2810 = vpop.f32.mrb[0].mxu0
        %v2811 = vadd.f32 0.0, %v2810
        %v2812 = vpop.f32.mrb[0].mxu0
        %v2813 = vadd.f32 0.0, %v2812
        %v2814 = vpop.f32.mrb[0].mxu0
        %v2815 = vadd.f32 0.0, %v2814
        %2816 = vmatprep.mubr.bf16.mxu0 0
        %2817 = vmatmul.mubr.bf16.gmra.mrb[0].mxu0 %v499
        %v2818 = vpop.f32.mrb[0].mxu0
        %v2819 = vadd.f32 0.0, %v2818
        %v2820 = vpop.f32.mrb[0].mxu0
        %v2821 = vadd.f32 0.0, %v2820
        %v2822 = vpop.f32.mrb[0].mxu0
        %v2823 = vadd.f32 0.0, %v2822
        %v2824 = vpop.f32.mrb[0].mxu0
        %v2825 = vadd.f32 0.0, %v2824
        %2826 = vmatprep.mubr.bf16.mxu0 0
        %2827 = vmatmul.mubr.bf16.gmra.mrb[0].mxu0 %v502
        %v2828 = vpop.f32.mrb[0].mxu0
        %v2829 = vadd.f32 0.0, %v2828
        %v2830 = vpop.f32.mrb[0].mxu0
        %v2831 = vadd.f32 0.0, %v2830
        %v2832 = vpop.f32.mrb[0].mxu0
        %v2833 = vadd.f32 0.0, %v2832
        %v2834 = vpop.f32.mrb[0].mxu0
        %v2835 = vadd.f32 0.0, %v2834
        %2836 = vmatprep.mubr.bf16.mxu0 0
        %2837 = vmatmul.mubr.bf16.gmra.mrb[0].mxu0 %v505
        %v2838 = vpop.f32.mrb[0].mxu0
        %v2839 = vadd.f32 0.0, %v2838
        %v2840 = vpop.f32.mrb[0].mxu0
        %v2841 = vadd.f32 0.0, %v2840
        %v2842 = vpop.f32.mrb[0].mxu0
        %v2843 = vadd.f32 0.0, %v2842
        %v2844 = vpop.f32.mrb[0].mxu0
        %v2845 = vadd.f32 0.0, %v2844
        %2846 = vmatprep.mubr.bf16.mxu0 0
        %2847 = vmatmul.mubr.bf16.gmra.mrb[0].mxu0 %v508
        %v2848 = vpop.f32.mrb[0].mxu0
        %v2849 = vadd.f32 0.0, %v2848
        %v2850 = vpop.f32.mrb[0].mxu0
        %v2851 = vadd.f32 0.0, %v2850
        %v2852 = vpop.f32.mrb[0].mxu0
        %v2853 = vadd.f32 0.0, %v2852
        %v2854 = vpop.f32.mrb[0].mxu0
        %v2855 = vadd.f32 0.0, %v2854
        %2856 = vmatprep.mubr.bf16.mxu0 0
        %2857 = vmatmul.mubr.bf16.gmra.mrb[0].mxu0 %v511
        %v2858 = vpop.f32.mrb[0].mxu0
        %v2859 = vadd.f32 0.0, %v2858
        %v2860 = vpop.f32.mrb[0].mxu0
        %v2861 = vadd.f32 0.0, %v2860
        %v2862 = vpop.f32.mrb[0].mxu0
        %v2863 = vadd.f32 0.0, %v2862
        %v2864 = vpop.f32.mrb[0].mxu0
        %v2865 = vadd.f32 0.0, %v2864
        %2866 = vmatprep.mubr.bf16.mxu0 0
        %2867 = vmatmul.mubr.bf16.gmra.mrb[0].mxu0 %v514
        %v2868 = vpop.f32.mrb[0].mxu0
        %v2869 = vadd.f32 0.0, %v2868
        %v2870 = vpop.f32.mrb[0].mxu0
        %v2871 = vadd.f32 0.0, %v2870
        %v2872 = vpop.f32.mrb[0].mxu0
        %v2873 = vadd.f32 0.0, %v2872
        %v2874 = vpop.f32.mrb[0].mxu0
        %v2875 = vadd.f32 0.0, %v2874
        %2876 = vmatprep.mubr.bf16.mxu0 0
        %2877 = vmatmul.mubr.bf16.gmra.mrb[0].mxu0 %v517
        %v2878 = vpop.f32.mrb[0].mxu0
        %v2879 = vadd.f32 0.0, %v2878
        %v2880 = vpop.f32.mrb[0].mxu0
        %v2881 = vadd.f32 0.0, %v2880
        %v2882 = vpop.f32.mrb[0].mxu0
        %v2883 = vadd.f32 0.0, %v2882
        %v2884 = vpop.f32.mrb[0].mxu0
        %v2885 = vadd.f32 0.0, %v2884
        %2886 = vmatprep.mubr.bf16.mxu0 0
        %2887 = vmatmul.mubr.bf16.gmra.mrb[0].mxu0 %v520
        %v2888 = vpop.f32.mrb[0].mxu0
        %v2889 = vadd.f32 0.0, %v2888
        %v2890 = vpop.f32.mrb[0].mxu0
        %v2891 = vadd.f32 0.0, %v2890
        %v2892 = vpop.f32.mrb[0].mxu0
        %v2893 = vadd.f32 0.0, %v2892
        %v2894 = vpop.f32.mrb[0].mxu0
        %v2895 = vadd.f32 0.0, %v2894
        %2896 = vdwg.mxu0
        %v2897 = vlaneseq
        %v2898 = vshrl.u32 %v2897, 7
        %v2899 = vsub.s32 0, %v2898
        %v2900 = vrot.slane %v2453, %v2899
        %v2901 = vlaneseq
        %v2902 = vshrl.u32 %v2901, 7
        %v2903 = vsub.s32 4, %v2902
        %v2904 = vrot.slane %v2453, %v2903
        %v2905 = vlaneseq
        %v2906 = vshrl.u32 %v2905, 7
        %v2907 = vsub.s32 0, %v2906
        %v2908 = vrot.slane %v2454, %v2907
        %v2909 = vlaneseq
        %v2910 = vshrl.u32 %v2909, 7
        %v2911 = vsub.s32 4, %v2910
        %v2912 = vrot.slane %v2454, %v2911
        %v2913 = vlaneseq
        %v2914 = vshrl.u32 %v2913, 7
        %v2915 = vsub.s32 0, %v2914
        %v2916 = vrot.slane %v2900, %v2915
        %v2917 = vlaneseq
        %v2918 = vshrl.u32 %v2917, 7
        %v2919 = vsub.s32 0, %v2918
        %v2920 = vrot.slane %v2904, %v2919
        %v2921 = vlaneseq
        %v2922 = vshrl.u32 %v2921, 7
        %v2923 = vsub.s32 0, %v2922
        %v2924 = vrot.slane %v2908, %v2923
        %v2925 = vlaneseq
        %v2926 = vshrl.u32 %v2925, 7
        %v2927 = vsub.s32 0, %v2926
        %v2928 = vrot.slane %v2912, %v2927
        %vm2929 = vcmp.eq.s32.totalorder %v254, %v2916
        %vm2930 = vcmp.eq.s32.totalorder %v254, %v2920
        %vm2931 = vcmp.eq.s32.totalorder %v254, %v2924
        %vm2932 = vcmp.eq.s32.totalorder %v254, %v2928
        %vm2933 = vcmp.eq.s32.totalorder %v255, %v2916
        %vm2934 = vcmp.eq.s32.totalorder %v255, %v2920
        %vm2935 = vcmp.eq.s32.totalorder %v255, %v2924
        %vm2936 = vcmp.eq.s32.totalorder %v255, %v2928
        %vm2937 = vcmp.eq.s32.totalorder %v256, %v2916
        %vm2938 = vcmp.eq.s32.totalorder %v256, %v2920
        %vm2939 = vcmp.eq.s32.totalorder %v256, %v2924
        %vm2940 = vcmp.eq.s32.totalorder %v256, %v2928
        %vm2941 = vcmp.eq.s32.totalorder %v257, %v2916
        %vm2942 = vcmp.eq.s32.totalorder %v257, %v2920
        %vm2943 = vcmp.eq.s32.totalorder %v257, %v2924
        %vm2944 = vcmp.eq.s32.totalorder %v257, %v2928
        %vm2945 = vcmp.eq.s32.totalorder %v258, %v2916
        %vm2946 = vcmp.eq.s32.totalorder %v258, %v2920
        %vm2947 = vcmp.eq.s32.totalorder %v258, %v2924
        %vm2948 = vcmp.eq.s32.totalorder %v258, %v2928
        %vm2949 = vcmp.eq.s32.totalorder %v259, %v2916
        %vm2950 = vcmp.eq.s32.totalorder %v259, %v2920
        %vm2951 = vcmp.eq.s32.totalorder %v259, %v2924
        %vm2952 = vcmp.eq.s32.totalorder %v259, %v2928
        %vm2953 = vcmp.eq.s32.totalorder %v260, %v2916
        %vm2954 = vcmp.eq.s32.totalorder %v260, %v2920
        %vm2955 = vcmp.eq.s32.totalorder %v260, %v2924
        %vm2956 = vcmp.eq.s32.totalorder %v260, %v2928
        %vm2957 = vcmp.eq.s32.totalorder %v261, %v2916
        %vm2958 = vcmp.eq.s32.totalorder %v261, %v2920
        %vm2959 = vcmp.eq.s32.totalorder %v261, %v2924
        %vm2960 = vcmp.eq.s32.totalorder %v261, %v2928
        %vm2961 = vcmp.eq.s32.totalorder %v262, %v2916
        %vm2962 = vcmp.eq.s32.totalorder %v262, %v2920
        %vm2963 = vcmp.eq.s32.totalorder %v262, %v2924
        %vm2964 = vcmp.eq.s32.totalorder %v262, %v2928
        %vm2965 = vcmp.eq.s32.totalorder %v263, %v2916
        %vm2966 = vcmp.eq.s32.totalorder %v263, %v2920
        %vm2967 = vcmp.eq.s32.totalorder %v263, %v2924
        %vm2968 = vcmp.eq.s32.totalorder %v263, %v2928
        %vm2969 = vcmp.eq.s32.totalorder %v264, %v2916
        %vm2970 = vcmp.eq.s32.totalorder %v264, %v2920
        %vm2971 = vcmp.eq.s32.totalorder %v264, %v2924
        %vm2972 = vcmp.eq.s32.totalorder %v264, %v2928
        %vm2973 = vcmp.eq.s32.totalorder %v265, %v2916
        %vm2974 = vcmp.eq.s32.totalorder %v265, %v2920
        %vm2975 = vcmp.eq.s32.totalorder %v265, %v2924
        %vm2976 = vcmp.eq.s32.totalorder %v265, %v2928
        %vm2977 = vcmp.eq.s32.totalorder %v266, %v2916
        %vm2978 = vcmp.eq.s32.totalorder %v266, %v2920
        %vm2979 = vcmp.eq.s32.totalorder %v266, %v2924
        %vm2980 = vcmp.eq.s32.totalorder %v266, %v2928
        %vm2981 = vcmp.eq.s32.totalorder %v267, %v2916
        %vm2982 = vcmp.eq.s32.totalorder %v267, %v2920
        %vm2983 = vcmp.eq.s32.totalorder %v267, %v2924
        %vm2984 = vcmp.eq.s32.totalorder %v267, %v2928
        %vm2985 = vcmp.eq.s32.totalorder %v268, %v2916
        %vm2986 = vcmp.eq.s32.totalorder %v268, %v2920
        %vm2987 = vcmp.eq.s32.totalorder %v268, %v2924
        %vm2988 = vcmp.eq.s32.totalorder %v268, %v2928
        %vm2989 = vcmp.eq.s32.totalorder %v269, %v2916
        %vm2990 = vcmp.eq.s32.totalorder %v269, %v2920
        %vm2991 = vcmp.eq.s32.totalorder %v269, %v2924
        %vm2992 = vcmp.eq.s32.totalorder %v269, %v2928
        %v2995 = vlaneseq
        %v2996 = vshrl.u32 %v2995, 7
        %v2997 = vsub.s32 0, %v2996
        %v2998 = vrot.slane %v2429, %v2997
        %v2999 = vlaneseq
        %v3000 = vshrl.u32 %v2999, 7
        %v3001 = vsub.s32 4, %v3000
        %v3002 = vrot.slane %v2429, %v3001
        %v3003 = vlaneseq
        %v3004 = vshrl.u32 %v3003, 7
        %v3005 = vsub.s32 0, %v3004
        %v3006 = vrot.slane %v2430, %v3005
        %v3007 = vlaneseq
        %v3008 = vshrl.u32 %v3007, 7
        %v3009 = vsub.s32 4, %v3008
        %v3010 = vrot.slane %v2430, %v3009
        %v3015 = vlaneseq
        %v3016 = vshrl.u32 %v3015, 7
        %v3017 = vsub.s32 0, %v3016
        %v3018 = vrot.slane %v2998, %v3017
        %v3019 = vlaneseq
        %v3020 = vshrl.u32 %v3019, 7
        %v3021 = vsub.s32 0, %v3020
        %v3022 = vrot.slane %v3002, %v3021
        %v3023 = vlaneseq
        %v3024 = vshrl.u32 %v3023, 7
        %v3025 = vsub.s32 0, %v3024
        %v3026 = vrot.slane %v3006, %v3025
        %v3027 = vlaneseq
        %v3028 = vshrl.u32 %v3027, 7
        %v3029 = vsub.s32 0, %v3028
        %v3030 = vrot.slane %v3010, %v3029
        %v3031 = vsel %vm2929, %v3018, 0.0
        %v3032 = vsel %vm2930, %v3022, 0.0
        %v3033 = vsel %vm2931, %v3026, 0.0
        %v3034 = vsel %vm2932, %v3030, 0.0
        %v3035 = vsel %vm2933, %v3018, 0.0
        %v3036 = vsel %vm2934, %v3022, 0.0
        %v3037 = vsel %vm2935, %v3026, 0.0
        %v3038 = vsel %vm2936, %v3030, 0.0
        %v3039 = vsel %vm2937, %v3018, 0.0
        %v3040 = vsel %vm2938, %v3022, 0.0
        %v3041 = vsel %vm2939, %v3026, 0.0
        %v3042 = vsel %vm2940, %v3030, 0.0
        %v3043 = vsel %vm2941, %v3018, 0.0
        %v3044 = vsel %vm2942, %v3022, 0.0
        %v3045 = vsel %vm2943, %v3026, 0.0
        %v3046 = vsel %vm2944, %v3030, 0.0
        %v3047 = vsel %vm2945, %v3018, 0.0
        %v3048 = vsel %vm2946, %v3022, 0.0
        %v3049 = vsel %vm2947, %v3026, 0.0
        %v3050 = vsel %vm2948, %v3030, 0.0
        %v3051 = vsel %vm2949, %v3018, 0.0
        %v3052 = vsel %vm2950, %v3022, 0.0
        %v3053 = vsel %vm2951, %v3026, 0.0
        %v3054 = vsel %vm2952, %v3030, 0.0
        %v3055 = vsel %vm2953, %v3018, 0.0
        %v3056 = vsel %vm2954, %v3022, 0.0
        %v3057 = vsel %vm2955, %v3026, 0.0
        %v3058 = vsel %vm2956, %v3030, 0.0
        %v3059 = vsel %vm2957, %v3018, 0.0
        %v3060 = vsel %vm2958, %v3022, 0.0
        %v3061 = vsel %vm2959, %v3026, 0.0
        %v3062 = vsel %vm2960, %v3030, 0.0
        %v3063 = vsel %vm2961, %v3018, 0.0
        %v3064 = vsel %vm2962, %v3022, 0.0
        %v3065 = vsel %vm2963, %v3026, 0.0
        %v3066 = vsel %vm2964, %v3030, 0.0
        %v3067 = vsel %vm2965, %v3018, 0.0
        %v3068 = vsel %vm2966, %v3022, 0.0
        %v3069 = vsel %vm2967, %v3026, 0.0
        %v3070 = vsel %vm2968, %v3030, 0.0
        %v3071 = vsel %vm2969, %v3018, 0.0
        %v3072 = vsel %vm2970, %v3022, 0.0
        %v3073 = vsel %vm2971, %v3026, 0.0
        %v3074 = vsel %vm2972, %v3030, 0.0
        %v3075 = vsel %vm2973, %v3018, 0.0
        %v3076 = vsel %vm2974, %v3022, 0.0
        %v3077 = vsel %vm2975, %v3026, 0.0
        %v3078 = vsel %vm2976, %v3030, 0.0
        %v3079 = vsel %vm2977, %v3018, 0.0
        %v3080 = vsel %vm2978, %v3022, 0.0
        %v3081 = vsel %vm2979, %v3026, 0.0
        %v3082 = vsel %vm2980, %v3030, 0.0
        %v3083 = vsel %vm2981, %v3018, 0.0
        %v3084 = vsel %vm2982, %v3022, 0.0
        %v3085 = vsel %vm2983, %v3026, 0.0
        %v3086 = vsel %vm2984, %v3030, 0.0
        %v3087 = vsel %vm2985, %v3018, 0.0
        %v3088 = vsel %vm2986, %v3022, 0.0
        %v3089 = vsel %vm2987, %v3026, 0.0
        %v3090 = vsel %vm2988, %v3030, 0.0
        %v3091 = vsel %vm2989, %v3018, 0.0
        %v3092 = vsel %vm2990, %v3022, 0.0
        %v3093 = vsel %vm2991, %v3026, 0.0
        %v3094 = vsel %vm2992, %v3030, 0.0
        %v3095 = vmul.f32 %v2546, %v3031
        %v3096 = vmul.f32 %v2548, %v3032
        %v3097 = vmul.f32 %v2739, %v3033
        %v3098 = vmul.f32 %v2741, %v3034
        %v3099 = vmul.f32 %v2550, %v3035
        %v3100 = vmul.f32 %v2552, %v3036
        %v3101 = vmul.f32 %v2743, %v3037
        %v3102 = vmul.f32 %v2745, %v3038
        %v3103 = vmul.f32 %v2556, %v3039
        %v3104 = vmul.f32 %v2558, %v3040
        %v3105 = vmul.f32 %v2749, %v3041
        %v3106 = vmul.f32 %v2751, %v3042
        %v3107 = vmul.f32 %v2560, %v3043
        %v3108 = vmul.f32 %v2562, %v3044
        %v3109 = vmul.f32 %v2753, %v3045
        %v3110 = vmul.f32 %v2755, %v3046
        %v3111 = vmul.f32 %v2566, %v3047
        %v3112 = vmul.f32 %v2568, %v3048
        %v3113 = vmul.f32 %v2759, %v3049
        %v3114 = vmul.f32 %v2761, %v3050
        %v3115 = vmul.f32 %v2570, %v3051
        %v3116 = vmul.f32 %v2572, %v3052
        %v3117 = vmul.f32 %v2763, %v3053
        %v3118 = vmul.f32 %v2765, %v3054
        %v3119 = vmul.f32 %v2576, %v3055
        %v3120 = vmul.f32 %v2578, %v3056
        %v3121 = vmul.f32 %v2769, %v3057
        %v3122 = vmul.f32 %v2771, %v3058
        %v3123 = vmul.f32 %v2580, %v3059
        %v3124 = vmul.f32 %v2582, %v3060
        %v3125 = vmul.f32 %v2773, %v3061
        %v3126 = vmul.f32 %v2775, %v3062
        %v3127 = vmul.f32 %v2586, %v3063
        %v3128 = vmul.f32 %v2588, %v3064
        %v3129 = vmul.f32 %v2779, %v3065
        %v3130 = vmul.f32 %v2781, %v3066
        %v3131 = vmul.f32 %v2590, %v3067
        %v3132 = vmul.f32 %v2592, %v3068
        %v3133 = vmul.f32 %v2783, %v3069
        %v3134 = vmul.f32 %v2785, %v3070
        %v3135 = vmul.f32 %v2596, %v3071
        %v3136 = vmul.f32 %v2598, %v3072
        %v3137 = vmul.f32 %v2789, %v3073
        %v3138 = vmul.f32 %v2791, %v3074
        %v3139 = vmul.f32 %v2600, %v3075
        %v3140 = vmul.f32 %v2602, %v3076
        %v3141 = vmul.f32 %v2793, %v3077
        %v3142 = vmul.f32 %v2795, %v3078
        %v3143 = vmul.f32 %v2606, %v3079
        %v3144 = vmul.f32 %v2608, %v3080
        %v3145 = vmul.f32 %v2799, %v3081
        %v3146 = vmul.f32 %v2801, %v3082
        %v3147 = vmul.f32 %v2610, %v3083
        %v3148 = vmul.f32 %v2612, %v3084
        %v3149 = vmul.f32 %v2803, %v3085
        %v3150 = vmul.f32 %v2805, %v3086
        %v3151 = vmul.f32 %v2616, %v3087
        %v3152 = vmul.f32 %v2618, %v3088
        %v3153 = vmul.f32 %v2809, %v3089
        %v3154 = vmul.f32 %v2811, %v3090
        %v3155 = vmul.f32 %v2620, %v3091
        %v3156 = vmul.f32 %v2622, %v3092
        %v3157 = vmul.f32 %v2813, %v3093
        %v3158 = vmul.f32 %v2815, %v3094
        %v3159 = vadd.f32 %v3095, %v3099
        %v3160 = vadd.f32 %v3159, %v3103
        %v3161 = vadd.f32 %v3160, %v3107
        %v3162 = vadd.f32 %v3161, %v3111
        %v3163 = vadd.f32 %v3162, %v3115
        %v3164 = vadd.f32 %v3163, %v3119
        %v3165 = vadd.f32 %v3164, %v3123
        %v3166 = vadd.f32 %v3165, %v3127
        %v3167 = vadd.f32 %v3166, %v3131
        %v3168 = vadd.f32 %v3167, %v3135
        %v3169 = vadd.f32 %v3168, %v3139
        %v3170 = vadd.f32 %v3169, %v3143
        %v3171 = vadd.f32 %v3170, %v3147
        %v3172 = vadd.f32 %v3171, %v3151
        %v3173 = vadd.f32 %v3172, %v3155
        %v3174 = vrot.slane %v3173, 4
        %v3175 = vadd.f32 %v3173, %v3174
        %v3176 = vrot.slane %v3175, 2
        %v3177 = vadd.f32 %v3175, %v3176
        %v3178 = vrot.slane %v3177, 1
        %v3179 = vadd.f32 %v3177, %v3178
        %v3180 = vadd.f32 %v3096, %v3100
        %v3181 = vadd.f32 %v3180, %v3104
        %v3182 = vadd.f32 %v3181, %v3108
        %v3183 = vadd.f32 %v3182, %v3112
        %v3184 = vadd.f32 %v3183, %v3116
        %v3185 = vadd.f32 %v3184, %v3120
        %v3186 = vadd.f32 %v3185, %v3124
        %v3187 = vadd.f32 %v3186, %v3128
        %v3188 = vadd.f32 %v3187, %v3132
        %v3189 = vadd.f32 %v3188, %v3136
        %v3190 = vadd.f32 %v3189, %v3140
        %v3191 = vadd.f32 %v3190, %v3144
        %v3192 = vadd.f32 %v3191, %v3148
        %v3193 = vadd.f32 %v3192, %v3152
        %v3194 = vadd.f32 %v3193, %v3156
        %v3195 = vrot.slane %v3194, 4
        %v3196 = vadd.f32 %v3194, %v3195
        %v3197 = vrot.slane %v3196, 2
        %v3198 = vadd.f32 %v3196, %v3197
        %v3199 = vrot.slane %v3198, 1
        %v3200 = vadd.f32 %v3198, %v3199
        %v3201 = vadd.f32 %v3097, %v3101
        %v3202 = vadd.f32 %v3201, %v3105
        %v3203 = vadd.f32 %v3202, %v3109
        %v3204 = vadd.f32 %v3203, %v3113
        %v3205 = vadd.f32 %v3204, %v3117
        %v3206 = vadd.f32 %v3205, %v3121
        %v3207 = vadd.f32 %v3206, %v3125
        %v3208 = vadd.f32 %v3207, %v3129
        %v3209 = vadd.f32 %v3208, %v3133
        %v3210 = vadd.f32 %v3209, %v3137
        %v3211 = vadd.f32 %v3210, %v3141
        %v3212 = vadd.f32 %v3211, %v3145
        %v3213 = vadd.f32 %v3212, %v3149
        %v3214 = vadd.f32 %v3213, %v3153
        %v3215 = vadd.f32 %v3214, %v3157
        %v3216 = vrot.slane %v3215, 4
        %v3217 = vadd.f32 %v3215, %v3216
        %v3218 = vrot.slane %v3217, 2
        %v3219 = vadd.f32 %v3217, %v3218
        %v3220 = vrot.slane %v3219, 1
        %v3221 = vadd.f32 %v3219, %v3220
        %v3222 = vadd.f32 %v3098, %v3102
        %v3223 = vadd.f32 %v3222, %v3106
        %v3224 = vadd.f32 %v3223, %v3110
        %v3225 = vadd.f32 %v3224, %v3114
        %v3226 = vadd.f32 %v3225, %v3118
        %v3227 = vadd.f32 %v3226, %v3122
        %v3228 = vadd.f32 %v3227, %v3126
        %v3229 = vadd.f32 %v3228, %v3130
        %v3230 = vadd.f32 %v3229, %v3134
        %v3231 = vadd.f32 %v3230, %v3138
        %v3232 = vadd.f32 %v3231, %v3142
        %v3233 = vadd.f32 %v3232, %v3146
        %v3234 = vadd.f32 %v3233, %v3150
        %v3235 = vadd.f32 %v3234, %v3154
        %v3236 = vadd.f32 %v3235, %v3158
        %v3237 = vrot.slane %v3236, 4
        %v3238 = vadd.f32 %v3236, %v3237
        %v3239 = vrot.slane %v3238, 2
        %v3240 = vadd.f32 %v3238, %v3239
        %v3241 = vrot.slane %v3240, 1
        %v3242 = vadd.f32 %v3240, %v3241
        %v3243 = vadd.f32 %v2247, %v3179
        %v3244 = vadd.f32 %v2248, %v3200
        %v3245 = vadd.f32 %v2249, %v3221
        %v3246 = vadd.f32 %v2250, %v3242
        %v3247 = vmul.f32 %v2626, %v3031
        %v3248 = vmul.f32 %v2628, %v3032
        %v3249 = vmul.f32 %v2819, %v3033
        %v3250 = vmul.f32 %v2821, %v3034
        %v3251 = vmul.f32 %v2630, %v3035
        %v3252 = vmul.f32 %v2632, %v3036
        %v3253 = vmul.f32 %v2823, %v3037
        %v3254 = vmul.f32 %v2825, %v3038
        %v3255 = vmul.f32 %v2636, %v3039
        %v3256 = vmul.f32 %v2638, %v3040
        %v3257 = vmul.f32 %v2829, %v3041
        %v3258 = vmul.f32 %v2831, %v3042
        %v3259 = vmul.f32 %v2640, %v3043
        %v3260 = vmul.f32 %v2642, %v3044
        %v3261 = vmul.f32 %v2833, %v3045
        %v3262 = vmul.f32 %v2835, %v3046
        %v3263 = vmul.f32 %v2646, %v3047
        %v3264 = vmul.f32 %v2648, %v3048
        %v3265 = vmul.f32 %v2839, %v3049
        %v3266 = vmul.f32 %v2841, %v3050
        %v3267 = vmul.f32 %v2650, %v3051
        %v3268 = vmul.f32 %v2652, %v3052
        %v3269 = vmul.f32 %v2843, %v3053
        %v3270 = vmul.f32 %v2845, %v3054
        %v3271 = vmul.f32 %v2656, %v3055
        %v3272 = vmul.f32 %v2658, %v3056
        %v3273 = vmul.f32 %v2849, %v3057
        %v3274 = vmul.f32 %v2851, %v3058
        %v3275 = vmul.f32 %v2660, %v3059
        %v3276 = vmul.f32 %v2662, %v3060
        %v3277 = vmul.f32 %v2853, %v3061
        %v3278 = vmul.f32 %v2855, %v3062
        %v3279 = vmul.f32 %v2666, %v3063
        %v3280 = vmul.f32 %v2668, %v3064
        %v3281 = vmul.f32 %v2859, %v3065
        %v3282 = vmul.f32 %v2861, %v3066
        %v3283 = vmul.f32 %v2670, %v3067
        %v3284 = vmul.f32 %v2672, %v3068
        %v3285 = vmul.f32 %v2863, %v3069
        %v3286 = vmul.f32 %v2865, %v3070
        %v3287 = vmul.f32 %v2676, %v3071
        %v3288 = vmul.f32 %v2678, %v3072
        %v3289 = vmul.f32 %v2869, %v3073
        %v3290 = vmul.f32 %v2871, %v3074
        %v3291 = vmul.f32 %v2680, %v3075
        %v3292 = vmul.f32 %v2682, %v3076
        %v3293 = vmul.f32 %v2873, %v3077
        %v3294 = vmul.f32 %v2875, %v3078
        %v3295 = vmul.f32 %v2686, %v3079
        %v3296 = vmul.f32 %v2688, %v3080
        %v3297 = vmul.f32 %v2879, %v3081
        %v3298 = vmul.f32 %v2881, %v3082
        %v3299 = vmul.f32 %v2690, %v3083
        %v3300 = vmul.f32 %v2692, %v3084
        %v3301 = vmul.f32 %v2883, %v3085
        %v3302 = vmul.f32 %v2885, %v3086
        %v3303 = vmul.f32 %v2696, %v3087
        %v3304 = vmul.f32 %v2698, %v3088
        %v3305 = vmul.f32 %v2889, %v3089
        %v3306 = vmul.f32 %v2891, %v3090
        %v3307 = vmul.f32 %v2700, %v3091
        %v3308 = vmul.f32 %v2702, %v3092
        %v3309 = vmul.f32 %v2893, %v3093
        %v3310 = vmul.f32 %v2895, %v3094
        %v3311 = vadd.f32 %v3247, %v3251
        %v3312 = vadd.f32 %v3311, %v3255
        %v3313 = vadd.f32 %v3312, %v3259
        %v3314 = vadd.f32 %v3313, %v3263
        %v3315 = vadd.f32 %v3314, %v3267
        %v3316 = vadd.f32 %v3315, %v3271
        %v3317 = vadd.f32 %v3316, %v3275
        %v3318 = vadd.f32 %v3317, %v3279
        %v3319 = vadd.f32 %v3318, %v3283
        %v3320 = vadd.f32 %v3319, %v3287
        %v3321 = vadd.f32 %v3320, %v3291
        %v3322 = vadd.f32 %v3321, %v3295
        %v3323 = vadd.f32 %v3322, %v3299
        %v3324 = vadd.f32 %v3323, %v3303
        %v3325 = vadd.f32 %v3324, %v3307
        %v3326 = vrot.slane %v3325, 4
        %v3327 = vadd.f32 %v3325, %v3326
        %v3328 = vrot.slane %v3327, 2
        %v3329 = vadd.f32 %v3327, %v3328
        %v3330 = vrot.slane %v3329, 1
        %v3331 = vadd.f32 %v3329, %v3330
        %v3332 = vadd.f32 %v3248, %v3252
        %v3333 = vadd.f32 %v3332, %v3256
        %v3334 = vadd.f32 %v3333, %v3260
        %v3335 = vadd.f32 %v3334, %v3264
        %v3336 = vadd.f32 %v3335, %v3268
        %v3337 = vadd.f32 %v3336, %v3272
        %v3338 = vadd.f32 %v3337, %v3276
        %v3339 = vadd.f32 %v3338, %v3280
        %v3340 = vadd.f32 %v3339, %v3284
        %v3341 = vadd.f32 %v3340, %v3288
        %v3342 = vadd.f32 %v3341, %v3292
        %v3343 = vadd.f32 %v3342, %v3296
        %v3344 = vadd.f32 %v3343, %v3300
        %v3345 = vadd.f32 %v3344, %v3304
        %v3346 = vadd.f32 %v3345, %v3308
        %v3347 = vrot.slane %v3346, 4
        %v3348 = vadd.f32 %v3346, %v3347
        %v3349 = vrot.slane %v3348, 2
        %v3350 = vadd.f32 %v3348, %v3349
        %v3351 = vrot.slane %v3350, 1
        %v3352 = vadd.f32 %v3350, %v3351
        %v3353 = vadd.f32 %v3249, %v3253
        %v3354 = vadd.f32 %v3353, %v3257
        %v3355 = vadd.f32 %v3354, %v3261
        %v3356 = vadd.f32 %v3355, %v3265
        %v3357 = vadd.f32 %v3356, %v3269
        %v3358 = vadd.f32 %v3357, %v3273
        %v3359 = vadd.f32 %v3358, %v3277
        %v3360 = vadd.f32 %v3359, %v3281
        %v3361 = vadd.f32 %v3360, %v3285
        %v3362 = vadd.f32 %v3361, %v3289
        %v3363 = vadd.f32 %v3362, %v3293
        %v3364 = vadd.f32 %v3363, %v3297
        %v3365 = vadd.f32 %v3364, %v3301
        %v3366 = vadd.f32 %v3365, %v3305
        %v3367 = vadd.f32 %v3366, %v3309
        %v3368 = vrot.slane %v3367, 4
        %v3369 = vadd.f32 %v3367, %v3368
        %v3370 = vrot.slane %v3369, 2
        %v3371 = vadd.f32 %v3369, %v3370
        %v3372 = vrot.slane %v3371, 1
        %v3373 = vadd.f32 %v3371, %v3372
        %v3374 = vadd.f32 %v3250, %v3254
        %v3375 = vadd.f32 %v3374, %v3258
        %v3376 = vadd.f32 %v3375, %v3262
        %v3377 = vadd.f32 %v3376, %v3266
        %v3378 = vadd.f32 %v3377, %v3270
        %v3379 = vadd.f32 %v3378, %v3274
        %v3380 = vadd.f32 %v3379, %v3278
        %v3381 = vadd.f32 %v3380, %v3282
        %v3382 = vadd.f32 %v3381, %v3286
        %v3383 = vadd.f32 %v3382, %v3290
        %v3384 = vadd.f32 %v3383, %v3294
        %v3385 = vadd.f32 %v3384, %v3298
        %v3386 = vadd.f32 %v3385, %v3302
        %v3387 = vadd.f32 %v3386, %v3306
        %v3388 = vadd.f32 %v3387, %v3310
        %v3389 = vrot.slane %v3388, 4
        %v3390 = vadd.f32 %v3388, %v3389
        %v3391 = vrot.slane %v3390, 2
        %v3392 = vadd.f32 %v3390, %v3391
        %v3393 = vrot.slane %v3392, 1
        %v3394 = vadd.f32 %v3392, %v3393
        %v3395 = vadd.f32 %v2399, %v3331
        %v3396 = vadd.f32 %v2400, %v3352
        %v3397 = vadd.f32 %v2401, %v3373
        %v3398 = vadd.f32 %v2402, %v3394
        %v3399 = vmul.f32 %v215, %v2406
        %v3400 = vmul.f32 %v216, %v2408
        %v3401 = vadd.s32 %v1425, %v2416
        %v3402 = vadd.s32 %v1426, %v2418
        %v3403 = vxor.u32 %v1423, %v2424
        %v3404 = vxor.u32 %v1424, %v2426
        %v3405 = vmul.f32 %v3399, %v301
        %v3406 = vmul.f32 %v3400, %v303
        %v3407 = vadd.s32 %v3401, %v312
        %v3408 = vadd.s32 %v3402, %v314
        %v3409 = vxor.u32 %v3403, %v320
        %v3410 = vxor.u32 %v3404, %v322
        %v3411 = vand.u32 %v3409, %v325
        %v3412 = vand.u32 %v3410, %v325
        %v3413 = vmul.u32 %v328, %v3407
        %v3414 = vmul.u32 %v328, %v3408
        %v3415 = vmul.u32 %v332, %v3411
        %v3416 = vmul.u32 %v332, %v3412
        %v3417 = vadd.s32 %v3413, %v3415
        %v3418 = vadd.s32 %v3414, %v3416
        %vm3419 = vcmp.gt.s32.totalorder %v3417, 0
        %v3420 = vsel %vm3419, %v3417, 0
        %vm3421 = vcmp.gt.s32.totalorder %v3418, 0
        %v3422 = vsel %vm3421, %v3418, 0
        %vm3423 = vcmp.lt.s32.totalorder %v325, %v3420
        %v3424 = vsel %vm3423, %v325, %v3420
        %vm3425 = vcmp.lt.s32.totalorder %v325, %v3422
        %v3426 = vsel %vm3425, %v325, %v3422
        %v3427 = vshrl.u32 %v3424, 7
        %v3428 = vshrl.u32 %v3426, 7
        %v3429 = vand.u32 %v3424, 127
        %v3430 = vand.u32 %v3426, 127
        %v3431 = vlaneseq
        %v3432 = vshrl.u32 %v3431, 7
        %v3433 = vsub.s32 0, %v3432
        %v3434 = vrot.slane %v3427, %v3433
        %v3435 = vlaneseq
        %v3436 = vshrl.u32 %v3435, 7
        %v3437 = vsub.s32 4, %v3436
        %v3438 = vrot.slane %v3427, %v3437
        %v3439 = vlaneseq
        %v3440 = vshrl.u32 %v3439, 7
        %v3441 = vsub.s32 0, %v3440
        %v3442 = vrot.slane %v3428, %v3441
        %v3443 = vlaneseq
        %v3444 = vshrl.u32 %v3443, 7
        %v3445 = vsub.s32 4, %v3444
        %v3446 = vrot.slane %v3428, %v3445
        %v3447 = vlaneseq
        %v3448 = vshrl.u32 %v3447, 7
        %v3449 = vsub.s32 0, %v3448
        %v3450 = vrot.slane %v3434, %v3449
        %v3451 = vlaneseq
        %v3452 = vshrl.u32 %v3451, 7
        %v3453 = vsub.s32 0, %v3452
        %v3454 = vrot.slane %v3438, %v3453
        %v3455 = vlaneseq
        %v3456 = vshrl.u32 %v3455, 7
        %v3457 = vsub.s32 0, %v3456
        %v3458 = vrot.slane %v3442, %v3457
        %v3459 = vlaneseq
        %v3460 = vshrl.u32 %v3459, 7
        %v3461 = vsub.s32 0, %v3460
        %v3462 = vrot.slane %v3446, %v3461
        %vm3463 = vcmp.eq.s32.totalorder %v254, %v3450
        %vm3464 = vcmp.eq.s32.totalorder %v254, %v3454
        %vm3465 = vcmp.eq.s32.totalorder %v254, %v3458
        %vm3466 = vcmp.eq.s32.totalorder %v254, %v3462
        %v3467 = vsel %vm3463, 1.0, 0.0
        %v3468 = vsel %vm3464, 1.0, 0.0
        %v3469 = vsel %vm3465, 1.0, 0.0
        %v3470 = vsel %vm3466, 1.0, 0.0
        %v3471 = vpack.c.bf16 %v3467, %v3467
        %v3472 = vpack.c.bf16 %v3468, %v3468
        %v3473 = vpack.c.bf16 %v3469, %v3469
        %v3474 = vpack.c.bf16 %v3470, %v3470
        %v3476 = vsel %vm522, %v3471, 0
        %v3479 = vsel %vm522, %v3472, 0
        %v3482 = vsel %vm522, %v3473, 0
        %v3485 = vsel %vm522, %v3474, 0
        %3487 = vmatprep.subr.bf16.mxu0 %v3479
        %3488 = vmatpush1.bf16.msra.mxu0 %v3476
        %3489 = vmatprep.subr.bf16.mxu0 0
        %3490 = vmatpush1.bf16.msra.mxu0 0
        %3491 = vmatprep.subr.bf16.mxu0 0
        %3492 = vmatpush1.bf16.msra.mxu0 0
        %3493 = vmatprep.subr.bf16.mxu0 0
        %3494 = vmatpush1.bf16.msra.mxu0 0
        %3495 = vmatprep.subr.bf16.mxu0 0
        %3496 = vmatpush1.bf16.msra.mxu0 0
        %3497 = vmatprep.subr.bf16.mxu0 0
        %3498 = vmatpush1.bf16.msra.mxu0 0
        %3499 = vmatprep.subr.bf16.mxu0 0
        %3500 = vmatpush1.bf16.msra.mxu0 0
        %3501 = vmatprep.subr.bf16.mxu0 0
        %3502 = vmatpush1.bf16.msra.mxu0 0
        %3503 = vmatprep.subr.bf16.mxu0 0
        %3504 = vmatpush1.bf16.msra.mxu0 0
        %3505 = vmatprep.subr.bf16.mxu0 0
        %3506 = vmatpush1.bf16.msra.mxu0 0
        %3507 = vmatprep.subr.bf16.mxu0 0
        %3508 = vmatpush1.bf16.msra.mxu0 0
        %3509 = vmatprep.subr.bf16.mxu0 0
        %3510 = vmatpush1.bf16.msra.mxu0 0
        %3511 = vmatprep.subr.bf16.mxu0 0
        %3512 = vmatpush1.bf16.msra.mxu0 0
        %3513 = vmatprep.subr.bf16.mxu0 0
        %3514 = vmatpush1.bf16.msra.mxu0 0
        %3515 = vmatprep.subr.bf16.mxu0 0
        %3516 = vmatpush1.bf16.msra.mxu0 0
        %3517 = vmatprep.subr.bf16.mxu0 0
        %3518 = vmatpush1.bf16.msra.mxu0 0
        %3519 = vmatprep.mubr.bf16.mxu0 0
        %3520 = vmatmul.mubr.bf16.gmra.mrb[0].mxu0 %v475
        %v3521 = vpop.f32.mrb[0].mxu0
        %v3522 = vadd.f32 0.0, %v3521
        %v3523 = vpop.f32.mrb[0].mxu0
        %v3524 = vadd.f32 0.0, %v3523
        %v3525 = vpop.f32.mrb[0].mxu0
        %v3526 = vadd.f32 0.0, %v3525
        %v3527 = vpop.f32.mrb[0].mxu0
        %v3528 = vadd.f32 0.0, %v3527
        %3529 = vmatprep.mubr.bf16.mxu0 0
        %3530 = vmatmul.mubr.bf16.gmra.mrb[0].mxu0 %v478
        %v3531 = vpop.f32.mrb[0].mxu0
        %v3532 = vadd.f32 0.0, %v3531
        %v3533 = vpop.f32.mrb[0].mxu0
        %v3534 = vadd.f32 0.0, %v3533
        %v3535 = vpop.f32.mrb[0].mxu0
        %v3536 = vadd.f32 0.0, %v3535
        %v3537 = vpop.f32.mrb[0].mxu0
        %v3538 = vadd.f32 0.0, %v3537
        %3539 = vmatprep.mubr.bf16.mxu0 0
        %3540 = vmatmul.mubr.bf16.gmra.mrb[0].mxu0 %v481
        %v3541 = vpop.f32.mrb[0].mxu0
        %v3542 = vadd.f32 0.0, %v3541
        %v3543 = vpop.f32.mrb[0].mxu0
        %v3544 = vadd.f32 0.0, %v3543
        %v3545 = vpop.f32.mrb[0].mxu0
        %v3546 = vadd.f32 0.0, %v3545
        %v3547 = vpop.f32.mrb[0].mxu0
        %v3548 = vadd.f32 0.0, %v3547
        %3549 = vmatprep.mubr.bf16.mxu0 0
        %3550 = vmatmul.mubr.bf16.gmra.mrb[0].mxu0 %v484
        %v3551 = vpop.f32.mrb[0].mxu0
        %v3552 = vadd.f32 0.0, %v3551
        %v3553 = vpop.f32.mrb[0].mxu0
        %v3554 = vadd.f32 0.0, %v3553
        %v3555 = vpop.f32.mrb[0].mxu0
        %v3556 = vadd.f32 0.0, %v3555
        %v3557 = vpop.f32.mrb[0].mxu0
        %v3558 = vadd.f32 0.0, %v3557
        %3559 = vmatprep.mubr.bf16.mxu0 0
        %3560 = vmatmul.mubr.bf16.gmra.mrb[0].mxu0 %v487
        %v3561 = vpop.f32.mrb[0].mxu0
        %v3562 = vadd.f32 0.0, %v3561
        %v3563 = vpop.f32.mrb[0].mxu0
        %v3564 = vadd.f32 0.0, %v3563
        %v3565 = vpop.f32.mrb[0].mxu0
        %v3566 = vadd.f32 0.0, %v3565
        %v3567 = vpop.f32.mrb[0].mxu0
        %v3568 = vadd.f32 0.0, %v3567
        %3569 = vmatprep.mubr.bf16.mxu0 0
        %3570 = vmatmul.mubr.bf16.gmra.mrb[0].mxu0 %v490
        %v3571 = vpop.f32.mrb[0].mxu0
        %v3572 = vadd.f32 0.0, %v3571
        %v3573 = vpop.f32.mrb[0].mxu0
        %v3574 = vadd.f32 0.0, %v3573
        %v3575 = vpop.f32.mrb[0].mxu0
        %v3576 = vadd.f32 0.0, %v3575
        %v3577 = vpop.f32.mrb[0].mxu0
        %v3578 = vadd.f32 0.0, %v3577
        %3579 = vmatprep.mubr.bf16.mxu0 0
        %3580 = vmatmul.mubr.bf16.gmra.mrb[0].mxu0 %v493
        %v3581 = vpop.f32.mrb[0].mxu0
        %v3582 = vadd.f32 0.0, %v3581
        %v3583 = vpop.f32.mrb[0].mxu0
        %v3584 = vadd.f32 0.0, %v3583
        %v3585 = vpop.f32.mrb[0].mxu0
        %v3586 = vadd.f32 0.0, %v3585
        %v3587 = vpop.f32.mrb[0].mxu0
        %v3588 = vadd.f32 0.0, %v3587
        %3589 = vmatprep.mubr.bf16.mxu0 0
        %3590 = vmatmul.mubr.bf16.gmra.mrb[0].mxu0 %v496
        %v3591 = vpop.f32.mrb[0].mxu0
        %v3592 = vadd.f32 0.0, %v3591
        %v3593 = vpop.f32.mrb[0].mxu0
        %v3594 = vadd.f32 0.0, %v3593
        %v3595 = vpop.f32.mrb[0].mxu0
        %v3596 = vadd.f32 0.0, %v3595
        %v3597 = vpop.f32.mrb[0].mxu0
        %v3598 = vadd.f32 0.0, %v3597
        %3599 = vmatprep.mubr.bf16.mxu0 0
        %3600 = vmatmul.mubr.bf16.gmra.mrb[0].mxu0 %v499
        %v3601 = vpop.f32.mrb[0].mxu0
        %v3602 = vadd.f32 0.0, %v3601
        %v3603 = vpop.f32.mrb[0].mxu0
        %v3604 = vadd.f32 0.0, %v3603
        %v3605 = vpop.f32.mrb[0].mxu0
        %v3606 = vadd.f32 0.0, %v3605
        %v3607 = vpop.f32.mrb[0].mxu0
        %v3608 = vadd.f32 0.0, %v3607
        %3609 = vmatprep.mubr.bf16.mxu0 0
        %3610 = vmatmul.mubr.bf16.gmra.mrb[0].mxu0 %v502
        %v3611 = vpop.f32.mrb[0].mxu0
        %v3612 = vadd.f32 0.0, %v3611
        %v3613 = vpop.f32.mrb[0].mxu0
        %v3614 = vadd.f32 0.0, %v3613
        %v3615 = vpop.f32.mrb[0].mxu0
        %v3616 = vadd.f32 0.0, %v3615
        %v3617 = vpop.f32.mrb[0].mxu0
        %v3618 = vadd.f32 0.0, %v3617
        %3619 = vmatprep.mubr.bf16.mxu0 0
        %3620 = vmatmul.mubr.bf16.gmra.mrb[0].mxu0 %v505
        %v3621 = vpop.f32.mrb[0].mxu0
        %v3622 = vadd.f32 0.0, %v3621
        %v3623 = vpop.f32.mrb[0].mxu0
        %v3624 = vadd.f32 0.0, %v3623
        %v3625 = vpop.f32.mrb[0].mxu0
        %v3626 = vadd.f32 0.0, %v3625
        %v3627 = vpop.f32.mrb[0].mxu0
        %v3628 = vadd.f32 0.0, %v3627
        %3629 = vmatprep.mubr.bf16.mxu0 0
        %3630 = vmatmul.mubr.bf16.gmra.mrb[0].mxu0 %v508
        %v3631 = vpop.f32.mrb[0].mxu0
        %v3632 = vadd.f32 0.0, %v3631
        %v3633 = vpop.f32.mrb[0].mxu0
        %v3634 = vadd.f32 0.0, %v3633
        %v3635 = vpop.f32.mrb[0].mxu0
        %v3636 = vadd.f32 0.0, %v3635
        %v3637 = vpop.f32.mrb[0].mxu0
        %v3638 = vadd.f32 0.0, %v3637
        %3639 = vmatprep.mubr.bf16.mxu0 0
        %3640 = vmatmul.mubr.bf16.gmra.mrb[0].mxu0 %v511
        %v3641 = vpop.f32.mrb[0].mxu0
        %v3642 = vadd.f32 0.0, %v3641
        %v3643 = vpop.f32.mrb[0].mxu0
        %v3644 = vadd.f32 0.0, %v3643
        %v3645 = vpop.f32.mrb[0].mxu0
        %v3646 = vadd.f32 0.0, %v3645
        %v3647 = vpop.f32.mrb[0].mxu0
        %v3648 = vadd.f32 0.0, %v3647
        %3649 = vmatprep.mubr.bf16.mxu0 0
        %3650 = vmatmul.mubr.bf16.gmra.mrb[0].mxu0 %v514
        %v3651 = vpop.f32.mrb[0].mxu0
        %v3652 = vadd.f32 0.0, %v3651
        %v3653 = vpop.f32.mrb[0].mxu0
        %v3654 = vadd.f32 0.0, %v3653
        %v3655 = vpop.f32.mrb[0].mxu0
        %v3656 = vadd.f32 0.0, %v3655
        %v3657 = vpop.f32.mrb[0].mxu0
        %v3658 = vadd.f32 0.0, %v3657
        %3659 = vmatprep.mubr.bf16.mxu0 0
        %3660 = vmatmul.mubr.bf16.gmra.mrb[0].mxu0 %v517
        %v3661 = vpop.f32.mrb[0].mxu0
        %v3662 = vadd.f32 0.0, %v3661
        %v3663 = vpop.f32.mrb[0].mxu0
        %v3664 = vadd.f32 0.0, %v3663
        %v3665 = vpop.f32.mrb[0].mxu0
        %v3666 = vadd.f32 0.0, %v3665
        %v3667 = vpop.f32.mrb[0].mxu0
        %v3668 = vadd.f32 0.0, %v3667
        %3669 = vmatprep.mubr.bf16.mxu0 0
        %3670 = vmatmul.mubr.bf16.gmra.mrb[0].mxu0 %v520
        %v3671 = vpop.f32.mrb[0].mxu0
        %v3672 = vadd.f32 0.0, %v3671
        %v3673 = vpop.f32.mrb[0].mxu0
        %v3674 = vadd.f32 0.0, %v3673
        %v3675 = vpop.f32.mrb[0].mxu0
        %v3676 = vadd.f32 0.0, %v3675
        %v3677 = vpop.f32.mrb[0].mxu0
        %v3678 = vadd.f32 0.0, %v3677
        %3679 = vdwg.mxu0
        %3680 = vmatprep.subr.bf16.mxu0 %v3485
        %3681 = vmatpush1.bf16.msra.mxu0 %v3482
        %3682 = vmatprep.subr.bf16.mxu0 0
        %3683 = vmatpush1.bf16.msra.mxu0 0
        %3684 = vmatprep.subr.bf16.mxu0 0
        %3685 = vmatpush1.bf16.msra.mxu0 0
        %3686 = vmatprep.subr.bf16.mxu0 0
        %3687 = vmatpush1.bf16.msra.mxu0 0
        %3688 = vmatprep.subr.bf16.mxu0 0
        %3689 = vmatpush1.bf16.msra.mxu0 0
        %3690 = vmatprep.subr.bf16.mxu0 0
        %3691 = vmatpush1.bf16.msra.mxu0 0
        %3692 = vmatprep.subr.bf16.mxu0 0
        %3693 = vmatpush1.bf16.msra.mxu0 0
        %3694 = vmatprep.subr.bf16.mxu0 0
        %3695 = vmatpush1.bf16.msra.mxu0 0
        %3696 = vmatprep.subr.bf16.mxu0 0
        %3697 = vmatpush1.bf16.msra.mxu0 0
        %3698 = vmatprep.subr.bf16.mxu0 0
        %3699 = vmatpush1.bf16.msra.mxu0 0
        %3700 = vmatprep.subr.bf16.mxu0 0
        %3701 = vmatpush1.bf16.msra.mxu0 0
        %3702 = vmatprep.subr.bf16.mxu0 0
        %3703 = vmatpush1.bf16.msra.mxu0 0
        %3704 = vmatprep.subr.bf16.mxu0 0
        %3705 = vmatpush1.bf16.msra.mxu0 0
        %3706 = vmatprep.subr.bf16.mxu0 0
        %3707 = vmatpush1.bf16.msra.mxu0 0
        %3708 = vmatprep.subr.bf16.mxu0 0
        %3709 = vmatpush1.bf16.msra.mxu0 0
        %3710 = vmatprep.subr.bf16.mxu0 0
        %3711 = vmatpush1.bf16.msra.mxu0 0
        %3712 = vmatprep.mubr.bf16.mxu0 0
        %3713 = vmatmul.mubr.bf16.gmra.mrb[0].mxu0 %v475
        %v3714 = vpop.f32.mrb[0].mxu0
        %v3715 = vadd.f32 0.0, %v3714
        %v3716 = vpop.f32.mrb[0].mxu0
        %v3717 = vadd.f32 0.0, %v3716
        %v3718 = vpop.f32.mrb[0].mxu0
        %v3719 = vadd.f32 0.0, %v3718
        %v3720 = vpop.f32.mrb[0].mxu0
        %v3721 = vadd.f32 0.0, %v3720
        %3722 = vmatprep.mubr.bf16.mxu0 0
        %3723 = vmatmul.mubr.bf16.gmra.mrb[0].mxu0 %v478
        %v3724 = vpop.f32.mrb[0].mxu0
        %v3725 = vadd.f32 0.0, %v3724
        %v3726 = vpop.f32.mrb[0].mxu0
        %v3727 = vadd.f32 0.0, %v3726
        %v3728 = vpop.f32.mrb[0].mxu0
        %v3729 = vadd.f32 0.0, %v3728
        %v3730 = vpop.f32.mrb[0].mxu0
        %v3731 = vadd.f32 0.0, %v3730
        %3732 = vmatprep.mubr.bf16.mxu0 0
        %3733 = vmatmul.mubr.bf16.gmra.mrb[0].mxu0 %v481
        %v3734 = vpop.f32.mrb[0].mxu0
        %v3735 = vadd.f32 0.0, %v3734
        %v3736 = vpop.f32.mrb[0].mxu0
        %v3737 = vadd.f32 0.0, %v3736
        %v3738 = vpop.f32.mrb[0].mxu0
        %v3739 = vadd.f32 0.0, %v3738
        %v3740 = vpop.f32.mrb[0].mxu0
        %v3741 = vadd.f32 0.0, %v3740
        %3742 = vmatprep.mubr.bf16.mxu0 0
        %3743 = vmatmul.mubr.bf16.gmra.mrb[0].mxu0 %v484
        %v3744 = vpop.f32.mrb[0].mxu0
        %v3745 = vadd.f32 0.0, %v3744
        %v3746 = vpop.f32.mrb[0].mxu0
        %v3747 = vadd.f32 0.0, %v3746
        %v3748 = vpop.f32.mrb[0].mxu0
        %v3749 = vadd.f32 0.0, %v3748
        %v3750 = vpop.f32.mrb[0].mxu0
        %v3751 = vadd.f32 0.0, %v3750
        %3752 = vmatprep.mubr.bf16.mxu0 0
        %3753 = vmatmul.mubr.bf16.gmra.mrb[0].mxu0 %v487
        %v3754 = vpop.f32.mrb[0].mxu0
        %v3755 = vadd.f32 0.0, %v3754
        %v3756 = vpop.f32.mrb[0].mxu0
        %v3757 = vadd.f32 0.0, %v3756
        %v3758 = vpop.f32.mrb[0].mxu0
        %v3759 = vadd.f32 0.0, %v3758
        %v3760 = vpop.f32.mrb[0].mxu0
        %v3761 = vadd.f32 0.0, %v3760
        %3762 = vmatprep.mubr.bf16.mxu0 0
        %3763 = vmatmul.mubr.bf16.gmra.mrb[0].mxu0 %v490
        %v3764 = vpop.f32.mrb[0].mxu0
        %v3765 = vadd.f32 0.0, %v3764
        %v3766 = vpop.f32.mrb[0].mxu0
        %v3767 = vadd.f32 0.0, %v3766
        %v3768 = vpop.f32.mrb[0].mxu0
        %v3769 = vadd.f32 0.0, %v3768
        %v3770 = vpop.f32.mrb[0].mxu0
        %v3771 = vadd.f32 0.0, %v3770
        %3772 = vmatprep.mubr.bf16.mxu0 0
        %3773 = vmatmul.mubr.bf16.gmra.mrb[0].mxu0 %v493
        %v3774 = vpop.f32.mrb[0].mxu0
        %v3775 = vadd.f32 0.0, %v3774
        %v3776 = vpop.f32.mrb[0].mxu0
        %v3777 = vadd.f32 0.0, %v3776
        %v3778 = vpop.f32.mrb[0].mxu0
        %v3779 = vadd.f32 0.0, %v3778
        %v3780 = vpop.f32.mrb[0].mxu0
        %v3781 = vadd.f32 0.0, %v3780
        %3782 = vmatprep.mubr.bf16.mxu0 0
        %3783 = vmatmul.mubr.bf16.gmra.mrb[0].mxu0 %v496
        %v3784 = vpop.f32.mrb[0].mxu0
        %v3785 = vadd.f32 0.0, %v3784
        %v3786 = vpop.f32.mrb[0].mxu0
        %v3787 = vadd.f32 0.0, %v3786
        %v3788 = vpop.f32.mrb[0].mxu0
        %v3789 = vadd.f32 0.0, %v3788
        %v3790 = vpop.f32.mrb[0].mxu0
        %v3791 = vadd.f32 0.0, %v3790
        %3792 = vmatprep.mubr.bf16.mxu0 0
        %3793 = vmatmul.mubr.bf16.gmra.mrb[0].mxu0 %v499
        %v3794 = vpop.f32.mrb[0].mxu0
        %v3795 = vadd.f32 0.0, %v3794
        %v3796 = vpop.f32.mrb[0].mxu0
        %v3797 = vadd.f32 0.0, %v3796
        %v3798 = vpop.f32.mrb[0].mxu0
        %v3799 = vadd.f32 0.0, %v3798
        %v3800 = vpop.f32.mrb[0].mxu0
        %v3801 = vadd.f32 0.0, %v3800
        %3802 = vmatprep.mubr.bf16.mxu0 0
        %3803 = vmatmul.mubr.bf16.gmra.mrb[0].mxu0 %v502
        %v3804 = vpop.f32.mrb[0].mxu0
        %v3805 = vadd.f32 0.0, %v3804
        %v3806 = vpop.f32.mrb[0].mxu0
        %v3807 = vadd.f32 0.0, %v3806
        %v3808 = vpop.f32.mrb[0].mxu0
        %v3809 = vadd.f32 0.0, %v3808
        %v3810 = vpop.f32.mrb[0].mxu0
        %v3811 = vadd.f32 0.0, %v3810
        %3812 = vmatprep.mubr.bf16.mxu0 0
        %3813 = vmatmul.mubr.bf16.gmra.mrb[0].mxu0 %v505
        %v3814 = vpop.f32.mrb[0].mxu0
        %v3815 = vadd.f32 0.0, %v3814
        %v3816 = vpop.f32.mrb[0].mxu0
        %v3817 = vadd.f32 0.0, %v3816
        %v3818 = vpop.f32.mrb[0].mxu0
        %v3819 = vadd.f32 0.0, %v3818
        %v3820 = vpop.f32.mrb[0].mxu0
        %v3821 = vadd.f32 0.0, %v3820
        %3822 = vmatprep.mubr.bf16.mxu0 0
        %3823 = vmatmul.mubr.bf16.gmra.mrb[0].mxu0 %v508
        %v3824 = vpop.f32.mrb[0].mxu0
        %v3825 = vadd.f32 0.0, %v3824
        %v3826 = vpop.f32.mrb[0].mxu0
        %v3827 = vadd.f32 0.0, %v3826
        %v3828 = vpop.f32.mrb[0].mxu0
        %v3829 = vadd.f32 0.0, %v3828
        %v3830 = vpop.f32.mrb[0].mxu0
        %v3831 = vadd.f32 0.0, %v3830
        %3832 = vmatprep.mubr.bf16.mxu0 0
        %3833 = vmatmul.mubr.bf16.gmra.mrb[0].mxu0 %v511
        %v3834 = vpop.f32.mrb[0].mxu0
        %v3835 = vadd.f32 0.0, %v3834
        %v3836 = vpop.f32.mrb[0].mxu0
        %v3837 = vadd.f32 0.0, %v3836
        %v3838 = vpop.f32.mrb[0].mxu0
        %v3839 = vadd.f32 0.0, %v3838
        %v3840 = vpop.f32.mrb[0].mxu0
        %v3841 = vadd.f32 0.0, %v3840
        %3842 = vmatprep.mubr.bf16.mxu0 0
        %3843 = vmatmul.mubr.bf16.gmra.mrb[0].mxu0 %v514
        %v3844 = vpop.f32.mrb[0].mxu0
        %v3845 = vadd.f32 0.0, %v3844
        %v3846 = vpop.f32.mrb[0].mxu0
        %v3847 = vadd.f32 0.0, %v3846
        %v3848 = vpop.f32.mrb[0].mxu0
        %v3849 = vadd.f32 0.0, %v3848
        %v3850 = vpop.f32.mrb[0].mxu0
        %v3851 = vadd.f32 0.0, %v3850
        %3852 = vmatprep.mubr.bf16.mxu0 0
        %3853 = vmatmul.mubr.bf16.gmra.mrb[0].mxu0 %v517
        %v3854 = vpop.f32.mrb[0].mxu0
        %v3855 = vadd.f32 0.0, %v3854
        %v3856 = vpop.f32.mrb[0].mxu0
        %v3857 = vadd.f32 0.0, %v3856
        %v3858 = vpop.f32.mrb[0].mxu0
        %v3859 = vadd.f32 0.0, %v3858
        %v3860 = vpop.f32.mrb[0].mxu0
        %v3861 = vadd.f32 0.0, %v3860
        %3862 = vmatprep.mubr.bf16.mxu0 0
        %3863 = vmatmul.mubr.bf16.gmra.mrb[0].mxu0 %v520
        %v3864 = vpop.f32.mrb[0].mxu0
        %v3865 = vadd.f32 0.0, %v3864
        %v3866 = vpop.f32.mrb[0].mxu0
        %v3867 = vadd.f32 0.0, %v3866
        %v3868 = vpop.f32.mrb[0].mxu0
        %v3869 = vadd.f32 0.0, %v3868
        %v3870 = vpop.f32.mrb[0].mxu0
        %v3871 = vadd.f32 0.0, %v3870
        %3872 = vdwg.mxu0
        %v3873 = vlaneseq
        %v3874 = vshrl.u32 %v3873, 7
        %v3875 = vsub.s32 0, %v3874
        %v3876 = vrot.slane %v3429, %v3875
        %v3877 = vlaneseq
        %v3878 = vshrl.u32 %v3877, 7
        %v3879 = vsub.s32 4, %v3878
        %v3880 = vrot.slane %v3429, %v3879
        %v3881 = vlaneseq
        %v3882 = vshrl.u32 %v3881, 7
        %v3883 = vsub.s32 0, %v3882
        %v3884 = vrot.slane %v3430, %v3883
        %v3885 = vlaneseq
        %v3886 = vshrl.u32 %v3885, 7
        %v3887 = vsub.s32 4, %v3886
        %v3888 = vrot.slane %v3430, %v3887
        %v3889 = vlaneseq
        %v3890 = vshrl.u32 %v3889, 7
        %v3891 = vsub.s32 0, %v3890
        %v3892 = vrot.slane %v3876, %v3891
        %v3893 = vlaneseq
        %v3894 = vshrl.u32 %v3893, 7
        %v3895 = vsub.s32 0, %v3894
        %v3896 = vrot.slane %v3880, %v3895
        %v3897 = vlaneseq
        %v3898 = vshrl.u32 %v3897, 7
        %v3899 = vsub.s32 0, %v3898
        %v3900 = vrot.slane %v3884, %v3899
        %v3901 = vlaneseq
        %v3902 = vshrl.u32 %v3901, 7
        %v3903 = vsub.s32 0, %v3902
        %v3904 = vrot.slane %v3888, %v3903
        %vm3905 = vcmp.eq.s32.totalorder %v254, %v3892
        %vm3906 = vcmp.eq.s32.totalorder %v254, %v3896
        %vm3907 = vcmp.eq.s32.totalorder %v254, %v3900
        %vm3908 = vcmp.eq.s32.totalorder %v254, %v3904
        %vm3909 = vcmp.eq.s32.totalorder %v255, %v3892
        %vm3910 = vcmp.eq.s32.totalorder %v255, %v3896
        %vm3911 = vcmp.eq.s32.totalorder %v255, %v3900
        %vm3912 = vcmp.eq.s32.totalorder %v255, %v3904
        %vm3913 = vcmp.eq.s32.totalorder %v256, %v3892
        %vm3914 = vcmp.eq.s32.totalorder %v256, %v3896
        %vm3915 = vcmp.eq.s32.totalorder %v256, %v3900
        %vm3916 = vcmp.eq.s32.totalorder %v256, %v3904
        %vm3917 = vcmp.eq.s32.totalorder %v257, %v3892
        %vm3918 = vcmp.eq.s32.totalorder %v257, %v3896
        %vm3919 = vcmp.eq.s32.totalorder %v257, %v3900
        %vm3920 = vcmp.eq.s32.totalorder %v257, %v3904
        %vm3921 = vcmp.eq.s32.totalorder %v258, %v3892
        %vm3922 = vcmp.eq.s32.totalorder %v258, %v3896
        %vm3923 = vcmp.eq.s32.totalorder %v258, %v3900
        %vm3924 = vcmp.eq.s32.totalorder %v258, %v3904
        %vm3925 = vcmp.eq.s32.totalorder %v259, %v3892
        %vm3926 = vcmp.eq.s32.totalorder %v259, %v3896
        %vm3927 = vcmp.eq.s32.totalorder %v259, %v3900
        %vm3928 = vcmp.eq.s32.totalorder %v259, %v3904
        %vm3929 = vcmp.eq.s32.totalorder %v260, %v3892
        %vm3930 = vcmp.eq.s32.totalorder %v260, %v3896
        %vm3931 = vcmp.eq.s32.totalorder %v260, %v3900
        %vm3932 = vcmp.eq.s32.totalorder %v260, %v3904
        %vm3933 = vcmp.eq.s32.totalorder %v261, %v3892
        %vm3934 = vcmp.eq.s32.totalorder %v261, %v3896
        %vm3935 = vcmp.eq.s32.totalorder %v261, %v3900
        %vm3936 = vcmp.eq.s32.totalorder %v261, %v3904
        %vm3937 = vcmp.eq.s32.totalorder %v262, %v3892
        %vm3938 = vcmp.eq.s32.totalorder %v262, %v3896
        %vm3939 = vcmp.eq.s32.totalorder %v262, %v3900
        %vm3940 = vcmp.eq.s32.totalorder %v262, %v3904
        %vm3941 = vcmp.eq.s32.totalorder %v263, %v3892
        %vm3942 = vcmp.eq.s32.totalorder %v263, %v3896
        %vm3943 = vcmp.eq.s32.totalorder %v263, %v3900
        %vm3944 = vcmp.eq.s32.totalorder %v263, %v3904
        %vm3945 = vcmp.eq.s32.totalorder %v264, %v3892
        %vm3946 = vcmp.eq.s32.totalorder %v264, %v3896
        %vm3947 = vcmp.eq.s32.totalorder %v264, %v3900
        %vm3948 = vcmp.eq.s32.totalorder %v264, %v3904
        %vm3949 = vcmp.eq.s32.totalorder %v265, %v3892
        %vm3950 = vcmp.eq.s32.totalorder %v265, %v3896
        %vm3951 = vcmp.eq.s32.totalorder %v265, %v3900
        %vm3952 = vcmp.eq.s32.totalorder %v265, %v3904
        %vm3953 = vcmp.eq.s32.totalorder %v266, %v3892
        %vm3954 = vcmp.eq.s32.totalorder %v266, %v3896
        %vm3955 = vcmp.eq.s32.totalorder %v266, %v3900
        %vm3956 = vcmp.eq.s32.totalorder %v266, %v3904
        %vm3957 = vcmp.eq.s32.totalorder %v267, %v3892
        %vm3958 = vcmp.eq.s32.totalorder %v267, %v3896
        %vm3959 = vcmp.eq.s32.totalorder %v267, %v3900
        %vm3960 = vcmp.eq.s32.totalorder %v267, %v3904
        %vm3961 = vcmp.eq.s32.totalorder %v268, %v3892
        %vm3962 = vcmp.eq.s32.totalorder %v268, %v3896
        %vm3963 = vcmp.eq.s32.totalorder %v268, %v3900
        %vm3964 = vcmp.eq.s32.totalorder %v268, %v3904
        %vm3965 = vcmp.eq.s32.totalorder %v269, %v3892
        %vm3966 = vcmp.eq.s32.totalorder %v269, %v3896
        %vm3967 = vcmp.eq.s32.totalorder %v269, %v3900
        %vm3968 = vcmp.eq.s32.totalorder %v269, %v3904
        %v3971 = vlaneseq
        %v3972 = vshrl.u32 %v3971, 7
        %v3973 = vsub.s32 0, %v3972
        %v3974 = vrot.slane %v3405, %v3973
        %v3975 = vlaneseq
        %v3976 = vshrl.u32 %v3975, 7
        %v3977 = vsub.s32 4, %v3976
        %v3978 = vrot.slane %v3405, %v3977
        %v3979 = vlaneseq
        %v3980 = vshrl.u32 %v3979, 7
        %v3981 = vsub.s32 0, %v3980
        %v3982 = vrot.slane %v3406, %v3981
        %v3983 = vlaneseq
        %v3984 = vshrl.u32 %v3983, 7
        %v3985 = vsub.s32 4, %v3984
        %v3986 = vrot.slane %v3406, %v3985
        %v3991 = vlaneseq
        %v3992 = vshrl.u32 %v3991, 7
        %v3993 = vsub.s32 0, %v3992
        %v3994 = vrot.slane %v3974, %v3993
        %v3995 = vlaneseq
        %v3996 = vshrl.u32 %v3995, 7
        %v3997 = vsub.s32 0, %v3996
        %v3998 = vrot.slane %v3978, %v3997
        %v3999 = vlaneseq
        %v4000 = vshrl.u32 %v3999, 7
        %v4001 = vsub.s32 0, %v4000
        %v4002 = vrot.slane %v3982, %v4001
        %v4003 = vlaneseq
        %v4004 = vshrl.u32 %v4003, 7
        %v4005 = vsub.s32 0, %v4004
        %v4006 = vrot.slane %v3986, %v4005
        %v4007 = vsel %vm3905, %v3994, 0.0
        %v4008 = vsel %vm3906, %v3998, 0.0
        %v4009 = vsel %vm3907, %v4002, 0.0
        %v4010 = vsel %vm3908, %v4006, 0.0
        %v4011 = vsel %vm3909, %v3994, 0.0
        %v4012 = vsel %vm3910, %v3998, 0.0
        %v4013 = vsel %vm3911, %v4002, 0.0
        %v4014 = vsel %vm3912, %v4006, 0.0
        %v4015 = vsel %vm3913, %v3994, 0.0
        %v4016 = vsel %vm3914, %v3998, 0.0
        %v4017 = vsel %vm3915, %v4002, 0.0
        %v4018 = vsel %vm3916, %v4006, 0.0
        %v4019 = vsel %vm3917, %v3994, 0.0
        %v4020 = vsel %vm3918, %v3998, 0.0
        %v4021 = vsel %vm3919, %v4002, 0.0
        %v4022 = vsel %vm3920, %v4006, 0.0
        %v4023 = vsel %vm3921, %v3994, 0.0
        %v4024 = vsel %vm3922, %v3998, 0.0
        %v4025 = vsel %vm3923, %v4002, 0.0
        %v4026 = vsel %vm3924, %v4006, 0.0
        %v4027 = vsel %vm3925, %v3994, 0.0
        %v4028 = vsel %vm3926, %v3998, 0.0
        %v4029 = vsel %vm3927, %v4002, 0.0
        %v4030 = vsel %vm3928, %v4006, 0.0
        %v4031 = vsel %vm3929, %v3994, 0.0
        %v4032 = vsel %vm3930, %v3998, 0.0
        %v4033 = vsel %vm3931, %v4002, 0.0
        %v4034 = vsel %vm3932, %v4006, 0.0
        %v4035 = vsel %vm3933, %v3994, 0.0
        %v4036 = vsel %vm3934, %v3998, 0.0
        %v4037 = vsel %vm3935, %v4002, 0.0
        %v4038 = vsel %vm3936, %v4006, 0.0
        %v4039 = vsel %vm3937, %v3994, 0.0
        %v4040 = vsel %vm3938, %v3998, 0.0
        %v4041 = vsel %vm3939, %v4002, 0.0
        %v4042 = vsel %vm3940, %v4006, 0.0
        %v4043 = vsel %vm3941, %v3994, 0.0
        %v4044 = vsel %vm3942, %v3998, 0.0
        %v4045 = vsel %vm3943, %v4002, 0.0
        %v4046 = vsel %vm3944, %v4006, 0.0
        %v4047 = vsel %vm3945, %v3994, 0.0
        %v4048 = vsel %vm3946, %v3998, 0.0
        %v4049 = vsel %vm3947, %v4002, 0.0
        %v4050 = vsel %vm3948, %v4006, 0.0
        %v4051 = vsel %vm3949, %v3994, 0.0
        %v4052 = vsel %vm3950, %v3998, 0.0
        %v4053 = vsel %vm3951, %v4002, 0.0
        %v4054 = vsel %vm3952, %v4006, 0.0
        %v4055 = vsel %vm3953, %v3994, 0.0
        %v4056 = vsel %vm3954, %v3998, 0.0
        %v4057 = vsel %vm3955, %v4002, 0.0
        %v4058 = vsel %vm3956, %v4006, 0.0
        %v4059 = vsel %vm3957, %v3994, 0.0
        %v4060 = vsel %vm3958, %v3998, 0.0
        %v4061 = vsel %vm3959, %v4002, 0.0
        %v4062 = vsel %vm3960, %v4006, 0.0
        %v4063 = vsel %vm3961, %v3994, 0.0
        %v4064 = vsel %vm3962, %v3998, 0.0
        %v4065 = vsel %vm3963, %v4002, 0.0
        %v4066 = vsel %vm3964, %v4006, 0.0
        %v4067 = vsel %vm3965, %v3994, 0.0
        %v4068 = vsel %vm3966, %v3998, 0.0
        %v4069 = vsel %vm3967, %v4002, 0.0
        %v4070 = vsel %vm3968, %v4006, 0.0
        %v4071 = vmul.f32 %v3522, %v4007
        %v4072 = vmul.f32 %v3524, %v4008
        %v4073 = vmul.f32 %v3715, %v4009
        %v4074 = vmul.f32 %v3717, %v4010
        %v4075 = vmul.f32 %v3526, %v4011
        %v4076 = vmul.f32 %v3528, %v4012
        %v4077 = vmul.f32 %v3719, %v4013
        %v4078 = vmul.f32 %v3721, %v4014
        %v4079 = vmul.f32 %v3532, %v4015
        %v4080 = vmul.f32 %v3534, %v4016
        %v4081 = vmul.f32 %v3725, %v4017
        %v4082 = vmul.f32 %v3727, %v4018
        %v4083 = vmul.f32 %v3536, %v4019
        %v4084 = vmul.f32 %v3538, %v4020
        %v4085 = vmul.f32 %v3729, %v4021
        %v4086 = vmul.f32 %v3731, %v4022
        %v4087 = vmul.f32 %v3542, %v4023
        %v4088 = vmul.f32 %v3544, %v4024
        %v4089 = vmul.f32 %v3735, %v4025
        %v4090 = vmul.f32 %v3737, %v4026
        %v4091 = vmul.f32 %v3546, %v4027
        %v4092 = vmul.f32 %v3548, %v4028
        %v4093 = vmul.f32 %v3739, %v4029
        %v4094 = vmul.f32 %v3741, %v4030
        %v4095 = vmul.f32 %v3552, %v4031
        %v4096 = vmul.f32 %v3554, %v4032
        %v4097 = vmul.f32 %v3745, %v4033
        %v4098 = vmul.f32 %v3747, %v4034
        %v4099 = vmul.f32 %v3556, %v4035
        %v4100 = vmul.f32 %v3558, %v4036
        %v4101 = vmul.f32 %v3749, %v4037
        %v4102 = vmul.f32 %v3751, %v4038
        %v4103 = vmul.f32 %v3562, %v4039
        %v4104 = vmul.f32 %v3564, %v4040
        %v4105 = vmul.f32 %v3755, %v4041
        %v4106 = vmul.f32 %v3757, %v4042
        %v4107 = vmul.f32 %v3566, %v4043
        %v4108 = vmul.f32 %v3568, %v4044
        %v4109 = vmul.f32 %v3759, %v4045
        %v4110 = vmul.f32 %v3761, %v4046
        %v4111 = vmul.f32 %v3572, %v4047
        %v4112 = vmul.f32 %v3574, %v4048
        %v4113 = vmul.f32 %v3765, %v4049
        %v4114 = vmul.f32 %v3767, %v4050
        %v4115 = vmul.f32 %v3576, %v4051
        %v4116 = vmul.f32 %v3578, %v4052
        %v4117 = vmul.f32 %v3769, %v4053
        %v4118 = vmul.f32 %v3771, %v4054
        %v4119 = vmul.f32 %v3582, %v4055
        %v4120 = vmul.f32 %v3584, %v4056
        %v4121 = vmul.f32 %v3775, %v4057
        %v4122 = vmul.f32 %v3777, %v4058
        %v4123 = vmul.f32 %v3586, %v4059
        %v4124 = vmul.f32 %v3588, %v4060
        %v4125 = vmul.f32 %v3779, %v4061
        %v4126 = vmul.f32 %v3781, %v4062
        %v4127 = vmul.f32 %v3592, %v4063
        %v4128 = vmul.f32 %v3594, %v4064
        %v4129 = vmul.f32 %v3785, %v4065
        %v4130 = vmul.f32 %v3787, %v4066
        %v4131 = vmul.f32 %v3596, %v4067
        %v4132 = vmul.f32 %v3598, %v4068
        %v4133 = vmul.f32 %v3789, %v4069
        %v4134 = vmul.f32 %v3791, %v4070
        %v4135 = vadd.f32 %v4071, %v4075
        %v4136 = vadd.f32 %v4135, %v4079
        %v4137 = vadd.f32 %v4136, %v4083
        %v4138 = vadd.f32 %v4137, %v4087
        %v4139 = vadd.f32 %v4138, %v4091
        %v4140 = vadd.f32 %v4139, %v4095
        %v4141 = vadd.f32 %v4140, %v4099
        %v4142 = vadd.f32 %v4141, %v4103
        %v4143 = vadd.f32 %v4142, %v4107
        %v4144 = vadd.f32 %v4143, %v4111
        %v4145 = vadd.f32 %v4144, %v4115
        %v4146 = vadd.f32 %v4145, %v4119
        %v4147 = vadd.f32 %v4146, %v4123
        %v4148 = vadd.f32 %v4147, %v4127
        %v4149 = vadd.f32 %v4148, %v4131
        %v4150 = vrot.slane %v4149, 4
        %v4151 = vadd.f32 %v4149, %v4150
        %v4152 = vrot.slane %v4151, 2
        %v4153 = vadd.f32 %v4151, %v4152
        %v4154 = vrot.slane %v4153, 1
        %v4155 = vadd.f32 %v4153, %v4154
        %v4156 = vadd.f32 %v4072, %v4076
        %v4157 = vadd.f32 %v4156, %v4080
        %v4158 = vadd.f32 %v4157, %v4084
        %v4159 = vadd.f32 %v4158, %v4088
        %v4160 = vadd.f32 %v4159, %v4092
        %v4161 = vadd.f32 %v4160, %v4096
        %v4162 = vadd.f32 %v4161, %v4100
        %v4163 = vadd.f32 %v4162, %v4104
        %v4164 = vadd.f32 %v4163, %v4108
        %v4165 = vadd.f32 %v4164, %v4112
        %v4166 = vadd.f32 %v4165, %v4116
        %v4167 = vadd.f32 %v4166, %v4120
        %v4168 = vadd.f32 %v4167, %v4124
        %v4169 = vadd.f32 %v4168, %v4128
        %v4170 = vadd.f32 %v4169, %v4132
        %v4171 = vrot.slane %v4170, 4
        %v4172 = vadd.f32 %v4170, %v4171
        %v4173 = vrot.slane %v4172, 2
        %v4174 = vadd.f32 %v4172, %v4173
        %v4175 = vrot.slane %v4174, 1
        %v4176 = vadd.f32 %v4174, %v4175
        %v4177 = vadd.f32 %v4073, %v4077
        %v4178 = vadd.f32 %v4177, %v4081
        %v4179 = vadd.f32 %v4178, %v4085
        %v4180 = vadd.f32 %v4179, %v4089
        %v4181 = vadd.f32 %v4180, %v4093
        %v4182 = vadd.f32 %v4181, %v4097
        %v4183 = vadd.f32 %v4182, %v4101
        %v4184 = vadd.f32 %v4183, %v4105
        %v4185 = vadd.f32 %v4184, %v4109
        %v4186 = vadd.f32 %v4185, %v4113
        %v4187 = vadd.f32 %v4186, %v4117
        %v4188 = vadd.f32 %v4187, %v4121
        %v4189 = vadd.f32 %v4188, %v4125
        %v4190 = vadd.f32 %v4189, %v4129
        %v4191 = vadd.f32 %v4190, %v4133
        %v4192 = vrot.slane %v4191, 4
        %v4193 = vadd.f32 %v4191, %v4192
        %v4194 = vrot.slane %v4193, 2
        %v4195 = vadd.f32 %v4193, %v4194
        %v4196 = vrot.slane %v4195, 1
        %v4197 = vadd.f32 %v4195, %v4196
        %v4198 = vadd.f32 %v4074, %v4078
        %v4199 = vadd.f32 %v4198, %v4082
        %v4200 = vadd.f32 %v4199, %v4086
        %v4201 = vadd.f32 %v4200, %v4090
        %v4202 = vadd.f32 %v4201, %v4094
        %v4203 = vadd.f32 %v4202, %v4098
        %v4204 = vadd.f32 %v4203, %v4102
        %v4205 = vadd.f32 %v4204, %v4106
        %v4206 = vadd.f32 %v4205, %v4110
        %v4207 = vadd.f32 %v4206, %v4114
        %v4208 = vadd.f32 %v4207, %v4118
        %v4209 = vadd.f32 %v4208, %v4122
        %v4210 = vadd.f32 %v4209, %v4126
        %v4211 = vadd.f32 %v4210, %v4130
        %v4212 = vadd.f32 %v4211, %v4134
        %v4213 = vrot.slane %v4212, 4
        %v4214 = vadd.f32 %v4212, %v4213
        %v4215 = vrot.slane %v4214, 2
        %v4216 = vadd.f32 %v4214, %v4215
        %v4217 = vrot.slane %v4216, 1
        %v4218 = vadd.f32 %v4216, %v4217
        %v4219 = vadd.f32 %v3243, %v4155
        %v4220 = vadd.f32 %v3244, %v4176
        %v4221 = vadd.f32 %v3245, %v4197
        %v4222 = vadd.f32 %v3246, %v4218
        %v4223 = vmul.f32 %v3602, %v4007
        %v4224 = vmul.f32 %v3604, %v4008
        %v4225 = vmul.f32 %v3795, %v4009
        %v4226 = vmul.f32 %v3797, %v4010
        %v4227 = vmul.f32 %v3606, %v4011
        %v4228 = vmul.f32 %v3608, %v4012
        %v4229 = vmul.f32 %v3799, %v4013
        %v4230 = vmul.f32 %v3801, %v4014
        %v4231 = vmul.f32 %v3612, %v4015
        %v4232 = vmul.f32 %v3614, %v4016
        %v4233 = vmul.f32 %v3805, %v4017
        %v4234 = vmul.f32 %v3807, %v4018
        %v4235 = vmul.f32 %v3616, %v4019
        %v4236 = vmul.f32 %v3618, %v4020
        %v4237 = vmul.f32 %v3809, %v4021
        %v4238 = vmul.f32 %v3811, %v4022
        %v4239 = vmul.f32 %v3622, %v4023
        %v4240 = vmul.f32 %v3624, %v4024
        %v4241 = vmul.f32 %v3815, %v4025
        %v4242 = vmul.f32 %v3817, %v4026
        %v4243 = vmul.f32 %v3626, %v4027
        %v4244 = vmul.f32 %v3628, %v4028
        %v4245 = vmul.f32 %v3819, %v4029
        %v4246 = vmul.f32 %v3821, %v4030
        %v4247 = vmul.f32 %v3632, %v4031
        %v4248 = vmul.f32 %v3634, %v4032
        %v4249 = vmul.f32 %v3825, %v4033
        %v4250 = vmul.f32 %v3827, %v4034
        %v4251 = vmul.f32 %v3636, %v4035
        %v4252 = vmul.f32 %v3638, %v4036
        %v4253 = vmul.f32 %v3829, %v4037
        %v4254 = vmul.f32 %v3831, %v4038
        %v4255 = vmul.f32 %v3642, %v4039
        %v4256 = vmul.f32 %v3644, %v4040
        %v4257 = vmul.f32 %v3835, %v4041
        %v4258 = vmul.f32 %v3837, %v4042
        %v4259 = vmul.f32 %v3646, %v4043
        %v4260 = vmul.f32 %v3648, %v4044
        %v4261 = vmul.f32 %v3839, %v4045
        %v4262 = vmul.f32 %v3841, %v4046
        %v4263 = vmul.f32 %v3652, %v4047
        %v4264 = vmul.f32 %v3654, %v4048
        %v4265 = vmul.f32 %v3845, %v4049
        %v4266 = vmul.f32 %v3847, %v4050
        %v4267 = vmul.f32 %v3656, %v4051
        %v4268 = vmul.f32 %v3658, %v4052
        %v4269 = vmul.f32 %v3849, %v4053
        %v4270 = vmul.f32 %v3851, %v4054
        %v4271 = vmul.f32 %v3662, %v4055
        %v4272 = vmul.f32 %v3664, %v4056
        %v4273 = vmul.f32 %v3855, %v4057
        %v4274 = vmul.f32 %v3857, %v4058
        %v4275 = vmul.f32 %v3666, %v4059
        %v4276 = vmul.f32 %v3668, %v4060
        %v4277 = vmul.f32 %v3859, %v4061
        %v4278 = vmul.f32 %v3861, %v4062
        %v4279 = vmul.f32 %v3672, %v4063
        %v4280 = vmul.f32 %v3674, %v4064
        %v4281 = vmul.f32 %v3865, %v4065
        %v4282 = vmul.f32 %v3867, %v4066
        %v4283 = vmul.f32 %v3676, %v4067
        %v4284 = vmul.f32 %v3678, %v4068
        %v4285 = vmul.f32 %v3869, %v4069
        %v4286 = vmul.f32 %v3871, %v4070
        %v4287 = vadd.f32 %v4223, %v4227
        %v4288 = vadd.f32 %v4287, %v4231
        %v4289 = vadd.f32 %v4288, %v4235
        %v4290 = vadd.f32 %v4289, %v4239
        %v4291 = vadd.f32 %v4290, %v4243
        %v4292 = vadd.f32 %v4291, %v4247
        %v4293 = vadd.f32 %v4292, %v4251
        %v4294 = vadd.f32 %v4293, %v4255
        %v4295 = vadd.f32 %v4294, %v4259
        %v4296 = vadd.f32 %v4295, %v4263
        %v4297 = vadd.f32 %v4296, %v4267
        %v4298 = vadd.f32 %v4297, %v4271
        %v4299 = vadd.f32 %v4298, %v4275
        %v4300 = vadd.f32 %v4299, %v4279
        %v4301 = vadd.f32 %v4300, %v4283
        %v4302 = vrot.slane %v4301, 4
        %v4303 = vadd.f32 %v4301, %v4302
        %v4304 = vrot.slane %v4303, 2
        %v4305 = vadd.f32 %v4303, %v4304
        %v4306 = vrot.slane %v4305, 1
        %v4307 = vadd.f32 %v4305, %v4306
        %v4308 = vadd.f32 %v4224, %v4228
        %v4309 = vadd.f32 %v4308, %v4232
        %v4310 = vadd.f32 %v4309, %v4236
        %v4311 = vadd.f32 %v4310, %v4240
        %v4312 = vadd.f32 %v4311, %v4244
        %v4313 = vadd.f32 %v4312, %v4248
        %v4314 = vadd.f32 %v4313, %v4252
        %v4315 = vadd.f32 %v4314, %v4256
        %v4316 = vadd.f32 %v4315, %v4260
        %v4317 = vadd.f32 %v4316, %v4264
        %v4318 = vadd.f32 %v4317, %v4268
        %v4319 = vadd.f32 %v4318, %v4272
        %v4320 = vadd.f32 %v4319, %v4276
        %v4321 = vadd.f32 %v4320, %v4280
        %v4322 = vadd.f32 %v4321, %v4284
        %v4323 = vrot.slane %v4322, 4
        %v4324 = vadd.f32 %v4322, %v4323
        %v4325 = vrot.slane %v4324, 2
        %v4326 = vadd.f32 %v4324, %v4325
        %v4327 = vrot.slane %v4326, 1
        %v4328 = vadd.f32 %v4326, %v4327
        %v4329 = vadd.f32 %v4225, %v4229
        %v4330 = vadd.f32 %v4329, %v4233
        %v4331 = vadd.f32 %v4330, %v4237
        %v4332 = vadd.f32 %v4331, %v4241
        %v4333 = vadd.f32 %v4332, %v4245
        %v4334 = vadd.f32 %v4333, %v4249
        %v4335 = vadd.f32 %v4334, %v4253
        %v4336 = vadd.f32 %v4335, %v4257
        %v4337 = vadd.f32 %v4336, %v4261
        %v4338 = vadd.f32 %v4337, %v4265
        %v4339 = vadd.f32 %v4338, %v4269
        %v4340 = vadd.f32 %v4339, %v4273
        %v4341 = vadd.f32 %v4340, %v4277
        %v4342 = vadd.f32 %v4341, %v4281
        %v4343 = vadd.f32 %v4342, %v4285
        %v4344 = vrot.slane %v4343, 4
        %v4345 = vadd.f32 %v4343, %v4344
        %v4346 = vrot.slane %v4345, 2
        %v4347 = vadd.f32 %v4345, %v4346
        %v4348 = vrot.slane %v4347, 1
        %v4349 = vadd.f32 %v4347, %v4348
        %v4350 = vadd.f32 %v4226, %v4230
        %v4351 = vadd.f32 %v4350, %v4234
        %v4352 = vadd.f32 %v4351, %v4238
        %v4353 = vadd.f32 %v4352, %v4242
        %v4354 = vadd.f32 %v4353, %v4246
        %v4355 = vadd.f32 %v4354, %v4250
        %v4356 = vadd.f32 %v4355, %v4254
        %v4357 = vadd.f32 %v4356, %v4258
        %v4358 = vadd.f32 %v4357, %v4262
        %v4359 = vadd.f32 %v4358, %v4266
        %v4360 = vadd.f32 %v4359, %v4270
        %v4361 = vadd.f32 %v4360, %v4274
        %v4362 = vadd.f32 %v4361, %v4278
        %v4363 = vadd.f32 %v4362, %v4282
        %v4364 = vadd.f32 %v4363, %v4286
        %v4365 = vrot.slane %v4364, 4
        %v4366 = vadd.f32 %v4364, %v4365
        %v4367 = vrot.slane %v4366, 2
        %v4368 = vadd.f32 %v4366, %v4367
        %v4369 = vrot.slane %v4368, 1
        %v4370 = vadd.f32 %v4368, %v4369
        %v4371 = vadd.f32 %v3395, %v4307
        %v4372 = vadd.f32 %v3396, %v4328
        %v4373 = vadd.f32 %v3397, %v4349
        %v4374 = vadd.f32 %v3398, %v4370
        %v4375 = vrot.slane %v215, 6
        %v4376 = vrot.slane %v4375, 4
        %v4377 = vrot.slane %v216, 6
        %v4378 = vrot.slane %v4377, 4
        %v4381 = vmul.f32 %v281, %v4376
        %v4382 = vmul.f32 %v282, %v4378
        %v4383 = vmul.u32 %v1423, %v308
        %v4384 = vmul.u32 %v1424, %v308
        %v4385 = vrot.slane %v4383, 6
        %v4386 = vrot.slane %v4385, 4
        %v4387 = vrot.slane %v4384, 6
        %v4388 = vrot.slane %v4387, 4
        %v4389 = vadd.s32 %v290, %v4386
        %v4390 = vadd.s32 %v291, %v4388
        %v4391 = vmul.u32 %v1423, 805459861
        %v4392 = vmul.u32 %v1424, 805459861
        %v4393 = vrot.slane %v4391, 6
        %v4394 = vrot.slane %v4393, 4
        %v4395 = vrot.slane %v4392, 6
        %v4396 = vrot.slane %v4395, 4
        %v4397 = vxor.u32 %v298, %v4394
        %v4398 = vxor.u32 %v299, %v4396
        %v4399 = vand.u32 %v4397, %v325
        %v4400 = vand.u32 %v4398, %v325
        %v4401 = vmul.u32 %v328, %v4389
        %v4402 = vmul.u32 %v328, %v4390
        %v4403 = vmul.u32 %v332, %v4399
        %v4404 = vmul.u32 %v332, %v4400
        %v4405 = vadd.s32 %v4401, %v4403
        %v4406 = vadd.s32 %v4402, %v4404
        %vm4407 = vcmp.gt.s32.totalorder %v4405, 0
        %v4408 = vsel %vm4407, %v4405, 0
        %vm4409 = vcmp.gt.s32.totalorder %v4406, 0
        %v4410 = vsel %vm4409, %v4406, 0
        %vm4411 = vcmp.lt.s32.totalorder %v325, %v4408
        %v4412 = vsel %vm4411, %v325, %v4408
        %vm4413 = vcmp.lt.s32.totalorder %v325, %v4410
        %v4414 = vsel %vm4413, %v325, %v4410
        %v4415 = vshrl.u32 %v4412, 7
        %v4416 = vshrl.u32 %v4414, 7
        %v4417 = vand.u32 %v4412, 127
        %v4418 = vand.u32 %v4414, 127
        %v4419 = vlaneseq
        %v4420 = vshrl.u32 %v4419, 7
        %v4421 = vsub.s32 0, %v4420
        %v4422 = vrot.slane %v4415, %v4421
        %v4423 = vlaneseq
        %v4424 = vshrl.u32 %v4423, 7
        %v4425 = vsub.s32 4, %v4424
        %v4426 = vrot.slane %v4415, %v4425
        %v4427 = vlaneseq
        %v4428 = vshrl.u32 %v4427, 7
        %v4429 = vsub.s32 0, %v4428
        %v4430 = vrot.slane %v4416, %v4429
        %v4431 = vlaneseq
        %v4432 = vshrl.u32 %v4431, 7
        %v4433 = vsub.s32 4, %v4432
        %v4434 = vrot.slane %v4416, %v4433
        %v4435 = vlaneseq
        %v4436 = vshrl.u32 %v4435, 7
        %v4437 = vsub.s32 0, %v4436
        %v4438 = vrot.slane %v4422, %v4437
        %v4439 = vlaneseq
        %v4440 = vshrl.u32 %v4439, 7
        %v4441 = vsub.s32 0, %v4440
        %v4442 = vrot.slane %v4426, %v4441
        %v4443 = vlaneseq
        %v4444 = vshrl.u32 %v4443, 7
        %v4445 = vsub.s32 0, %v4444
        %v4446 = vrot.slane %v4430, %v4445
        %v4447 = vlaneseq
        %v4448 = vshrl.u32 %v4447, 7
        %v4449 = vsub.s32 0, %v4448
        %v4450 = vrot.slane %v4434, %v4449
        %vm4451 = vcmp.eq.s32.totalorder %v254, %v4438
        %vm4452 = vcmp.eq.s32.totalorder %v254, %v4442
        %vm4453 = vcmp.eq.s32.totalorder %v254, %v4446
        %vm4454 = vcmp.eq.s32.totalorder %v254, %v4450
        %v4455 = vsel %vm4451, 1.0, 0.0
        %v4456 = vsel %vm4452, 1.0, 0.0
        %v4457 = vsel %vm4453, 1.0, 0.0
        %v4458 = vsel %vm4454, 1.0, 0.0
        %v4459 = vpack.c.bf16 %v4455, %v4455
        %v4460 = vpack.c.bf16 %v4456, %v4456
        %v4461 = vpack.c.bf16 %v4457, %v4457
        %v4462 = vpack.c.bf16 %v4458, %v4458
        %v4464 = vsel %vm522, %v4459, 0
        %v4467 = vsel %vm522, %v4460, 0
        %v4470 = vsel %vm522, %v4461, 0
        %v4473 = vsel %vm522, %v4462, 0
        %4475 = vmatprep.subr.bf16.mxu0 %v4467
        %4476 = vmatpush1.bf16.msra.mxu0 %v4464
        %4477 = vmatprep.subr.bf16.mxu0 0
        %4478 = vmatpush1.bf16.msra.mxu0 0
        %4479 = vmatprep.subr.bf16.mxu0 0
        %4480 = vmatpush1.bf16.msra.mxu0 0
        %4481 = vmatprep.subr.bf16.mxu0 0
        %4482 = vmatpush1.bf16.msra.mxu0 0
        %4483 = vmatprep.subr.bf16.mxu0 0
        %4484 = vmatpush1.bf16.msra.mxu0 0
        %4485 = vmatprep.subr.bf16.mxu0 0
        %4486 = vmatpush1.bf16.msra.mxu0 0
        %4487 = vmatprep.subr.bf16.mxu0 0
        %4488 = vmatpush1.bf16.msra.mxu0 0
        %4489 = vmatprep.subr.bf16.mxu0 0
        %4490 = vmatpush1.bf16.msra.mxu0 0
        %4491 = vmatprep.subr.bf16.mxu0 0
        %4492 = vmatpush1.bf16.msra.mxu0 0
        %4493 = vmatprep.subr.bf16.mxu0 0
        %4494 = vmatpush1.bf16.msra.mxu0 0
        %4495 = vmatprep.subr.bf16.mxu0 0
        %4496 = vmatpush1.bf16.msra.mxu0 0
        %4497 = vmatprep.subr.bf16.mxu0 0
        %4498 = vmatpush1.bf16.msra.mxu0 0
        %4499 = vmatprep.subr.bf16.mxu0 0
        %4500 = vmatpush1.bf16.msra.mxu0 0
        %4501 = vmatprep.subr.bf16.mxu0 0
        %4502 = vmatpush1.bf16.msra.mxu0 0
        %4503 = vmatprep.subr.bf16.mxu0 0
        %4504 = vmatpush1.bf16.msra.mxu0 0
        %4505 = vmatprep.subr.bf16.mxu0 0
        %4506 = vmatpush1.bf16.msra.mxu0 0
        %4507 = vmatprep.mubr.bf16.mxu0 0
        %4508 = vmatmul.mubr.bf16.gmra.mrb[0].mxu0 %v475
        %v4509 = vpop.f32.mrb[0].mxu0
        %v4510 = vadd.f32 0.0, %v4509
        %v4511 = vpop.f32.mrb[0].mxu0
        %v4512 = vadd.f32 0.0, %v4511
        %v4513 = vpop.f32.mrb[0].mxu0
        %v4514 = vadd.f32 0.0, %v4513
        %v4515 = vpop.f32.mrb[0].mxu0
        %v4516 = vadd.f32 0.0, %v4515
        %4517 = vmatprep.mubr.bf16.mxu0 0
        %4518 = vmatmul.mubr.bf16.gmra.mrb[0].mxu0 %v478
        %v4519 = vpop.f32.mrb[0].mxu0
        %v4520 = vadd.f32 0.0, %v4519
        %v4521 = vpop.f32.mrb[0].mxu0
        %v4522 = vadd.f32 0.0, %v4521
        %v4523 = vpop.f32.mrb[0].mxu0
        %v4524 = vadd.f32 0.0, %v4523
        %v4525 = vpop.f32.mrb[0].mxu0
        %v4526 = vadd.f32 0.0, %v4525
        %4527 = vmatprep.mubr.bf16.mxu0 0
        %4528 = vmatmul.mubr.bf16.gmra.mrb[0].mxu0 %v481
        %v4529 = vpop.f32.mrb[0].mxu0
        %v4530 = vadd.f32 0.0, %v4529
        %v4531 = vpop.f32.mrb[0].mxu0
        %v4532 = vadd.f32 0.0, %v4531
        %v4533 = vpop.f32.mrb[0].mxu0
        %v4534 = vadd.f32 0.0, %v4533
        %v4535 = vpop.f32.mrb[0].mxu0
        %v4536 = vadd.f32 0.0, %v4535
        %4537 = vmatprep.mubr.bf16.mxu0 0
        %4538 = vmatmul.mubr.bf16.gmra.mrb[0].mxu0 %v484
        %v4539 = vpop.f32.mrb[0].mxu0
        %v4540 = vadd.f32 0.0, %v4539
        %v4541 = vpop.f32.mrb[0].mxu0
        %v4542 = vadd.f32 0.0, %v4541
        %v4543 = vpop.f32.mrb[0].mxu0
        %v4544 = vadd.f32 0.0, %v4543
        %v4545 = vpop.f32.mrb[0].mxu0
        %v4546 = vadd.f32 0.0, %v4545
        %4547 = vmatprep.mubr.bf16.mxu0 0
        %4548 = vmatmul.mubr.bf16.gmra.mrb[0].mxu0 %v487
        %v4549 = vpop.f32.mrb[0].mxu0
        %v4550 = vadd.f32 0.0, %v4549
        %v4551 = vpop.f32.mrb[0].mxu0
        %v4552 = vadd.f32 0.0, %v4551
        %v4553 = vpop.f32.mrb[0].mxu0
        %v4554 = vadd.f32 0.0, %v4553
        %v4555 = vpop.f32.mrb[0].mxu0
        %v4556 = vadd.f32 0.0, %v4555
        %4557 = vmatprep.mubr.bf16.mxu0 0
        %4558 = vmatmul.mubr.bf16.gmra.mrb[0].mxu0 %v490
        %v4559 = vpop.f32.mrb[0].mxu0
        %v4560 = vadd.f32 0.0, %v4559
        %v4561 = vpop.f32.mrb[0].mxu0
        %v4562 = vadd.f32 0.0, %v4561
        %v4563 = vpop.f32.mrb[0].mxu0
        %v4564 = vadd.f32 0.0, %v4563
        %v4565 = vpop.f32.mrb[0].mxu0
        %v4566 = vadd.f32 0.0, %v4565
        %4567 = vmatprep.mubr.bf16.mxu0 0
        %4568 = vmatmul.mubr.bf16.gmra.mrb[0].mxu0 %v493
        %v4569 = vpop.f32.mrb[0].mxu0
        %v4570 = vadd.f32 0.0, %v4569
        %v4571 = vpop.f32.mrb[0].mxu0
        %v4572 = vadd.f32 0.0, %v4571
        %v4573 = vpop.f32.mrb[0].mxu0
        %v4574 = vadd.f32 0.0, %v4573
        %v4575 = vpop.f32.mrb[0].mxu0
        %v4576 = vadd.f32 0.0, %v4575
        %4577 = vmatprep.mubr.bf16.mxu0 0
        %4578 = vmatmul.mubr.bf16.gmra.mrb[0].mxu0 %v496
        %v4579 = vpop.f32.mrb[0].mxu0
        %v4580 = vadd.f32 0.0, %v4579
        %v4581 = vpop.f32.mrb[0].mxu0
        %v4582 = vadd.f32 0.0, %v4581
        %v4583 = vpop.f32.mrb[0].mxu0
        %v4584 = vadd.f32 0.0, %v4583
        %v4585 = vpop.f32.mrb[0].mxu0
        %v4586 = vadd.f32 0.0, %v4585
        %4587 = vmatprep.mubr.bf16.mxu0 0
        %4588 = vmatmul.mubr.bf16.gmra.mrb[0].mxu0 %v499
        %v4589 = vpop.f32.mrb[0].mxu0
        %v4590 = vadd.f32 0.0, %v4589
        %v4591 = vpop.f32.mrb[0].mxu0
        %v4592 = vadd.f32 0.0, %v4591
        %v4593 = vpop.f32.mrb[0].mxu0
        %v4594 = vadd.f32 0.0, %v4593
        %v4595 = vpop.f32.mrb[0].mxu0
        %v4596 = vadd.f32 0.0, %v4595
        %4597 = vmatprep.mubr.bf16.mxu0 0
        %4598 = vmatmul.mubr.bf16.gmra.mrb[0].mxu0 %v502
        %v4599 = vpop.f32.mrb[0].mxu0
        %v4600 = vadd.f32 0.0, %v4599
        %v4601 = vpop.f32.mrb[0].mxu0
        %v4602 = vadd.f32 0.0, %v4601
        %v4603 = vpop.f32.mrb[0].mxu0
        %v4604 = vadd.f32 0.0, %v4603
        %v4605 = vpop.f32.mrb[0].mxu0
        %v4606 = vadd.f32 0.0, %v4605
        %4607 = vmatprep.mubr.bf16.mxu0 0
        %4608 = vmatmul.mubr.bf16.gmra.mrb[0].mxu0 %v505
        %v4609 = vpop.f32.mrb[0].mxu0
        %v4610 = vadd.f32 0.0, %v4609
        %v4611 = vpop.f32.mrb[0].mxu0
        %v4612 = vadd.f32 0.0, %v4611
        %v4613 = vpop.f32.mrb[0].mxu0
        %v4614 = vadd.f32 0.0, %v4613
        %v4615 = vpop.f32.mrb[0].mxu0
        %v4616 = vadd.f32 0.0, %v4615
        %4617 = vmatprep.mubr.bf16.mxu0 0
        %4618 = vmatmul.mubr.bf16.gmra.mrb[0].mxu0 %v508
        %v4619 = vpop.f32.mrb[0].mxu0
        %v4620 = vadd.f32 0.0, %v4619
        %v4621 = vpop.f32.mrb[0].mxu0
        %v4622 = vadd.f32 0.0, %v4621
        %v4623 = vpop.f32.mrb[0].mxu0
        %v4624 = vadd.f32 0.0, %v4623
        %v4625 = vpop.f32.mrb[0].mxu0
        %v4626 = vadd.f32 0.0, %v4625
        %4627 = vmatprep.mubr.bf16.mxu0 0
        %4628 = vmatmul.mubr.bf16.gmra.mrb[0].mxu0 %v511
        %v4629 = vpop.f32.mrb[0].mxu0
        %v4630 = vadd.f32 0.0, %v4629
        %v4631 = vpop.f32.mrb[0].mxu0
        %v4632 = vadd.f32 0.0, %v4631
        %v4633 = vpop.f32.mrb[0].mxu0
        %v4634 = vadd.f32 0.0, %v4633
        %v4635 = vpop.f32.mrb[0].mxu0
        %v4636 = vadd.f32 0.0, %v4635
        %4637 = vmatprep.mubr.bf16.mxu0 0
        %4638 = vmatmul.mubr.bf16.gmra.mrb[0].mxu0 %v514
        %v4639 = vpop.f32.mrb[0].mxu0
        %v4640 = vadd.f32 0.0, %v4639
        %v4641 = vpop.f32.mrb[0].mxu0
        %v4642 = vadd.f32 0.0, %v4641
        %v4643 = vpop.f32.mrb[0].mxu0
        %v4644 = vadd.f32 0.0, %v4643
        %v4645 = vpop.f32.mrb[0].mxu0
        %v4646 = vadd.f32 0.0, %v4645
        %4647 = vmatprep.mubr.bf16.mxu0 0
        %4648 = vmatmul.mubr.bf16.gmra.mrb[0].mxu0 %v517
        %v4649 = vpop.f32.mrb[0].mxu0
        %v4650 = vadd.f32 0.0, %v4649
        %v4651 = vpop.f32.mrb[0].mxu0
        %v4652 = vadd.f32 0.0, %v4651
        %v4653 = vpop.f32.mrb[0].mxu0
        %v4654 = vadd.f32 0.0, %v4653
        %v4655 = vpop.f32.mrb[0].mxu0
        %v4656 = vadd.f32 0.0, %v4655
        %4657 = vmatprep.mubr.bf16.mxu0 0
        %4658 = vmatmul.mubr.bf16.gmra.mrb[0].mxu0 %v520
        %v4659 = vpop.f32.mrb[0].mxu0
        %v4660 = vadd.f32 0.0, %v4659
        %v4661 = vpop.f32.mrb[0].mxu0
        %v4662 = vadd.f32 0.0, %v4661
        %v4663 = vpop.f32.mrb[0].mxu0
        %v4664 = vadd.f32 0.0, %v4663
        %v4665 = vpop.f32.mrb[0].mxu0
        %v4666 = vadd.f32 0.0, %v4665
        %4667 = vdwg.mxu0
        %4668 = vmatprep.subr.bf16.mxu0 %v4473
        %4669 = vmatpush1.bf16.msra.mxu0 %v4470
        %4670 = vmatprep.subr.bf16.mxu0 0
        %4671 = vmatpush1.bf16.msra.mxu0 0
        %4672 = vmatprep.subr.bf16.mxu0 0
        %4673 = vmatpush1.bf16.msra.mxu0 0
        %4674 = vmatprep.subr.bf16.mxu0 0
        %4675 = vmatpush1.bf16.msra.mxu0 0
        %4676 = vmatprep.subr.bf16.mxu0 0
        %4677 = vmatpush1.bf16.msra.mxu0 0
        %4678 = vmatprep.subr.bf16.mxu0 0
        %4679 = vmatpush1.bf16.msra.mxu0 0
        %4680 = vmatprep.subr.bf16.mxu0 0
        %4681 = vmatpush1.bf16.msra.mxu0 0
        %4682 = vmatprep.subr.bf16.mxu0 0
        %4683 = vmatpush1.bf16.msra.mxu0 0
        %4684 = vmatprep.subr.bf16.mxu0 0
        %4685 = vmatpush1.bf16.msra.mxu0 0
        %4686 = vmatprep.subr.bf16.mxu0 0
        %4687 = vmatpush1.bf16.msra.mxu0 0
        %4688 = vmatprep.subr.bf16.mxu0 0
        %4689 = vmatpush1.bf16.msra.mxu0 0
        %4690 = vmatprep.subr.bf16.mxu0 0
        %4691 = vmatpush1.bf16.msra.mxu0 0
        %4692 = vmatprep.subr.bf16.mxu0 0
        %4693 = vmatpush1.bf16.msra.mxu0 0
        %4694 = vmatprep.subr.bf16.mxu0 0
        %4695 = vmatpush1.bf16.msra.mxu0 0
        %4696 = vmatprep.subr.bf16.mxu0 0
        %4697 = vmatpush1.bf16.msra.mxu0 0
        %4698 = vmatprep.subr.bf16.mxu0 0
        %4699 = vmatpush1.bf16.msra.mxu0 0
        %4700 = vmatprep.mubr.bf16.mxu0 0
        %4701 = vmatmul.mubr.bf16.gmra.mrb[0].mxu0 %v475
        %v4702 = vpop.f32.mrb[0].mxu0
        %v4703 = vadd.f32 0.0, %v4702
        %v4704 = vpop.f32.mrb[0].mxu0
        %v4705 = vadd.f32 0.0, %v4704
        %v4706 = vpop.f32.mrb[0].mxu0
        %v4707 = vadd.f32 0.0, %v4706
        %v4708 = vpop.f32.mrb[0].mxu0
        %v4709 = vadd.f32 0.0, %v4708
        %4710 = vmatprep.mubr.bf16.mxu0 0
        %4711 = vmatmul.mubr.bf16.gmra.mrb[0].mxu0 %v478
        %v4712 = vpop.f32.mrb[0].mxu0
        %v4713 = vadd.f32 0.0, %v4712
        %v4714 = vpop.f32.mrb[0].mxu0
        %v4715 = vadd.f32 0.0, %v4714
        %v4716 = vpop.f32.mrb[0].mxu0
        %v4717 = vadd.f32 0.0, %v4716
        %v4718 = vpop.f32.mrb[0].mxu0
        %v4719 = vadd.f32 0.0, %v4718
        %4720 = vmatprep.mubr.bf16.mxu0 0
        %4721 = vmatmul.mubr.bf16.gmra.mrb[0].mxu0 %v481
        %v4722 = vpop.f32.mrb[0].mxu0
        %v4723 = vadd.f32 0.0, %v4722
        %v4724 = vpop.f32.mrb[0].mxu0
        %v4725 = vadd.f32 0.0, %v4724
        %v4726 = vpop.f32.mrb[0].mxu0
        %v4727 = vadd.f32 0.0, %v4726
        %v4728 = vpop.f32.mrb[0].mxu0
        %v4729 = vadd.f32 0.0, %v4728
        %4730 = vmatprep.mubr.bf16.mxu0 0
        %4731 = vmatmul.mubr.bf16.gmra.mrb[0].mxu0 %v484
        %v4732 = vpop.f32.mrb[0].mxu0
        %v4733 = vadd.f32 0.0, %v4732
        %v4734 = vpop.f32.mrb[0].mxu0
        %v4735 = vadd.f32 0.0, %v4734
        %v4736 = vpop.f32.mrb[0].mxu0
        %v4737 = vadd.f32 0.0, %v4736
        %v4738 = vpop.f32.mrb[0].mxu0
        %v4739 = vadd.f32 0.0, %v4738
        %4740 = vmatprep.mubr.bf16.mxu0 0
        %4741 = vmatmul.mubr.bf16.gmra.mrb[0].mxu0 %v487
        %v4742 = vpop.f32.mrb[0].mxu0
        %v4743 = vadd.f32 0.0, %v4742
        %v4744 = vpop.f32.mrb[0].mxu0
        %v4745 = vadd.f32 0.0, %v4744
        %v4746 = vpop.f32.mrb[0].mxu0
        %v4747 = vadd.f32 0.0, %v4746
        %v4748 = vpop.f32.mrb[0].mxu0
        %v4749 = vadd.f32 0.0, %v4748
        %4750 = vmatprep.mubr.bf16.mxu0 0
        %4751 = vmatmul.mubr.bf16.gmra.mrb[0].mxu0 %v490
        %v4752 = vpop.f32.mrb[0].mxu0
        %v4753 = vadd.f32 0.0, %v4752
        %v4754 = vpop.f32.mrb[0].mxu0
        %v4755 = vadd.f32 0.0, %v4754
        %v4756 = vpop.f32.mrb[0].mxu0
        %v4757 = vadd.f32 0.0, %v4756
        %v4758 = vpop.f32.mrb[0].mxu0
        %v4759 = vadd.f32 0.0, %v4758
        %4760 = vmatprep.mubr.bf16.mxu0 0
        %4761 = vmatmul.mubr.bf16.gmra.mrb[0].mxu0 %v493
        %v4762 = vpop.f32.mrb[0].mxu0
        %v4763 = vadd.f32 0.0, %v4762
        %v4764 = vpop.f32.mrb[0].mxu0
        %v4765 = vadd.f32 0.0, %v4764
        %v4766 = vpop.f32.mrb[0].mxu0
        %v4767 = vadd.f32 0.0, %v4766
        %v4768 = vpop.f32.mrb[0].mxu0
        %v4769 = vadd.f32 0.0, %v4768
        %4770 = vmatprep.mubr.bf16.mxu0 0
        %4771 = vmatmul.mubr.bf16.gmra.mrb[0].mxu0 %v496
        %v4772 = vpop.f32.mrb[0].mxu0
        %v4773 = vadd.f32 0.0, %v4772
        %v4774 = vpop.f32.mrb[0].mxu0
        %v4775 = vadd.f32 0.0, %v4774
        %v4776 = vpop.f32.mrb[0].mxu0
        %v4777 = vadd.f32 0.0, %v4776
        %v4778 = vpop.f32.mrb[0].mxu0
        %v4779 = vadd.f32 0.0, %v4778
        %4780 = vmatprep.mubr.bf16.mxu0 0
        %4781 = vmatmul.mubr.bf16.gmra.mrb[0].mxu0 %v499
        %v4782 = vpop.f32.mrb[0].mxu0
        %v4783 = vadd.f32 0.0, %v4782
        %v4784 = vpop.f32.mrb[0].mxu0
        %v4785 = vadd.f32 0.0, %v4784
        %v4786 = vpop.f32.mrb[0].mxu0
        %v4787 = vadd.f32 0.0, %v4786
        %v4788 = vpop.f32.mrb[0].mxu0
        %v4789 = vadd.f32 0.0, %v4788
        %4790 = vmatprep.mubr.bf16.mxu0 0
        %4791 = vmatmul.mubr.bf16.gmra.mrb[0].mxu0 %v502
        %v4792 = vpop.f32.mrb[0].mxu0
        %v4793 = vadd.f32 0.0, %v4792
        %v4794 = vpop.f32.mrb[0].mxu0
        %v4795 = vadd.f32 0.0, %v4794
        %v4796 = vpop.f32.mrb[0].mxu0
        %v4797 = vadd.f32 0.0, %v4796
        %v4798 = vpop.f32.mrb[0].mxu0
        %v4799 = vadd.f32 0.0, %v4798
        %4800 = vmatprep.mubr.bf16.mxu0 0
        %4801 = vmatmul.mubr.bf16.gmra.mrb[0].mxu0 %v505
        %v4802 = vpop.f32.mrb[0].mxu0
        %v4803 = vadd.f32 0.0, %v4802
        %v4804 = vpop.f32.mrb[0].mxu0
        %v4805 = vadd.f32 0.0, %v4804
        %v4806 = vpop.f32.mrb[0].mxu0
        %v4807 = vadd.f32 0.0, %v4806
        %v4808 = vpop.f32.mrb[0].mxu0
        %v4809 = vadd.f32 0.0, %v4808
        %4810 = vmatprep.mubr.bf16.mxu0 0
        %4811 = vmatmul.mubr.bf16.gmra.mrb[0].mxu0 %v508
        %v4812 = vpop.f32.mrb[0].mxu0
        %v4813 = vadd.f32 0.0, %v4812
        %v4814 = vpop.f32.mrb[0].mxu0
        %v4815 = vadd.f32 0.0, %v4814
        %v4816 = vpop.f32.mrb[0].mxu0
        %v4817 = vadd.f32 0.0, %v4816
        %v4818 = vpop.f32.mrb[0].mxu0
        %v4819 = vadd.f32 0.0, %v4818
        %4820 = vmatprep.mubr.bf16.mxu0 0
        %4821 = vmatmul.mubr.bf16.gmra.mrb[0].mxu0 %v511
        %v4822 = vpop.f32.mrb[0].mxu0
        %v4823 = vadd.f32 0.0, %v4822
        %v4824 = vpop.f32.mrb[0].mxu0
        %v4825 = vadd.f32 0.0, %v4824
        %v4826 = vpop.f32.mrb[0].mxu0
        %v4827 = vadd.f32 0.0, %v4826
        %v4828 = vpop.f32.mrb[0].mxu0
        %v4829 = vadd.f32 0.0, %v4828
        %4830 = vmatprep.mubr.bf16.mxu0 0
        %4831 = vmatmul.mubr.bf16.gmra.mrb[0].mxu0 %v514
        %v4832 = vpop.f32.mrb[0].mxu0
        %v4833 = vadd.f32 0.0, %v4832
        %v4834 = vpop.f32.mrb[0].mxu0
        %v4835 = vadd.f32 0.0, %v4834
        %v4836 = vpop.f32.mrb[0].mxu0
        %v4837 = vadd.f32 0.0, %v4836
        %v4838 = vpop.f32.mrb[0].mxu0
        %v4839 = vadd.f32 0.0, %v4838
        %4840 = vmatprep.mubr.bf16.mxu0 0
        %4841 = vmatmul.mubr.bf16.gmra.mrb[0].mxu0 %v517
        %v4842 = vpop.f32.mrb[0].mxu0
        %v4843 = vadd.f32 0.0, %v4842
        %v4844 = vpop.f32.mrb[0].mxu0
        %v4845 = vadd.f32 0.0, %v4844
        %v4846 = vpop.f32.mrb[0].mxu0
        %v4847 = vadd.f32 0.0, %v4846
        %v4848 = vpop.f32.mrb[0].mxu0
        %v4849 = vadd.f32 0.0, %v4848
        %4850 = vmatprep.mubr.bf16.mxu0 0
        %4851 = vmatmul.mubr.bf16.gmra.mrb[0].mxu0 %v520
        %v4852 = vpop.f32.mrb[0].mxu0
        %v4853 = vadd.f32 0.0, %v4852
        %v4854 = vpop.f32.mrb[0].mxu0
        %v4855 = vadd.f32 0.0, %v4854
        %v4856 = vpop.f32.mrb[0].mxu0
        %v4857 = vadd.f32 0.0, %v4856
        %v4858 = vpop.f32.mrb[0].mxu0
        %v4859 = vadd.f32 0.0, %v4858
        %4860 = vdwg.mxu0
        %v4861 = vlaneseq
        %v4862 = vshrl.u32 %v4861, 7
        %v4863 = vsub.s32 0, %v4862
        %v4864 = vrot.slane %v4417, %v4863
        %v4865 = vlaneseq
        %v4866 = vshrl.u32 %v4865, 7
        %v4867 = vsub.s32 4, %v4866
        %v4868 = vrot.slane %v4417, %v4867
        %v4869 = vlaneseq
        %v4870 = vshrl.u32 %v4869, 7
        %v4871 = vsub.s32 0, %v4870
        %v4872 = vrot.slane %v4418, %v4871
        %v4873 = vlaneseq
        %v4874 = vshrl.u32 %v4873, 7
        %v4875 = vsub.s32 4, %v4874
        %v4876 = vrot.slane %v4418, %v4875
        %v4877 = vlaneseq
        %v4878 = vshrl.u32 %v4877, 7
        %v4879 = vsub.s32 0, %v4878
        %v4880 = vrot.slane %v4864, %v4879
        %v4881 = vlaneseq
        %v4882 = vshrl.u32 %v4881, 7
        %v4883 = vsub.s32 0, %v4882
        %v4884 = vrot.slane %v4868, %v4883
        %v4885 = vlaneseq
        %v4886 = vshrl.u32 %v4885, 7
        %v4887 = vsub.s32 0, %v4886
        %v4888 = vrot.slane %v4872, %v4887
        %v4889 = vlaneseq
        %v4890 = vshrl.u32 %v4889, 7
        %v4891 = vsub.s32 0, %v4890
        %v4892 = vrot.slane %v4876, %v4891
        %vm4893 = vcmp.eq.s32.totalorder %v254, %v4880
        %vm4894 = vcmp.eq.s32.totalorder %v254, %v4884
        %vm4895 = vcmp.eq.s32.totalorder %v254, %v4888
        %vm4896 = vcmp.eq.s32.totalorder %v254, %v4892
        %vm4897 = vcmp.eq.s32.totalorder %v255, %v4880
        %vm4898 = vcmp.eq.s32.totalorder %v255, %v4884
        %vm4899 = vcmp.eq.s32.totalorder %v255, %v4888
        %vm4900 = vcmp.eq.s32.totalorder %v255, %v4892
        %vm4901 = vcmp.eq.s32.totalorder %v256, %v4880
        %vm4902 = vcmp.eq.s32.totalorder %v256, %v4884
        %vm4903 = vcmp.eq.s32.totalorder %v256, %v4888
        %vm4904 = vcmp.eq.s32.totalorder %v256, %v4892
        %vm4905 = vcmp.eq.s32.totalorder %v257, %v4880
        %vm4906 = vcmp.eq.s32.totalorder %v257, %v4884
        %vm4907 = vcmp.eq.s32.totalorder %v257, %v4888
        %vm4908 = vcmp.eq.s32.totalorder %v257, %v4892
        %vm4909 = vcmp.eq.s32.totalorder %v258, %v4880
        %vm4910 = vcmp.eq.s32.totalorder %v258, %v4884
        %vm4911 = vcmp.eq.s32.totalorder %v258, %v4888
        %vm4912 = vcmp.eq.s32.totalorder %v258, %v4892
        %vm4913 = vcmp.eq.s32.totalorder %v259, %v4880
        %vm4914 = vcmp.eq.s32.totalorder %v259, %v4884
        %vm4915 = vcmp.eq.s32.totalorder %v259, %v4888
        %vm4916 = vcmp.eq.s32.totalorder %v259, %v4892
        %vm4917 = vcmp.eq.s32.totalorder %v260, %v4880
        %vm4918 = vcmp.eq.s32.totalorder %v260, %v4884
        %vm4919 = vcmp.eq.s32.totalorder %v260, %v4888
        %vm4920 = vcmp.eq.s32.totalorder %v260, %v4892
        %vm4921 = vcmp.eq.s32.totalorder %v261, %v4880
        %vm4922 = vcmp.eq.s32.totalorder %v261, %v4884
        %vm4923 = vcmp.eq.s32.totalorder %v261, %v4888
        %vm4924 = vcmp.eq.s32.totalorder %v261, %v4892
        %vm4925 = vcmp.eq.s32.totalorder %v262, %v4880
        %vm4926 = vcmp.eq.s32.totalorder %v262, %v4884
        %vm4927 = vcmp.eq.s32.totalorder %v262, %v4888
        %vm4928 = vcmp.eq.s32.totalorder %v262, %v4892
        %vm4929 = vcmp.eq.s32.totalorder %v263, %v4880
        %vm4930 = vcmp.eq.s32.totalorder %v263, %v4884
        %vm4931 = vcmp.eq.s32.totalorder %v263, %v4888
        %vm4932 = vcmp.eq.s32.totalorder %v263, %v4892
        %vm4933 = vcmp.eq.s32.totalorder %v264, %v4880
        %vm4934 = vcmp.eq.s32.totalorder %v264, %v4884
        %vm4935 = vcmp.eq.s32.totalorder %v264, %v4888
        %vm4936 = vcmp.eq.s32.totalorder %v264, %v4892
        %vm4937 = vcmp.eq.s32.totalorder %v265, %v4880
        %vm4938 = vcmp.eq.s32.totalorder %v265, %v4884
        %vm4939 = vcmp.eq.s32.totalorder %v265, %v4888
        %vm4940 = vcmp.eq.s32.totalorder %v265, %v4892
        %vm4941 = vcmp.eq.s32.totalorder %v266, %v4880
        %vm4942 = vcmp.eq.s32.totalorder %v266, %v4884
        %vm4943 = vcmp.eq.s32.totalorder %v266, %v4888
        %vm4944 = vcmp.eq.s32.totalorder %v266, %v4892
        %vm4945 = vcmp.eq.s32.totalorder %v267, %v4880
        %vm4946 = vcmp.eq.s32.totalorder %v267, %v4884
        %vm4947 = vcmp.eq.s32.totalorder %v267, %v4888
        %vm4948 = vcmp.eq.s32.totalorder %v267, %v4892
        %vm4949 = vcmp.eq.s32.totalorder %v268, %v4880
        %vm4950 = vcmp.eq.s32.totalorder %v268, %v4884
        %vm4951 = vcmp.eq.s32.totalorder %v268, %v4888
        %vm4952 = vcmp.eq.s32.totalorder %v268, %v4892
        %vm4953 = vcmp.eq.s32.totalorder %v269, %v4880
        %vm4954 = vcmp.eq.s32.totalorder %v269, %v4884
        %vm4955 = vcmp.eq.s32.totalorder %v269, %v4888
        %vm4956 = vcmp.eq.s32.totalorder %v269, %v4892
        %v4959 = vlaneseq
        %v4960 = vshrl.u32 %v4959, 7
        %v4961 = vsub.s32 0, %v4960
        %v4962 = vrot.slane %v4381, %v4961
        %v4963 = vlaneseq
        %v4964 = vshrl.u32 %v4963, 7
        %v4965 = vsub.s32 4, %v4964
        %v4966 = vrot.slane %v4381, %v4965
        %v4967 = vlaneseq
        %v4968 = vshrl.u32 %v4967, 7
        %v4969 = vsub.s32 0, %v4968
        %v4970 = vrot.slane %v4382, %v4969
        %v4971 = vlaneseq
        %v4972 = vshrl.u32 %v4971, 7
        %v4973 = vsub.s32 4, %v4972
        %v4974 = vrot.slane %v4382, %v4973
        %v4979 = vlaneseq
        %v4980 = vshrl.u32 %v4979, 7
        %v4981 = vsub.s32 0, %v4980
        %v4982 = vrot.slane %v4962, %v4981
        %v4983 = vlaneseq
        %v4984 = vshrl.u32 %v4983, 7
        %v4985 = vsub.s32 0, %v4984
        %v4986 = vrot.slane %v4966, %v4985
        %v4987 = vlaneseq
        %v4988 = vshrl.u32 %v4987, 7
        %v4989 = vsub.s32 0, %v4988
        %v4990 = vrot.slane %v4970, %v4989
        %v4991 = vlaneseq
        %v4992 = vshrl.u32 %v4991, 7
        %v4993 = vsub.s32 0, %v4992
        %v4994 = vrot.slane %v4974, %v4993
        %v4995 = vsel %vm4893, %v4982, 0.0
        %v4996 = vsel %vm4894, %v4986, 0.0
        %v4997 = vsel %vm4895, %v4990, 0.0
        %v4998 = vsel %vm4896, %v4994, 0.0
        %v4999 = vsel %vm4897, %v4982, 0.0
        %v5000 = vsel %vm4898, %v4986, 0.0
        %v5001 = vsel %vm4899, %v4990, 0.0
        %v5002 = vsel %vm4900, %v4994, 0.0
        %v5003 = vsel %vm4901, %v4982, 0.0
        %v5004 = vsel %vm4902, %v4986, 0.0
        %v5005 = vsel %vm4903, %v4990, 0.0
        %v5006 = vsel %vm4904, %v4994, 0.0
        %v5007 = vsel %vm4905, %v4982, 0.0
        %v5008 = vsel %vm4906, %v4986, 0.0
        %v5009 = vsel %vm4907, %v4990, 0.0
        %v5010 = vsel %vm4908, %v4994, 0.0
        %v5011 = vsel %vm4909, %v4982, 0.0
        %v5012 = vsel %vm4910, %v4986, 0.0
        %v5013 = vsel %vm4911, %v4990, 0.0
        %v5014 = vsel %vm4912, %v4994, 0.0
        %v5015 = vsel %vm4913, %v4982, 0.0
        %v5016 = vsel %vm4914, %v4986, 0.0
        %v5017 = vsel %vm4915, %v4990, 0.0
        %v5018 = vsel %vm4916, %v4994, 0.0
        %v5019 = vsel %vm4917, %v4982, 0.0
        %v5020 = vsel %vm4918, %v4986, 0.0
        %v5021 = vsel %vm4919, %v4990, 0.0
        %v5022 = vsel %vm4920, %v4994, 0.0
        %v5023 = vsel %vm4921, %v4982, 0.0
        %v5024 = vsel %vm4922, %v4986, 0.0
        %v5025 = vsel %vm4923, %v4990, 0.0
        %v5026 = vsel %vm4924, %v4994, 0.0
        %v5027 = vsel %vm4925, %v4982, 0.0
        %v5028 = vsel %vm4926, %v4986, 0.0
        %v5029 = vsel %vm4927, %v4990, 0.0
        %v5030 = vsel %vm4928, %v4994, 0.0
        %v5031 = vsel %vm4929, %v4982, 0.0
        %v5032 = vsel %vm4930, %v4986, 0.0
        %v5033 = vsel %vm4931, %v4990, 0.0
        %v5034 = vsel %vm4932, %v4994, 0.0
        %v5035 = vsel %vm4933, %v4982, 0.0
        %v5036 = vsel %vm4934, %v4986, 0.0
        %v5037 = vsel %vm4935, %v4990, 0.0
        %v5038 = vsel %vm4936, %v4994, 0.0
        %v5039 = vsel %vm4937, %v4982, 0.0
        %v5040 = vsel %vm4938, %v4986, 0.0
        %v5041 = vsel %vm4939, %v4990, 0.0
        %v5042 = vsel %vm4940, %v4994, 0.0
        %v5043 = vsel %vm4941, %v4982, 0.0
        %v5044 = vsel %vm4942, %v4986, 0.0
        %v5045 = vsel %vm4943, %v4990, 0.0
        %v5046 = vsel %vm4944, %v4994, 0.0
        %v5047 = vsel %vm4945, %v4982, 0.0
        %v5048 = vsel %vm4946, %v4986, 0.0
        %v5049 = vsel %vm4947, %v4990, 0.0
        %v5050 = vsel %vm4948, %v4994, 0.0
        %v5051 = vsel %vm4949, %v4982, 0.0
        %v5052 = vsel %vm4950, %v4986, 0.0
        %v5053 = vsel %vm4951, %v4990, 0.0
        %v5054 = vsel %vm4952, %v4994, 0.0
        %v5055 = vsel %vm4953, %v4982, 0.0
        %v5056 = vsel %vm4954, %v4986, 0.0
        %v5057 = vsel %vm4955, %v4990, 0.0
        %v5058 = vsel %vm4956, %v4994, 0.0
        %v5059 = vmul.f32 %v4510, %v4995
        %v5060 = vmul.f32 %v4512, %v4996
        %v5061 = vmul.f32 %v4703, %v4997
        %v5062 = vmul.f32 %v4705, %v4998
        %v5063 = vmul.f32 %v4514, %v4999
        %v5064 = vmul.f32 %v4516, %v5000
        %v5065 = vmul.f32 %v4707, %v5001
        %v5066 = vmul.f32 %v4709, %v5002
        %v5067 = vmul.f32 %v4520, %v5003
        %v5068 = vmul.f32 %v4522, %v5004
        %v5069 = vmul.f32 %v4713, %v5005
        %v5070 = vmul.f32 %v4715, %v5006
        %v5071 = vmul.f32 %v4524, %v5007
        %v5072 = vmul.f32 %v4526, %v5008
        %v5073 = vmul.f32 %v4717, %v5009
        %v5074 = vmul.f32 %v4719, %v5010
        %v5075 = vmul.f32 %v4530, %v5011
        %v5076 = vmul.f32 %v4532, %v5012
        %v5077 = vmul.f32 %v4723, %v5013
        %v5078 = vmul.f32 %v4725, %v5014
        %v5079 = vmul.f32 %v4534, %v5015
        %v5080 = vmul.f32 %v4536, %v5016
        %v5081 = vmul.f32 %v4727, %v5017
        %v5082 = vmul.f32 %v4729, %v5018
        %v5083 = vmul.f32 %v4540, %v5019
        %v5084 = vmul.f32 %v4542, %v5020
        %v5085 = vmul.f32 %v4733, %v5021
        %v5086 = vmul.f32 %v4735, %v5022
        %v5087 = vmul.f32 %v4544, %v5023
        %v5088 = vmul.f32 %v4546, %v5024
        %v5089 = vmul.f32 %v4737, %v5025
        %v5090 = vmul.f32 %v4739, %v5026
        %v5091 = vmul.f32 %v4550, %v5027
        %v5092 = vmul.f32 %v4552, %v5028
        %v5093 = vmul.f32 %v4743, %v5029
        %v5094 = vmul.f32 %v4745, %v5030
        %v5095 = vmul.f32 %v4554, %v5031
        %v5096 = vmul.f32 %v4556, %v5032
        %v5097 = vmul.f32 %v4747, %v5033
        %v5098 = vmul.f32 %v4749, %v5034
        %v5099 = vmul.f32 %v4560, %v5035
        %v5100 = vmul.f32 %v4562, %v5036
        %v5101 = vmul.f32 %v4753, %v5037
        %v5102 = vmul.f32 %v4755, %v5038
        %v5103 = vmul.f32 %v4564, %v5039
        %v5104 = vmul.f32 %v4566, %v5040
        %v5105 = vmul.f32 %v4757, %v5041
        %v5106 = vmul.f32 %v4759, %v5042
        %v5107 = vmul.f32 %v4570, %v5043
        %v5108 = vmul.f32 %v4572, %v5044
        %v5109 = vmul.f32 %v4763, %v5045
        %v5110 = vmul.f32 %v4765, %v5046
        %v5111 = vmul.f32 %v4574, %v5047
        %v5112 = vmul.f32 %v4576, %v5048
        %v5113 = vmul.f32 %v4767, %v5049
        %v5114 = vmul.f32 %v4769, %v5050
        %v5115 = vmul.f32 %v4580, %v5051
        %v5116 = vmul.f32 %v4582, %v5052
        %v5117 = vmul.f32 %v4773, %v5053
        %v5118 = vmul.f32 %v4775, %v5054
        %v5119 = vmul.f32 %v4584, %v5055
        %v5120 = vmul.f32 %v4586, %v5056
        %v5121 = vmul.f32 %v4777, %v5057
        %v5122 = vmul.f32 %v4779, %v5058
        %v5123 = vadd.f32 %v5059, %v5063
        %v5124 = vadd.f32 %v5123, %v5067
        %v5125 = vadd.f32 %v5124, %v5071
        %v5126 = vadd.f32 %v5125, %v5075
        %v5127 = vadd.f32 %v5126, %v5079
        %v5128 = vadd.f32 %v5127, %v5083
        %v5129 = vadd.f32 %v5128, %v5087
        %v5130 = vadd.f32 %v5129, %v5091
        %v5131 = vadd.f32 %v5130, %v5095
        %v5132 = vadd.f32 %v5131, %v5099
        %v5133 = vadd.f32 %v5132, %v5103
        %v5134 = vadd.f32 %v5133, %v5107
        %v5135 = vadd.f32 %v5134, %v5111
        %v5136 = vadd.f32 %v5135, %v5115
        %v5137 = vadd.f32 %v5136, %v5119
        %v5138 = vrot.slane %v5137, 4
        %v5139 = vadd.f32 %v5137, %v5138
        %v5140 = vrot.slane %v5139, 2
        %v5141 = vadd.f32 %v5139, %v5140
        %v5142 = vrot.slane %v5141, 1
        %v5143 = vadd.f32 %v5141, %v5142
        %v5144 = vadd.f32 %v5060, %v5064
        %v5145 = vadd.f32 %v5144, %v5068
        %v5146 = vadd.f32 %v5145, %v5072
        %v5147 = vadd.f32 %v5146, %v5076
        %v5148 = vadd.f32 %v5147, %v5080
        %v5149 = vadd.f32 %v5148, %v5084
        %v5150 = vadd.f32 %v5149, %v5088
        %v5151 = vadd.f32 %v5150, %v5092
        %v5152 = vadd.f32 %v5151, %v5096
        %v5153 = vadd.f32 %v5152, %v5100
        %v5154 = vadd.f32 %v5153, %v5104
        %v5155 = vadd.f32 %v5154, %v5108
        %v5156 = vadd.f32 %v5155, %v5112
        %v5157 = vadd.f32 %v5156, %v5116
        %v5158 = vadd.f32 %v5157, %v5120
        %v5159 = vrot.slane %v5158, 4
        %v5160 = vadd.f32 %v5158, %v5159
        %v5161 = vrot.slane %v5160, 2
        %v5162 = vadd.f32 %v5160, %v5161
        %v5163 = vrot.slane %v5162, 1
        %v5164 = vadd.f32 %v5162, %v5163
        %v5165 = vadd.f32 %v5061, %v5065
        %v5166 = vadd.f32 %v5165, %v5069
        %v5167 = vadd.f32 %v5166, %v5073
        %v5168 = vadd.f32 %v5167, %v5077
        %v5169 = vadd.f32 %v5168, %v5081
        %v5170 = vadd.f32 %v5169, %v5085
        %v5171 = vadd.f32 %v5170, %v5089
        %v5172 = vadd.f32 %v5171, %v5093
        %v5173 = vadd.f32 %v5172, %v5097
        %v5174 = vadd.f32 %v5173, %v5101
        %v5175 = vadd.f32 %v5174, %v5105
        %v5176 = vadd.f32 %v5175, %v5109
        %v5177 = vadd.f32 %v5176, %v5113
        %v5178 = vadd.f32 %v5177, %v5117
        %v5179 = vadd.f32 %v5178, %v5121
        %v5180 = vrot.slane %v5179, 4
        %v5181 = vadd.f32 %v5179, %v5180
        %v5182 = vrot.slane %v5181, 2
        %v5183 = vadd.f32 %v5181, %v5182
        %v5184 = vrot.slane %v5183, 1
        %v5185 = vadd.f32 %v5183, %v5184
        %v5186 = vadd.f32 %v5062, %v5066
        %v5187 = vadd.f32 %v5186, %v5070
        %v5188 = vadd.f32 %v5187, %v5074
        %v5189 = vadd.f32 %v5188, %v5078
        %v5190 = vadd.f32 %v5189, %v5082
        %v5191 = vadd.f32 %v5190, %v5086
        %v5192 = vadd.f32 %v5191, %v5090
        %v5193 = vadd.f32 %v5192, %v5094
        %v5194 = vadd.f32 %v5193, %v5098
        %v5195 = vadd.f32 %v5194, %v5102
        %v5196 = vadd.f32 %v5195, %v5106
        %v5197 = vadd.f32 %v5196, %v5110
        %v5198 = vadd.f32 %v5197, %v5114
        %v5199 = vadd.f32 %v5198, %v5118
        %v5200 = vadd.f32 %v5199, %v5122
        %v5201 = vrot.slane %v5200, 4
        %v5202 = vadd.f32 %v5200, %v5201
        %v5203 = vrot.slane %v5202, 2
        %v5204 = vadd.f32 %v5202, %v5203
        %v5205 = vrot.slane %v5204, 1
        %v5206 = vadd.f32 %v5204, %v5205
        %v5207 = vadd.f32 %v4219, %v5143
        %v5208 = vadd.f32 %v4220, %v5164
        %v5209 = vadd.f32 %v4221, %v5185
        %v5210 = vadd.f32 %v4222, %v5206
        %v5211 = vmul.f32 %v4590, %v4995
        %v5212 = vmul.f32 %v4592, %v4996
        %v5213 = vmul.f32 %v4783, %v4997
        %v5214 = vmul.f32 %v4785, %v4998
        %v5215 = vmul.f32 %v4594, %v4999
        %v5216 = vmul.f32 %v4596, %v5000
        %v5217 = vmul.f32 %v4787, %v5001
        %v5218 = vmul.f32 %v4789, %v5002
        %v5219 = vmul.f32 %v4600, %v5003
        %v5220 = vmul.f32 %v4602, %v5004
        %v5221 = vmul.f32 %v4793, %v5005
        %v5222 = vmul.f32 %v4795, %v5006
        %v5223 = vmul.f32 %v4604, %v5007
        %v5224 = vmul.f32 %v4606, %v5008
        %v5225 = vmul.f32 %v4797, %v5009
        %v5226 = vmul.f32 %v4799, %v5010
        %v5227 = vmul.f32 %v4610, %v5011
        %v5228 = vmul.f32 %v4612, %v5012
        %v5229 = vmul.f32 %v4803, %v5013
        %v5230 = vmul.f32 %v4805, %v5014
        %v5231 = vmul.f32 %v4614, %v5015
        %v5232 = vmul.f32 %v4616, %v5016
        %v5233 = vmul.f32 %v4807, %v5017
        %v5234 = vmul.f32 %v4809, %v5018
        %v5235 = vmul.f32 %v4620, %v5019
        %v5236 = vmul.f32 %v4622, %v5020
        %v5237 = vmul.f32 %v4813, %v5021
        %v5238 = vmul.f32 %v4815, %v5022
        %v5239 = vmul.f32 %v4624, %v5023
        %v5240 = vmul.f32 %v4626, %v5024
        %v5241 = vmul.f32 %v4817, %v5025
        %v5242 = vmul.f32 %v4819, %v5026
        %v5243 = vmul.f32 %v4630, %v5027
        %v5244 = vmul.f32 %v4632, %v5028
        %v5245 = vmul.f32 %v4823, %v5029
        %v5246 = vmul.f32 %v4825, %v5030
        %v5247 = vmul.f32 %v4634, %v5031
        %v5248 = vmul.f32 %v4636, %v5032
        %v5249 = vmul.f32 %v4827, %v5033
        %v5250 = vmul.f32 %v4829, %v5034
        %v5251 = vmul.f32 %v4640, %v5035
        %v5252 = vmul.f32 %v4642, %v5036
        %v5253 = vmul.f32 %v4833, %v5037
        %v5254 = vmul.f32 %v4835, %v5038
        %v5255 = vmul.f32 %v4644, %v5039
        %v5256 = vmul.f32 %v4646, %v5040
        %v5257 = vmul.f32 %v4837, %v5041
        %v5258 = vmul.f32 %v4839, %v5042
        %v5259 = vmul.f32 %v4650, %v5043
        %v5260 = vmul.f32 %v4652, %v5044
        %v5261 = vmul.f32 %v4843, %v5045
        %v5262 = vmul.f32 %v4845, %v5046
        %v5263 = vmul.f32 %v4654, %v5047
        %v5264 = vmul.f32 %v4656, %v5048
        %v5265 = vmul.f32 %v4847, %v5049
        %v5266 = vmul.f32 %v4849, %v5050
        %v5267 = vmul.f32 %v4660, %v5051
        %v5268 = vmul.f32 %v4662, %v5052
        %v5269 = vmul.f32 %v4853, %v5053
        %v5270 = vmul.f32 %v4855, %v5054
        %v5271 = vmul.f32 %v4664, %v5055
        %v5272 = vmul.f32 %v4666, %v5056
        %v5273 = vmul.f32 %v4857, %v5057
        %v5274 = vmul.f32 %v4859, %v5058
        %v5275 = vadd.f32 %v5211, %v5215
        %v5276 = vadd.f32 %v5275, %v5219
        %v5277 = vadd.f32 %v5276, %v5223
        %v5278 = vadd.f32 %v5277, %v5227
        %v5279 = vadd.f32 %v5278, %v5231
        %v5280 = vadd.f32 %v5279, %v5235
        %v5281 = vadd.f32 %v5280, %v5239
        %v5282 = vadd.f32 %v5281, %v5243
        %v5283 = vadd.f32 %v5282, %v5247
        %v5284 = vadd.f32 %v5283, %v5251
        %v5285 = vadd.f32 %v5284, %v5255
        %v5286 = vadd.f32 %v5285, %v5259
        %v5287 = vadd.f32 %v5286, %v5263
        %v5288 = vadd.f32 %v5287, %v5267
        %v5289 = vadd.f32 %v5288, %v5271
        %v5290 = vrot.slane %v5289, 4
        %v5291 = vadd.f32 %v5289, %v5290
        %v5292 = vrot.slane %v5291, 2
        %v5293 = vadd.f32 %v5291, %v5292
        %v5294 = vrot.slane %v5293, 1
        %v5295 = vadd.f32 %v5293, %v5294
        %v5296 = vadd.f32 %v5212, %v5216
        %v5297 = vadd.f32 %v5296, %v5220
        %v5298 = vadd.f32 %v5297, %v5224
        %v5299 = vadd.f32 %v5298, %v5228
        %v5300 = vadd.f32 %v5299, %v5232
        %v5301 = vadd.f32 %v5300, %v5236
        %v5302 = vadd.f32 %v5301, %v5240
        %v5303 = vadd.f32 %v5302, %v5244
        %v5304 = vadd.f32 %v5303, %v5248
        %v5305 = vadd.f32 %v5304, %v5252
        %v5306 = vadd.f32 %v5305, %v5256
        %v5307 = vadd.f32 %v5306, %v5260
        %v5308 = vadd.f32 %v5307, %v5264
        %v5309 = vadd.f32 %v5308, %v5268
        %v5310 = vadd.f32 %v5309, %v5272
        %v5311 = vrot.slane %v5310, 4
        %v5312 = vadd.f32 %v5310, %v5311
        %v5313 = vrot.slane %v5312, 2
        %v5314 = vadd.f32 %v5312, %v5313
        %v5315 = vrot.slane %v5314, 1
        %v5316 = vadd.f32 %v5314, %v5315
        %v5317 = vadd.f32 %v5213, %v5217
        %v5318 = vadd.f32 %v5317, %v5221
        %v5319 = vadd.f32 %v5318, %v5225
        %v5320 = vadd.f32 %v5319, %v5229
        %v5321 = vadd.f32 %v5320, %v5233
        %v5322 = vadd.f32 %v5321, %v5237
        %v5323 = vadd.f32 %v5322, %v5241
        %v5324 = vadd.f32 %v5323, %v5245
        %v5325 = vadd.f32 %v5324, %v5249
        %v5326 = vadd.f32 %v5325, %v5253
        %v5327 = vadd.f32 %v5326, %v5257
        %v5328 = vadd.f32 %v5327, %v5261
        %v5329 = vadd.f32 %v5328, %v5265
        %v5330 = vadd.f32 %v5329, %v5269
        %v5331 = vadd.f32 %v5330, %v5273
        %v5332 = vrot.slane %v5331, 4
        %v5333 = vadd.f32 %v5331, %v5332
        %v5334 = vrot.slane %v5333, 2
        %v5335 = vadd.f32 %v5333, %v5334
        %v5336 = vrot.slane %v5335, 1
        %v5337 = vadd.f32 %v5335, %v5336
        %v5338 = vadd.f32 %v5214, %v5218
        %v5339 = vadd.f32 %v5338, %v5222
        %v5340 = vadd.f32 %v5339, %v5226
        %v5341 = vadd.f32 %v5340, %v5230
        %v5342 = vadd.f32 %v5341, %v5234
        %v5343 = vadd.f32 %v5342, %v5238
        %v5344 = vadd.f32 %v5343, %v5242
        %v5345 = vadd.f32 %v5344, %v5246
        %v5346 = vadd.f32 %v5345, %v5250
        %v5347 = vadd.f32 %v5346, %v5254
        %v5348 = vadd.f32 %v5347, %v5258
        %v5349 = vadd.f32 %v5348, %v5262
        %v5350 = vadd.f32 %v5349, %v5266
        %v5351 = vadd.f32 %v5350, %v5270
        %v5352 = vadd.f32 %v5351, %v5274
        %v5353 = vrot.slane %v5352, 4
        %v5354 = vadd.f32 %v5352, %v5353
        %v5355 = vrot.slane %v5354, 2
        %v5356 = vadd.f32 %v5354, %v5355
        %v5357 = vrot.slane %v5356, 1
        %v5358 = vadd.f32 %v5356, %v5357
        %v5359 = vadd.f32 %v4371, %v5295
        %v5360 = vadd.f32 %v4372, %v5316
        %v5361 = vadd.f32 %v4373, %v5337
        %v5362 = vadd.f32 %v4374, %v5358
        %v5363 = vmul.f32 %v1427, %v4376
        %v5364 = vmul.f32 %v1428, %v4378
        %v5365 = vadd.s32 %v1429, %v4386
        %v5366 = vadd.s32 %v1430, %v4388
        %v5367 = vxor.u32 %v1431, %v4394
        %v5368 = vxor.u32 %v1432, %v4396
        %v5369 = vand.u32 %v5367, %v325
        %v5370 = vand.u32 %v5368, %v325
        %v5371 = vmul.u32 %v328, %v5365
        %v5372 = vmul.u32 %v328, %v5366
        %v5373 = vmul.u32 %v332, %v5369
        %v5374 = vmul.u32 %v332, %v5370
        %v5375 = vadd.s32 %v5371, %v5373
        %v5376 = vadd.s32 %v5372, %v5374
        %vm5377 = vcmp.gt.s32.totalorder %v5375, 0
        %v5378 = vsel %vm5377, %v5375, 0
        %vm5379 = vcmp.gt.s32.totalorder %v5376, 0
        %v5380 = vsel %vm5379, %v5376, 0
        %vm5381 = vcmp.lt.s32.totalorder %v325, %v5378
        %v5382 = vsel %vm5381, %v325, %v5378
        %vm5383 = vcmp.lt.s32.totalorder %v325, %v5380
        %v5384 = vsel %vm5383, %v325, %v5380
        %v5385 = vshrl.u32 %v5382, 7
        %v5386 = vshrl.u32 %v5384, 7
        %v5387 = vand.u32 %v5382, 127
        %v5388 = vand.u32 %v5384, 127
        %v5389 = vlaneseq
        %v5390 = vshrl.u32 %v5389, 7
        %v5391 = vsub.s32 0, %v5390
        %v5392 = vrot.slane %v5385, %v5391
        %v5393 = vlaneseq
        %v5394 = vshrl.u32 %v5393, 7
        %v5395 = vsub.s32 4, %v5394
        %v5396 = vrot.slane %v5385, %v5395
        %v5397 = vlaneseq
        %v5398 = vshrl.u32 %v5397, 7
        %v5399 = vsub.s32 0, %v5398
        %v5400 = vrot.slane %v5386, %v5399
        %v5401 = vlaneseq
        %v5402 = vshrl.u32 %v5401, 7
        %v5403 = vsub.s32 4, %v5402
        %v5404 = vrot.slane %v5386, %v5403
        %v5405 = vlaneseq
        %v5406 = vshrl.u32 %v5405, 7
        %v5407 = vsub.s32 0, %v5406
        %v5408 = vrot.slane %v5392, %v5407
        %v5409 = vlaneseq
        %v5410 = vshrl.u32 %v5409, 7
        %v5411 = vsub.s32 0, %v5410
        %v5412 = vrot.slane %v5396, %v5411
        %v5413 = vlaneseq
        %v5414 = vshrl.u32 %v5413, 7
        %v5415 = vsub.s32 0, %v5414
        %v5416 = vrot.slane %v5400, %v5415
        %v5417 = vlaneseq
        %v5418 = vshrl.u32 %v5417, 7
        %v5419 = vsub.s32 0, %v5418
        %v5420 = vrot.slane %v5404, %v5419
        %vm5421 = vcmp.eq.s32.totalorder %v254, %v5408
        %vm5422 = vcmp.eq.s32.totalorder %v254, %v5412
        %vm5423 = vcmp.eq.s32.totalorder %v254, %v5416
        %vm5424 = vcmp.eq.s32.totalorder %v254, %v5420
        %v5425 = vsel %vm5421, 1.0, 0.0
        %v5426 = vsel %vm5422, 1.0, 0.0
        %v5427 = vsel %vm5423, 1.0, 0.0
        %v5428 = vsel %vm5424, 1.0, 0.0
        %v5429 = vpack.c.bf16 %v5425, %v5425
        %v5430 = vpack.c.bf16 %v5426, %v5426
        %v5431 = vpack.c.bf16 %v5427, %v5427
        %v5432 = vpack.c.bf16 %v5428, %v5428
        %v5434 = vsel %vm522, %v5429, 0
        %v5437 = vsel %vm522, %v5430, 0
        %v5440 = vsel %vm522, %v5431, 0
        %v5443 = vsel %vm522, %v5432, 0
        %5445 = vmatprep.subr.bf16.mxu0 %v5437
        %5446 = vmatpush1.bf16.msra.mxu0 %v5434
        %5447 = vmatprep.subr.bf16.mxu0 0
        %5448 = vmatpush1.bf16.msra.mxu0 0
        %5449 = vmatprep.subr.bf16.mxu0 0
        %5450 = vmatpush1.bf16.msra.mxu0 0
        %5451 = vmatprep.subr.bf16.mxu0 0
        %5452 = vmatpush1.bf16.msra.mxu0 0
        %5453 = vmatprep.subr.bf16.mxu0 0
        %5454 = vmatpush1.bf16.msra.mxu0 0
        %5455 = vmatprep.subr.bf16.mxu0 0
        %5456 = vmatpush1.bf16.msra.mxu0 0
        %5457 = vmatprep.subr.bf16.mxu0 0
        %5458 = vmatpush1.bf16.msra.mxu0 0
        %5459 = vmatprep.subr.bf16.mxu0 0
        %5460 = vmatpush1.bf16.msra.mxu0 0
        %5461 = vmatprep.subr.bf16.mxu0 0
        %5462 = vmatpush1.bf16.msra.mxu0 0
        %5463 = vmatprep.subr.bf16.mxu0 0
        %5464 = vmatpush1.bf16.msra.mxu0 0
        %5465 = vmatprep.subr.bf16.mxu0 0
        %5466 = vmatpush1.bf16.msra.mxu0 0
        %5467 = vmatprep.subr.bf16.mxu0 0
        %5468 = vmatpush1.bf16.msra.mxu0 0
        %5469 = vmatprep.subr.bf16.mxu0 0
        %5470 = vmatpush1.bf16.msra.mxu0 0
        %5471 = vmatprep.subr.bf16.mxu0 0
        %5472 = vmatpush1.bf16.msra.mxu0 0
        %5473 = vmatprep.subr.bf16.mxu0 0
        %5474 = vmatpush1.bf16.msra.mxu0 0
        %5475 = vmatprep.subr.bf16.mxu0 0
        %5476 = vmatpush1.bf16.msra.mxu0 0
        %5477 = vmatprep.mubr.bf16.mxu0 0
        %5478 = vmatmul.mubr.bf16.gmra.mrb[0].mxu0 %v475
        %v5479 = vpop.f32.mrb[0].mxu0
        %v5480 = vadd.f32 0.0, %v5479
        %v5481 = vpop.f32.mrb[0].mxu0
        %v5482 = vadd.f32 0.0, %v5481
        %v5483 = vpop.f32.mrb[0].mxu0
        %v5484 = vadd.f32 0.0, %v5483
        %v5485 = vpop.f32.mrb[0].mxu0
        %v5486 = vadd.f32 0.0, %v5485
        %5487 = vmatprep.mubr.bf16.mxu0 0
        %5488 = vmatmul.mubr.bf16.gmra.mrb[0].mxu0 %v478
        %v5489 = vpop.f32.mrb[0].mxu0
        %v5490 = vadd.f32 0.0, %v5489
        %v5491 = vpop.f32.mrb[0].mxu0
        %v5492 = vadd.f32 0.0, %v5491
        %v5493 = vpop.f32.mrb[0].mxu0
        %v5494 = vadd.f32 0.0, %v5493
        %v5495 = vpop.f32.mrb[0].mxu0
        %v5496 = vadd.f32 0.0, %v5495
        %5497 = vmatprep.mubr.bf16.mxu0 0
        %5498 = vmatmul.mubr.bf16.gmra.mrb[0].mxu0 %v481
        %v5499 = vpop.f32.mrb[0].mxu0
        %v5500 = vadd.f32 0.0, %v5499
        %v5501 = vpop.f32.mrb[0].mxu0
        %v5502 = vadd.f32 0.0, %v5501
        %v5503 = vpop.f32.mrb[0].mxu0
        %v5504 = vadd.f32 0.0, %v5503
        %v5505 = vpop.f32.mrb[0].mxu0
        %v5506 = vadd.f32 0.0, %v5505
        %5507 = vmatprep.mubr.bf16.mxu0 0
        %5508 = vmatmul.mubr.bf16.gmra.mrb[0].mxu0 %v484
        %v5509 = vpop.f32.mrb[0].mxu0
        %v5510 = vadd.f32 0.0, %v5509
        %v5511 = vpop.f32.mrb[0].mxu0
        %v5512 = vadd.f32 0.0, %v5511
        %v5513 = vpop.f32.mrb[0].mxu0
        %v5514 = vadd.f32 0.0, %v5513
        %v5515 = vpop.f32.mrb[0].mxu0
        %v5516 = vadd.f32 0.0, %v5515
        %5517 = vmatprep.mubr.bf16.mxu0 0
        %5518 = vmatmul.mubr.bf16.gmra.mrb[0].mxu0 %v487
        %v5519 = vpop.f32.mrb[0].mxu0
        %v5520 = vadd.f32 0.0, %v5519
        %v5521 = vpop.f32.mrb[0].mxu0
        %v5522 = vadd.f32 0.0, %v5521
        %v5523 = vpop.f32.mrb[0].mxu0
        %v5524 = vadd.f32 0.0, %v5523
        %v5525 = vpop.f32.mrb[0].mxu0
        %v5526 = vadd.f32 0.0, %v5525
        %5527 = vmatprep.mubr.bf16.mxu0 0
        %5528 = vmatmul.mubr.bf16.gmra.mrb[0].mxu0 %v490
        %v5529 = vpop.f32.mrb[0].mxu0
        %v5530 = vadd.f32 0.0, %v5529
        %v5531 = vpop.f32.mrb[0].mxu0
        %v5532 = vadd.f32 0.0, %v5531
        %v5533 = vpop.f32.mrb[0].mxu0
        %v5534 = vadd.f32 0.0, %v5533
        %v5535 = vpop.f32.mrb[0].mxu0
        %v5536 = vadd.f32 0.0, %v5535
        %5537 = vmatprep.mubr.bf16.mxu0 0
        %5538 = vmatmul.mubr.bf16.gmra.mrb[0].mxu0 %v493
        %v5539 = vpop.f32.mrb[0].mxu0
        %v5540 = vadd.f32 0.0, %v5539
        %v5541 = vpop.f32.mrb[0].mxu0
        %v5542 = vadd.f32 0.0, %v5541
        %v5543 = vpop.f32.mrb[0].mxu0
        %v5544 = vadd.f32 0.0, %v5543
        %v5545 = vpop.f32.mrb[0].mxu0
        %v5546 = vadd.f32 0.0, %v5545
        %5547 = vmatprep.mubr.bf16.mxu0 0
        %5548 = vmatmul.mubr.bf16.gmra.mrb[0].mxu0 %v496
        %v5549 = vpop.f32.mrb[0].mxu0
        %v5550 = vadd.f32 0.0, %v5549
        %v5551 = vpop.f32.mrb[0].mxu0
        %v5552 = vadd.f32 0.0, %v5551
        %v5553 = vpop.f32.mrb[0].mxu0
        %v5554 = vadd.f32 0.0, %v5553
        %v5555 = vpop.f32.mrb[0].mxu0
        %v5556 = vadd.f32 0.0, %v5555
        %5557 = vmatprep.mubr.bf16.mxu0 0
        %5558 = vmatmul.mubr.bf16.gmra.mrb[0].mxu0 %v499
        %v5559 = vpop.f32.mrb[0].mxu0
        %v5560 = vadd.f32 0.0, %v5559
        %v5561 = vpop.f32.mrb[0].mxu0
        %v5562 = vadd.f32 0.0, %v5561
        %v5563 = vpop.f32.mrb[0].mxu0
        %v5564 = vadd.f32 0.0, %v5563
        %v5565 = vpop.f32.mrb[0].mxu0
        %v5566 = vadd.f32 0.0, %v5565
        %5567 = vmatprep.mubr.bf16.mxu0 0
        %5568 = vmatmul.mubr.bf16.gmra.mrb[0].mxu0 %v502
        %v5569 = vpop.f32.mrb[0].mxu0
        %v5570 = vadd.f32 0.0, %v5569
        %v5571 = vpop.f32.mrb[0].mxu0
        %v5572 = vadd.f32 0.0, %v5571
        %v5573 = vpop.f32.mrb[0].mxu0
        %v5574 = vadd.f32 0.0, %v5573
        %v5575 = vpop.f32.mrb[0].mxu0
        %v5576 = vadd.f32 0.0, %v5575
        %5577 = vmatprep.mubr.bf16.mxu0 0
        %5578 = vmatmul.mubr.bf16.gmra.mrb[0].mxu0 %v505
        %v5579 = vpop.f32.mrb[0].mxu0
        %v5580 = vadd.f32 0.0, %v5579
        %v5581 = vpop.f32.mrb[0].mxu0
        %v5582 = vadd.f32 0.0, %v5581
        %v5583 = vpop.f32.mrb[0].mxu0
        %v5584 = vadd.f32 0.0, %v5583
        %v5585 = vpop.f32.mrb[0].mxu0
        %v5586 = vadd.f32 0.0, %v5585
        %5587 = vmatprep.mubr.bf16.mxu0 0
        %5588 = vmatmul.mubr.bf16.gmra.mrb[0].mxu0 %v508
        %v5589 = vpop.f32.mrb[0].mxu0
        %v5590 = vadd.f32 0.0, %v5589
        %v5591 = vpop.f32.mrb[0].mxu0
        %v5592 = vadd.f32 0.0, %v5591
        %v5593 = vpop.f32.mrb[0].mxu0
        %v5594 = vadd.f32 0.0, %v5593
        %v5595 = vpop.f32.mrb[0].mxu0
        %v5596 = vadd.f32 0.0, %v5595
        %5597 = vmatprep.mubr.bf16.mxu0 0
        %5598 = vmatmul.mubr.bf16.gmra.mrb[0].mxu0 %v511
        %v5599 = vpop.f32.mrb[0].mxu0
        %v5600 = vadd.f32 0.0, %v5599
        %v5601 = vpop.f32.mrb[0].mxu0
        %v5602 = vadd.f32 0.0, %v5601
        %v5603 = vpop.f32.mrb[0].mxu0
        %v5604 = vadd.f32 0.0, %v5603
        %v5605 = vpop.f32.mrb[0].mxu0
        %v5606 = vadd.f32 0.0, %v5605
        %5607 = vmatprep.mubr.bf16.mxu0 0
        %5608 = vmatmul.mubr.bf16.gmra.mrb[0].mxu0 %v514
        %v5609 = vpop.f32.mrb[0].mxu0
        %v5610 = vadd.f32 0.0, %v5609
        %v5611 = vpop.f32.mrb[0].mxu0
        %v5612 = vadd.f32 0.0, %v5611
        %v5613 = vpop.f32.mrb[0].mxu0
        %v5614 = vadd.f32 0.0, %v5613
        %v5615 = vpop.f32.mrb[0].mxu0
        %v5616 = vadd.f32 0.0, %v5615
        %5617 = vmatprep.mubr.bf16.mxu0 0
        %5618 = vmatmul.mubr.bf16.gmra.mrb[0].mxu0 %v517
        %v5619 = vpop.f32.mrb[0].mxu0
        %v5620 = vadd.f32 0.0, %v5619
        %v5621 = vpop.f32.mrb[0].mxu0
        %v5622 = vadd.f32 0.0, %v5621
        %v5623 = vpop.f32.mrb[0].mxu0
        %v5624 = vadd.f32 0.0, %v5623
        %v5625 = vpop.f32.mrb[0].mxu0
        %v5626 = vadd.f32 0.0, %v5625
        %5627 = vmatprep.mubr.bf16.mxu0 0
        %5628 = vmatmul.mubr.bf16.gmra.mrb[0].mxu0 %v520
        %v5629 = vpop.f32.mrb[0].mxu0
        %v5630 = vadd.f32 0.0, %v5629
        %v5631 = vpop.f32.mrb[0].mxu0
        %v5632 = vadd.f32 0.0, %v5631
        %v5633 = vpop.f32.mrb[0].mxu0
        %v5634 = vadd.f32 0.0, %v5633
        %v5635 = vpop.f32.mrb[0].mxu0
        %v5636 = vadd.f32 0.0, %v5635
        %5637 = vdwg.mxu0
        %5638 = vmatprep.subr.bf16.mxu0 %v5443
        %5639 = vmatpush1.bf16.msra.mxu0 %v5440
        %5640 = vmatprep.subr.bf16.mxu0 0
        %5641 = vmatpush1.bf16.msra.mxu0 0
        %5642 = vmatprep.subr.bf16.mxu0 0
        %5643 = vmatpush1.bf16.msra.mxu0 0
        %5644 = vmatprep.subr.bf16.mxu0 0
        %5645 = vmatpush1.bf16.msra.mxu0 0
        %5646 = vmatprep.subr.bf16.mxu0 0
        %5647 = vmatpush1.bf16.msra.mxu0 0
        %5648 = vmatprep.subr.bf16.mxu0 0
        %5649 = vmatpush1.bf16.msra.mxu0 0
        %5650 = vmatprep.subr.bf16.mxu0 0
        %5651 = vmatpush1.bf16.msra.mxu0 0
        %5652 = vmatprep.subr.bf16.mxu0 0
        %5653 = vmatpush1.bf16.msra.mxu0 0
        %5654 = vmatprep.subr.bf16.mxu0 0
        %5655 = vmatpush1.bf16.msra.mxu0 0
        %5656 = vmatprep.subr.bf16.mxu0 0
        %5657 = vmatpush1.bf16.msra.mxu0 0
        %5658 = vmatprep.subr.bf16.mxu0 0
        %5659 = vmatpush1.bf16.msra.mxu0 0
        %5660 = vmatprep.subr.bf16.mxu0 0
        %5661 = vmatpush1.bf16.msra.mxu0 0
        %5662 = vmatprep.subr.bf16.mxu0 0
        %5663 = vmatpush1.bf16.msra.mxu0 0
        %5664 = vmatprep.subr.bf16.mxu0 0
        %5665 = vmatpush1.bf16.msra.mxu0 0
        %5666 = vmatprep.subr.bf16.mxu0 0
        %5667 = vmatpush1.bf16.msra.mxu0 0
        %5668 = vmatprep.subr.bf16.mxu0 0
        %5669 = vmatpush1.bf16.msra.mxu0 0
        %5670 = vmatprep.mubr.bf16.mxu0 0
        %5671 = vmatmul.mubr.bf16.gmra.mrb[0].mxu0 %v475
        %v5672 = vpop.f32.mrb[0].mxu0
        %v5673 = vadd.f32 0.0, %v5672
        %v5674 = vpop.f32.mrb[0].mxu0
        %v5675 = vadd.f32 0.0, %v5674
        %v5676 = vpop.f32.mrb[0].mxu0
        %v5677 = vadd.f32 0.0, %v5676
        %v5678 = vpop.f32.mrb[0].mxu0
        %v5679 = vadd.f32 0.0, %v5678
        %5680 = vmatprep.mubr.bf16.mxu0 0
        %5681 = vmatmul.mubr.bf16.gmra.mrb[0].mxu0 %v478
        %v5682 = vpop.f32.mrb[0].mxu0
        %v5683 = vadd.f32 0.0, %v5682
        %v5684 = vpop.f32.mrb[0].mxu0
        %v5685 = vadd.f32 0.0, %v5684
        %v5686 = vpop.f32.mrb[0].mxu0
        %v5687 = vadd.f32 0.0, %v5686
        %v5688 = vpop.f32.mrb[0].mxu0
        %v5689 = vadd.f32 0.0, %v5688
        %5690 = vmatprep.mubr.bf16.mxu0 0
        %5691 = vmatmul.mubr.bf16.gmra.mrb[0].mxu0 %v481
        %v5692 = vpop.f32.mrb[0].mxu0
        %v5693 = vadd.f32 0.0, %v5692
        %v5694 = vpop.f32.mrb[0].mxu0
        %v5695 = vadd.f32 0.0, %v5694
        %v5696 = vpop.f32.mrb[0].mxu0
        %v5697 = vadd.f32 0.0, %v5696
        %v5698 = vpop.f32.mrb[0].mxu0
        %v5699 = vadd.f32 0.0, %v5698
        %5700 = vmatprep.mubr.bf16.mxu0 0
        %5701 = vmatmul.mubr.bf16.gmra.mrb[0].mxu0 %v484
        %v5702 = vpop.f32.mrb[0].mxu0
        %v5703 = vadd.f32 0.0, %v5702
        %v5704 = vpop.f32.mrb[0].mxu0
        %v5705 = vadd.f32 0.0, %v5704
        %v5706 = vpop.f32.mrb[0].mxu0
        %v5707 = vadd.f32 0.0, %v5706
        %v5708 = vpop.f32.mrb[0].mxu0
        %v5709 = vadd.f32 0.0, %v5708
        %5710 = vmatprep.mubr.bf16.mxu0 0
        %5711 = vmatmul.mubr.bf16.gmra.mrb[0].mxu0 %v487
        %v5712 = vpop.f32.mrb[0].mxu0
        %v5713 = vadd.f32 0.0, %v5712
        %v5714 = vpop.f32.mrb[0].mxu0
        %v5715 = vadd.f32 0.0, %v5714
        %v5716 = vpop.f32.mrb[0].mxu0
        %v5717 = vadd.f32 0.0, %v5716
        %v5718 = vpop.f32.mrb[0].mxu0
        %v5719 = vadd.f32 0.0, %v5718
        %5720 = vmatprep.mubr.bf16.mxu0 0
        %5721 = vmatmul.mubr.bf16.gmra.mrb[0].mxu0 %v490
        %v5722 = vpop.f32.mrb[0].mxu0
        %v5723 = vadd.f32 0.0, %v5722
        %v5724 = vpop.f32.mrb[0].mxu0
        %v5725 = vadd.f32 0.0, %v5724
        %v5726 = vpop.f32.mrb[0].mxu0
        %v5727 = vadd.f32 0.0, %v5726
        %v5728 = vpop.f32.mrb[0].mxu0
        %v5729 = vadd.f32 0.0, %v5728
        %5730 = vmatprep.mubr.bf16.mxu0 0
        %5731 = vmatmul.mubr.bf16.gmra.mrb[0].mxu0 %v493
        %v5732 = vpop.f32.mrb[0].mxu0
        %v5733 = vadd.f32 0.0, %v5732
        %v5734 = vpop.f32.mrb[0].mxu0
        %v5735 = vadd.f32 0.0, %v5734
        %v5736 = vpop.f32.mrb[0].mxu0
        %v5737 = vadd.f32 0.0, %v5736
        %v5738 = vpop.f32.mrb[0].mxu0
        %v5739 = vadd.f32 0.0, %v5738
        %5740 = vmatprep.mubr.bf16.mxu0 0
        %5741 = vmatmul.mubr.bf16.gmra.mrb[0].mxu0 %v496
        %v5742 = vpop.f32.mrb[0].mxu0
        %v5743 = vadd.f32 0.0, %v5742
        %v5744 = vpop.f32.mrb[0].mxu0
        %v5745 = vadd.f32 0.0, %v5744
        %v5746 = vpop.f32.mrb[0].mxu0
        %v5747 = vadd.f32 0.0, %v5746
        %v5748 = vpop.f32.mrb[0].mxu0
        %v5749 = vadd.f32 0.0, %v5748
        %5750 = vmatprep.mubr.bf16.mxu0 0
        %5751 = vmatmul.mubr.bf16.gmra.mrb[0].mxu0 %v499
        %v5752 = vpop.f32.mrb[0].mxu0
        %v5753 = vadd.f32 0.0, %v5752
        %v5754 = vpop.f32.mrb[0].mxu0
        %v5755 = vadd.f32 0.0, %v5754
        %v5756 = vpop.f32.mrb[0].mxu0
        %v5757 = vadd.f32 0.0, %v5756
        %v5758 = vpop.f32.mrb[0].mxu0
        %v5759 = vadd.f32 0.0, %v5758
        %5760 = vmatprep.mubr.bf16.mxu0 0
        %5761 = vmatmul.mubr.bf16.gmra.mrb[0].mxu0 %v502
        %v5762 = vpop.f32.mrb[0].mxu0
        %v5763 = vadd.f32 0.0, %v5762
        %v5764 = vpop.f32.mrb[0].mxu0
        %v5765 = vadd.f32 0.0, %v5764
        %v5766 = vpop.f32.mrb[0].mxu0
        %v5767 = vadd.f32 0.0, %v5766
        %v5768 = vpop.f32.mrb[0].mxu0
        %v5769 = vadd.f32 0.0, %v5768
        %5770 = vmatprep.mubr.bf16.mxu0 0
        %5771 = vmatmul.mubr.bf16.gmra.mrb[0].mxu0 %v505
        %v5772 = vpop.f32.mrb[0].mxu0
        %v5773 = vadd.f32 0.0, %v5772
        %v5774 = vpop.f32.mrb[0].mxu0
        %v5775 = vadd.f32 0.0, %v5774
        %v5776 = vpop.f32.mrb[0].mxu0
        %v5777 = vadd.f32 0.0, %v5776
        %v5778 = vpop.f32.mrb[0].mxu0
        %v5779 = vadd.f32 0.0, %v5778
        %5780 = vmatprep.mubr.bf16.mxu0 0
        %5781 = vmatmul.mubr.bf16.gmra.mrb[0].mxu0 %v508
        %v5782 = vpop.f32.mrb[0].mxu0
        %v5783 = vadd.f32 0.0, %v5782
        %v5784 = vpop.f32.mrb[0].mxu0
        %v5785 = vadd.f32 0.0, %v5784
        %v5786 = vpop.f32.mrb[0].mxu0
        %v5787 = vadd.f32 0.0, %v5786
        %v5788 = vpop.f32.mrb[0].mxu0
        %v5789 = vadd.f32 0.0, %v5788
        %5790 = vmatprep.mubr.bf16.mxu0 0
        %5791 = vmatmul.mubr.bf16.gmra.mrb[0].mxu0 %v511
        %v5792 = vpop.f32.mrb[0].mxu0
        %v5793 = vadd.f32 0.0, %v5792
        %v5794 = vpop.f32.mrb[0].mxu0
        %v5795 = vadd.f32 0.0, %v5794
        %v5796 = vpop.f32.mrb[0].mxu0
        %v5797 = vadd.f32 0.0, %v5796
        %v5798 = vpop.f32.mrb[0].mxu0
        %v5799 = vadd.f32 0.0, %v5798
        %5800 = vmatprep.mubr.bf16.mxu0 0
        %5801 = vmatmul.mubr.bf16.gmra.mrb[0].mxu0 %v514
        %v5802 = vpop.f32.mrb[0].mxu0
        %v5803 = vadd.f32 0.0, %v5802
        %v5804 = vpop.f32.mrb[0].mxu0
        %v5805 = vadd.f32 0.0, %v5804
        %v5806 = vpop.f32.mrb[0].mxu0
        %v5807 = vadd.f32 0.0, %v5806
        %v5808 = vpop.f32.mrb[0].mxu0
        %v5809 = vadd.f32 0.0, %v5808
        %5810 = vmatprep.mubr.bf16.mxu0 0
        %5811 = vmatmul.mubr.bf16.gmra.mrb[0].mxu0 %v517
        %v5812 = vpop.f32.mrb[0].mxu0
        %v5813 = vadd.f32 0.0, %v5812
        %v5814 = vpop.f32.mrb[0].mxu0
        %v5815 = vadd.f32 0.0, %v5814
        %v5816 = vpop.f32.mrb[0].mxu0
        %v5817 = vadd.f32 0.0, %v5816
        %v5818 = vpop.f32.mrb[0].mxu0
        %v5819 = vadd.f32 0.0, %v5818
        %5820 = vmatprep.mubr.bf16.mxu0 0
        %5821 = vmatmul.mubr.bf16.gmra.mrb[0].mxu0 %v520
        %v5822 = vpop.f32.mrb[0].mxu0
        %v5823 = vadd.f32 0.0, %v5822
        %v5824 = vpop.f32.mrb[0].mxu0
        %v5825 = vadd.f32 0.0, %v5824
        %v5826 = vpop.f32.mrb[0].mxu0
        %v5827 = vadd.f32 0.0, %v5826
        %v5828 = vpop.f32.mrb[0].mxu0
        %v5829 = vadd.f32 0.0, %v5828
        %5830 = vdwg.mxu0
        %v5831 = vlaneseq
        %v5832 = vshrl.u32 %v5831, 7
        %v5833 = vsub.s32 0, %v5832
        %v5834 = vrot.slane %v5387, %v5833
        %v5835 = vlaneseq
        %v5836 = vshrl.u32 %v5835, 7
        %v5837 = vsub.s32 4, %v5836
        %v5838 = vrot.slane %v5387, %v5837
        %v5839 = vlaneseq
        %v5840 = vshrl.u32 %v5839, 7
        %v5841 = vsub.s32 0, %v5840
        %v5842 = vrot.slane %v5388, %v5841
        %v5843 = vlaneseq
        %v5844 = vshrl.u32 %v5843, 7
        %v5845 = vsub.s32 4, %v5844
        %v5846 = vrot.slane %v5388, %v5845
        %v5847 = vlaneseq
        %v5848 = vshrl.u32 %v5847, 7
        %v5849 = vsub.s32 0, %v5848
        %v5850 = vrot.slane %v5834, %v5849
        %v5851 = vlaneseq
        %v5852 = vshrl.u32 %v5851, 7
        %v5853 = vsub.s32 0, %v5852
        %v5854 = vrot.slane %v5838, %v5853
        %v5855 = vlaneseq
        %v5856 = vshrl.u32 %v5855, 7
        %v5857 = vsub.s32 0, %v5856
        %v5858 = vrot.slane %v5842, %v5857
        %v5859 = vlaneseq
        %v5860 = vshrl.u32 %v5859, 7
        %v5861 = vsub.s32 0, %v5860
        %v5862 = vrot.slane %v5846, %v5861
        %vm5863 = vcmp.eq.s32.totalorder %v254, %v5850
        %vm5864 = vcmp.eq.s32.totalorder %v254, %v5854
        %vm5865 = vcmp.eq.s32.totalorder %v254, %v5858
        %vm5866 = vcmp.eq.s32.totalorder %v254, %v5862
        %vm5867 = vcmp.eq.s32.totalorder %v255, %v5850
        %vm5868 = vcmp.eq.s32.totalorder %v255, %v5854
        %vm5869 = vcmp.eq.s32.totalorder %v255, %v5858
        %vm5870 = vcmp.eq.s32.totalorder %v255, %v5862
        %vm5871 = vcmp.eq.s32.totalorder %v256, %v5850
        %vm5872 = vcmp.eq.s32.totalorder %v256, %v5854
        %vm5873 = vcmp.eq.s32.totalorder %v256, %v5858
        %vm5874 = vcmp.eq.s32.totalorder %v256, %v5862
        %vm5875 = vcmp.eq.s32.totalorder %v257, %v5850
        %vm5876 = vcmp.eq.s32.totalorder %v257, %v5854
        %vm5877 = vcmp.eq.s32.totalorder %v257, %v5858
        %vm5878 = vcmp.eq.s32.totalorder %v257, %v5862
        %vm5879 = vcmp.eq.s32.totalorder %v258, %v5850
        %vm5880 = vcmp.eq.s32.totalorder %v258, %v5854
        %vm5881 = vcmp.eq.s32.totalorder %v258, %v5858
        %vm5882 = vcmp.eq.s32.totalorder %v258, %v5862
        %vm5883 = vcmp.eq.s32.totalorder %v259, %v5850
        %vm5884 = vcmp.eq.s32.totalorder %v259, %v5854
        %vm5885 = vcmp.eq.s32.totalorder %v259, %v5858
        %vm5886 = vcmp.eq.s32.totalorder %v259, %v5862
        %vm5887 = vcmp.eq.s32.totalorder %v260, %v5850
        %vm5888 = vcmp.eq.s32.totalorder %v260, %v5854
        %vm5889 = vcmp.eq.s32.totalorder %v260, %v5858
        %vm5890 = vcmp.eq.s32.totalorder %v260, %v5862
        %vm5891 = vcmp.eq.s32.totalorder %v261, %v5850
        %vm5892 = vcmp.eq.s32.totalorder %v261, %v5854
        %vm5893 = vcmp.eq.s32.totalorder %v261, %v5858
        %vm5894 = vcmp.eq.s32.totalorder %v261, %v5862
        %vm5895 = vcmp.eq.s32.totalorder %v262, %v5850
        %vm5896 = vcmp.eq.s32.totalorder %v262, %v5854
        %vm5897 = vcmp.eq.s32.totalorder %v262, %v5858
        %vm5898 = vcmp.eq.s32.totalorder %v262, %v5862
        %vm5899 = vcmp.eq.s32.totalorder %v263, %v5850
        %vm5900 = vcmp.eq.s32.totalorder %v263, %v5854
        %vm5901 = vcmp.eq.s32.totalorder %v263, %v5858
        %vm5902 = vcmp.eq.s32.totalorder %v263, %v5862
        %vm5903 = vcmp.eq.s32.totalorder %v264, %v5850
        %vm5904 = vcmp.eq.s32.totalorder %v264, %v5854
        %vm5905 = vcmp.eq.s32.totalorder %v264, %v5858
        %vm5906 = vcmp.eq.s32.totalorder %v264, %v5862
        %vm5907 = vcmp.eq.s32.totalorder %v265, %v5850
        %vm5908 = vcmp.eq.s32.totalorder %v265, %v5854
        %vm5909 = vcmp.eq.s32.totalorder %v265, %v5858
        %vm5910 = vcmp.eq.s32.totalorder %v265, %v5862
        %vm5911 = vcmp.eq.s32.totalorder %v266, %v5850
        %vm5912 = vcmp.eq.s32.totalorder %v266, %v5854
        %vm5913 = vcmp.eq.s32.totalorder %v266, %v5858
        %vm5914 = vcmp.eq.s32.totalorder %v266, %v5862
        %vm5915 = vcmp.eq.s32.totalorder %v267, %v5850
        %vm5916 = vcmp.eq.s32.totalorder %v267, %v5854
        %vm5917 = vcmp.eq.s32.totalorder %v267, %v5858
        %vm5918 = vcmp.eq.s32.totalorder %v267, %v5862
        %vm5919 = vcmp.eq.s32.totalorder %v268, %v5850
        %vm5920 = vcmp.eq.s32.totalorder %v268, %v5854
        %vm5921 = vcmp.eq.s32.totalorder %v268, %v5858
        %vm5922 = vcmp.eq.s32.totalorder %v268, %v5862
        %vm5923 = vcmp.eq.s32.totalorder %v269, %v5850
        %vm5924 = vcmp.eq.s32.totalorder %v269, %v5854
        %vm5925 = vcmp.eq.s32.totalorder %v269, %v5858
        %vm5926 = vcmp.eq.s32.totalorder %v269, %v5862
        %v5929 = vlaneseq
        %v5930 = vshrl.u32 %v5929, 7
        %v5931 = vsub.s32 0, %v5930
        %v5932 = vrot.slane %v5363, %v5931
        %v5933 = vlaneseq
        %v5934 = vshrl.u32 %v5933, 7
        %v5935 = vsub.s32 4, %v5934
        %v5936 = vrot.slane %v5363, %v5935
        %v5937 = vlaneseq
        %v5938 = vshrl.u32 %v5937, 7
        %v5939 = vsub.s32 0, %v5938
        %v5940 = vrot.slane %v5364, %v5939
        %v5941 = vlaneseq
        %v5942 = vshrl.u32 %v5941, 7
        %v5943 = vsub.s32 4, %v5942
        %v5944 = vrot.slane %v5364, %v5943
        %v5949 = vlaneseq
        %v5950 = vshrl.u32 %v5949, 7
        %v5951 = vsub.s32 0, %v5950
        %v5952 = vrot.slane %v5932, %v5951
        %v5953 = vlaneseq
        %v5954 = vshrl.u32 %v5953, 7
        %v5955 = vsub.s32 0, %v5954
        %v5956 = vrot.slane %v5936, %v5955
        %v5957 = vlaneseq
        %v5958 = vshrl.u32 %v5957, 7
        %v5959 = vsub.s32 0, %v5958
        %v5960 = vrot.slane %v5940, %v5959
        %v5961 = vlaneseq
        %v5962 = vshrl.u32 %v5961, 7
        %v5963 = vsub.s32 0, %v5962
        %v5964 = vrot.slane %v5944, %v5963
        %v5965 = vsel %vm5863, %v5952, 0.0
        %v5966 = vsel %vm5864, %v5956, 0.0
        %v5967 = vsel %vm5865, %v5960, 0.0
        %v5968 = vsel %vm5866, %v5964, 0.0
        %v5969 = vsel %vm5867, %v5952, 0.0
        %v5970 = vsel %vm5868, %v5956, 0.0
        %v5971 = vsel %vm5869, %v5960, 0.0
        %v5972 = vsel %vm5870, %v5964, 0.0
        %v5973 = vsel %vm5871, %v5952, 0.0
        %v5974 = vsel %vm5872, %v5956, 0.0
        %v5975 = vsel %vm5873, %v5960, 0.0
        %v5976 = vsel %vm5874, %v5964, 0.0
        %v5977 = vsel %vm5875, %v5952, 0.0
        %v5978 = vsel %vm5876, %v5956, 0.0
        %v5979 = vsel %vm5877, %v5960, 0.0
        %v5980 = vsel %vm5878, %v5964, 0.0
        %v5981 = vsel %vm5879, %v5952, 0.0
        %v5982 = vsel %vm5880, %v5956, 0.0
        %v5983 = vsel %vm5881, %v5960, 0.0
        %v5984 = vsel %vm5882, %v5964, 0.0
        %v5985 = vsel %vm5883, %v5952, 0.0
        %v5986 = vsel %vm5884, %v5956, 0.0
        %v5987 = vsel %vm5885, %v5960, 0.0
        %v5988 = vsel %vm5886, %v5964, 0.0
        %v5989 = vsel %vm5887, %v5952, 0.0
        %v5990 = vsel %vm5888, %v5956, 0.0
        %v5991 = vsel %vm5889, %v5960, 0.0
        %v5992 = vsel %vm5890, %v5964, 0.0
        %v5993 = vsel %vm5891, %v5952, 0.0
        %v5994 = vsel %vm5892, %v5956, 0.0
        %v5995 = vsel %vm5893, %v5960, 0.0
        %v5996 = vsel %vm5894, %v5964, 0.0
        %v5997 = vsel %vm5895, %v5952, 0.0
        %v5998 = vsel %vm5896, %v5956, 0.0
        %v5999 = vsel %vm5897, %v5960, 0.0
        %v6000 = vsel %vm5898, %v5964, 0.0
        %v6001 = vsel %vm5899, %v5952, 0.0
        %v6002 = vsel %vm5900, %v5956, 0.0
        %v6003 = vsel %vm5901, %v5960, 0.0
        %v6004 = vsel %vm5902, %v5964, 0.0
        %v6005 = vsel %vm5903, %v5952, 0.0
        %v6006 = vsel %vm5904, %v5956, 0.0
        %v6007 = vsel %vm5905, %v5960, 0.0
        %v6008 = vsel %vm5906, %v5964, 0.0
        %v6009 = vsel %vm5907, %v5952, 0.0
        %v6010 = vsel %vm5908, %v5956, 0.0
        %v6011 = vsel %vm5909, %v5960, 0.0
        %v6012 = vsel %vm5910, %v5964, 0.0
        %v6013 = vsel %vm5911, %v5952, 0.0
        %v6014 = vsel %vm5912, %v5956, 0.0
        %v6015 = vsel %vm5913, %v5960, 0.0
        %v6016 = vsel %vm5914, %v5964, 0.0
        %v6017 = vsel %vm5915, %v5952, 0.0
        %v6018 = vsel %vm5916, %v5956, 0.0
        %v6019 = vsel %vm5917, %v5960, 0.0
        %v6020 = vsel %vm5918, %v5964, 0.0
        %v6021 = vsel %vm5919, %v5952, 0.0
        %v6022 = vsel %vm5920, %v5956, 0.0
        %v6023 = vsel %vm5921, %v5960, 0.0
        %v6024 = vsel %vm5922, %v5964, 0.0
        %v6025 = vsel %vm5923, %v5952, 0.0
        %v6026 = vsel %vm5924, %v5956, 0.0
        %v6027 = vsel %vm5925, %v5960, 0.0
        %v6028 = vsel %vm5926, %v5964, 0.0
        %v6029 = vmul.f32 %v5480, %v5965
        %v6030 = vmul.f32 %v5482, %v5966
        %v6031 = vmul.f32 %v5673, %v5967
        %v6032 = vmul.f32 %v5675, %v5968
        %v6033 = vmul.f32 %v5484, %v5969
        %v6034 = vmul.f32 %v5486, %v5970
        %v6035 = vmul.f32 %v5677, %v5971
        %v6036 = vmul.f32 %v5679, %v5972
        %v6037 = vmul.f32 %v5490, %v5973
        %v6038 = vmul.f32 %v5492, %v5974
        %v6039 = vmul.f32 %v5683, %v5975
        %v6040 = vmul.f32 %v5685, %v5976
        %v6041 = vmul.f32 %v5494, %v5977
        %v6042 = vmul.f32 %v5496, %v5978
        %v6043 = vmul.f32 %v5687, %v5979
        %v6044 = vmul.f32 %v5689, %v5980
        %v6045 = vmul.f32 %v5500, %v5981
        %v6046 = vmul.f32 %v5502, %v5982
        %v6047 = vmul.f32 %v5693, %v5983
        %v6048 = vmul.f32 %v5695, %v5984
        %v6049 = vmul.f32 %v5504, %v5985
        %v6050 = vmul.f32 %v5506, %v5986
        %v6051 = vmul.f32 %v5697, %v5987
        %v6052 = vmul.f32 %v5699, %v5988
        %v6053 = vmul.f32 %v5510, %v5989
        %v6054 = vmul.f32 %v5512, %v5990
        %v6055 = vmul.f32 %v5703, %v5991
        %v6056 = vmul.f32 %v5705, %v5992
        %v6057 = vmul.f32 %v5514, %v5993
        %v6058 = vmul.f32 %v5516, %v5994
        %v6059 = vmul.f32 %v5707, %v5995
        %v6060 = vmul.f32 %v5709, %v5996
        %v6061 = vmul.f32 %v5520, %v5997
        %v6062 = vmul.f32 %v5522, %v5998
        %v6063 = vmul.f32 %v5713, %v5999
        %v6064 = vmul.f32 %v5715, %v6000
        %v6065 = vmul.f32 %v5524, %v6001
        %v6066 = vmul.f32 %v5526, %v6002
        %v6067 = vmul.f32 %v5717, %v6003
        %v6068 = vmul.f32 %v5719, %v6004
        %v6069 = vmul.f32 %v5530, %v6005
        %v6070 = vmul.f32 %v5532, %v6006
        %v6071 = vmul.f32 %v5723, %v6007
        %v6072 = vmul.f32 %v5725, %v6008
        %v6073 = vmul.f32 %v5534, %v6009
        %v6074 = vmul.f32 %v5536, %v6010
        %v6075 = vmul.f32 %v5727, %v6011
        %v6076 = vmul.f32 %v5729, %v6012
        %v6077 = vmul.f32 %v5540, %v6013
        %v6078 = vmul.f32 %v5542, %v6014
        %v6079 = vmul.f32 %v5733, %v6015
        %v6080 = vmul.f32 %v5735, %v6016
        %v6081 = vmul.f32 %v5544, %v6017
        %v6082 = vmul.f32 %v5546, %v6018
        %v6083 = vmul.f32 %v5737, %v6019
        %v6084 = vmul.f32 %v5739, %v6020
        %v6085 = vmul.f32 %v5550, %v6021
        %v6086 = vmul.f32 %v5552, %v6022
        %v6087 = vmul.f32 %v5743, %v6023
        %v6088 = vmul.f32 %v5745, %v6024
        %v6089 = vmul.f32 %v5554, %v6025
        %v6090 = vmul.f32 %v5556, %v6026
        %v6091 = vmul.f32 %v5747, %v6027
        %v6092 = vmul.f32 %v5749, %v6028
        %v6093 = vadd.f32 %v6029, %v6033
        %v6094 = vadd.f32 %v6093, %v6037
        %v6095 = vadd.f32 %v6094, %v6041
        %v6096 = vadd.f32 %v6095, %v6045
        %v6097 = vadd.f32 %v6096, %v6049
        %v6098 = vadd.f32 %v6097, %v6053
        %v6099 = vadd.f32 %v6098, %v6057
        %v6100 = vadd.f32 %v6099, %v6061
        %v6101 = vadd.f32 %v6100, %v6065
        %v6102 = vadd.f32 %v6101, %v6069
        %v6103 = vadd.f32 %v6102, %v6073
        %v6104 = vadd.f32 %v6103, %v6077
        %v6105 = vadd.f32 %v6104, %v6081
        %v6106 = vadd.f32 %v6105, %v6085
        %v6107 = vadd.f32 %v6106, %v6089
        %v6108 = vrot.slane %v6107, 4
        %v6109 = vadd.f32 %v6107, %v6108
        %v6110 = vrot.slane %v6109, 2
        %v6111 = vadd.f32 %v6109, %v6110
        %v6112 = vrot.slane %v6111, 1
        %v6113 = vadd.f32 %v6111, %v6112
        %v6114 = vadd.f32 %v6030, %v6034
        %v6115 = vadd.f32 %v6114, %v6038
        %v6116 = vadd.f32 %v6115, %v6042
        %v6117 = vadd.f32 %v6116, %v6046
        %v6118 = vadd.f32 %v6117, %v6050
        %v6119 = vadd.f32 %v6118, %v6054
        %v6120 = vadd.f32 %v6119, %v6058
        %v6121 = vadd.f32 %v6120, %v6062
        %v6122 = vadd.f32 %v6121, %v6066
        %v6123 = vadd.f32 %v6122, %v6070
        %v6124 = vadd.f32 %v6123, %v6074
        %v6125 = vadd.f32 %v6124, %v6078
        %v6126 = vadd.f32 %v6125, %v6082
        %v6127 = vadd.f32 %v6126, %v6086
        %v6128 = vadd.f32 %v6127, %v6090
        %v6129 = vrot.slane %v6128, 4
        %v6130 = vadd.f32 %v6128, %v6129
        %v6131 = vrot.slane %v6130, 2
        %v6132 = vadd.f32 %v6130, %v6131
        %v6133 = vrot.slane %v6132, 1
        %v6134 = vadd.f32 %v6132, %v6133
        %v6135 = vadd.f32 %v6031, %v6035
        %v6136 = vadd.f32 %v6135, %v6039
        %v6137 = vadd.f32 %v6136, %v6043
        %v6138 = vadd.f32 %v6137, %v6047
        %v6139 = vadd.f32 %v6138, %v6051
        %v6140 = vadd.f32 %v6139, %v6055
        %v6141 = vadd.f32 %v6140, %v6059
        %v6142 = vadd.f32 %v6141, %v6063
        %v6143 = vadd.f32 %v6142, %v6067
        %v6144 = vadd.f32 %v6143, %v6071
        %v6145 = vadd.f32 %v6144, %v6075
        %v6146 = vadd.f32 %v6145, %v6079
        %v6147 = vadd.f32 %v6146, %v6083
        %v6148 = vadd.f32 %v6147, %v6087
        %v6149 = vadd.f32 %v6148, %v6091
        %v6150 = vrot.slane %v6149, 4
        %v6151 = vadd.f32 %v6149, %v6150
        %v6152 = vrot.slane %v6151, 2
        %v6153 = vadd.f32 %v6151, %v6152
        %v6154 = vrot.slane %v6153, 1
        %v6155 = vadd.f32 %v6153, %v6154
        %v6156 = vadd.f32 %v6032, %v6036
        %v6157 = vadd.f32 %v6156, %v6040
        %v6158 = vadd.f32 %v6157, %v6044
        %v6159 = vadd.f32 %v6158, %v6048
        %v6160 = vadd.f32 %v6159, %v6052
        %v6161 = vadd.f32 %v6160, %v6056
        %v6162 = vadd.f32 %v6161, %v6060
        %v6163 = vadd.f32 %v6162, %v6064
        %v6164 = vadd.f32 %v6163, %v6068
        %v6165 = vadd.f32 %v6164, %v6072
        %v6166 = vadd.f32 %v6165, %v6076
        %v6167 = vadd.f32 %v6166, %v6080
        %v6168 = vadd.f32 %v6167, %v6084
        %v6169 = vadd.f32 %v6168, %v6088
        %v6170 = vadd.f32 %v6169, %v6092
        %v6171 = vrot.slane %v6170, 4
        %v6172 = vadd.f32 %v6170, %v6171
        %v6173 = vrot.slane %v6172, 2
        %v6174 = vadd.f32 %v6172, %v6173
        %v6175 = vrot.slane %v6174, 1
        %v6176 = vadd.f32 %v6174, %v6175
        %v6177 = vadd.f32 %v5207, %v6113
        %v6178 = vadd.f32 %v5208, %v6134
        %v6179 = vadd.f32 %v5209, %v6155
        %v6180 = vadd.f32 %v5210, %v6176
        %v6181 = vmul.f32 %v5560, %v5965
        %v6182 = vmul.f32 %v5562, %v5966
        %v6183 = vmul.f32 %v5753, %v5967
        %v6184 = vmul.f32 %v5755, %v5968
        %v6185 = vmul.f32 %v5564, %v5969
        %v6186 = vmul.f32 %v5566, %v5970
        %v6187 = vmul.f32 %v5757, %v5971
        %v6188 = vmul.f32 %v5759, %v5972
        %v6189 = vmul.f32 %v5570, %v5973
        %v6190 = vmul.f32 %v5572, %v5974
        %v6191 = vmul.f32 %v5763, %v5975
        %v6192 = vmul.f32 %v5765, %v5976
        %v6193 = vmul.f32 %v5574, %v5977
        %v6194 = vmul.f32 %v5576, %v5978
        %v6195 = vmul.f32 %v5767, %v5979
        %v6196 = vmul.f32 %v5769, %v5980
        %v6197 = vmul.f32 %v5580, %v5981
        %v6198 = vmul.f32 %v5582, %v5982
        %v6199 = vmul.f32 %v5773, %v5983
        %v6200 = vmul.f32 %v5775, %v5984
        %v6201 = vmul.f32 %v5584, %v5985
        %v6202 = vmul.f32 %v5586, %v5986
        %v6203 = vmul.f32 %v5777, %v5987
        %v6204 = vmul.f32 %v5779, %v5988
        %v6205 = vmul.f32 %v5590, %v5989
        %v6206 = vmul.f32 %v5592, %v5990
        %v6207 = vmul.f32 %v5783, %v5991
        %v6208 = vmul.f32 %v5785, %v5992
        %v6209 = vmul.f32 %v5594, %v5993
        %v6210 = vmul.f32 %v5596, %v5994
        %v6211 = vmul.f32 %v5787, %v5995
        %v6212 = vmul.f32 %v5789, %v5996
        %v6213 = vmul.f32 %v5600, %v5997
        %v6214 = vmul.f32 %v5602, %v5998
        %v6215 = vmul.f32 %v5793, %v5999
        %v6216 = vmul.f32 %v5795, %v6000
        %v6217 = vmul.f32 %v5604, %v6001
        %v6218 = vmul.f32 %v5606, %v6002
        %v6219 = vmul.f32 %v5797, %v6003
        %v6220 = vmul.f32 %v5799, %v6004
        %v6221 = vmul.f32 %v5610, %v6005
        %v6222 = vmul.f32 %v5612, %v6006
        %v6223 = vmul.f32 %v5803, %v6007
        %v6224 = vmul.f32 %v5805, %v6008
        %v6225 = vmul.f32 %v5614, %v6009
        %v6226 = vmul.f32 %v5616, %v6010
        %v6227 = vmul.f32 %v5807, %v6011
        %v6228 = vmul.f32 %v5809, %v6012
        %v6229 = vmul.f32 %v5620, %v6013
        %v6230 = vmul.f32 %v5622, %v6014
        %v6231 = vmul.f32 %v5813, %v6015
        %v6232 = vmul.f32 %v5815, %v6016
        %v6233 = vmul.f32 %v5624, %v6017
        %v6234 = vmul.f32 %v5626, %v6018
        %v6235 = vmul.f32 %v5817, %v6019
        %v6236 = vmul.f32 %v5819, %v6020
        %v6237 = vmul.f32 %v5630, %v6021
        %v6238 = vmul.f32 %v5632, %v6022
        %v6239 = vmul.f32 %v5823, %v6023
        %v6240 = vmul.f32 %v5825, %v6024
        %v6241 = vmul.f32 %v5634, %v6025
        %v6242 = vmul.f32 %v5636, %v6026
        %v6243 = vmul.f32 %v5827, %v6027
        %v6244 = vmul.f32 %v5829, %v6028
        %v6245 = vadd.f32 %v6181, %v6185
        %v6246 = vadd.f32 %v6245, %v6189
        %v6247 = vadd.f32 %v6246, %v6193
        %v6248 = vadd.f32 %v6247, %v6197
        %v6249 = vadd.f32 %v6248, %v6201
        %v6250 = vadd.f32 %v6249, %v6205
        %v6251 = vadd.f32 %v6250, %v6209
        %v6252 = vadd.f32 %v6251, %v6213
        %v6253 = vadd.f32 %v6252, %v6217
        %v6254 = vadd.f32 %v6253, %v6221
        %v6255 = vadd.f32 %v6254, %v6225
        %v6256 = vadd.f32 %v6255, %v6229
        %v6257 = vadd.f32 %v6256, %v6233
        %v6258 = vadd.f32 %v6257, %v6237
        %v6259 = vadd.f32 %v6258, %v6241
        %v6260 = vrot.slane %v6259, 4
        %v6261 = vadd.f32 %v6259, %v6260
        %v6262 = vrot.slane %v6261, 2
        %v6263 = vadd.f32 %v6261, %v6262
        %v6264 = vrot.slane %v6263, 1
        %v6265 = vadd.f32 %v6263, %v6264
        %v6266 = vadd.f32 %v6182, %v6186
        %v6267 = vadd.f32 %v6266, %v6190
        %v6268 = vadd.f32 %v6267, %v6194
        %v6269 = vadd.f32 %v6268, %v6198
        %v6270 = vadd.f32 %v6269, %v6202
        %v6271 = vadd.f32 %v6270, %v6206
        %v6272 = vadd.f32 %v6271, %v6210
        %v6273 = vadd.f32 %v6272, %v6214
        %v6274 = vadd.f32 %v6273, %v6218
        %v6275 = vadd.f32 %v6274, %v6222
        %v6276 = vadd.f32 %v6275, %v6226
        %v6277 = vadd.f32 %v6276, %v6230
        %v6278 = vadd.f32 %v6277, %v6234
        %v6279 = vadd.f32 %v6278, %v6238
        %v6280 = vadd.f32 %v6279, %v6242
        %v6281 = vrot.slane %v6280, 4
        %v6282 = vadd.f32 %v6280, %v6281
        %v6283 = vrot.slane %v6282, 2
        %v6284 = vadd.f32 %v6282, %v6283
        %v6285 = vrot.slane %v6284, 1
        %v6286 = vadd.f32 %v6284, %v6285
        %v6287 = vadd.f32 %v6183, %v6187
        %v6288 = vadd.f32 %v6287, %v6191
        %v6289 = vadd.f32 %v6288, %v6195
        %v6290 = vadd.f32 %v6289, %v6199
        %v6291 = vadd.f32 %v6290, %v6203
        %v6292 = vadd.f32 %v6291, %v6207
        %v6293 = vadd.f32 %v6292, %v6211
        %v6294 = vadd.f32 %v6293, %v6215
        %v6295 = vadd.f32 %v6294, %v6219
        %v6296 = vadd.f32 %v6295, %v6223
        %v6297 = vadd.f32 %v6296, %v6227
        %v6298 = vadd.f32 %v6297, %v6231
        %v6299 = vadd.f32 %v6298, %v6235
        %v6300 = vadd.f32 %v6299, %v6239
        %v6301 = vadd.f32 %v6300, %v6243
        %v6302 = vrot.slane %v6301, 4
        %v6303 = vadd.f32 %v6301, %v6302
        %v6304 = vrot.slane %v6303, 2
        %v6305 = vadd.f32 %v6303, %v6304
        %v6306 = vrot.slane %v6305, 1
        %v6307 = vadd.f32 %v6305, %v6306
        %v6308 = vadd.f32 %v6184, %v6188
        %v6309 = vadd.f32 %v6308, %v6192
        %v6310 = vadd.f32 %v6309, %v6196
        %v6311 = vadd.f32 %v6310, %v6200
        %v6312 = vadd.f32 %v6311, %v6204
        %v6313 = vadd.f32 %v6312, %v6208
        %v6314 = vadd.f32 %v6313, %v6212
        %v6315 = vadd.f32 %v6314, %v6216
        %v6316 = vadd.f32 %v6315, %v6220
        %v6317 = vadd.f32 %v6316, %v6224
        %v6318 = vadd.f32 %v6317, %v6228
        %v6319 = vadd.f32 %v6318, %v6232
        %v6320 = vadd.f32 %v6319, %v6236
        %v6321 = vadd.f32 %v6320, %v6240
        %v6322 = vadd.f32 %v6321, %v6244
        %v6323 = vrot.slane %v6322, 4
        %v6324 = vadd.f32 %v6322, %v6323
        %v6325 = vrot.slane %v6324, 2
        %v6326 = vadd.f32 %v6324, %v6325
        %v6327 = vrot.slane %v6326, 1
        %v6328 = vadd.f32 %v6326, %v6327
        %v6329 = vadd.f32 %v5359, %v6265
        %v6330 = vadd.f32 %v5360, %v6286
        %v6331 = vadd.f32 %v5361, %v6307
        %v6332 = vadd.f32 %v5362, %v6328
        %v6333 = vmul.f32 %v2411, %v4376
        %v6334 = vmul.f32 %v2412, %v4378
        %v6335 = vadd.s32 %v2419, %v4386
        %v6336 = vadd.s32 %v2420, %v4388
        %v6337 = vxor.u32 %v2427, %v4394
        %v6338 = vxor.u32 %v2428, %v4396
        %v6339 = vand.u32 %v6337, %v325
        %v6340 = vand.u32 %v6338, %v325
        %v6341 = vmul.u32 %v328, %v6335
        %v6342 = vmul.u32 %v328, %v6336
        %v6343 = vmul.u32 %v332, %v6339
        %v6344 = vmul.u32 %v332, %v6340
        %v6345 = vadd.s32 %v6341, %v6343
        %v6346 = vadd.s32 %v6342, %v6344
        %vm6347 = vcmp.gt.s32.totalorder %v6345, 0
        %v6348 = vsel %vm6347, %v6345, 0
        %vm6349 = vcmp.gt.s32.totalorder %v6346, 0
        %v6350 = vsel %vm6349, %v6346, 0
        %vm6351 = vcmp.lt.s32.totalorder %v325, %v6348
        %v6352 = vsel %vm6351, %v325, %v6348
        %vm6353 = vcmp.lt.s32.totalorder %v325, %v6350
        %v6354 = vsel %vm6353, %v325, %v6350
        %v6355 = vshrl.u32 %v6352, 7
        %v6356 = vshrl.u32 %v6354, 7
        %v6357 = vand.u32 %v6352, 127
        %v6358 = vand.u32 %v6354, 127
        %v6359 = vlaneseq
        %v6360 = vshrl.u32 %v6359, 7
        %v6361 = vsub.s32 0, %v6360
        %v6362 = vrot.slane %v6355, %v6361
        %v6363 = vlaneseq
        %v6364 = vshrl.u32 %v6363, 7
        %v6365 = vsub.s32 4, %v6364
        %v6366 = vrot.slane %v6355, %v6365
        %v6367 = vlaneseq
        %v6368 = vshrl.u32 %v6367, 7
        %v6369 = vsub.s32 0, %v6368
        %v6370 = vrot.slane %v6356, %v6369
        %v6371 = vlaneseq
        %v6372 = vshrl.u32 %v6371, 7
        %v6373 = vsub.s32 4, %v6372
        %v6374 = vrot.slane %v6356, %v6373
        %v6375 = vlaneseq
        %v6376 = vshrl.u32 %v6375, 7
        %v6377 = vsub.s32 0, %v6376
        %v6378 = vrot.slane %v6362, %v6377
        %v6379 = vlaneseq
        %v6380 = vshrl.u32 %v6379, 7
        %v6381 = vsub.s32 0, %v6380
        %v6382 = vrot.slane %v6366, %v6381
        %v6383 = vlaneseq
        %v6384 = vshrl.u32 %v6383, 7
        %v6385 = vsub.s32 0, %v6384
        %v6386 = vrot.slane %v6370, %v6385
        %v6387 = vlaneseq
        %v6388 = vshrl.u32 %v6387, 7
        %v6389 = vsub.s32 0, %v6388
        %v6390 = vrot.slane %v6374, %v6389
        %vm6391 = vcmp.eq.s32.totalorder %v254, %v6378
        %vm6392 = vcmp.eq.s32.totalorder %v254, %v6382
        %vm6393 = vcmp.eq.s32.totalorder %v254, %v6386
        %vm6394 = vcmp.eq.s32.totalorder %v254, %v6390
        %v6395 = vsel %vm6391, 1.0, 0.0
        %v6396 = vsel %vm6392, 1.0, 0.0
        %v6397 = vsel %vm6393, 1.0, 0.0
        %v6398 = vsel %vm6394, 1.0, 0.0
        %v6399 = vpack.c.bf16 %v6395, %v6395
        %v6400 = vpack.c.bf16 %v6396, %v6396
        %v6401 = vpack.c.bf16 %v6397, %v6397
        %v6402 = vpack.c.bf16 %v6398, %v6398
        %v6404 = vsel %vm522, %v6399, 0
        %v6407 = vsel %vm522, %v6400, 0
        %v6410 = vsel %vm522, %v6401, 0
        %v6413 = vsel %vm522, %v6402, 0
        %6415 = vmatprep.subr.bf16.mxu0 %v6407
        %6416 = vmatpush1.bf16.msra.mxu0 %v6404
        %6417 = vmatprep.subr.bf16.mxu0 0
        %6418 = vmatpush1.bf16.msra.mxu0 0
        %6419 = vmatprep.subr.bf16.mxu0 0
        %6420 = vmatpush1.bf16.msra.mxu0 0
        %6421 = vmatprep.subr.bf16.mxu0 0
        %6422 = vmatpush1.bf16.msra.mxu0 0
        %6423 = vmatprep.subr.bf16.mxu0 0
        %6424 = vmatpush1.bf16.msra.mxu0 0
        %6425 = vmatprep.subr.bf16.mxu0 0
        %6426 = vmatpush1.bf16.msra.mxu0 0
        %6427 = vmatprep.subr.bf16.mxu0 0
        %6428 = vmatpush1.bf16.msra.mxu0 0
        %6429 = vmatprep.subr.bf16.mxu0 0
        %6430 = vmatpush1.bf16.msra.mxu0 0
        %6431 = vmatprep.subr.bf16.mxu0 0
        %6432 = vmatpush1.bf16.msra.mxu0 0
        %6433 = vmatprep.subr.bf16.mxu0 0
        %6434 = vmatpush1.bf16.msra.mxu0 0
        %6435 = vmatprep.subr.bf16.mxu0 0
        %6436 = vmatpush1.bf16.msra.mxu0 0
        %6437 = vmatprep.subr.bf16.mxu0 0
        %6438 = vmatpush1.bf16.msra.mxu0 0
        %6439 = vmatprep.subr.bf16.mxu0 0
        %6440 = vmatpush1.bf16.msra.mxu0 0
        %6441 = vmatprep.subr.bf16.mxu0 0
        %6442 = vmatpush1.bf16.msra.mxu0 0
        %6443 = vmatprep.subr.bf16.mxu0 0
        %6444 = vmatpush1.bf16.msra.mxu0 0
        %6445 = vmatprep.subr.bf16.mxu0 0
        %6446 = vmatpush1.bf16.msra.mxu0 0
        %6447 = vmatprep.mubr.bf16.mxu0 0
        %6448 = vmatmul.mubr.bf16.gmra.mrb[0].mxu0 %v475
        %v6449 = vpop.f32.mrb[0].mxu0
        %v6450 = vadd.f32 0.0, %v6449
        %v6451 = vpop.f32.mrb[0].mxu0
        %v6452 = vadd.f32 0.0, %v6451
        %v6453 = vpop.f32.mrb[0].mxu0
        %v6454 = vadd.f32 0.0, %v6453
        %v6455 = vpop.f32.mrb[0].mxu0
        %v6456 = vadd.f32 0.0, %v6455
        %6457 = vmatprep.mubr.bf16.mxu0 0
        %6458 = vmatmul.mubr.bf16.gmra.mrb[0].mxu0 %v478
        %v6459 = vpop.f32.mrb[0].mxu0
        %v6460 = vadd.f32 0.0, %v6459
        %v6461 = vpop.f32.mrb[0].mxu0
        %v6462 = vadd.f32 0.0, %v6461
        %v6463 = vpop.f32.mrb[0].mxu0
        %v6464 = vadd.f32 0.0, %v6463
        %v6465 = vpop.f32.mrb[0].mxu0
        %v6466 = vadd.f32 0.0, %v6465
        %6467 = vmatprep.mubr.bf16.mxu0 0
        %6468 = vmatmul.mubr.bf16.gmra.mrb[0].mxu0 %v481
        %v6469 = vpop.f32.mrb[0].mxu0
        %v6470 = vadd.f32 0.0, %v6469
        %v6471 = vpop.f32.mrb[0].mxu0
        %v6472 = vadd.f32 0.0, %v6471
        %v6473 = vpop.f32.mrb[0].mxu0
        %v6474 = vadd.f32 0.0, %v6473
        %v6475 = vpop.f32.mrb[0].mxu0
        %v6476 = vadd.f32 0.0, %v6475
        %6477 = vmatprep.mubr.bf16.mxu0 0
        %6478 = vmatmul.mubr.bf16.gmra.mrb[0].mxu0 %v484
        %v6479 = vpop.f32.mrb[0].mxu0
        %v6480 = vadd.f32 0.0, %v6479
        %v6481 = vpop.f32.mrb[0].mxu0
        %v6482 = vadd.f32 0.0, %v6481
        %v6483 = vpop.f32.mrb[0].mxu0
        %v6484 = vadd.f32 0.0, %v6483
        %v6485 = vpop.f32.mrb[0].mxu0
        %v6486 = vadd.f32 0.0, %v6485
        %6487 = vmatprep.mubr.bf16.mxu0 0
        %6488 = vmatmul.mubr.bf16.gmra.mrb[0].mxu0 %v487
        %v6489 = vpop.f32.mrb[0].mxu0
        %v6490 = vadd.f32 0.0, %v6489
        %v6491 = vpop.f32.mrb[0].mxu0
        %v6492 = vadd.f32 0.0, %v6491
        %v6493 = vpop.f32.mrb[0].mxu0
        %v6494 = vadd.f32 0.0, %v6493
        %v6495 = vpop.f32.mrb[0].mxu0
        %v6496 = vadd.f32 0.0, %v6495
        %6497 = vmatprep.mubr.bf16.mxu0 0
        %6498 = vmatmul.mubr.bf16.gmra.mrb[0].mxu0 %v490
        %v6499 = vpop.f32.mrb[0].mxu0
        %v6500 = vadd.f32 0.0, %v6499
        %v6501 = vpop.f32.mrb[0].mxu0
        %v6502 = vadd.f32 0.0, %v6501
        %v6503 = vpop.f32.mrb[0].mxu0
        %v6504 = vadd.f32 0.0, %v6503
        %v6505 = vpop.f32.mrb[0].mxu0
        %v6506 = vadd.f32 0.0, %v6505
        %6507 = vmatprep.mubr.bf16.mxu0 0
        %6508 = vmatmul.mubr.bf16.gmra.mrb[0].mxu0 %v493
        %v6509 = vpop.f32.mrb[0].mxu0
        %v6510 = vadd.f32 0.0, %v6509
        %v6511 = vpop.f32.mrb[0].mxu0
        %v6512 = vadd.f32 0.0, %v6511
        %v6513 = vpop.f32.mrb[0].mxu0
        %v6514 = vadd.f32 0.0, %v6513
        %v6515 = vpop.f32.mrb[0].mxu0
        %v6516 = vadd.f32 0.0, %v6515
        %6517 = vmatprep.mubr.bf16.mxu0 0
        %6518 = vmatmul.mubr.bf16.gmra.mrb[0].mxu0 %v496
        %v6519 = vpop.f32.mrb[0].mxu0
        %v6520 = vadd.f32 0.0, %v6519
        %v6521 = vpop.f32.mrb[0].mxu0
        %v6522 = vadd.f32 0.0, %v6521
        %v6523 = vpop.f32.mrb[0].mxu0
        %v6524 = vadd.f32 0.0, %v6523
        %v6525 = vpop.f32.mrb[0].mxu0
        %v6526 = vadd.f32 0.0, %v6525
        %6527 = vmatprep.mubr.bf16.mxu0 0
        %6528 = vmatmul.mubr.bf16.gmra.mrb[0].mxu0 %v499
        %v6529 = vpop.f32.mrb[0].mxu0
        %v6530 = vadd.f32 0.0, %v6529
        %v6531 = vpop.f32.mrb[0].mxu0
        %v6532 = vadd.f32 0.0, %v6531
        %v6533 = vpop.f32.mrb[0].mxu0
        %v6534 = vadd.f32 0.0, %v6533
        %v6535 = vpop.f32.mrb[0].mxu0
        %v6536 = vadd.f32 0.0, %v6535
        %6537 = vmatprep.mubr.bf16.mxu0 0
        %6538 = vmatmul.mubr.bf16.gmra.mrb[0].mxu0 %v502
        %v6539 = vpop.f32.mrb[0].mxu0
        %v6540 = vadd.f32 0.0, %v6539
        %v6541 = vpop.f32.mrb[0].mxu0
        %v6542 = vadd.f32 0.0, %v6541
        %v6543 = vpop.f32.mrb[0].mxu0
        %v6544 = vadd.f32 0.0, %v6543
        %v6545 = vpop.f32.mrb[0].mxu0
        %v6546 = vadd.f32 0.0, %v6545
        %6547 = vmatprep.mubr.bf16.mxu0 0
        %6548 = vmatmul.mubr.bf16.gmra.mrb[0].mxu0 %v505
        %v6549 = vpop.f32.mrb[0].mxu0
        %v6550 = vadd.f32 0.0, %v6549
        %v6551 = vpop.f32.mrb[0].mxu0
        %v6552 = vadd.f32 0.0, %v6551
        %v6553 = vpop.f32.mrb[0].mxu0
        %v6554 = vadd.f32 0.0, %v6553
        %v6555 = vpop.f32.mrb[0].mxu0
        %v6556 = vadd.f32 0.0, %v6555
        %6557 = vmatprep.mubr.bf16.mxu0 0
        %6558 = vmatmul.mubr.bf16.gmra.mrb[0].mxu0 %v508
        %v6559 = vpop.f32.mrb[0].mxu0
        %v6560 = vadd.f32 0.0, %v6559
        %v6561 = vpop.f32.mrb[0].mxu0
        %v6562 = vadd.f32 0.0, %v6561
        %v6563 = vpop.f32.mrb[0].mxu0
        %v6564 = vadd.f32 0.0, %v6563
        %v6565 = vpop.f32.mrb[0].mxu0
        %v6566 = vadd.f32 0.0, %v6565
        %6567 = vmatprep.mubr.bf16.mxu0 0
        %6568 = vmatmul.mubr.bf16.gmra.mrb[0].mxu0 %v511
        %v6569 = vpop.f32.mrb[0].mxu0
        %v6570 = vadd.f32 0.0, %v6569
        %v6571 = vpop.f32.mrb[0].mxu0
        %v6572 = vadd.f32 0.0, %v6571
        %v6573 = vpop.f32.mrb[0].mxu0
        %v6574 = vadd.f32 0.0, %v6573
        %v6575 = vpop.f32.mrb[0].mxu0
        %v6576 = vadd.f32 0.0, %v6575
        %6577 = vmatprep.mubr.bf16.mxu0 0
        %6578 = vmatmul.mubr.bf16.gmra.mrb[0].mxu0 %v514
        %v6579 = vpop.f32.mrb[0].mxu0
        %v6580 = vadd.f32 0.0, %v6579
        %v6581 = vpop.f32.mrb[0].mxu0
        %v6582 = vadd.f32 0.0, %v6581
        %v6583 = vpop.f32.mrb[0].mxu0
        %v6584 = vadd.f32 0.0, %v6583
        %v6585 = vpop.f32.mrb[0].mxu0
        %v6586 = vadd.f32 0.0, %v6585
        %6587 = vmatprep.mubr.bf16.mxu0 0
        %6588 = vmatmul.mubr.bf16.gmra.mrb[0].mxu0 %v517
        %v6589 = vpop.f32.mrb[0].mxu0
        %v6590 = vadd.f32 0.0, %v6589
        %v6591 = vpop.f32.mrb[0].mxu0
        %v6592 = vadd.f32 0.0, %v6591
        %v6593 = vpop.f32.mrb[0].mxu0
        %v6594 = vadd.f32 0.0, %v6593
        %v6595 = vpop.f32.mrb[0].mxu0
        %v6596 = vadd.f32 0.0, %v6595
        %6597 = vmatprep.mubr.bf16.mxu0 0
        %6598 = vmatmul.mubr.bf16.gmra.mrb[0].mxu0 %v520
        %v6599 = vpop.f32.mrb[0].mxu0
        %v6600 = vadd.f32 0.0, %v6599
        %v6601 = vpop.f32.mrb[0].mxu0
        %v6602 = vadd.f32 0.0, %v6601
        %v6603 = vpop.f32.mrb[0].mxu0
        %v6604 = vadd.f32 0.0, %v6603
        %v6605 = vpop.f32.mrb[0].mxu0
        %v6606 = vadd.f32 0.0, %v6605
        %6607 = vdwg.mxu0
        %6608 = vmatprep.subr.bf16.mxu0 %v6413
        %6609 = vmatpush1.bf16.msra.mxu0 %v6410
        %6610 = vmatprep.subr.bf16.mxu0 0
        %6611 = vmatpush1.bf16.msra.mxu0 0
        %6612 = vmatprep.subr.bf16.mxu0 0
        %6613 = vmatpush1.bf16.msra.mxu0 0
        %6614 = vmatprep.subr.bf16.mxu0 0
        %6615 = vmatpush1.bf16.msra.mxu0 0
        %6616 = vmatprep.subr.bf16.mxu0 0
        %6617 = vmatpush1.bf16.msra.mxu0 0
        %6618 = vmatprep.subr.bf16.mxu0 0
        %6619 = vmatpush1.bf16.msra.mxu0 0
        %6620 = vmatprep.subr.bf16.mxu0 0
        %6621 = vmatpush1.bf16.msra.mxu0 0
        %6622 = vmatprep.subr.bf16.mxu0 0
        %6623 = vmatpush1.bf16.msra.mxu0 0
        %6624 = vmatprep.subr.bf16.mxu0 0
        %6625 = vmatpush1.bf16.msra.mxu0 0
        %6626 = vmatprep.subr.bf16.mxu0 0
        %6627 = vmatpush1.bf16.msra.mxu0 0
        %6628 = vmatprep.subr.bf16.mxu0 0
        %6629 = vmatpush1.bf16.msra.mxu0 0
        %6630 = vmatprep.subr.bf16.mxu0 0
        %6631 = vmatpush1.bf16.msra.mxu0 0
        %6632 = vmatprep.subr.bf16.mxu0 0
        %6633 = vmatpush1.bf16.msra.mxu0 0
        %6634 = vmatprep.subr.bf16.mxu0 0
        %6635 = vmatpush1.bf16.msra.mxu0 0
        %6636 = vmatprep.subr.bf16.mxu0 0
        %6637 = vmatpush1.bf16.msra.mxu0 0
        %6638 = vmatprep.subr.bf16.mxu0 0
        %6639 = vmatpush1.bf16.msra.mxu0 0
        %6640 = vmatprep.mubr.bf16.mxu0 0
        %6641 = vmatmul.mubr.bf16.gmra.mrb[0].mxu0 %v475
        %v6642 = vpop.f32.mrb[0].mxu0
        %v6643 = vadd.f32 0.0, %v6642
        %v6644 = vpop.f32.mrb[0].mxu0
        %v6645 = vadd.f32 0.0, %v6644
        %v6646 = vpop.f32.mrb[0].mxu0
        %v6647 = vadd.f32 0.0, %v6646
        %v6648 = vpop.f32.mrb[0].mxu0
        %v6649 = vadd.f32 0.0, %v6648
        %6650 = vmatprep.mubr.bf16.mxu0 0
        %6651 = vmatmul.mubr.bf16.gmra.mrb[0].mxu0 %v478
        %v6652 = vpop.f32.mrb[0].mxu0
        %v6653 = vadd.f32 0.0, %v6652
        %v6654 = vpop.f32.mrb[0].mxu0
        %v6655 = vadd.f32 0.0, %v6654
        %v6656 = vpop.f32.mrb[0].mxu0
        %v6657 = vadd.f32 0.0, %v6656
        %v6658 = vpop.f32.mrb[0].mxu0
        %v6659 = vadd.f32 0.0, %v6658
        %6660 = vmatprep.mubr.bf16.mxu0 0
        %6661 = vmatmul.mubr.bf16.gmra.mrb[0].mxu0 %v481
        %v6662 = vpop.f32.mrb[0].mxu0
        %v6663 = vadd.f32 0.0, %v6662
        %v6664 = vpop.f32.mrb[0].mxu0
        %v6665 = vadd.f32 0.0, %v6664
        %v6666 = vpop.f32.mrb[0].mxu0
        %v6667 = vadd.f32 0.0, %v6666
        %v6668 = vpop.f32.mrb[0].mxu0
        %v6669 = vadd.f32 0.0, %v6668
        %6670 = vmatprep.mubr.bf16.mxu0 0
        %6671 = vmatmul.mubr.bf16.gmra.mrb[0].mxu0 %v484
        %v6672 = vpop.f32.mrb[0].mxu0
        %v6673 = vadd.f32 0.0, %v6672
        %v6674 = vpop.f32.mrb[0].mxu0
        %v6675 = vadd.f32 0.0, %v6674
        %v6676 = vpop.f32.mrb[0].mxu0
        %v6677 = vadd.f32 0.0, %v6676
        %v6678 = vpop.f32.mrb[0].mxu0
        %v6679 = vadd.f32 0.0, %v6678
        %6680 = vmatprep.mubr.bf16.mxu0 0
        %6681 = vmatmul.mubr.bf16.gmra.mrb[0].mxu0 %v487
        %v6682 = vpop.f32.mrb[0].mxu0
        %v6683 = vadd.f32 0.0, %v6682
        %v6684 = vpop.f32.mrb[0].mxu0
        %v6685 = vadd.f32 0.0, %v6684
        %v6686 = vpop.f32.mrb[0].mxu0
        %v6687 = vadd.f32 0.0, %v6686
        %v6688 = vpop.f32.mrb[0].mxu0
        %v6689 = vadd.f32 0.0, %v6688
        %6690 = vmatprep.mubr.bf16.mxu0 0
        %6691 = vmatmul.mubr.bf16.gmra.mrb[0].mxu0 %v490
        %v6692 = vpop.f32.mrb[0].mxu0
        %v6693 = vadd.f32 0.0, %v6692
        %v6694 = vpop.f32.mrb[0].mxu0
        %v6695 = vadd.f32 0.0, %v6694
        %v6696 = vpop.f32.mrb[0].mxu0
        %v6697 = vadd.f32 0.0, %v6696
        %v6698 = vpop.f32.mrb[0].mxu0
        %v6699 = vadd.f32 0.0, %v6698
        %6700 = vmatprep.mubr.bf16.mxu0 0
        %6701 = vmatmul.mubr.bf16.gmra.mrb[0].mxu0 %v493
        %v6702 = vpop.f32.mrb[0].mxu0
        %v6703 = vadd.f32 0.0, %v6702
        %v6704 = vpop.f32.mrb[0].mxu0
        %v6705 = vadd.f32 0.0, %v6704
        %v6706 = vpop.f32.mrb[0].mxu0
        %v6707 = vadd.f32 0.0, %v6706
        %v6708 = vpop.f32.mrb[0].mxu0
        %v6709 = vadd.f32 0.0, %v6708
        %6710 = vmatprep.mubr.bf16.mxu0 0
        %6711 = vmatmul.mubr.bf16.gmra.mrb[0].mxu0 %v496
        %v6712 = vpop.f32.mrb[0].mxu0
        %v6713 = vadd.f32 0.0, %v6712
        %v6714 = vpop.f32.mrb[0].mxu0
        %v6715 = vadd.f32 0.0, %v6714
        %v6716 = vpop.f32.mrb[0].mxu0
        %v6717 = vadd.f32 0.0, %v6716
        %v6718 = vpop.f32.mrb[0].mxu0
        %v6719 = vadd.f32 0.0, %v6718
        %6720 = vmatprep.mubr.bf16.mxu0 0
        %6721 = vmatmul.mubr.bf16.gmra.mrb[0].mxu0 %v499
        %v6722 = vpop.f32.mrb[0].mxu0
        %v6723 = vadd.f32 0.0, %v6722
        %v6724 = vpop.f32.mrb[0].mxu0
        %v6725 = vadd.f32 0.0, %v6724
        %v6726 = vpop.f32.mrb[0].mxu0
        %v6727 = vadd.f32 0.0, %v6726
        %v6728 = vpop.f32.mrb[0].mxu0
        %v6729 = vadd.f32 0.0, %v6728
        %6730 = vmatprep.mubr.bf16.mxu0 0
        %6731 = vmatmul.mubr.bf16.gmra.mrb[0].mxu0 %v502
        %v6732 = vpop.f32.mrb[0].mxu0
        %v6733 = vadd.f32 0.0, %v6732
        %v6734 = vpop.f32.mrb[0].mxu0
        %v6735 = vadd.f32 0.0, %v6734
        %v6736 = vpop.f32.mrb[0].mxu0
        %v6737 = vadd.f32 0.0, %v6736
        %v6738 = vpop.f32.mrb[0].mxu0
        %v6739 = vadd.f32 0.0, %v6738
        %6740 = vmatprep.mubr.bf16.mxu0 0
        %6741 = vmatmul.mubr.bf16.gmra.mrb[0].mxu0 %v505
        %v6742 = vpop.f32.mrb[0].mxu0
        %v6743 = vadd.f32 0.0, %v6742
        %v6744 = vpop.f32.mrb[0].mxu0
        %v6745 = vadd.f32 0.0, %v6744
        %v6746 = vpop.f32.mrb[0].mxu0
        %v6747 = vadd.f32 0.0, %v6746
        %v6748 = vpop.f32.mrb[0].mxu0
        %v6749 = vadd.f32 0.0, %v6748
        %6750 = vmatprep.mubr.bf16.mxu0 0
        %6751 = vmatmul.mubr.bf16.gmra.mrb[0].mxu0 %v508
        %v6752 = vpop.f32.mrb[0].mxu0
        %v6753 = vadd.f32 0.0, %v6752
        %v6754 = vpop.f32.mrb[0].mxu0
        %v6755 = vadd.f32 0.0, %v6754
        %v6756 = vpop.f32.mrb[0].mxu0
        %v6757 = vadd.f32 0.0, %v6756
        %v6758 = vpop.f32.mrb[0].mxu0
        %v6759 = vadd.f32 0.0, %v6758
        %6760 = vmatprep.mubr.bf16.mxu0 0
        %6761 = vmatmul.mubr.bf16.gmra.mrb[0].mxu0 %v511
        %v6762 = vpop.f32.mrb[0].mxu0
        %v6763 = vadd.f32 0.0, %v6762
        %v6764 = vpop.f32.mrb[0].mxu0
        %v6765 = vadd.f32 0.0, %v6764
        %v6766 = vpop.f32.mrb[0].mxu0
        %v6767 = vadd.f32 0.0, %v6766
        %v6768 = vpop.f32.mrb[0].mxu0
        %v6769 = vadd.f32 0.0, %v6768
        %6770 = vmatprep.mubr.bf16.mxu0 0
        %6771 = vmatmul.mubr.bf16.gmra.mrb[0].mxu0 %v514
        %v6772 = vpop.f32.mrb[0].mxu0
        %v6773 = vadd.f32 0.0, %v6772
        %v6774 = vpop.f32.mrb[0].mxu0
        %v6775 = vadd.f32 0.0, %v6774
        %v6776 = vpop.f32.mrb[0].mxu0
        %v6777 = vadd.f32 0.0, %v6776
        %v6778 = vpop.f32.mrb[0].mxu0
        %v6779 = vadd.f32 0.0, %v6778
        %6780 = vmatprep.mubr.bf16.mxu0 0
        %6781 = vmatmul.mubr.bf16.gmra.mrb[0].mxu0 %v517
        %v6782 = vpop.f32.mrb[0].mxu0
        %v6783 = vadd.f32 0.0, %v6782
        %v6784 = vpop.f32.mrb[0].mxu0
        %v6785 = vadd.f32 0.0, %v6784
        %v6786 = vpop.f32.mrb[0].mxu0
        %v6787 = vadd.f32 0.0, %v6786
        %v6788 = vpop.f32.mrb[0].mxu0
        %v6789 = vadd.f32 0.0, %v6788
        %6790 = vmatprep.mubr.bf16.mxu0 0
        %6791 = vmatmul.mubr.bf16.gmra.mrb[0].mxu0 %v520
        %v6792 = vpop.f32.mrb[0].mxu0
        %v6793 = vadd.f32 0.0, %v6792
        %v6794 = vpop.f32.mrb[0].mxu0
        %v6795 = vadd.f32 0.0, %v6794
        %v6796 = vpop.f32.mrb[0].mxu0
        %v6797 = vadd.f32 0.0, %v6796
        %v6798 = vpop.f32.mrb[0].mxu0
        %v6799 = vadd.f32 0.0, %v6798
        %6800 = vdwg.mxu0
        %v6801 = vlaneseq
        %v6802 = vshrl.u32 %v6801, 7
        %v6803 = vsub.s32 0, %v6802
        %v6804 = vrot.slane %v6357, %v6803
        %v6805 = vlaneseq
        %v6806 = vshrl.u32 %v6805, 7
        %v6807 = vsub.s32 4, %v6806
        %v6808 = vrot.slane %v6357, %v6807
        %v6809 = vlaneseq
        %v6810 = vshrl.u32 %v6809, 7
        %v6811 = vsub.s32 0, %v6810
        %v6812 = vrot.slane %v6358, %v6811
        %v6813 = vlaneseq
        %v6814 = vshrl.u32 %v6813, 7
        %v6815 = vsub.s32 4, %v6814
        %v6816 = vrot.slane %v6358, %v6815
        %v6817 = vlaneseq
        %v6818 = vshrl.u32 %v6817, 7
        %v6819 = vsub.s32 0, %v6818
        %v6820 = vrot.slane %v6804, %v6819
        %v6821 = vlaneseq
        %v6822 = vshrl.u32 %v6821, 7
        %v6823 = vsub.s32 0, %v6822
        %v6824 = vrot.slane %v6808, %v6823
        %v6825 = vlaneseq
        %v6826 = vshrl.u32 %v6825, 7
        %v6827 = vsub.s32 0, %v6826
        %v6828 = vrot.slane %v6812, %v6827
        %v6829 = vlaneseq
        %v6830 = vshrl.u32 %v6829, 7
        %v6831 = vsub.s32 0, %v6830
        %v6832 = vrot.slane %v6816, %v6831
        %vm6833 = vcmp.eq.s32.totalorder %v254, %v6820
        %vm6834 = vcmp.eq.s32.totalorder %v254, %v6824
        %vm6835 = vcmp.eq.s32.totalorder %v254, %v6828
        %vm6836 = vcmp.eq.s32.totalorder %v254, %v6832
        %vm6837 = vcmp.eq.s32.totalorder %v255, %v6820
        %vm6838 = vcmp.eq.s32.totalorder %v255, %v6824
        %vm6839 = vcmp.eq.s32.totalorder %v255, %v6828
        %vm6840 = vcmp.eq.s32.totalorder %v255, %v6832
        %vm6841 = vcmp.eq.s32.totalorder %v256, %v6820
        %vm6842 = vcmp.eq.s32.totalorder %v256, %v6824
        %vm6843 = vcmp.eq.s32.totalorder %v256, %v6828
        %vm6844 = vcmp.eq.s32.totalorder %v256, %v6832
        %vm6845 = vcmp.eq.s32.totalorder %v257, %v6820
        %vm6846 = vcmp.eq.s32.totalorder %v257, %v6824
        %vm6847 = vcmp.eq.s32.totalorder %v257, %v6828
        %vm6848 = vcmp.eq.s32.totalorder %v257, %v6832
        %vm6849 = vcmp.eq.s32.totalorder %v258, %v6820
        %vm6850 = vcmp.eq.s32.totalorder %v258, %v6824
        %vm6851 = vcmp.eq.s32.totalorder %v258, %v6828
        %vm6852 = vcmp.eq.s32.totalorder %v258, %v6832
        %vm6853 = vcmp.eq.s32.totalorder %v259, %v6820
        %vm6854 = vcmp.eq.s32.totalorder %v259, %v6824
        %vm6855 = vcmp.eq.s32.totalorder %v259, %v6828
        %vm6856 = vcmp.eq.s32.totalorder %v259, %v6832
        %vm6857 = vcmp.eq.s32.totalorder %v260, %v6820
        %vm6858 = vcmp.eq.s32.totalorder %v260, %v6824
        %vm6859 = vcmp.eq.s32.totalorder %v260, %v6828
        %vm6860 = vcmp.eq.s32.totalorder %v260, %v6832
        %vm6861 = vcmp.eq.s32.totalorder %v261, %v6820
        %vm6862 = vcmp.eq.s32.totalorder %v261, %v6824
        %vm6863 = vcmp.eq.s32.totalorder %v261, %v6828
        %vm6864 = vcmp.eq.s32.totalorder %v261, %v6832
        %vm6865 = vcmp.eq.s32.totalorder %v262, %v6820
        %vm6866 = vcmp.eq.s32.totalorder %v262, %v6824
        %vm6867 = vcmp.eq.s32.totalorder %v262, %v6828
        %vm6868 = vcmp.eq.s32.totalorder %v262, %v6832
        %vm6869 = vcmp.eq.s32.totalorder %v263, %v6820
        %vm6870 = vcmp.eq.s32.totalorder %v263, %v6824
        %vm6871 = vcmp.eq.s32.totalorder %v263, %v6828
        %vm6872 = vcmp.eq.s32.totalorder %v263, %v6832
        %vm6873 = vcmp.eq.s32.totalorder %v264, %v6820
        %vm6874 = vcmp.eq.s32.totalorder %v264, %v6824
        %vm6875 = vcmp.eq.s32.totalorder %v264, %v6828
        %vm6876 = vcmp.eq.s32.totalorder %v264, %v6832
        %vm6877 = vcmp.eq.s32.totalorder %v265, %v6820
        %vm6878 = vcmp.eq.s32.totalorder %v265, %v6824
        %vm6879 = vcmp.eq.s32.totalorder %v265, %v6828
        %vm6880 = vcmp.eq.s32.totalorder %v265, %v6832
        %vm6881 = vcmp.eq.s32.totalorder %v266, %v6820
        %vm6882 = vcmp.eq.s32.totalorder %v266, %v6824
        %vm6883 = vcmp.eq.s32.totalorder %v266, %v6828
        %vm6884 = vcmp.eq.s32.totalorder %v266, %v6832
        %vm6885 = vcmp.eq.s32.totalorder %v267, %v6820
        %vm6886 = vcmp.eq.s32.totalorder %v267, %v6824
        %vm6887 = vcmp.eq.s32.totalorder %v267, %v6828
        %vm6888 = vcmp.eq.s32.totalorder %v267, %v6832
        %vm6889 = vcmp.eq.s32.totalorder %v268, %v6820
        %vm6890 = vcmp.eq.s32.totalorder %v268, %v6824
        %vm6891 = vcmp.eq.s32.totalorder %v268, %v6828
        %vm6892 = vcmp.eq.s32.totalorder %v268, %v6832
        %vm6893 = vcmp.eq.s32.totalorder %v269, %v6820
        %vm6894 = vcmp.eq.s32.totalorder %v269, %v6824
        %vm6895 = vcmp.eq.s32.totalorder %v269, %v6828
        %vm6896 = vcmp.eq.s32.totalorder %v269, %v6832
        %v6899 = vlaneseq
        %v6900 = vshrl.u32 %v6899, 7
        %v6901 = vsub.s32 0, %v6900
        %v6902 = vrot.slane %v6333, %v6901
        %v6903 = vlaneseq
        %v6904 = vshrl.u32 %v6903, 7
        %v6905 = vsub.s32 4, %v6904
        %v6906 = vrot.slane %v6333, %v6905
        %v6907 = vlaneseq
        %v6908 = vshrl.u32 %v6907, 7
        %v6909 = vsub.s32 0, %v6908
        %v6910 = vrot.slane %v6334, %v6909
        %v6911 = vlaneseq
        %v6912 = vshrl.u32 %v6911, 7
        %v6913 = vsub.s32 4, %v6912
        %v6914 = vrot.slane %v6334, %v6913
        %v6919 = vlaneseq
        %v6920 = vshrl.u32 %v6919, 7
        %v6921 = vsub.s32 0, %v6920
        %v6922 = vrot.slane %v6902, %v6921
        %v6923 = vlaneseq
        %v6924 = vshrl.u32 %v6923, 7
        %v6925 = vsub.s32 0, %v6924
        %v6926 = vrot.slane %v6906, %v6925
        %v6927 = vlaneseq
        %v6928 = vshrl.u32 %v6927, 7
        %v6929 = vsub.s32 0, %v6928
        %v6930 = vrot.slane %v6910, %v6929
        %v6931 = vlaneseq
        %v6932 = vshrl.u32 %v6931, 7
        %v6933 = vsub.s32 0, %v6932
        %v6934 = vrot.slane %v6914, %v6933
        %v6935 = vsel %vm6833, %v6922, 0.0
        %v6936 = vsel %vm6834, %v6926, 0.0
        %v6937 = vsel %vm6835, %v6930, 0.0
        %v6938 = vsel %vm6836, %v6934, 0.0
        %v6939 = vsel %vm6837, %v6922, 0.0
        %v6940 = vsel %vm6838, %v6926, 0.0
        %v6941 = vsel %vm6839, %v6930, 0.0
        %v6942 = vsel %vm6840, %v6934, 0.0
        %v6943 = vsel %vm6841, %v6922, 0.0
        %v6944 = vsel %vm6842, %v6926, 0.0
        %v6945 = vsel %vm6843, %v6930, 0.0
        %v6946 = vsel %vm6844, %v6934, 0.0
        %v6947 = vsel %vm6845, %v6922, 0.0
        %v6948 = vsel %vm6846, %v6926, 0.0
        %v6949 = vsel %vm6847, %v6930, 0.0
        %v6950 = vsel %vm6848, %v6934, 0.0
        %v6951 = vsel %vm6849, %v6922, 0.0
        %v6952 = vsel %vm6850, %v6926, 0.0
        %v6953 = vsel %vm6851, %v6930, 0.0
        %v6954 = vsel %vm6852, %v6934, 0.0
        %v6955 = vsel %vm6853, %v6922, 0.0
        %v6956 = vsel %vm6854, %v6926, 0.0
        %v6957 = vsel %vm6855, %v6930, 0.0
        %v6958 = vsel %vm6856, %v6934, 0.0
        %v6959 = vsel %vm6857, %v6922, 0.0
        %v6960 = vsel %vm6858, %v6926, 0.0
        %v6961 = vsel %vm6859, %v6930, 0.0
        %v6962 = vsel %vm6860, %v6934, 0.0
        %v6963 = vsel %vm6861, %v6922, 0.0
        %v6964 = vsel %vm6862, %v6926, 0.0
        %v6965 = vsel %vm6863, %v6930, 0.0
        %v6966 = vsel %vm6864, %v6934, 0.0
        %v6967 = vsel %vm6865, %v6922, 0.0
        %v6968 = vsel %vm6866, %v6926, 0.0
        %v6969 = vsel %vm6867, %v6930, 0.0
        %v6970 = vsel %vm6868, %v6934, 0.0
        %v6971 = vsel %vm6869, %v6922, 0.0
        %v6972 = vsel %vm6870, %v6926, 0.0
        %v6973 = vsel %vm6871, %v6930, 0.0
        %v6974 = vsel %vm6872, %v6934, 0.0
        %v6975 = vsel %vm6873, %v6922, 0.0
        %v6976 = vsel %vm6874, %v6926, 0.0
        %v6977 = vsel %vm6875, %v6930, 0.0
        %v6978 = vsel %vm6876, %v6934, 0.0
        %v6979 = vsel %vm6877, %v6922, 0.0
        %v6980 = vsel %vm6878, %v6926, 0.0
        %v6981 = vsel %vm6879, %v6930, 0.0
        %v6982 = vsel %vm6880, %v6934, 0.0
        %v6983 = vsel %vm6881, %v6922, 0.0
        %v6984 = vsel %vm6882, %v6926, 0.0
        %v6985 = vsel %vm6883, %v6930, 0.0
        %v6986 = vsel %vm6884, %v6934, 0.0
        %v6987 = vsel %vm6885, %v6922, 0.0
        %v6988 = vsel %vm6886, %v6926, 0.0
        %v6989 = vsel %vm6887, %v6930, 0.0
        %v6990 = vsel %vm6888, %v6934, 0.0
        %v6991 = vsel %vm6889, %v6922, 0.0
        %v6992 = vsel %vm6890, %v6926, 0.0
        %v6993 = vsel %vm6891, %v6930, 0.0
        %v6994 = vsel %vm6892, %v6934, 0.0
        %v6995 = vsel %vm6893, %v6922, 0.0
        %v6996 = vsel %vm6894, %v6926, 0.0
        %v6997 = vsel %vm6895, %v6930, 0.0
        %v6998 = vsel %vm6896, %v6934, 0.0
        %v6999 = vmul.f32 %v6450, %v6935
        %v7000 = vmul.f32 %v6452, %v6936
        %v7001 = vmul.f32 %v6643, %v6937
        %v7002 = vmul.f32 %v6645, %v6938
        %v7003 = vmul.f32 %v6454, %v6939
        %v7004 = vmul.f32 %v6456, %v6940
        %v7005 = vmul.f32 %v6647, %v6941
        %v7006 = vmul.f32 %v6649, %v6942
        %v7007 = vmul.f32 %v6460, %v6943
        %v7008 = vmul.f32 %v6462, %v6944
        %v7009 = vmul.f32 %v6653, %v6945
        %v7010 = vmul.f32 %v6655, %v6946
        %v7011 = vmul.f32 %v6464, %v6947
        %v7012 = vmul.f32 %v6466, %v6948
        %v7013 = vmul.f32 %v6657, %v6949
        %v7014 = vmul.f32 %v6659, %v6950
        %v7015 = vmul.f32 %v6470, %v6951
        %v7016 = vmul.f32 %v6472, %v6952
        %v7017 = vmul.f32 %v6663, %v6953
        %v7018 = vmul.f32 %v6665, %v6954
        %v7019 = vmul.f32 %v6474, %v6955
        %v7020 = vmul.f32 %v6476, %v6956
        %v7021 = vmul.f32 %v6667, %v6957
        %v7022 = vmul.f32 %v6669, %v6958
        %v7023 = vmul.f32 %v6480, %v6959
        %v7024 = vmul.f32 %v6482, %v6960
        %v7025 = vmul.f32 %v6673, %v6961
        %v7026 = vmul.f32 %v6675, %v6962
        %v7027 = vmul.f32 %v6484, %v6963
        %v7028 = vmul.f32 %v6486, %v6964
        %v7029 = vmul.f32 %v6677, %v6965
        %v7030 = vmul.f32 %v6679, %v6966
        %v7031 = vmul.f32 %v6490, %v6967
        %v7032 = vmul.f32 %v6492, %v6968
        %v7033 = vmul.f32 %v6683, %v6969
        %v7034 = vmul.f32 %v6685, %v6970
        %v7035 = vmul.f32 %v6494, %v6971
        %v7036 = vmul.f32 %v6496, %v6972
        %v7037 = vmul.f32 %v6687, %v6973
        %v7038 = vmul.f32 %v6689, %v6974
        %v7039 = vmul.f32 %v6500, %v6975
        %v7040 = vmul.f32 %v6502, %v6976
        %v7041 = vmul.f32 %v6693, %v6977
        %v7042 = vmul.f32 %v6695, %v6978
        %v7043 = vmul.f32 %v6504, %v6979
        %v7044 = vmul.f32 %v6506, %v6980
        %v7045 = vmul.f32 %v6697, %v6981
        %v7046 = vmul.f32 %v6699, %v6982
        %v7047 = vmul.f32 %v6510, %v6983
        %v7048 = vmul.f32 %v6512, %v6984
        %v7049 = vmul.f32 %v6703, %v6985
        %v7050 = vmul.f32 %v6705, %v6986
        %v7051 = vmul.f32 %v6514, %v6987
        %v7052 = vmul.f32 %v6516, %v6988
        %v7053 = vmul.f32 %v6707, %v6989
        %v7054 = vmul.f32 %v6709, %v6990
        %v7055 = vmul.f32 %v6520, %v6991
        %v7056 = vmul.f32 %v6522, %v6992
        %v7057 = vmul.f32 %v6713, %v6993
        %v7058 = vmul.f32 %v6715, %v6994
        %v7059 = vmul.f32 %v6524, %v6995
        %v7060 = vmul.f32 %v6526, %v6996
        %v7061 = vmul.f32 %v6717, %v6997
        %v7062 = vmul.f32 %v6719, %v6998
        %v7063 = vadd.f32 %v6999, %v7003
        %v7064 = vadd.f32 %v7063, %v7007
        %v7065 = vadd.f32 %v7064, %v7011
        %v7066 = vadd.f32 %v7065, %v7015
        %v7067 = vadd.f32 %v7066, %v7019
        %v7068 = vadd.f32 %v7067, %v7023
        %v7069 = vadd.f32 %v7068, %v7027
        %v7070 = vadd.f32 %v7069, %v7031
        %v7071 = vadd.f32 %v7070, %v7035
        %v7072 = vadd.f32 %v7071, %v7039
        %v7073 = vadd.f32 %v7072, %v7043
        %v7074 = vadd.f32 %v7073, %v7047
        %v7075 = vadd.f32 %v7074, %v7051
        %v7076 = vadd.f32 %v7075, %v7055
        %v7077 = vadd.f32 %v7076, %v7059
        %v7078 = vrot.slane %v7077, 4
        %v7079 = vadd.f32 %v7077, %v7078
        %v7080 = vrot.slane %v7079, 2
        %v7081 = vadd.f32 %v7079, %v7080
        %v7082 = vrot.slane %v7081, 1
        %v7083 = vadd.f32 %v7081, %v7082
        %v7084 = vadd.f32 %v7000, %v7004
        %v7085 = vadd.f32 %v7084, %v7008
        %v7086 = vadd.f32 %v7085, %v7012
        %v7087 = vadd.f32 %v7086, %v7016
        %v7088 = vadd.f32 %v7087, %v7020
        %v7089 = vadd.f32 %v7088, %v7024
        %v7090 = vadd.f32 %v7089, %v7028
        %v7091 = vadd.f32 %v7090, %v7032
        %v7092 = vadd.f32 %v7091, %v7036
        %v7093 = vadd.f32 %v7092, %v7040
        %v7094 = vadd.f32 %v7093, %v7044
        %v7095 = vadd.f32 %v7094, %v7048
        %v7096 = vadd.f32 %v7095, %v7052
        %v7097 = vadd.f32 %v7096, %v7056
        %v7098 = vadd.f32 %v7097, %v7060
        %v7099 = vrot.slane %v7098, 4
        %v7100 = vadd.f32 %v7098, %v7099
        %v7101 = vrot.slane %v7100, 2
        %v7102 = vadd.f32 %v7100, %v7101
        %v7103 = vrot.slane %v7102, 1
        %v7104 = vadd.f32 %v7102, %v7103
        %v7105 = vadd.f32 %v7001, %v7005
        %v7106 = vadd.f32 %v7105, %v7009
        %v7107 = vadd.f32 %v7106, %v7013
        %v7108 = vadd.f32 %v7107, %v7017
        %v7109 = vadd.f32 %v7108, %v7021
        %v7110 = vadd.f32 %v7109, %v7025
        %v7111 = vadd.f32 %v7110, %v7029
        %v7112 = vadd.f32 %v7111, %v7033
        %v7113 = vadd.f32 %v7112, %v7037
        %v7114 = vadd.f32 %v7113, %v7041
        %v7115 = vadd.f32 %v7114, %v7045
        %v7116 = vadd.f32 %v7115, %v7049
        %v7117 = vadd.f32 %v7116, %v7053
        %v7118 = vadd.f32 %v7117, %v7057
        %v7119 = vadd.f32 %v7118, %v7061
        %v7120 = vrot.slane %v7119, 4
        %v7121 = vadd.f32 %v7119, %v7120
        %v7122 = vrot.slane %v7121, 2
        %v7123 = vadd.f32 %v7121, %v7122
        %v7124 = vrot.slane %v7123, 1
        %v7125 = vadd.f32 %v7123, %v7124
        %v7126 = vadd.f32 %v7002, %v7006
        %v7127 = vadd.f32 %v7126, %v7010
        %v7128 = vadd.f32 %v7127, %v7014
        %v7129 = vadd.f32 %v7128, %v7018
        %v7130 = vadd.f32 %v7129, %v7022
        %v7131 = vadd.f32 %v7130, %v7026
        %v7132 = vadd.f32 %v7131, %v7030
        %v7133 = vadd.f32 %v7132, %v7034
        %v7134 = vadd.f32 %v7133, %v7038
        %v7135 = vadd.f32 %v7134, %v7042
        %v7136 = vadd.f32 %v7135, %v7046
        %v7137 = vadd.f32 %v7136, %v7050
        %v7138 = vadd.f32 %v7137, %v7054
        %v7139 = vadd.f32 %v7138, %v7058
        %v7140 = vadd.f32 %v7139, %v7062
        %v7141 = vrot.slane %v7140, 4
        %v7142 = vadd.f32 %v7140, %v7141
        %v7143 = vrot.slane %v7142, 2
        %v7144 = vadd.f32 %v7142, %v7143
        %v7145 = vrot.slane %v7144, 1
        %v7146 = vadd.f32 %v7144, %v7145
        %v7147 = vadd.f32 %v6177, %v7083
        %v7148 = vadd.f32 %v6178, %v7104
        %v7149 = vadd.f32 %v6179, %v7125
        %v7150 = vadd.f32 %v6180, %v7146
        %v7151 = vmul.f32 %v6530, %v6935
        %v7152 = vmul.f32 %v6532, %v6936
        %v7153 = vmul.f32 %v6723, %v6937
        %v7154 = vmul.f32 %v6725, %v6938
        %v7155 = vmul.f32 %v6534, %v6939
        %v7156 = vmul.f32 %v6536, %v6940
        %v7157 = vmul.f32 %v6727, %v6941
        %v7158 = vmul.f32 %v6729, %v6942
        %v7159 = vmul.f32 %v6540, %v6943
        %v7160 = vmul.f32 %v6542, %v6944
        %v7161 = vmul.f32 %v6733, %v6945
        %v7162 = vmul.f32 %v6735, %v6946
        %v7163 = vmul.f32 %v6544, %v6947
        %v7164 = vmul.f32 %v6546, %v6948
        %v7165 = vmul.f32 %v6737, %v6949
        %v7166 = vmul.f32 %v6739, %v6950
        %v7167 = vmul.f32 %v6550, %v6951
        %v7168 = vmul.f32 %v6552, %v6952
        %v7169 = vmul.f32 %v6743, %v6953
        %v7170 = vmul.f32 %v6745, %v6954
        %v7171 = vmul.f32 %v6554, %v6955
        %v7172 = vmul.f32 %v6556, %v6956
        %v7173 = vmul.f32 %v6747, %v6957
        %v7174 = vmul.f32 %v6749, %v6958
        %v7175 = vmul.f32 %v6560, %v6959
        %v7176 = vmul.f32 %v6562, %v6960
        %v7177 = vmul.f32 %v6753, %v6961
        %v7178 = vmul.f32 %v6755, %v6962
        %v7179 = vmul.f32 %v6564, %v6963
        %v7180 = vmul.f32 %v6566, %v6964
        %v7181 = vmul.f32 %v6757, %v6965
        %v7182 = vmul.f32 %v6759, %v6966
        %v7183 = vmul.f32 %v6570, %v6967
        %v7184 = vmul.f32 %v6572, %v6968
        %v7185 = vmul.f32 %v6763, %v6969
        %v7186 = vmul.f32 %v6765, %v6970
        %v7187 = vmul.f32 %v6574, %v6971
        %v7188 = vmul.f32 %v6576, %v6972
        %v7189 = vmul.f32 %v6767, %v6973
        %v7190 = vmul.f32 %v6769, %v6974
        %v7191 = vmul.f32 %v6580, %v6975
        %v7192 = vmul.f32 %v6582, %v6976
        %v7193 = vmul.f32 %v6773, %v6977
        %v7194 = vmul.f32 %v6775, %v6978
        %v7195 = vmul.f32 %v6584, %v6979
        %v7196 = vmul.f32 %v6586, %v6980
        %v7197 = vmul.f32 %v6777, %v6981
        %v7198 = vmul.f32 %v6779, %v6982
        %v7199 = vmul.f32 %v6590, %v6983
        %v7200 = vmul.f32 %v6592, %v6984
        %v7201 = vmul.f32 %v6783, %v6985
        %v7202 = vmul.f32 %v6785, %v6986
        %v7203 = vmul.f32 %v6594, %v6987
        %v7204 = vmul.f32 %v6596, %v6988
        %v7205 = vmul.f32 %v6787, %v6989
        %v7206 = vmul.f32 %v6789, %v6990
        %v7207 = vmul.f32 %v6600, %v6991
        %v7208 = vmul.f32 %v6602, %v6992
        %v7209 = vmul.f32 %v6793, %v6993
        %v7210 = vmul.f32 %v6795, %v6994
        %v7211 = vmul.f32 %v6604, %v6995
        %v7212 = vmul.f32 %v6606, %v6996
        %v7213 = vmul.f32 %v6797, %v6997
        %v7214 = vmul.f32 %v6799, %v6998
        %v7215 = vadd.f32 %v7151, %v7155
        %v7216 = vadd.f32 %v7215, %v7159
        %v7217 = vadd.f32 %v7216, %v7163
        %v7218 = vadd.f32 %v7217, %v7167
        %v7219 = vadd.f32 %v7218, %v7171
        %v7220 = vadd.f32 %v7219, %v7175
        %v7221 = vadd.f32 %v7220, %v7179
        %v7222 = vadd.f32 %v7221, %v7183
        %v7223 = vadd.f32 %v7222, %v7187
        %v7224 = vadd.f32 %v7223, %v7191
        %v7225 = vadd.f32 %v7224, %v7195
        %v7226 = vadd.f32 %v7225, %v7199
        %v7227 = vadd.f32 %v7226, %v7203
        %v7228 = vadd.f32 %v7227, %v7207
        %v7229 = vadd.f32 %v7228, %v7211
        %v7230 = vrot.slane %v7229, 4
        %v7231 = vadd.f32 %v7229, %v7230
        %v7232 = vrot.slane %v7231, 2
        %v7233 = vadd.f32 %v7231, %v7232
        %v7234 = vrot.slane %v7233, 1
        %v7235 = vadd.f32 %v7233, %v7234
        %v7236 = vadd.f32 %v7152, %v7156
        %v7237 = vadd.f32 %v7236, %v7160
        %v7238 = vadd.f32 %v7237, %v7164
        %v7239 = vadd.f32 %v7238, %v7168
        %v7240 = vadd.f32 %v7239, %v7172
        %v7241 = vadd.f32 %v7240, %v7176
        %v7242 = vadd.f32 %v7241, %v7180
        %v7243 = vadd.f32 %v7242, %v7184
        %v7244 = vadd.f32 %v7243, %v7188
        %v7245 = vadd.f32 %v7244, %v7192
        %v7246 = vadd.f32 %v7245, %v7196
        %v7247 = vadd.f32 %v7246, %v7200
        %v7248 = vadd.f32 %v7247, %v7204
        %v7249 = vadd.f32 %v7248, %v7208
        %v7250 = vadd.f32 %v7249, %v7212
        %v7251 = vrot.slane %v7250, 4
        %v7252 = vadd.f32 %v7250, %v7251
        %v7253 = vrot.slane %v7252, 2
        %v7254 = vadd.f32 %v7252, %v7253
        %v7255 = vrot.slane %v7254, 1
        %v7256 = vadd.f32 %v7254, %v7255
        %v7257 = vadd.f32 %v7153, %v7157
        %v7258 = vadd.f32 %v7257, %v7161
        %v7259 = vadd.f32 %v7258, %v7165
        %v7260 = vadd.f32 %v7259, %v7169
        %v7261 = vadd.f32 %v7260, %v7173
        %v7262 = vadd.f32 %v7261, %v7177
        %v7263 = vadd.f32 %v7262, %v7181
        %v7264 = vadd.f32 %v7263, %v7185
        %v7265 = vadd.f32 %v7264, %v7189
        %v7266 = vadd.f32 %v7265, %v7193
        %v7267 = vadd.f32 %v7266, %v7197
        %v7268 = vadd.f32 %v7267, %v7201
        %v7269 = vadd.f32 %v7268, %v7205
        %v7270 = vadd.f32 %v7269, %v7209
        %v7271 = vadd.f32 %v7270, %v7213
        %v7272 = vrot.slane %v7271, 4
        %v7273 = vadd.f32 %v7271, %v7272
        %v7274 = vrot.slane %v7273, 2
        %v7275 = vadd.f32 %v7273, %v7274
        %v7276 = vrot.slane %v7275, 1
        %v7277 = vadd.f32 %v7275, %v7276
        %v7278 = vadd.f32 %v7154, %v7158
        %v7279 = vadd.f32 %v7278, %v7162
        %v7280 = vadd.f32 %v7279, %v7166
        %v7281 = vadd.f32 %v7280, %v7170
        %v7282 = vadd.f32 %v7281, %v7174
        %v7283 = vadd.f32 %v7282, %v7178
        %v7284 = vadd.f32 %v7283, %v7182
        %v7285 = vadd.f32 %v7284, %v7186
        %v7286 = vadd.f32 %v7285, %v7190
        %v7287 = vadd.f32 %v7286, %v7194
        %v7288 = vadd.f32 %v7287, %v7198
        %v7289 = vadd.f32 %v7288, %v7202
        %v7290 = vadd.f32 %v7289, %v7206
        %v7291 = vadd.f32 %v7290, %v7210
        %v7292 = vadd.f32 %v7291, %v7214
        %v7293 = vrot.slane %v7292, 4
        %v7294 = vadd.f32 %v7292, %v7293
        %v7295 = vrot.slane %v7294, 2
        %v7296 = vadd.f32 %v7294, %v7295
        %v7297 = vrot.slane %v7296, 1
        %v7298 = vadd.f32 %v7296, %v7297
        %v7299 = vadd.f32 %v6329, %v7235
        %v7300 = vadd.f32 %v6330, %v7256
        %v7301 = vadd.f32 %v6331, %v7277
        %v7302 = vadd.f32 %v6332, %v7298
        %v7303 = vmul.f32 %v3399, %v4376
        %v7304 = vmul.f32 %v3400, %v4378
        %v7305 = vadd.s32 %v3401, %v4386
        %v7306 = vadd.s32 %v3402, %v4388
        %v7307 = vxor.u32 %v3403, %v4394
        %v7308 = vxor.u32 %v3404, %v4396
        %v7309 = vand.u32 %v7307, %v325
        %v7310 = vand.u32 %v7308, %v325
        %v7311 = vmul.u32 %v328, %v7305
        %v7312 = vmul.u32 %v328, %v7306
        %v7313 = vmul.u32 %v332, %v7309
        %v7314 = vmul.u32 %v332, %v7310
        %v7315 = vadd.s32 %v7311, %v7313
        %v7316 = vadd.s32 %v7312, %v7314
        %vm7317 = vcmp.gt.s32.totalorder %v7315, 0
        %v7318 = vsel %vm7317, %v7315, 0
        %vm7319 = vcmp.gt.s32.totalorder %v7316, 0
        %v7320 = vsel %vm7319, %v7316, 0
        %vm7321 = vcmp.lt.s32.totalorder %v325, %v7318
        %v7322 = vsel %vm7321, %v325, %v7318
        %vm7323 = vcmp.lt.s32.totalorder %v325, %v7320
        %v7324 = vsel %vm7323, %v325, %v7320
        %v7325 = vshrl.u32 %v7322, 7
        %v7326 = vshrl.u32 %v7324, 7
        %v7327 = vand.u32 %v7322, 127
        %v7328 = vand.u32 %v7324, 127
        %v7329 = vlaneseq
        %v7330 = vshrl.u32 %v7329, 7
        %v7331 = vsub.s32 0, %v7330
        %v7332 = vrot.slane %v7325, %v7331
        %v7333 = vlaneseq
        %v7334 = vshrl.u32 %v7333, 7
        %v7335 = vsub.s32 4, %v7334
        %v7336 = vrot.slane %v7325, %v7335
        %v7337 = vlaneseq
        %v7338 = vshrl.u32 %v7337, 7
        %v7339 = vsub.s32 0, %v7338
        %v7340 = vrot.slane %v7326, %v7339
        %v7341 = vlaneseq
        %v7342 = vshrl.u32 %v7341, 7
        %v7343 = vsub.s32 4, %v7342
        %v7344 = vrot.slane %v7326, %v7343
        %v7345 = vlaneseq
        %v7346 = vshrl.u32 %v7345, 7
        %v7347 = vsub.s32 0, %v7346
        %v7348 = vrot.slane %v7332, %v7347
        %v7349 = vlaneseq
        %v7350 = vshrl.u32 %v7349, 7
        %v7351 = vsub.s32 0, %v7350
        %v7352 = vrot.slane %v7336, %v7351
        %v7353 = vlaneseq
        %v7354 = vshrl.u32 %v7353, 7
        %v7355 = vsub.s32 0, %v7354
        %v7356 = vrot.slane %v7340, %v7355
        %v7357 = vlaneseq
        %v7358 = vshrl.u32 %v7357, 7
        %v7359 = vsub.s32 0, %v7358
        %v7360 = vrot.slane %v7344, %v7359
        %vm7361 = vcmp.eq.s32.totalorder %v254, %v7348
        %vm7362 = vcmp.eq.s32.totalorder %v254, %v7352
        %vm7363 = vcmp.eq.s32.totalorder %v254, %v7356
        %vm7364 = vcmp.eq.s32.totalorder %v254, %v7360
        %v7365 = vsel %vm7361, 1.0, 0.0
        %v7366 = vsel %vm7362, 1.0, 0.0
        %v7367 = vsel %vm7363, 1.0, 0.0
        %v7368 = vsel %vm7364, 1.0, 0.0
        %v7369 = vpack.c.bf16 %v7365, %v7365
        %v7370 = vpack.c.bf16 %v7366, %v7366
        %v7371 = vpack.c.bf16 %v7367, %v7367
        %v7372 = vpack.c.bf16 %v7368, %v7368
        %v7374 = vsel %vm522, %v7369, 0
        %v7377 = vsel %vm522, %v7370, 0
        %v7380 = vsel %vm522, %v7371, 0
        %v7383 = vsel %vm522, %v7372, 0
        %7385 = vmatprep.subr.bf16.mxu0 %v7377
        %7386 = vmatpush1.bf16.msra.mxu0 %v7374
        %7387 = vmatprep.subr.bf16.mxu0 0
        %7388 = vmatpush1.bf16.msra.mxu0 0
        %7389 = vmatprep.subr.bf16.mxu0 0
        %7390 = vmatpush1.bf16.msra.mxu0 0
        %7391 = vmatprep.subr.bf16.mxu0 0
        %7392 = vmatpush1.bf16.msra.mxu0 0
        %7393 = vmatprep.subr.bf16.mxu0 0
        %7394 = vmatpush1.bf16.msra.mxu0 0
        %7395 = vmatprep.subr.bf16.mxu0 0
        %7396 = vmatpush1.bf16.msra.mxu0 0
        %7397 = vmatprep.subr.bf16.mxu0 0
        %7398 = vmatpush1.bf16.msra.mxu0 0
        %7399 = vmatprep.subr.bf16.mxu0 0
        %7400 = vmatpush1.bf16.msra.mxu0 0
        %7401 = vmatprep.subr.bf16.mxu0 0
        %7402 = vmatpush1.bf16.msra.mxu0 0
        %7403 = vmatprep.subr.bf16.mxu0 0
        %7404 = vmatpush1.bf16.msra.mxu0 0
        %7405 = vmatprep.subr.bf16.mxu0 0
        %7406 = vmatpush1.bf16.msra.mxu0 0
        %7407 = vmatprep.subr.bf16.mxu0 0
        %7408 = vmatpush1.bf16.msra.mxu0 0
        %7409 = vmatprep.subr.bf16.mxu0 0
        %7410 = vmatpush1.bf16.msra.mxu0 0
        %7411 = vmatprep.subr.bf16.mxu0 0
        %7412 = vmatpush1.bf16.msra.mxu0 0
        %7413 = vmatprep.subr.bf16.mxu0 0
        %7414 = vmatpush1.bf16.msra.mxu0 0
        %7415 = vmatprep.subr.bf16.mxu0 0
        %7416 = vmatpush1.bf16.msra.mxu0 0
        %7417 = vmatprep.mubr.bf16.mxu0 0
        %7418 = vmatmul.mubr.bf16.gmra.mrb[0].mxu0 %v475
        %v7419 = vpop.f32.mrb[0].mxu0
        %v7420 = vadd.f32 0.0, %v7419
        %v7421 = vpop.f32.mrb[0].mxu0
        %v7422 = vadd.f32 0.0, %v7421
        %v7423 = vpop.f32.mrb[0].mxu0
        %v7424 = vadd.f32 0.0, %v7423
        %v7425 = vpop.f32.mrb[0].mxu0
        %v7426 = vadd.f32 0.0, %v7425
        %7427 = vmatprep.mubr.bf16.mxu0 0
        %7428 = vmatmul.mubr.bf16.gmra.mrb[0].mxu0 %v478
        %v7429 = vpop.f32.mrb[0].mxu0
        %v7430 = vadd.f32 0.0, %v7429
        %v7431 = vpop.f32.mrb[0].mxu0
        %v7432 = vadd.f32 0.0, %v7431
        %v7433 = vpop.f32.mrb[0].mxu0
        %v7434 = vadd.f32 0.0, %v7433
        %v7435 = vpop.f32.mrb[0].mxu0
        %v7436 = vadd.f32 0.0, %v7435
        %7437 = vmatprep.mubr.bf16.mxu0 0
        %7438 = vmatmul.mubr.bf16.gmra.mrb[0].mxu0 %v481
        %v7439 = vpop.f32.mrb[0].mxu0
        %v7440 = vadd.f32 0.0, %v7439
        %v7441 = vpop.f32.mrb[0].mxu0
        %v7442 = vadd.f32 0.0, %v7441
        %v7443 = vpop.f32.mrb[0].mxu0
        %v7444 = vadd.f32 0.0, %v7443
        %v7445 = vpop.f32.mrb[0].mxu0
        %v7446 = vadd.f32 0.0, %v7445
        %7447 = vmatprep.mubr.bf16.mxu0 0
        %7448 = vmatmul.mubr.bf16.gmra.mrb[0].mxu0 %v484
        %v7449 = vpop.f32.mrb[0].mxu0
        %v7450 = vadd.f32 0.0, %v7449
        %v7451 = vpop.f32.mrb[0].mxu0
        %v7452 = vadd.f32 0.0, %v7451
        %v7453 = vpop.f32.mrb[0].mxu0
        %v7454 = vadd.f32 0.0, %v7453
        %v7455 = vpop.f32.mrb[0].mxu0
        %v7456 = vadd.f32 0.0, %v7455
        %7457 = vmatprep.mubr.bf16.mxu0 0
        %7458 = vmatmul.mubr.bf16.gmra.mrb[0].mxu0 %v487
        %v7459 = vpop.f32.mrb[0].mxu0
        %v7460 = vadd.f32 0.0, %v7459
        %v7461 = vpop.f32.mrb[0].mxu0
        %v7462 = vadd.f32 0.0, %v7461
        %v7463 = vpop.f32.mrb[0].mxu0
        %v7464 = vadd.f32 0.0, %v7463
        %v7465 = vpop.f32.mrb[0].mxu0
        %v7466 = vadd.f32 0.0, %v7465
        %7467 = vmatprep.mubr.bf16.mxu0 0
        %7468 = vmatmul.mubr.bf16.gmra.mrb[0].mxu0 %v490
        %v7469 = vpop.f32.mrb[0].mxu0
        %v7470 = vadd.f32 0.0, %v7469
        %v7471 = vpop.f32.mrb[0].mxu0
        %v7472 = vadd.f32 0.0, %v7471
        %v7473 = vpop.f32.mrb[0].mxu0
        %v7474 = vadd.f32 0.0, %v7473
        %v7475 = vpop.f32.mrb[0].mxu0
        %v7476 = vadd.f32 0.0, %v7475
        %7477 = vmatprep.mubr.bf16.mxu0 0
        %7478 = vmatmul.mubr.bf16.gmra.mrb[0].mxu0 %v493
        %v7479 = vpop.f32.mrb[0].mxu0
        %v7480 = vadd.f32 0.0, %v7479
        %v7481 = vpop.f32.mrb[0].mxu0
        %v7482 = vadd.f32 0.0, %v7481
        %v7483 = vpop.f32.mrb[0].mxu0
        %v7484 = vadd.f32 0.0, %v7483
        %v7485 = vpop.f32.mrb[0].mxu0
        %v7486 = vadd.f32 0.0, %v7485
        %7487 = vmatprep.mubr.bf16.mxu0 0
        %7488 = vmatmul.mubr.bf16.gmra.mrb[0].mxu0 %v496
        %v7489 = vpop.f32.mrb[0].mxu0
        %v7490 = vadd.f32 0.0, %v7489
        %v7491 = vpop.f32.mrb[0].mxu0
        %v7492 = vadd.f32 0.0, %v7491
        %v7493 = vpop.f32.mrb[0].mxu0
        %v7494 = vadd.f32 0.0, %v7493
        %v7495 = vpop.f32.mrb[0].mxu0
        %v7496 = vadd.f32 0.0, %v7495
        %7497 = vmatprep.mubr.bf16.mxu0 0
        %7498 = vmatmul.mubr.bf16.gmra.mrb[0].mxu0 %v499
        %v7499 = vpop.f32.mrb[0].mxu0
        %v7500 = vadd.f32 0.0, %v7499
        %v7501 = vpop.f32.mrb[0].mxu0
        %v7502 = vadd.f32 0.0, %v7501
        %v7503 = vpop.f32.mrb[0].mxu0
        %v7504 = vadd.f32 0.0, %v7503
        %v7505 = vpop.f32.mrb[0].mxu0
        %v7506 = vadd.f32 0.0, %v7505
        %7507 = vmatprep.mubr.bf16.mxu0 0
        %7508 = vmatmul.mubr.bf16.gmra.mrb[0].mxu0 %v502
        %v7509 = vpop.f32.mrb[0].mxu0
        %v7510 = vadd.f32 0.0, %v7509
        %v7511 = vpop.f32.mrb[0].mxu0
        %v7512 = vadd.f32 0.0, %v7511
        %v7513 = vpop.f32.mrb[0].mxu0
        %v7514 = vadd.f32 0.0, %v7513
        %v7515 = vpop.f32.mrb[0].mxu0
        %v7516 = vadd.f32 0.0, %v7515
        %7517 = vmatprep.mubr.bf16.mxu0 0
        %7518 = vmatmul.mubr.bf16.gmra.mrb[0].mxu0 %v505
        %v7519 = vpop.f32.mrb[0].mxu0
        %v7520 = vadd.f32 0.0, %v7519
        %v7521 = vpop.f32.mrb[0].mxu0
        %v7522 = vadd.f32 0.0, %v7521
        %v7523 = vpop.f32.mrb[0].mxu0
        %v7524 = vadd.f32 0.0, %v7523
        %v7525 = vpop.f32.mrb[0].mxu0
        %v7526 = vadd.f32 0.0, %v7525
        %7527 = vmatprep.mubr.bf16.mxu0 0
        %7528 = vmatmul.mubr.bf16.gmra.mrb[0].mxu0 %v508
        %v7529 = vpop.f32.mrb[0].mxu0
        %v7530 = vadd.f32 0.0, %v7529
        %v7531 = vpop.f32.mrb[0].mxu0
        %v7532 = vadd.f32 0.0, %v7531
        %v7533 = vpop.f32.mrb[0].mxu0
        %v7534 = vadd.f32 0.0, %v7533
        %v7535 = vpop.f32.mrb[0].mxu0
        %v7536 = vadd.f32 0.0, %v7535
        %7537 = vmatprep.mubr.bf16.mxu0 0
        %7538 = vmatmul.mubr.bf16.gmra.mrb[0].mxu0 %v511
        %v7539 = vpop.f32.mrb[0].mxu0
        %v7540 = vadd.f32 0.0, %v7539
        %v7541 = vpop.f32.mrb[0].mxu0
        %v7542 = vadd.f32 0.0, %v7541
        %v7543 = vpop.f32.mrb[0].mxu0
        %v7544 = vadd.f32 0.0, %v7543
        %v7545 = vpop.f32.mrb[0].mxu0
        %v7546 = vadd.f32 0.0, %v7545
        %7547 = vmatprep.mubr.bf16.mxu0 0
        %7548 = vmatmul.mubr.bf16.gmra.mrb[0].mxu0 %v514
        %v7549 = vpop.f32.mrb[0].mxu0
        %v7550 = vadd.f32 0.0, %v7549
        %v7551 = vpop.f32.mrb[0].mxu0
        %v7552 = vadd.f32 0.0, %v7551
        %v7553 = vpop.f32.mrb[0].mxu0
        %v7554 = vadd.f32 0.0, %v7553
        %v7555 = vpop.f32.mrb[0].mxu0
        %v7556 = vadd.f32 0.0, %v7555
        %7557 = vmatprep.mubr.bf16.mxu0 0
        %7558 = vmatmul.mubr.bf16.gmra.mrb[0].mxu0 %v517
        %v7559 = vpop.f32.mrb[0].mxu0
        %v7560 = vadd.f32 0.0, %v7559
        %v7561 = vpop.f32.mrb[0].mxu0
        %v7562 = vadd.f32 0.0, %v7561
        %v7563 = vpop.f32.mrb[0].mxu0
        %v7564 = vadd.f32 0.0, %v7563
        %v7565 = vpop.f32.mrb[0].mxu0
        %v7566 = vadd.f32 0.0, %v7565
        %7567 = vmatprep.mubr.bf16.mxu0 0
        %7568 = vmatmul.mubr.bf16.gmra.mrb[0].mxu0 %v520
        %v7569 = vpop.f32.mrb[0].mxu0
        %v7570 = vadd.f32 0.0, %v7569
        %v7571 = vpop.f32.mrb[0].mxu0
        %v7572 = vadd.f32 0.0, %v7571
        %v7573 = vpop.f32.mrb[0].mxu0
        %v7574 = vadd.f32 0.0, %v7573
        %v7575 = vpop.f32.mrb[0].mxu0
        %v7576 = vadd.f32 0.0, %v7575
        %7577 = vdwg.mxu0
        %7578 = vmatprep.subr.bf16.mxu0 %v7383
        %7579 = vmatpush1.bf16.msra.mxu0 %v7380
        %7580 = vmatprep.subr.bf16.mxu0 0
        %7581 = vmatpush1.bf16.msra.mxu0 0
        %7582 = vmatprep.subr.bf16.mxu0 0
        %7583 = vmatpush1.bf16.msra.mxu0 0
        %7584 = vmatprep.subr.bf16.mxu0 0
        %7585 = vmatpush1.bf16.msra.mxu0 0
        %7586 = vmatprep.subr.bf16.mxu0 0
        %7587 = vmatpush1.bf16.msra.mxu0 0
        %7588 = vmatprep.subr.bf16.mxu0 0
        %7589 = vmatpush1.bf16.msra.mxu0 0
        %7590 = vmatprep.subr.bf16.mxu0 0
        %7591 = vmatpush1.bf16.msra.mxu0 0
        %7592 = vmatprep.subr.bf16.mxu0 0
        %7593 = vmatpush1.bf16.msra.mxu0 0
        %7594 = vmatprep.subr.bf16.mxu0 0
        %7595 = vmatpush1.bf16.msra.mxu0 0
        %7596 = vmatprep.subr.bf16.mxu0 0
        %7597 = vmatpush1.bf16.msra.mxu0 0
        %7598 = vmatprep.subr.bf16.mxu0 0
        %7599 = vmatpush1.bf16.msra.mxu0 0
        %7600 = vmatprep.subr.bf16.mxu0 0
        %7601 = vmatpush1.bf16.msra.mxu0 0
        %7602 = vmatprep.subr.bf16.mxu0 0
        %7603 = vmatpush1.bf16.msra.mxu0 0
        %7604 = vmatprep.subr.bf16.mxu0 0
        %7605 = vmatpush1.bf16.msra.mxu0 0
        %7606 = vmatprep.subr.bf16.mxu0 0
        %7607 = vmatpush1.bf16.msra.mxu0 0
        %7608 = vmatprep.subr.bf16.mxu0 0
        %7609 = vmatpush1.bf16.msra.mxu0 0
        %7610 = vmatprep.mubr.bf16.mxu0 0
        %7611 = vmatmul.mubr.bf16.gmra.mrb[0].mxu0 %v475
        %v7612 = vpop.f32.mrb[0].mxu0
        %v7613 = vadd.f32 0.0, %v7612
        %v7614 = vpop.f32.mrb[0].mxu0
        %v7615 = vadd.f32 0.0, %v7614
        %v7616 = vpop.f32.mrb[0].mxu0
        %v7617 = vadd.f32 0.0, %v7616
        %v7618 = vpop.f32.mrb[0].mxu0
        %v7619 = vadd.f32 0.0, %v7618
        %7620 = vmatprep.mubr.bf16.mxu0 0
        %7621 = vmatmul.mubr.bf16.gmra.mrb[0].mxu0 %v478
        %v7622 = vpop.f32.mrb[0].mxu0
        %v7623 = vadd.f32 0.0, %v7622
        %v7624 = vpop.f32.mrb[0].mxu0
        %v7625 = vadd.f32 0.0, %v7624
        %v7626 = vpop.f32.mrb[0].mxu0
        %v7627 = vadd.f32 0.0, %v7626
        %v7628 = vpop.f32.mrb[0].mxu0
        %v7629 = vadd.f32 0.0, %v7628
        %7630 = vmatprep.mubr.bf16.mxu0 0
        %7631 = vmatmul.mubr.bf16.gmra.mrb[0].mxu0 %v481
        %v7632 = vpop.f32.mrb[0].mxu0
        %v7633 = vadd.f32 0.0, %v7632
        %v7634 = vpop.f32.mrb[0].mxu0
        %v7635 = vadd.f32 0.0, %v7634
        %v7636 = vpop.f32.mrb[0].mxu0
        %v7637 = vadd.f32 0.0, %v7636
        %v7638 = vpop.f32.mrb[0].mxu0
        %v7639 = vadd.f32 0.0, %v7638
        %7640 = vmatprep.mubr.bf16.mxu0 0
        %7641 = vmatmul.mubr.bf16.gmra.mrb[0].mxu0 %v484
        %v7642 = vpop.f32.mrb[0].mxu0
        %v7643 = vadd.f32 0.0, %v7642
        %v7644 = vpop.f32.mrb[0].mxu0
        %v7645 = vadd.f32 0.0, %v7644
        %v7646 = vpop.f32.mrb[0].mxu0
        %v7647 = vadd.f32 0.0, %v7646
        %v7648 = vpop.f32.mrb[0].mxu0
        %v7649 = vadd.f32 0.0, %v7648
        %7650 = vmatprep.mubr.bf16.mxu0 0
        %7651 = vmatmul.mubr.bf16.gmra.mrb[0].mxu0 %v487
        %v7652 = vpop.f32.mrb[0].mxu0
        %v7653 = vadd.f32 0.0, %v7652
        %v7654 = vpop.f32.mrb[0].mxu0
        %v7655 = vadd.f32 0.0, %v7654
        %v7656 = vpop.f32.mrb[0].mxu0
        %v7657 = vadd.f32 0.0, %v7656
        %v7658 = vpop.f32.mrb[0].mxu0
        %v7659 = vadd.f32 0.0, %v7658
        %7660 = vmatprep.mubr.bf16.mxu0 0
        %7661 = vmatmul.mubr.bf16.gmra.mrb[0].mxu0 %v490
        %v7662 = vpop.f32.mrb[0].mxu0
        %v7663 = vadd.f32 0.0, %v7662
        %v7664 = vpop.f32.mrb[0].mxu0
        %v7665 = vadd.f32 0.0, %v7664
        %v7666 = vpop.f32.mrb[0].mxu0
        %v7667 = vadd.f32 0.0, %v7666
        %v7668 = vpop.f32.mrb[0].mxu0
        %v7669 = vadd.f32 0.0, %v7668
        %7670 = vmatprep.mubr.bf16.mxu0 0
        %7671 = vmatmul.mubr.bf16.gmra.mrb[0].mxu0 %v493
        %v7672 = vpop.f32.mrb[0].mxu0
        %v7673 = vadd.f32 0.0, %v7672
        %v7674 = vpop.f32.mrb[0].mxu0
        %v7675 = vadd.f32 0.0, %v7674
        %v7676 = vpop.f32.mrb[0].mxu0
        %v7677 = vadd.f32 0.0, %v7676
        %v7678 = vpop.f32.mrb[0].mxu0
        %v7679 = vadd.f32 0.0, %v7678
        %7680 = vmatprep.mubr.bf16.mxu0 0
        %7681 = vmatmul.mubr.bf16.gmra.mrb[0].mxu0 %v496
        %v7682 = vpop.f32.mrb[0].mxu0
        %v7683 = vadd.f32 0.0, %v7682
        %v7684 = vpop.f32.mrb[0].mxu0
        %v7685 = vadd.f32 0.0, %v7684
        %v7686 = vpop.f32.mrb[0].mxu0
        %v7687 = vadd.f32 0.0, %v7686
        %v7688 = vpop.f32.mrb[0].mxu0
        %v7689 = vadd.f32 0.0, %v7688
        %7690 = vmatprep.mubr.bf16.mxu0 0
        %7691 = vmatmul.mubr.bf16.gmra.mrb[0].mxu0 %v499
        %v7692 = vpop.f32.mrb[0].mxu0
        %v7693 = vadd.f32 0.0, %v7692
        %v7694 = vpop.f32.mrb[0].mxu0
        %v7695 = vadd.f32 0.0, %v7694
        %v7696 = vpop.f32.mrb[0].mxu0
        %v7697 = vadd.f32 0.0, %v7696
        %v7698 = vpop.f32.mrb[0].mxu0
        %v7699 = vadd.f32 0.0, %v7698
        %7700 = vmatprep.mubr.bf16.mxu0 0
        %7701 = vmatmul.mubr.bf16.gmra.mrb[0].mxu0 %v502
        %v7702 = vpop.f32.mrb[0].mxu0
        %v7703 = vadd.f32 0.0, %v7702
        %v7704 = vpop.f32.mrb[0].mxu0
        %v7705 = vadd.f32 0.0, %v7704
        %v7706 = vpop.f32.mrb[0].mxu0
        %v7707 = vadd.f32 0.0, %v7706
        %v7708 = vpop.f32.mrb[0].mxu0
        %v7709 = vadd.f32 0.0, %v7708
        %7710 = vmatprep.mubr.bf16.mxu0 0
        %7711 = vmatmul.mubr.bf16.gmra.mrb[0].mxu0 %v505
        %v7712 = vpop.f32.mrb[0].mxu0
        %v7713 = vadd.f32 0.0, %v7712
        %v7714 = vpop.f32.mrb[0].mxu0
        %v7715 = vadd.f32 0.0, %v7714
        %v7716 = vpop.f32.mrb[0].mxu0
        %v7717 = vadd.f32 0.0, %v7716
        %v7718 = vpop.f32.mrb[0].mxu0
        %v7719 = vadd.f32 0.0, %v7718
        %7720 = vmatprep.mubr.bf16.mxu0 0
        %7721 = vmatmul.mubr.bf16.gmra.mrb[0].mxu0 %v508
        %v7722 = vpop.f32.mrb[0].mxu0
        %v7723 = vadd.f32 0.0, %v7722
        %v7724 = vpop.f32.mrb[0].mxu0
        %v7725 = vadd.f32 0.0, %v7724
        %v7726 = vpop.f32.mrb[0].mxu0
        %v7727 = vadd.f32 0.0, %v7726
        %v7728 = vpop.f32.mrb[0].mxu0
        %v7729 = vadd.f32 0.0, %v7728
        %7730 = vmatprep.mubr.bf16.mxu0 0
        %7731 = vmatmul.mubr.bf16.gmra.mrb[0].mxu0 %v511
        %v7732 = vpop.f32.mrb[0].mxu0
        %v7733 = vadd.f32 0.0, %v7732
        %v7734 = vpop.f32.mrb[0].mxu0
        %v7735 = vadd.f32 0.0, %v7734
        %v7736 = vpop.f32.mrb[0].mxu0
        %v7737 = vadd.f32 0.0, %v7736
        %v7738 = vpop.f32.mrb[0].mxu0
        %v7739 = vadd.f32 0.0, %v7738
        %7740 = vmatprep.mubr.bf16.mxu0 0
        %7741 = vmatmul.mubr.bf16.gmra.mrb[0].mxu0 %v514
        %v7742 = vpop.f32.mrb[0].mxu0
        %v7743 = vadd.f32 0.0, %v7742
        %v7744 = vpop.f32.mrb[0].mxu0
        %v7745 = vadd.f32 0.0, %v7744
        %v7746 = vpop.f32.mrb[0].mxu0
        %v7747 = vadd.f32 0.0, %v7746
        %v7748 = vpop.f32.mrb[0].mxu0
        %v7749 = vadd.f32 0.0, %v7748
        %7750 = vmatprep.mubr.bf16.mxu0 0
        %7751 = vmatmul.mubr.bf16.gmra.mrb[0].mxu0 %v517
        %v7752 = vpop.f32.mrb[0].mxu0
        %v7753 = vadd.f32 0.0, %v7752
        %v7754 = vpop.f32.mrb[0].mxu0
        %v7755 = vadd.f32 0.0, %v7754
        %v7756 = vpop.f32.mrb[0].mxu0
        %v7757 = vadd.f32 0.0, %v7756
        %v7758 = vpop.f32.mrb[0].mxu0
        %v7759 = vadd.f32 0.0, %v7758
        %7760 = vmatprep.mubr.bf16.mxu0 0
        %7761 = vmatmul.mubr.bf16.gmra.mrb[0].mxu0 %v520
        %v7762 = vpop.f32.mrb[0].mxu0
        %v7763 = vadd.f32 0.0, %v7762
        %v7764 = vpop.f32.mrb[0].mxu0
        %v7765 = vadd.f32 0.0, %v7764
        %v7766 = vpop.f32.mrb[0].mxu0
        %v7767 = vadd.f32 0.0, %v7766
        %v7768 = vpop.f32.mrb[0].mxu0
        %v7769 = vadd.f32 0.0, %v7768
        %7770 = vdwg.mxu0
        %v7771 = vlaneseq
        %v7772 = vshrl.u32 %v7771, 7
        %v7773 = vsub.s32 0, %v7772
        %v7774 = vrot.slane %v7327, %v7773
        %v7775 = vlaneseq
        %v7776 = vshrl.u32 %v7775, 7
        %v7777 = vsub.s32 4, %v7776
        %v7778 = vrot.slane %v7327, %v7777
        %v7779 = vlaneseq
        %v7780 = vshrl.u32 %v7779, 7
        %v7781 = vsub.s32 0, %v7780
        %v7782 = vrot.slane %v7328, %v7781
        %v7783 = vlaneseq
        %v7784 = vshrl.u32 %v7783, 7
        %v7785 = vsub.s32 4, %v7784
        %v7786 = vrot.slane %v7328, %v7785
        %v7787 = vlaneseq
        %v7788 = vshrl.u32 %v7787, 7
        %v7789 = vsub.s32 0, %v7788
        %v7790 = vrot.slane %v7774, %v7789
        %v7791 = vlaneseq
        %v7792 = vshrl.u32 %v7791, 7
        %v7793 = vsub.s32 0, %v7792
        %v7794 = vrot.slane %v7778, %v7793
        %v7795 = vlaneseq
        %v7796 = vshrl.u32 %v7795, 7
        %v7797 = vsub.s32 0, %v7796
        %v7798 = vrot.slane %v7782, %v7797
        %v7799 = vlaneseq
        %v7800 = vshrl.u32 %v7799, 7
        %v7801 = vsub.s32 0, %v7800
        %v7802 = vrot.slane %v7786, %v7801
        %vm7803 = vcmp.eq.s32.totalorder %v254, %v7790
        %vm7804 = vcmp.eq.s32.totalorder %v254, %v7794
        %vm7805 = vcmp.eq.s32.totalorder %v254, %v7798
        %vm7806 = vcmp.eq.s32.totalorder %v254, %v7802
        %vm7807 = vcmp.eq.s32.totalorder %v255, %v7790
        %vm7808 = vcmp.eq.s32.totalorder %v255, %v7794
        %vm7809 = vcmp.eq.s32.totalorder %v255, %v7798
        %vm7810 = vcmp.eq.s32.totalorder %v255, %v7802
        %vm7811 = vcmp.eq.s32.totalorder %v256, %v7790
        %vm7812 = vcmp.eq.s32.totalorder %v256, %v7794
        %vm7813 = vcmp.eq.s32.totalorder %v256, %v7798
        %vm7814 = vcmp.eq.s32.totalorder %v256, %v7802
        %vm7815 = vcmp.eq.s32.totalorder %v257, %v7790
        %vm7816 = vcmp.eq.s32.totalorder %v257, %v7794
        %vm7817 = vcmp.eq.s32.totalorder %v257, %v7798
        %vm7818 = vcmp.eq.s32.totalorder %v257, %v7802
        %vm7819 = vcmp.eq.s32.totalorder %v258, %v7790
        %vm7820 = vcmp.eq.s32.totalorder %v258, %v7794
        %vm7821 = vcmp.eq.s32.totalorder %v258, %v7798
        %vm7822 = vcmp.eq.s32.totalorder %v258, %v7802
        %vm7823 = vcmp.eq.s32.totalorder %v259, %v7790
        %vm7824 = vcmp.eq.s32.totalorder %v259, %v7794
        %vm7825 = vcmp.eq.s32.totalorder %v259, %v7798
        %vm7826 = vcmp.eq.s32.totalorder %v259, %v7802
        %vm7827 = vcmp.eq.s32.totalorder %v260, %v7790
        %vm7828 = vcmp.eq.s32.totalorder %v260, %v7794
        %vm7829 = vcmp.eq.s32.totalorder %v260, %v7798
        %vm7830 = vcmp.eq.s32.totalorder %v260, %v7802
        %vm7831 = vcmp.eq.s32.totalorder %v261, %v7790
        %vm7832 = vcmp.eq.s32.totalorder %v261, %v7794
        %vm7833 = vcmp.eq.s32.totalorder %v261, %v7798
        %vm7834 = vcmp.eq.s32.totalorder %v261, %v7802
        %vm7835 = vcmp.eq.s32.totalorder %v262, %v7790
        %vm7836 = vcmp.eq.s32.totalorder %v262, %v7794
        %vm7837 = vcmp.eq.s32.totalorder %v262, %v7798
        %vm7838 = vcmp.eq.s32.totalorder %v262, %v7802
        %vm7839 = vcmp.eq.s32.totalorder %v263, %v7790
        %vm7840 = vcmp.eq.s32.totalorder %v263, %v7794
        %vm7841 = vcmp.eq.s32.totalorder %v263, %v7798
        %vm7842 = vcmp.eq.s32.totalorder %v263, %v7802
        %vm7843 = vcmp.eq.s32.totalorder %v264, %v7790
        %vm7844 = vcmp.eq.s32.totalorder %v264, %v7794
        %vm7845 = vcmp.eq.s32.totalorder %v264, %v7798
        %vm7846 = vcmp.eq.s32.totalorder %v264, %v7802
        %vm7847 = vcmp.eq.s32.totalorder %v265, %v7790
        %vm7848 = vcmp.eq.s32.totalorder %v265, %v7794
        %vm7849 = vcmp.eq.s32.totalorder %v265, %v7798
        %vm7850 = vcmp.eq.s32.totalorder %v265, %v7802
        %vm7851 = vcmp.eq.s32.totalorder %v266, %v7790
        %vm7852 = vcmp.eq.s32.totalorder %v266, %v7794
        %vm7853 = vcmp.eq.s32.totalorder %v266, %v7798
        %vm7854 = vcmp.eq.s32.totalorder %v266, %v7802
        %vm7855 = vcmp.eq.s32.totalorder %v267, %v7790
        %vm7856 = vcmp.eq.s32.totalorder %v267, %v7794
        %vm7857 = vcmp.eq.s32.totalorder %v267, %v7798
        %vm7858 = vcmp.eq.s32.totalorder %v267, %v7802
        %vm7859 = vcmp.eq.s32.totalorder %v268, %v7790
        %vm7860 = vcmp.eq.s32.totalorder %v268, %v7794
        %vm7861 = vcmp.eq.s32.totalorder %v268, %v7798
        %vm7862 = vcmp.eq.s32.totalorder %v268, %v7802
        %vm7863 = vcmp.eq.s32.totalorder %v269, %v7790
        %vm7864 = vcmp.eq.s32.totalorder %v269, %v7794
        %vm7865 = vcmp.eq.s32.totalorder %v269, %v7798
        %vm7866 = vcmp.eq.s32.totalorder %v269, %v7802
        %v7869 = vlaneseq
        %v7870 = vshrl.u32 %v7869, 7
        %v7871 = vsub.s32 0, %v7870
        %v7872 = vrot.slane %v7303, %v7871
        %v7873 = vlaneseq
        %v7874 = vshrl.u32 %v7873, 7
        %v7875 = vsub.s32 4, %v7874
        %v7876 = vrot.slane %v7303, %v7875
        %v7877 = vlaneseq
        %v7878 = vshrl.u32 %v7877, 7
        %v7879 = vsub.s32 0, %v7878
        %v7880 = vrot.slane %v7304, %v7879
        %v7881 = vlaneseq
        %v7882 = vshrl.u32 %v7881, 7
        %v7883 = vsub.s32 4, %v7882
        %v7884 = vrot.slane %v7304, %v7883
        %v7889 = vlaneseq
        %v7890 = vshrl.u32 %v7889, 7
        %v7891 = vsub.s32 0, %v7890
        %v7892 = vrot.slane %v7872, %v7891
        %v7893 = vlaneseq
        %v7894 = vshrl.u32 %v7893, 7
        %v7895 = vsub.s32 0, %v7894
        %v7896 = vrot.slane %v7876, %v7895
        %v7897 = vlaneseq
        %v7898 = vshrl.u32 %v7897, 7
        %v7899 = vsub.s32 0, %v7898
        %v7900 = vrot.slane %v7880, %v7899
        %v7901 = vlaneseq
        %v7902 = vshrl.u32 %v7901, 7
        %v7903 = vsub.s32 0, %v7902
        %v7904 = vrot.slane %v7884, %v7903
        %v7905 = vsel %vm7803, %v7892, 0.0
        %v7906 = vsel %vm7804, %v7896, 0.0
        %v7907 = vsel %vm7805, %v7900, 0.0
        %v7908 = vsel %vm7806, %v7904, 0.0
        %v7909 = vsel %vm7807, %v7892, 0.0
        %v7910 = vsel %vm7808, %v7896, 0.0
        %v7911 = vsel %vm7809, %v7900, 0.0
        %v7912 = vsel %vm7810, %v7904, 0.0
        %v7913 = vsel %vm7811, %v7892, 0.0
        %v7914 = vsel %vm7812, %v7896, 0.0
        %v7915 = vsel %vm7813, %v7900, 0.0
        %v7916 = vsel %vm7814, %v7904, 0.0
        %v7917 = vsel %vm7815, %v7892, 0.0
        %v7918 = vsel %vm7816, %v7896, 0.0
        %v7919 = vsel %vm7817, %v7900, 0.0
        %v7920 = vsel %vm7818, %v7904, 0.0
        %v7921 = vsel %vm7819, %v7892, 0.0
        %v7922 = vsel %vm7820, %v7896, 0.0
        %v7923 = vsel %vm7821, %v7900, 0.0
        %v7924 = vsel %vm7822, %v7904, 0.0
        %v7925 = vsel %vm7823, %v7892, 0.0
        %v7926 = vsel %vm7824, %v7896, 0.0
        %v7927 = vsel %vm7825, %v7900, 0.0
        %v7928 = vsel %vm7826, %v7904, 0.0
        %v7929 = vsel %vm7827, %v7892, 0.0
        %v7930 = vsel %vm7828, %v7896, 0.0
        %v7931 = vsel %vm7829, %v7900, 0.0
        %v7932 = vsel %vm7830, %v7904, 0.0
        %v7933 = vsel %vm7831, %v7892, 0.0
        %v7934 = vsel %vm7832, %v7896, 0.0
        %v7935 = vsel %vm7833, %v7900, 0.0
        %v7936 = vsel %vm7834, %v7904, 0.0
        %v7937 = vsel %vm7835, %v7892, 0.0
        %v7938 = vsel %vm7836, %v7896, 0.0
        %v7939 = vsel %vm7837, %v7900, 0.0
        %v7940 = vsel %vm7838, %v7904, 0.0
        %v7941 = vsel %vm7839, %v7892, 0.0
        %v7942 = vsel %vm7840, %v7896, 0.0
        %v7943 = vsel %vm7841, %v7900, 0.0
        %v7944 = vsel %vm7842, %v7904, 0.0
        %v7945 = vsel %vm7843, %v7892, 0.0
        %v7946 = vsel %vm7844, %v7896, 0.0
        %v7947 = vsel %vm7845, %v7900, 0.0
        %v7948 = vsel %vm7846, %v7904, 0.0
        %v7949 = vsel %vm7847, %v7892, 0.0
        %v7950 = vsel %vm7848, %v7896, 0.0
        %v7951 = vsel %vm7849, %v7900, 0.0
        %v7952 = vsel %vm7850, %v7904, 0.0
        %v7953 = vsel %vm7851, %v7892, 0.0
        %v7954 = vsel %vm7852, %v7896, 0.0
        %v7955 = vsel %vm7853, %v7900, 0.0
        %v7956 = vsel %vm7854, %v7904, 0.0
        %v7957 = vsel %vm7855, %v7892, 0.0
        %v7958 = vsel %vm7856, %v7896, 0.0
        %v7959 = vsel %vm7857, %v7900, 0.0
        %v7960 = vsel %vm7858, %v7904, 0.0
        %v7961 = vsel %vm7859, %v7892, 0.0
        %v7962 = vsel %vm7860, %v7896, 0.0
        %v7963 = vsel %vm7861, %v7900, 0.0
        %v7964 = vsel %vm7862, %v7904, 0.0
        %v7965 = vsel %vm7863, %v7892, 0.0
        %v7966 = vsel %vm7864, %v7896, 0.0
        %v7967 = vsel %vm7865, %v7900, 0.0
        %v7968 = vsel %vm7866, %v7904, 0.0
        %v7969 = vmul.f32 %v7420, %v7905
        %v7970 = vmul.f32 %v7422, %v7906
        %v7971 = vmul.f32 %v7613, %v7907
        %v7972 = vmul.f32 %v7615, %v7908
        %v7973 = vmul.f32 %v7424, %v7909
        %v7974 = vmul.f32 %v7426, %v7910
        %v7975 = vmul.f32 %v7617, %v7911
        %v7976 = vmul.f32 %v7619, %v7912
        %v7977 = vmul.f32 %v7430, %v7913
        %v7978 = vmul.f32 %v7432, %v7914
        %v7979 = vmul.f32 %v7623, %v7915
        %v7980 = vmul.f32 %v7625, %v7916
        %v7981 = vmul.f32 %v7434, %v7917
        %v7982 = vmul.f32 %v7436, %v7918
        %v7983 = vmul.f32 %v7627, %v7919
        %v7984 = vmul.f32 %v7629, %v7920
        %v7985 = vmul.f32 %v7440, %v7921
        %v7986 = vmul.f32 %v7442, %v7922
        %v7987 = vmul.f32 %v7633, %v7923
        %v7988 = vmul.f32 %v7635, %v7924
        %v7989 = vmul.f32 %v7444, %v7925
        %v7990 = vmul.f32 %v7446, %v7926
        %v7991 = vmul.f32 %v7637, %v7927
        %v7992 = vmul.f32 %v7639, %v7928
        %v7993 = vmul.f32 %v7450, %v7929
        %v7994 = vmul.f32 %v7452, %v7930
        %v7995 = vmul.f32 %v7643, %v7931
        %v7996 = vmul.f32 %v7645, %v7932
        %v7997 = vmul.f32 %v7454, %v7933
        %v7998 = vmul.f32 %v7456, %v7934
        %v7999 = vmul.f32 %v7647, %v7935
        %v8000 = vmul.f32 %v7649, %v7936
        %v8001 = vmul.f32 %v7460, %v7937
        %v8002 = vmul.f32 %v7462, %v7938
        %v8003 = vmul.f32 %v7653, %v7939
        %v8004 = vmul.f32 %v7655, %v7940
        %v8005 = vmul.f32 %v7464, %v7941
        %v8006 = vmul.f32 %v7466, %v7942
        %v8007 = vmul.f32 %v7657, %v7943
        %v8008 = vmul.f32 %v7659, %v7944
        %v8009 = vmul.f32 %v7470, %v7945
        %v8010 = vmul.f32 %v7472, %v7946
        %v8011 = vmul.f32 %v7663, %v7947
        %v8012 = vmul.f32 %v7665, %v7948
        %v8013 = vmul.f32 %v7474, %v7949
        %v8014 = vmul.f32 %v7476, %v7950
        %v8015 = vmul.f32 %v7667, %v7951
        %v8016 = vmul.f32 %v7669, %v7952
        %v8017 = vmul.f32 %v7480, %v7953
        %v8018 = vmul.f32 %v7482, %v7954
        %v8019 = vmul.f32 %v7673, %v7955
        %v8020 = vmul.f32 %v7675, %v7956
        %v8021 = vmul.f32 %v7484, %v7957
        %v8022 = vmul.f32 %v7486, %v7958
        %v8023 = vmul.f32 %v7677, %v7959
        %v8024 = vmul.f32 %v7679, %v7960
        %v8025 = vmul.f32 %v7490, %v7961
        %v8026 = vmul.f32 %v7492, %v7962
        %v8027 = vmul.f32 %v7683, %v7963
        %v8028 = vmul.f32 %v7685, %v7964
        %v8029 = vmul.f32 %v7494, %v7965
        %v8030 = vmul.f32 %v7496, %v7966
        %v8031 = vmul.f32 %v7687, %v7967
        %v8032 = vmul.f32 %v7689, %v7968
        %v8033 = vadd.f32 %v7969, %v7973
        %v8034 = vadd.f32 %v8033, %v7977
        %v8035 = vadd.f32 %v8034, %v7981
        %v8036 = vadd.f32 %v8035, %v7985
        %v8037 = vadd.f32 %v8036, %v7989
        %v8038 = vadd.f32 %v8037, %v7993
        %v8039 = vadd.f32 %v8038, %v7997
        %v8040 = vadd.f32 %v8039, %v8001
        %v8041 = vadd.f32 %v8040, %v8005
        %v8042 = vadd.f32 %v8041, %v8009
        %v8043 = vadd.f32 %v8042, %v8013
        %v8044 = vadd.f32 %v8043, %v8017
        %v8045 = vadd.f32 %v8044, %v8021
        %v8046 = vadd.f32 %v8045, %v8025
        %v8047 = vadd.f32 %v8046, %v8029
        %v8048 = vrot.slane %v8047, 4
        %v8049 = vadd.f32 %v8047, %v8048
        %v8050 = vrot.slane %v8049, 2
        %v8051 = vadd.f32 %v8049, %v8050
        %v8052 = vrot.slane %v8051, 1
        %v8053 = vadd.f32 %v8051, %v8052
        %v8054 = vadd.f32 %v7970, %v7974
        %v8055 = vadd.f32 %v8054, %v7978
        %v8056 = vadd.f32 %v8055, %v7982
        %v8057 = vadd.f32 %v8056, %v7986
        %v8058 = vadd.f32 %v8057, %v7990
        %v8059 = vadd.f32 %v8058, %v7994
        %v8060 = vadd.f32 %v8059, %v7998
        %v8061 = vadd.f32 %v8060, %v8002
        %v8062 = vadd.f32 %v8061, %v8006
        %v8063 = vadd.f32 %v8062, %v8010
        %v8064 = vadd.f32 %v8063, %v8014
        %v8065 = vadd.f32 %v8064, %v8018
        %v8066 = vadd.f32 %v8065, %v8022
        %v8067 = vadd.f32 %v8066, %v8026
        %v8068 = vadd.f32 %v8067, %v8030
        %v8069 = vrot.slane %v8068, 4
        %v8070 = vadd.f32 %v8068, %v8069
        %v8071 = vrot.slane %v8070, 2
        %v8072 = vadd.f32 %v8070, %v8071
        %v8073 = vrot.slane %v8072, 1
        %v8074 = vadd.f32 %v8072, %v8073
        %v8075 = vadd.f32 %v7971, %v7975
        %v8076 = vadd.f32 %v8075, %v7979
        %v8077 = vadd.f32 %v8076, %v7983
        %v8078 = vadd.f32 %v8077, %v7987
        %v8079 = vadd.f32 %v8078, %v7991
        %v8080 = vadd.f32 %v8079, %v7995
        %v8081 = vadd.f32 %v8080, %v7999
        %v8082 = vadd.f32 %v8081, %v8003
        %v8083 = vadd.f32 %v8082, %v8007
        %v8084 = vadd.f32 %v8083, %v8011
        %v8085 = vadd.f32 %v8084, %v8015
        %v8086 = vadd.f32 %v8085, %v8019
        %v8087 = vadd.f32 %v8086, %v8023
        %v8088 = vadd.f32 %v8087, %v8027
        %v8089 = vadd.f32 %v8088, %v8031
        %v8090 = vrot.slane %v8089, 4
        %v8091 = vadd.f32 %v8089, %v8090
        %v8092 = vrot.slane %v8091, 2
        %v8093 = vadd.f32 %v8091, %v8092
        %v8094 = vrot.slane %v8093, 1
        %v8095 = vadd.f32 %v8093, %v8094
        %v8096 = vadd.f32 %v7972, %v7976
        %v8097 = vadd.f32 %v8096, %v7980
        %v8098 = vadd.f32 %v8097, %v7984
        %v8099 = vadd.f32 %v8098, %v7988
        %v8100 = vadd.f32 %v8099, %v7992
        %v8101 = vadd.f32 %v8100, %v7996
        %v8102 = vadd.f32 %v8101, %v8000
        %v8103 = vadd.f32 %v8102, %v8004
        %v8104 = vadd.f32 %v8103, %v8008
        %v8105 = vadd.f32 %v8104, %v8012
        %v8106 = vadd.f32 %v8105, %v8016
        %v8107 = vadd.f32 %v8106, %v8020
        %v8108 = vadd.f32 %v8107, %v8024
        %v8109 = vadd.f32 %v8108, %v8028
        %v8110 = vadd.f32 %v8109, %v8032
        %v8111 = vrot.slane %v8110, 4
        %v8112 = vadd.f32 %v8110, %v8111
        %v8113 = vrot.slane %v8112, 2
        %v8114 = vadd.f32 %v8112, %v8113
        %v8115 = vrot.slane %v8114, 1
        %v8116 = vadd.f32 %v8114, %v8115
        %v8117 = vadd.f32 %v7147, %v8053
        %v8118 = vadd.f32 %v7148, %v8074
        %v8119 = vadd.f32 %v7149, %v8095
        %v8120 = vadd.f32 %v7150, %v8116
        %v8121 = vmul.f32 %v7500, %v7905
        %v8122 = vmul.f32 %v7502, %v7906
        %v8123 = vmul.f32 %v7693, %v7907
        %v8124 = vmul.f32 %v7695, %v7908
        %v8125 = vmul.f32 %v7504, %v7909
        %v8126 = vmul.f32 %v7506, %v7910
        %v8127 = vmul.f32 %v7697, %v7911
        %v8128 = vmul.f32 %v7699, %v7912
        %v8129 = vmul.f32 %v7510, %v7913
        %v8130 = vmul.f32 %v7512, %v7914
        %v8131 = vmul.f32 %v7703, %v7915
        %v8132 = vmul.f32 %v7705, %v7916
        %v8133 = vmul.f32 %v7514, %v7917
        %v8134 = vmul.f32 %v7516, %v7918
        %v8135 = vmul.f32 %v7707, %v7919
        %v8136 = vmul.f32 %v7709, %v7920
        %v8137 = vmul.f32 %v7520, %v7921
        %v8138 = vmul.f32 %v7522, %v7922
        %v8139 = vmul.f32 %v7713, %v7923
        %v8140 = vmul.f32 %v7715, %v7924
        %v8141 = vmul.f32 %v7524, %v7925
        %v8142 = vmul.f32 %v7526, %v7926
        %v8143 = vmul.f32 %v7717, %v7927
        %v8144 = vmul.f32 %v7719, %v7928
        %v8145 = vmul.f32 %v7530, %v7929
        %v8146 = vmul.f32 %v7532, %v7930
        %v8147 = vmul.f32 %v7723, %v7931
        %v8148 = vmul.f32 %v7725, %v7932
        %v8149 = vmul.f32 %v7534, %v7933
        %v8150 = vmul.f32 %v7536, %v7934
        %v8151 = vmul.f32 %v7727, %v7935
        %v8152 = vmul.f32 %v7729, %v7936
        %v8153 = vmul.f32 %v7540, %v7937
        %v8154 = vmul.f32 %v7542, %v7938
        %v8155 = vmul.f32 %v7733, %v7939
        %v8156 = vmul.f32 %v7735, %v7940
        %v8157 = vmul.f32 %v7544, %v7941
        %v8158 = vmul.f32 %v7546, %v7942
        %v8159 = vmul.f32 %v7737, %v7943
        %v8160 = vmul.f32 %v7739, %v7944
        %v8161 = vmul.f32 %v7550, %v7945
        %v8162 = vmul.f32 %v7552, %v7946
        %v8163 = vmul.f32 %v7743, %v7947
        %v8164 = vmul.f32 %v7745, %v7948
        %v8165 = vmul.f32 %v7554, %v7949
        %v8166 = vmul.f32 %v7556, %v7950
        %v8167 = vmul.f32 %v7747, %v7951
        %v8168 = vmul.f32 %v7749, %v7952
        %v8169 = vmul.f32 %v7560, %v7953
        %v8170 = vmul.f32 %v7562, %v7954
        %v8171 = vmul.f32 %v7753, %v7955
        %v8172 = vmul.f32 %v7755, %v7956
        %v8173 = vmul.f32 %v7564, %v7957
        %v8174 = vmul.f32 %v7566, %v7958
        %v8175 = vmul.f32 %v7757, %v7959
        %v8176 = vmul.f32 %v7759, %v7960
        %v8177 = vmul.f32 %v7570, %v7961
        %v8178 = vmul.f32 %v7572, %v7962
        %v8179 = vmul.f32 %v7763, %v7963
        %v8180 = vmul.f32 %v7765, %v7964
        %v8181 = vmul.f32 %v7574, %v7965
        %v8182 = vmul.f32 %v7576, %v7966
        %v8183 = vmul.f32 %v7767, %v7967
        %v8184 = vmul.f32 %v7769, %v7968
        %v8185 = vadd.f32 %v8121, %v8125
        %v8186 = vadd.f32 %v8185, %v8129
        %v8187 = vadd.f32 %v8186, %v8133
        %v8188 = vadd.f32 %v8187, %v8137
        %v8189 = vadd.f32 %v8188, %v8141
        %v8190 = vadd.f32 %v8189, %v8145
        %v8191 = vadd.f32 %v8190, %v8149
        %v8192 = vadd.f32 %v8191, %v8153
        %v8193 = vadd.f32 %v8192, %v8157
        %v8194 = vadd.f32 %v8193, %v8161
        %v8195 = vadd.f32 %v8194, %v8165
        %v8196 = vadd.f32 %v8195, %v8169
        %v8197 = vadd.f32 %v8196, %v8173
        %v8198 = vadd.f32 %v8197, %v8177
        %v8199 = vadd.f32 %v8198, %v8181
        %v8200 = vrot.slane %v8199, 4
        %v8201 = vadd.f32 %v8199, %v8200
        %v8202 = vrot.slane %v8201, 2
        %v8203 = vadd.f32 %v8201, %v8202
        %v8204 = vrot.slane %v8203, 1
        %v8205 = vadd.f32 %v8203, %v8204
        %v8206 = vadd.f32 %v8122, %v8126
        %v8207 = vadd.f32 %v8206, %v8130
        %v8208 = vadd.f32 %v8207, %v8134
        %v8209 = vadd.f32 %v8208, %v8138
        %v8210 = vadd.f32 %v8209, %v8142
        %v8211 = vadd.f32 %v8210, %v8146
        %v8212 = vadd.f32 %v8211, %v8150
        %v8213 = vadd.f32 %v8212, %v8154
        %v8214 = vadd.f32 %v8213, %v8158
        %v8215 = vadd.f32 %v8214, %v8162
        %v8216 = vadd.f32 %v8215, %v8166
        %v8217 = vadd.f32 %v8216, %v8170
        %v8218 = vadd.f32 %v8217, %v8174
        %v8219 = vadd.f32 %v8218, %v8178
        %v8220 = vadd.f32 %v8219, %v8182
        %v8221 = vrot.slane %v8220, 4
        %v8222 = vadd.f32 %v8220, %v8221
        %v8223 = vrot.slane %v8222, 2
        %v8224 = vadd.f32 %v8222, %v8223
        %v8225 = vrot.slane %v8224, 1
        %v8226 = vadd.f32 %v8224, %v8225
        %v8227 = vadd.f32 %v8123, %v8127
        %v8228 = vadd.f32 %v8227, %v8131
        %v8229 = vadd.f32 %v8228, %v8135
        %v8230 = vadd.f32 %v8229, %v8139
        %v8231 = vadd.f32 %v8230, %v8143
        %v8232 = vadd.f32 %v8231, %v8147
        %v8233 = vadd.f32 %v8232, %v8151
        %v8234 = vadd.f32 %v8233, %v8155
        %v8235 = vadd.f32 %v8234, %v8159
        %v8236 = vadd.f32 %v8235, %v8163
        %v8237 = vadd.f32 %v8236, %v8167
        %v8238 = vadd.f32 %v8237, %v8171
        %v8239 = vadd.f32 %v8238, %v8175
        %v8240 = vadd.f32 %v8239, %v8179
        %v8241 = vadd.f32 %v8240, %v8183
        %v8242 = vrot.slane %v8241, 4
        %v8243 = vadd.f32 %v8241, %v8242
        %v8244 = vrot.slane %v8243, 2
        %v8245 = vadd.f32 %v8243, %v8244
        %v8246 = vrot.slane %v8245, 1
        %v8247 = vadd.f32 %v8245, %v8246
        %v8248 = vadd.f32 %v8124, %v8128
        %v8249 = vadd.f32 %v8248, %v8132
        %v8250 = vadd.f32 %v8249, %v8136
        %v8251 = vadd.f32 %v8250, %v8140
        %v8252 = vadd.f32 %v8251, %v8144
        %v8253 = vadd.f32 %v8252, %v8148
        %v8254 = vadd.f32 %v8253, %v8152
        %v8255 = vadd.f32 %v8254, %v8156
        %v8256 = vadd.f32 %v8255, %v8160
        %v8257 = vadd.f32 %v8256, %v8164
        %v8258 = vadd.f32 %v8257, %v8168
        %v8259 = vadd.f32 %v8258, %v8172
        %v8260 = vadd.f32 %v8259, %v8176
        %v8261 = vadd.f32 %v8260, %v8180
        %v8262 = vadd.f32 %v8261, %v8184
        %v8263 = vrot.slane %v8262, 4
        %v8264 = vadd.f32 %v8262, %v8263
        %v8265 = vrot.slane %v8264, 2
        %v8266 = vadd.f32 %v8264, %v8265
        %v8267 = vrot.slane %v8266, 1
        %v8268 = vadd.f32 %v8266, %v8267
        %v8269 = vadd.f32 %v7299, %v8205
        %v8270 = vadd.f32 %v7300, %v8226
        %v8271 = vadd.f32 %v7301, %v8247
        %v8272 = vadd.f32 %v7302, %v8268
        %vm8273 = vcmask 1040384
        %v8274 = vsel %vm8273, %v8117, %v8269
        %v8275 = vsel %vm8273, %v8118, %v8270
        %v8276 = vsel %vm8273, %v8119, %v8271
        %v8277 = vsel %vm8273, %v8120, %v8272
        %v8282 = vcombine.low %v8274, %v8275
        %v8283 = vcombine.low %v8276, %v8277
        %v8285 = vunpack.c.l.s4 1983009808
        %v8286 = vunpack.c.0.s8 %v8285
        %v8287 = vlaneseq
        %v8288 = vshrl.u32 %v8287, 7
        %v8289 = vsub.s32 %v8286, %v8288
        %v8290 = vrot.slane %v8282, %v8289
        %v8292 = vunpack.c.l.s4 1983009808
        %v8293 = vunpack.c.0.s8 %v8292
        %v8294 = vlaneseq
        %v8295 = vshrl.u32 %v8294, 7
        %v8296 = vsub.s32 %v8293, %v8295
        %v8297 = vrot.slane %v8283, %v8296
        %v8298 = vcombine.low %v8290, %v8297
        %8300 = vst [vmem:[%s178] sm:$0xff] %v8298
        %s8301 = sand.u32 %s102, 1
        %s8302 = scalar_lea.sflag [#allocation6], %s8301
        %s8303 = sand.u32 %s102, 1
        %s8304 = smul.addr %s8303, 8
        %s8305 = scalar_lea.vmem [#allocation5], %s8304
        // Predicated region
        $region29: #{tpu_custom_call.1} parent=27 // pred_check
          %p8306 = pneg %p112
        $region30: #{tpu_custom_call.1} parent=27 // pred_check_branch
          %8308 = sbr.rel (%p8306) target = $region32
        $region31: #{tpu_custom_call.1} parent=27 // pred_region
          %s8309 = smul.u32 4, %s33
          %s8311 = ssub.s32 128, 128
          %8312 = vsyncadd %s8302, %s8311
          %s8313 = smul.addr %s32, 4
          %s8314 = sadd.s32 %s8309, %s8313
          %s8315 = smul.addr %s8314, 32
          %s8316 = scalar_lea.hbm %s4, %s8315
          %s8318 = sshll.u32 %s8305, 4
          %s8319 = int_to_ptr.vmem [resolvable:$true] %s8318
          %8321 = dma.vmem_to_hbm [thread:$0]  %s8319, 128, %s8316, %s8302
        $region32: #{tpu_custom_call.1} parent=27 // pred_fallthru
          _
      $region28: #{tpu_custom_call.1} parent=5 // pred_fallthru
        _
      %p8322 = scmp.le.s32.totalorder 2, %s23
      // Predicated region
      $region33: #{tpu_custom_call.1} parent=5 // pred_check
        %p8323 = pneg %p8322
      $region34: #{tpu_custom_call.1} parent=5 // pred_check_branch
        %8325 = sbr.rel (%p8323) target = $region36
      $region35: #{tpu_custom_call.1} parent=5 // pred_region
        %s8326 = ssub.s32 %s23, 2
        // Predicated region
        $region37: #{tpu_custom_call.1} parent=35 // pred_check
          %p8327 = pneg %p118
        $region38: #{tpu_custom_call.1} parent=35 // pred_check_branch
          %8329 = sbr.rel (%p8327) target = $region40
        $region39: #{tpu_custom_call.1} parent=35 // pred_region
          %s8330 = sand.u32 %s103, 1
          %s8331 = scalar_lea.sflag [#allocation6], %s8330
          %s8332 = sand.u32 %s103, 1
          %s8333 = smul.addr %s8332, 8
          %s8334 = scalar_lea.vmem [#allocation5], %s8333
          %8335 = dma.done %s8331, 128
        $region40: #{tpu_custom_call.1} parent=35 // pred_fallthru
          _
      $region36: #{tpu_custom_call.1} parent=5 // pred_fallthru
        _
    $region6: #{tpu_custom_call.1} parent=1 // loop_footer
      %s27 = sadd.s32 1, %s23
    $region7: #{tpu_custom_call.1} parent=1 // loop_footer_branch
      %22 = sbr.rel target = $region3
    $region8: #{tpu_custom_call.1} parent=1 // loop_exit
      _
    %8336 = vsyncpa [#allocation6], 1
    %s8337 = scalar_lea.sflag [#allocation6], 1
    %8338 = vsyncpa %s8337, 1

</llo_original>
